<compile_context>
chip_gen: v6e
topology: v6e:2x2x1
jax: 0.10.0
libtpu: 0.0.40
codegen_flags: <defaults>
</compile_context>

<pallas_src>
import functools

import jax
import jax.numpy as jnp
import numpy as np
from jax.experimental import pallas as pl
from jax.experimental.pallas import tpu as pltpu


# ----------------------------- Pallas kernel ---------------------------------
def _wmsa_kernel(*refs, tb, seq, num_heads, head_dim, has_mask):
    """One grid step processes TB windows (tb*seq token rows).

    refs (masked variant):
      x_ref    : (TB*N, C)   input tokens for TB windows
      wqkv_ref : (C, 3C)     qkv weight (Q columns pre-scaled by qk_scale)
      bqkv_ref : (1, 3C)     qkv bias   (Q part pre-scaled)
      wproj_ref: (C, C)      output projection weight
      bproj_ref: (1, C)      output projection bias
      bias_ref : (H, N, N)   relative-position bias (constant -> VMEM resident)
      mask_ref : (TB, N, N)  shift mask, repeats every TB windows (resident)
      o_ref    : (TB*N, C)   output tokens
    The unmasked variant omits mask_ref.
    """
    if has_mask:
        (x_ref, wqkv_ref, bqkv_ref, wproj_ref, bproj_ref,
         bias_ref, mask_ref, o_ref) = refs
    else:
        (x_ref, wqkv_ref, bqkv_ref, wproj_ref, bproj_ref,
         bias_ref, o_ref) = refs
        mask_ref = None

    C = num_heads * head_dim

    # qkv projection: one wide-row MXU matmul for all TB windows.
    x = x_ref[...]                                                   # (TB*N, C)
    qkv = jnp.dot(x, wqkv_ref[...], preferred_element_type=jnp.float32)
    qkv = qkv + bqkv_ref[...]                                        # (TB*N, 3C)

    # split q/k/v and expose the window batch dim (leading-dim split only; the
    # minor dim C stays put, so no lane-crossing relayout).
    q = qkv[:, 0 * C:1 * C].reshape(tb, seq, C)
    k = qkv[:, 1 * C:2 * C].reshape(tb, seq, C)
    v = qkv[:, 2 * C:3 * C].reshape(tb, seq, C)

    # Loads hoisted out of the head loop (both stay in vregs / VMEM).
    rel_bias = bias_ref[...]                                         # (H, N, N)
    mask = mask_ref[...] if has_mask else None                       # (TB, N, N)

    # per-head attention, batched over the TB windows (H is small and static,
    # so the unrolled head loop's lane slice/concat cost is amortized over TB).
    head_outs = []
    for h in range(num_heads):
        hs = slice(h * head_dim, (h + 1) * head_dim)
        qh, kh, vh = q[:, :, hs], k[:, :, hs], v[:, :, hs]           # (TB, N, Dh)

        # q @ k^T without materializing k.T (contract the trailing dims).
        s = jnp.einsum("bnd,bmd->bnm", qh, kh,
                       preferred_element_type=jnp.float32)           # (TB, N, N)
        s = s + rel_bias[h]                                          # broadcast over TB
        if has_mask:
            s = s + mask                                             # per-window shift mask

        # numerically stable softmax; reciprocal goes to the EUP slot.
        s = s - jnp.max(s, axis=-1, keepdims=True)
        p = jnp.exp(s)
        p = p * pl.reciprocal(jnp.sum(p, axis=-1, keepdims=True))
        # TODO(synk): attn_drop / proj_drop are identity at rate 0.0 (module
        # default); stochastic dropout not implemented.

        head_outs.append(
            jnp.einsum("bnm,bmd->bnd", p, vh,
                       preferred_element_type=jnp.float32))          # (TB, N, Dh)

    ctx = jnp.concatenate(head_outs, axis=-1).reshape(tb * seq, C)   # (TB*N, C)

    # output projection (wide-row MXU matmul).
    y = jnp.dot(ctx, wproj_ref[...], preferred_element_type=jnp.float32)
    y = y + bproj_ref[...]
    o_ref[...] = y.astype(o_ref.dtype)


# ------------------------------ Python wrapper --------------------------------
def _double_step_seq(step1, len1, step2, len2):
    seq1 = jnp.arange(0, step1 * len1, step1)
    seq2 = jnp.arange(0, step2 * len2, step2)
    return (seq1[:, None] + seq2[None, :]).reshape(1, -1)


def make_relative_position_index(window_size):
    Wh, Ww = window_size
    rel_index_coords = _double_step_seq(2 * Ww - 1, Wh, 1, Ww)    # (1, Wh*Ww)
    rel_position_index = rel_index_coords + rel_index_coords.T    # (Wh*Ww, Wh*Ww)
    rel_position_index = jnp.flip(rel_position_index, axis=1)
    return rel_position_index


def _choose_block_windows(B, N, nW, max_rows=512):
    """Largest TB that divides B, is a multiple of nW (so the mask pattern is
    identical for every block), keeps the block's second-minor dim a multiple
    of 8, and stays <= max_rows token rows per grid step (sweet spot per the
    HBM-roofline measurements; raise for very small C if VMEM allows)."""
    candidates = [tb for tb in range(nW, B + 1, nW)
                  if B % tb == 0 and ((tb * N) % 8 == 0 or tb == B)]
    small = [tb for tb in candidates if tb * N <= max_rows]
    return max(small) if small else min(candidates)


def window_msa(x, params, window_size, num_heads, mask=None, qk_scale=None):
    """Pallas WindowMSA forward. x: (B, N, C). mask: (nW, N, N) or None."""
    B, N, C = x.shape
    Wh, Ww = window_size
    assert N == Wh * Ww
    head_dim = C // num_heads
    scale = qk_scale if qk_scale is not None else head_dim ** (-0.5)

    nW = 1 if mask is None else mask.shape[0]
    TB = _choose_block_windows(B, N, nW)
    G = B // TB

    # Fold the qk scale into the Q columns of the qkv projection (removes the
    # per-head VPU multiply inside the kernel).
    col_scale = jnp.concatenate(
        [jnp.full((C,), scale, jnp.float32), jnp.ones((2 * C,), jnp.float32)])
    wqkv = params["wqkv"] * col_scale[None, :]
    bqkv = (params["bqkv"] * col_scale).reshape(1, 3 * C)
    bproj = params["bproj"].reshape(1, C)

    # Relative position bias, un-replicated: (H, N, N), constant index_map ->
    # DMA'd once, resident in VMEM for the whole grid.
    rel_idx = make_relative_position_index(window_size).reshape(-1)
    rel_bias = params["rel_pos_table"][rel_idx].reshape(N, N, num_heads)
    rel_bias = jnp.transpose(rel_bias, (2, 0, 1)).astype(jnp.float32)   # (H, N, N)

    args = [x.reshape(B * N, C), wqkv, bqkv, params["wproj"], bproj, rel_bias]
    in_specs = [
        pl.BlockSpec((TB * N, C), lambda i: (i, 0)),                 # x (flat tokens)
        pl.BlockSpec((C, 3 * C), lambda i: (0, 0)),                  # wqkv
        pl.BlockSpec((1, 3 * C), lambda i: (0, 0)),                  # bqkv
        pl.BlockSpec((C, C), lambda i: (0, 0)),                      # wproj
        pl.BlockSpec((1, C), lambda i: (0, 0)),                      # bproj
        pl.BlockSpec((num_heads, N, N), lambda i: (0, 0, 0)),        # rel bias (resident)
    ]

    # Shift mask: windows are laid out (batch, window) so window b uses
    # mask[b % nW]; with TB % nW == 0 the pattern repeats every block, so one
    # (TB, N, N) slab with a constant index_map stays resident in VMEM.
    if mask is not None:
        mask_tiled = jnp.tile(mask, (TB // nW, 1, 1)).astype(jnp.float32)
        args.append(mask_tiled)
        in_specs.append(pl.BlockSpec((TB, N, N), lambda i: (0, 0, 0)))

    kernel = functools.partial(
        _wmsa_kernel, tb=TB, seq=N, num_heads=num_heads, head_dim=head_dim,
        has_mask=mask is not None)

    grid_spec = pltpu.PrefetchScalarGridSpec(
        num_scalar_prefetch=0,
        grid=(G,),
        in_specs=in_specs,
        out_specs=pl.BlockSpec((TB * N, C), lambda i: (i, 0)),
    )

    out_flat = pl.pallas_call(
        kernel,
        out_shape=jax.ShapeDtypeStruct((B * N, C), x.dtype),
        grid_spec=grid_spec,
        compiler_params=pltpu.CompilerParams(
            dimension_semantics=("parallel",)),   # window blocks are independent
    )(*args)

    return out_flat.reshape(B, N, C)


# ------------------------------ Pure-JAX reference -----------------------------
def window_msa_ref(x, params, window_size, num_heads, mask=None, qk_scale=None):
    B, N, C = x.shape
    head_dim = C // num_heads
    scale = qk_scale if qk_scale is not None else head_dim ** (-0.5)

    qkv = x @ params["wqkv"] + params["bqkv"]
    qkv = qkv.reshape(B, N, 3, num_heads, head_dim).transpose(2, 0, 3, 1, 4)
    q, k, v = qkv[0], qkv[1], qkv[2]
    q = q * scale
    attn = jnp.einsum("bhnd,bhmd->bhnm", q, k)

    rel_idx = make_relative_position_index(window_size).reshape(-1)
    rel_bias = params["rel_pos_table"][rel_idx].reshape(N, N, num_heads)
    rel_bias = jnp.transpose(rel_bias, (2, 0, 1))
    attn = attn + rel_bias[None]

    if mask is not None:
        nW = mask.shape[0]
        attn = attn.reshape(B // nW, nW, num_heads, N, N) + mask[None, :, None]
        attn = attn.reshape(-1, num_heads, N, N)

    attn = jax.nn.softmax(attn, axis=-1)
    out = jnp.einsum("bhnm,bhmd->bhnd", attn, v)
    out = out.transpose(0, 2, 1, 3).reshape(B, N, C)
    return out @ params["wproj"] + params["bproj"]


# ----------------------------------- main --------------------------------------
if __name__ == "__main__":
    embed_dims = 32
    num_heads = 4
    window_size = (4, 4)
    Wh, Ww = window_size
    N = Wh * Ww
    nW = 4            # windows per image
    batch = 2
    B = batch * nW    # (num_windows * B) in torch terms
    C = embed_dims

    key = jax.random.PRNGKey(0)
    ks = jax.random.split(key, 7)

    params = {
        # nn.Parameter(zeros(...)) in the module; use small random values so the
        # bias path is actually exercised (deterministic from PRNGKey(0)).
        "rel_pos_table": 0.02 * jax.random.normal(
            ks[0], ((2 * Wh - 1) * (2 * Ww - 1), num_heads), jnp.float32),
        "wqkv": 0.1 * jax.random.normal(ks[1], (embed_dims, 3 * embed_dims), jnp.float32),
        "bqkv": 0.1 * jax.random.normal(ks[2], (3 * embed_dims,), jnp.float32),
        "wproj": 0.1 * jax.random.normal(ks[3], (embed_dims, embed_dims), jnp.float32),
        "bproj": 0.1 * jax.random.normal(ks[4], (embed_dims,), jnp.float32),
    }

    x = jax.random.normal(ks[5], (B, N, C), jnp.float32)

    # attention mask with values in (-inf, 0]: block some keys in some windows
    mask_bits = jax.random.bernoulli(ks[6], 0.3, (nW, N, N))
    mask = jnp.where(mask_bits, -100.0, 0.0).astype(jnp.float32)

    # no-mask path
    out0 = jax.block_until_ready(
        window_msa(x, params, window_size, num_heads, mask=None))
    ref0 = window_msa_ref(x, params, window_size, num_heads, mask=None)
    np.testing.assert_allclose(np.asarray(out0), np.asarray(ref0), atol=1e-4, rtol=1e-4)

    # masked path
    out1 = jax.block_until_ready(
        window_msa(x, params, window_size, num_heads, mask=mask))
    ref1 = window_msa_ref(x, params, window_size, num_heads, mask=mask)
    np.testing.assert_allclose(np.asarray(out1), np.asarray(ref1), atol=1e-4, rtol=1e-4)

    print("KERNEL_OK")
</pallas_src>

<mosaic_0001>
module attributes {stable_mosaic.version = 11 : i64} {
  func.func @_wmsa_kernel(%arg0: i32, %arg1: memref<128x32xf32, #tpu.memory_space<vmem>>, %arg2: memref<32x96xf32, #tpu.memory_space<vmem>>, %arg3: memref<1x96xf32, #tpu.memory_space<vmem>>, %arg4: memref<32x32xf32, #tpu.memory_space<vmem>>, %arg5: memref<1x32xf32, #tpu.memory_space<vmem>>, %arg6: memref<4x16x16xf32, #tpu.memory_space<vmem>>, %arg7: memref<128x32xf32, #tpu.memory_space<vmem>>) attributes {dimension_semantics = [#tpu.dimension_semantics<parallel>], iteration_bounds = array<i64: 1>, scalar_prefetch = 0 : i64, scratch_operands = 0 : i64, tpu.core_type = #tpu.core_type<tc>, window_params = [{transform_indices = @transform_0, window_bounds = array<i64: 128, 32>}, {pipeline_mode = #tpu.pipeline_mode<synchronous>, transform_indices = @transform_1, window_bounds = array<i64: 32, 96>}, {pipeline_mode = #tpu.pipeline_mode<synchronous>, transform_indices = @transform_2, window_bounds = array<i64: 1, 96>}, {pipeline_mode = #tpu.pipeline_mode<synchronous>, transform_indices = @transform_3, window_bounds = array<i64: 32, 32>}, {pipeline_mode = #tpu.pipeline_mode<synchronous>, transform_indices = @transform_4, window_bounds = array<i64: 1, 32>}, {pipeline_mode = #tpu.pipeline_mode<synchronous>, transform_indices = @transform_5, window_bounds = array<i64: 4, 16, 16>}, {transform_indices = @transform_6, window_bounds = array<i64: 128, 32>}]} {
    %c0 = arith.constant 0 : index
    %c0_0 = arith.constant 0 : index
    %0 = vector.load %arg1[%c0, %c0_0] : memref<128x32xf32, #tpu.memory_space<vmem>>, vector<128x32xf32>
    %c0_1 = arith.constant 0 : index
    %c0_2 = arith.constant 0 : index
    %1 = vector.load %arg2[%c0_1, %c0_2] : memref<32x96xf32, #tpu.memory_space<vmem>>, vector<32x96xf32>
    %cst = arith.constant dense<0.000000e+00> : vector<128x96xf32>
    %2 = tpu.matmul %0, %1, %cst {dimension_numbers = #tpu.dot_dimension_numbers<[1], [0], [0], [1], [0, 0, 1, 1], [], []>} : vector<128x32xf32>, vector<32x96xf32>, vector<128x96xf32> -> vector<128x96xf32>
    %c0_3 = arith.constant 0 : index
    %c0_4 = arith.constant 0 : index
    %3 = vector.load %arg3[%c0_3, %c0_4] : memref<1x96xf32, #tpu.memory_space<vmem>>, vector<1x96xf32>
    %4 = vector.broadcast %3 : vector<1x96xf32> to vector<128x96xf32>
    %5 = arith.addf %2, %4 : vector<128x96xf32>
    %6 = vector.extract_strided_slice %5 {offsets = [0, 0], sizes = [128, 32], strides = [1, 1]} : vector<128x96xf32> to vector<128x32xf32>
    %7 = vector.shape_cast %6 : vector<128x32xf32> to vector<8x16x32xf32>
    %8 = vector.extract_strided_slice %5 {offsets = [0, 32], sizes = [128, 32], strides = [1, 1]} : vector<128x96xf32> to vector<128x32xf32>
    %9 = vector.shape_cast %8 : vector<128x32xf32> to vector<8x16x32xf32>
    %10 = vector.extract_strided_slice %5 {offsets = [0, 64], sizes = [128, 32], strides = [1, 1]} : vector<128x96xf32> to vector<128x32xf32>
    %11 = vector.shape_cast %10 : vector<128x32xf32> to vector<8x16x32xf32>
    %c0_5 = arith.constant 0 : index
    %c0_6 = arith.constant 0 : index
    %c0_7 = arith.constant 0 : index
    %12 = vector.load %arg6[%c0_5, %c0_6, %c0_7] : memref<4x16x16xf32, #tpu.memory_space<vmem>>, vector<4x16x16xf32>
    %13 = vector.extract_strided_slice %7 {offsets = [0, 0, 0], sizes = [8, 16, 8], strides = [1, 1, 1]} : vector<8x16x32xf32> to vector<8x16x8xf32>
    %14 = vector.extract_strided_slice %9 {offsets = [0, 0, 0], sizes = [8, 16, 8], strides = [1, 1, 1]} : vector<8x16x32xf32> to vector<8x16x8xf32>
    %15 = vector.extract_strided_slice %11 {offsets = [0, 0, 0], sizes = [8, 16, 8], strides = [1, 1, 1]} : vector<8x16x32xf32> to vector<8x16x8xf32>
    "tpu.trace_start"() <{level = 10 : i32, message = "bnd,bmd->bnm"}> : () -> ()
    %cst_8 = arith.constant dense<0.000000e+00> : vector<8x16x16xf32>
    %16 = tpu.matmul %13, %14, %cst_8 {dimension_numbers = #tpu.dot_dimension_numbers<[2], [2], [1], [1], [0, 0, 0, 1, 1, 1], [0], [0]>} : vector<8x16x8xf32>, vector<8x16x8xf32>, vector<8x16x16xf32> -> vector<8x16x16xf32>
    "tpu.trace_stop"() : () -> ()
    %17 = vector.extract_strided_slice %12 {offsets = [0, 0, 0], sizes = [1, 16, 16], strides = [1, 1, 1]} : vector<4x16x16xf32> to vector<1x16x16xf32>
    %18 = vector.shape_cast %17 : vector<1x16x16xf32> to vector<16x16xf32>
    %19 = vector.shape_cast %18 : vector<16x16xf32> to vector<1x16x16xf32>
    %20 = vector.broadcast %19 : vector<1x16x16xf32> to vector<8x16x16xf32>
    %21 = arith.addf %16, %20 : vector<8x16x16xf32>
    %cst_9 = arith.constant dense<0xFF800000> : vector<8x16xf32>
    %22 = vector.multi_reduction <maximumf>, %21, %cst_9 [2] : vector<8x16x16xf32> to vector<8x16xf32>
    %23 = vector.shape_cast %22 : vector<8x16xf32> to vector<8x16x1xf32>
    %24 = vector.broadcast %23 : vector<8x16x1xf32> to vector<8x16x16xf32>
    %25 = arith.subf %21, %24 : vector<8x16x16xf32>
    %26 = math.exp %25 : vector<8x16x16xf32>
    %cst_10 = arith.constant dense<0.000000e+00> : vector<8x16xf32>
    %27 = vector.multi_reduction <add>, %26, %cst_10 [2] : vector<8x16x16xf32> to vector<8x16xf32>
    %28 = vector.shape_cast %27 : vector<8x16xf32> to vector<8x16x1xf32>
    %29 = tpu.reciprocal %28 : vector<8x16x1xf32> -> vector<8x16x1xf32>
    %30 = vector.broadcast %29 : vector<8x16x1xf32> to vector<8x16x16xf32>
    %31 = arith.mulf %26, %30 : vector<8x16x16xf32>
    "tpu.trace_start"() <{level = 10 : i32, message = "bnm,bmd->bnd"}> : () -> ()
    %cst_11 = arith.constant dense<0.000000e+00> : vector<8x16x8xf32>
    %32 = tpu.matmul %31, %15, %cst_11 {dimension_numbers = #tpu.dot_dimension_numbers<[2], [1], [1], [2], [0, 0, 0, 1, 1, 2], [0], [0]>} : vector<8x16x16xf32>, vector<8x16x8xf32>, vector<8x16x8xf32> -> vector<8x16x8xf32>
    "tpu.trace_stop"() : () -> ()
    %33 = vector.extract_strided_slice %7 {offsets = [0, 0, 8], sizes = [8, 16, 8], strides = [1, 1, 1]} : vector<8x16x32xf32> to vector<8x16x8xf32>
    %34 = vector.extract_strided_slice %9 {offsets = [0, 0, 8], sizes = [8, 16, 8], strides = [1, 1, 1]} : vector<8x16x32xf32> to vector<8x16x8xf32>
    %35 = vector.extract_strided_slice %11 {offsets = [0, 0, 8], sizes = [8, 16, 8], strides = [1, 1, 1]} : vector<8x16x32xf32> to vector<8x16x8xf32>
    "tpu.trace_start"() <{level = 10 : i32, message = "bnd,bmd->bnm"}> : () -> ()
    %cst_12 = arith.constant dense<0.000000e+00> : vector<8x16x16xf32>
    %36 = tpu.matmul %33, %34, %cst_12 {dimension_numbers = #tpu.dot_dimension_numbers<[2], [2], [1], [1], [0, 0, 0, 1, 1, 1], [0], [0]>} : vector<8x16x8xf32>, vector<8x16x8xf32>, vector<8x16x16xf32> -> vector<8x16x16xf32>
    "tpu.trace_stop"() : () -> ()
    %37 = vector.extract_strided_slice %12 {offsets = [1, 0, 0], sizes = [1, 16, 16], strides = [1, 1, 1]} : vector<4x16x16xf32> to vector<1x16x16xf32>
    %38 = vector.shape_cast %37 : vector<1x16x16xf32> to vector<16x16xf32>
    %39 = vector.shape_cast %38 : vector<16x16xf32> to vector<1x16x16xf32>
    %40 = vector.broadcast %39 : vector<1x16x16xf32> to vector<8x16x16xf32>
    %41 = arith.addf %36, %40 : vector<8x16x16xf32>
    %cst_13 = arith.constant dense<0xFF800000> : vector<8x16xf32>
    %42 = vector.multi_reduction <maximumf>, %41, %cst_13 [2] : vector<8x16x16xf32> to vector<8x16xf32>
    %43 = vector.shape_cast %42 : vector<8x16xf32> to vector<8x16x1xf32>
    %44 = vector.broadcast %43 : vector<8x16x1xf32> to vector<8x16x16xf32>
    %45 = arith.subf %41, %44 : vector<8x16x16xf32>
    %46 = math.exp %45 : vector<8x16x16xf32>
    %cst_14 = arith.constant dense<0.000000e+00> : vector<8x16xf32>
    %47 = vector.multi_reduction <add>, %46, %cst_14 [2] : vector<8x16x16xf32> to vector<8x16xf32>
    %48 = vector.shape_cast %47 : vector<8x16xf32> to vector<8x16x1xf32>
    %49 = tpu.reciprocal %48 : vector<8x16x1xf32> -> vector<8x16x1xf32>
    %50 = vector.broadcast %49 : vector<8x16x1xf32> to vector<8x16x16xf32>
    %51 = arith.mulf %46, %50 : vector<8x16x16xf32>
    "tpu.trace_start"() <{level = 10 : i32, message = "bnm,bmd->bnd"}> : () -> ()
    %cst_15 = arith.constant dense<0.000000e+00> : vector<8x16x8xf32>
    %52 = tpu.matmul %51, %35, %cst_15 {dimension_numbers = #tpu.dot_dimension_numbers<[2], [1], [1], [2], [0, 0, 0, 1, 1, 2], [0], [0]>} : vector<8x16x16xf32>, vector<8x16x8xf32>, vector<8x16x8xf32> -> vector<8x16x8xf32>
    "tpu.trace_stop"() : () -> ()
    %53 = vector.extract_strided_slice %7 {offsets = [0, 0, 16], sizes = [8, 16, 8], strides = [1, 1, 1]} : vector<8x16x32xf32> to vector<8x16x8xf32>
    %54 = vector.extract_strided_slice %9 {offsets = [0, 0, 16], sizes = [8, 16, 8], strides = [1, 1, 1]} : vector<8x16x32xf32> to vector<8x16x8xf32>
    %55 = vector.extract_strided_slice %11 {offsets = [0, 0, 16], sizes = [8, 16, 8], strides = [1, 1, 1]} : vector<8x16x32xf32> to vector<8x16x8xf32>
    "tpu.trace_start"() <{level = 10 : i32, message = "bnd,bmd->bnm"}> : () -> ()
    %cst_16 = arith.constant dense<0.000000e+00> : vector<8x16x16xf32>
    %56 = tpu.matmul %53, %54, %cst_16 {dimension_numbers = #tpu.dot_dimension_numbers<[2], [2], [1], [1], [0, 0, 0, 1, 1, 1], [0], [0]>} : vector<8x16x8xf32>, vector<8x16x8xf32>, vector<8x16x16xf32> -> vector<8x16x16xf32>
    "tpu.trace_stop"() : () -> ()
    %57 = vector.extract_strided_slice %12 {offsets = [2, 0, 0], sizes = [1, 16, 16], strides = [1, 1, 1]} : vector<4x16x16xf32> to vector<1x16x16xf32>
    %58 = vector.shape_cast %57 : vector<1x16x16xf32> to vector<16x16xf32>
    %59 = vector.shape_cast %58 : vector<16x16xf32> to vector<1x16x16xf32>
    %60 = vector.broadcast %59 : vector<1x16x16xf32> to vector<8x16x16xf32>
    %61 = arith.addf %56, %60 : vector<8x16x16xf32>
    %cst_17 = arith.constant dense<0xFF800000> : vector<8x16xf32>
    %62 = vector.multi_reduction <maximumf>, %61, %cst_17 [2] : vector<8x16x16xf32> to vector<8x16xf32>
    %63 = vector.shape_cast %62 : vector<8x16xf32> to vector<8x16x1xf32>
    %64 = vector.broadcast %63 : vector<8x16x1xf32> to vector<8x16x16xf32>
    %65 = arith.subf %61, %64 : vector<8x16x16xf32>
    %66 = math.exp %65 : vector<8x16x16xf32>
    %cst_18 = arith.constant dense<0.000000e+00> : vector<8x16xf32>
    %67 = vector.multi_reduction <add>, %66, %cst_18 [2] : vector<8x16x16xf32> to vector<8x16xf32>
    %68 = vector.shape_cast %67 : vector<8x16xf32> to vector<8x16x1xf32>
    %69 = tpu.reciprocal %68 : vector<8x16x1xf32> -> vector<8x16x1xf32>
    %70 = vector.broadcast %69 : vector<8x16x1xf32> to vector<8x16x16xf32>
    %71 = arith.mulf %66, %70 : vector<8x16x16xf32>
    "tpu.trace_start"() <{level = 10 : i32, message = "bnm,bmd->bnd"}> : () -> ()
    %cst_19 = arith.constant dense<0.000000e+00> : vector<8x16x8xf32>
    %72 = tpu.matmul %71, %55, %cst_19 {dimension_numbers = #tpu.dot_dimension_numbers<[2], [1], [1], [2], [0, 0, 0, 1, 1, 2], [0], [0]>} : vector<8x16x16xf32>, vector<8x16x8xf32>, vector<8x16x8xf32> -> vector<8x16x8xf32>
    "tpu.trace_stop"() : () -> ()
    %73 = vector.extract_strided_slice %7 {offsets = [0, 0, 24], sizes = [8, 16, 8], strides = [1, 1, 1]} : vector<8x16x32xf32> to vector<8x16x8xf32>
    %74 = vector.extract_strided_slice %9 {offsets = [0, 0, 24], sizes = [8, 16, 8], strides = [1, 1, 1]} : vector<8x16x32xf32> to vector<8x16x8xf32>
    %75 = vector.extract_strided_slice %11 {offsets = [0, 0, 24], sizes = [8, 16, 8], strides = [1, 1, 1]} : vector<8x16x32xf32> to vector<8x16x8xf32>
    "tpu.trace_start"() <{level = 10 : i32, message = "bnd,bmd->bnm"}> : () -> ()
    %cst_20 = arith.constant dense<0.000000e+00> : vector<8x16x16xf32>
    %76 = tpu.matmul %73, %74, %cst_20 {dimension_numbers = #tpu.dot_dimension_numbers<[2], [2], [1], [1], [0, 0, 0, 1, 1, 1], [0], [0]>} : vector<8x16x8xf32>, vector<8x16x8xf32>, vector<8x16x16xf32> -> vector<8x16x16xf32>
    "tpu.trace_stop"() : () -> ()
    %77 = vector.extract_strided_slice %12 {offsets = [3, 0, 0], sizes = [1, 16, 16], strides = [1, 1, 1]} : vector<4x16x16xf32> to vector<1x16x16xf32>
    %78 = vector.shape_cast %77 : vector<1x16x16xf32> to vector<16x16xf32>
    %79 = vector.shape_cast %78 : vector<16x16xf32> to vector<1x16x16xf32>
    %80 = vector.broadcast %79 : vector<1x16x16xf32> to vector<8x16x16xf32>
    %81 = arith.addf %76, %80 : vector<8x16x16xf32>
    %cst_21 = arith.constant dense<0xFF800000> : vector<8x16xf32>
    %82 = vector.multi_reduction <maximumf>, %81, %cst_21 [2] : vector<8x16x16xf32> to vector<8x16xf32>
    %83 = vector.shape_cast %82 : vector<8x16xf32> to vector<8x16x1xf32>
    %84 = vector.broadcast %83 : vector<8x16x1xf32> to vector<8x16x16xf32>
    %85 = arith.subf %81, %84 : vector<8x16x16xf32>
    %86 = math.exp %85 : vector<8x16x16xf32>
    %cst_22 = arith.constant dense<0.000000e+00> : vector<8x16xf32>
    %87 = vector.multi_reduction <add>, %86, %cst_22 [2] : vector<8x16x16xf32> to vector<8x16xf32>
    %88 = vector.shape_cast %87 : vector<8x16xf32> to vector<8x16x1xf32>
    %89 = tpu.reciprocal %88 : vector<8x16x1xf32> -> vector<8x16x1xf32>
    %90 = vector.broadcast %89 : vector<8x16x1xf32> to vector<8x16x16xf32>
    %91 = arith.mulf %86, %90 : vector<8x16x16xf32>
    "tpu.trace_start"() <{level = 10 : i32, message = "bnm,bmd->bnd"}> : () -> ()
    %cst_23 = arith.constant dense<0.000000e+00> : vector<8x16x8xf32>
    %92 = tpu.matmul %91, %75, %cst_23 {dimension_numbers = #tpu.dot_dimension_numbers<[2], [1], [1], [2], [0, 0, 0, 1, 1, 2], [0], [0]>} : vector<8x16x16xf32>, vector<8x16x8xf32>, vector<8x16x8xf32> -> vector<8x16x8xf32>
    "tpu.trace_stop"() : () -> ()
    %93 = tpu.concatenate %32, %52, %72, %92 in 2 : vector<8x16x8xf32>, vector<8x16x8xf32>, vector<8x16x8xf32>, vector<8x16x8xf32> -> vector<8x16x32xf32>
    %94 = vector.shape_cast %93 : vector<8x16x32xf32> to vector<128x32xf32>
    %c0_24 = arith.constant 0 : index
    %c0_25 = arith.constant 0 : index
    %95 = vector.load %arg4[%c0_24, %c0_25] : memref<32x32xf32, #tpu.memory_space<vmem>>, vector<32x32xf32>
    %cst_26 = arith.constant dense<0.000000e+00> : vector<128x32xf32>
    %96 = tpu.matmul %94, %95, %cst_26 {dimension_numbers = #tpu.dot_dimension_numbers<[1], [0], [0], [1], [0, 0, 1, 1], [], []>} : vector<128x32xf32>, vector<32x32xf32>, vector<128x32xf32> -> vector<128x32xf32>
    %c0_27 = arith.constant 0 : index
    %c0_28 = arith.constant 0 : index
    %97 = vector.load %arg5[%c0_27, %c0_28] : memref<1x32xf32, #tpu.memory_space<vmem>>, vector<1x32xf32>
    %98 = vector.broadcast %97 : vector<1x32xf32> to vector<128x32xf32>
    %99 = arith.addf %96, %98 : vector<128x32xf32>
    %c0_29 = arith.constant 0 : index
    %c0_30 = arith.constant 0 : index
    %100 = vector.load %arg7[%c0_29, %c0_30] : memref<128x32xf32, #tpu.memory_space<vmem>>, vector<128x32xf32>
    tpu.vector_store %arg7[%c0_29, %c0_30], %99 {strides = array<i32>} : memref<128x32xf32, #tpu.memory_space<vmem>>, vector<128x32xf32>,
    return
  }
  func.func @transform_0(%arg0: i32) -> (i32, i32) {
    %c0_i32 = arith.constant 0 : i32
    %c0_i32_0 = arith.constant 0 : i32
    return %arg0, %c0_i32 : i32, i32
  }
  func.func @transform_1(%arg0: i32) -> (i32, i32) {
    %c0_i32 = arith.constant 0 : i32
    %c0_i32_0 = arith.constant 0 : i32
    %c0_i32_1 = arith.constant 0 : i32
    return %c0_i32, %c0_i32_0 : i32, i32
  }
  func.func @transform_2(%arg0: i32) -> (i32, i32) {
    %c0_i32 = arith.constant 0 : i32
    %c0_i32_0 = arith.constant 0 : i32
    %c0_i32_1 = arith.constant 0 : i32
    return %c0_i32, %c0_i32_0 : i32, i32
  }
  func.func @transform_3(%arg0: i32) -> (i32, i32) {
    %c0_i32 = arith.constant 0 : i32
    %c0_i32_0 = arith.constant 0 : i32
    %c0_i32_1 = arith.constant 0 : i32
    return %c0_i32, %c0_i32_0 : i32, i32
  }
  func.func @transform_4(%arg0: i32) -> (i32, i32) {
    %c0_i32 = arith.constant 0 : i32
    %c0_i32_0 = arith.constant 0 : i32
    %c0_i32_1 = arith.constant 0 : i32
    return %c0_i32, %c0_i32_0 : i32, i32
  }
  func.func @transform_5(%arg0: i32) -> (i32, i32, i32) {
    %c0_i32 = arith.constant 0 : i32
    %c0_i32_0 = arith.constant 0 : i32
    %c0_i32_1 = arith.constant 0 : i32
    %c0_i32_2 = arith.constant 0 : i32
    return %c0_i32, %c0_i32_0, %c0_i32_1 : i32, i32, i32
  }
  func.func @transform_6(%arg0: i32) -> (i32, i32) {
    %c0_i32 = arith.constant 0 : i32
    %c0_i32_0 = arith.constant 0 : i32
    return %arg0, %c0_i32 : i32, i32
  }
}

</mosaic_0001>

<llo_original>
// kernel: tpu_custom_call.1
$region0: #{tpu_custom_call.1}
  #allocation0 [shape = 'u32[]', space=smem, size = 0x4, offset = 0x4, fixed_abs, tag = 'smem constant byte address 0x4 - core index']
  #allocation1 [shape = 'u32[144,128]{1,0:T(1,128)}', space=vmem, size = 0x12000, scoped, tag = 'internal scratch']
  %s0 = inlined_call_operand.vmem [shape: f32[128,32], index: 0, kind: input, shape index: {}]
  %s1 = inlined_call_operand.vmem [shape: f32[32,96], index: 1, kind: input, shape index: {}]
  %s2 = inlined_call_operand.vmem [shape: f32[1,96], index: 2, kind: input, shape index: {}]
  %s3 = inlined_call_operand.vmem [shape: f32[32,32], index: 3, kind: input, shape index: {}]
  %s4 = inlined_call_operand.vmem [shape: f32[1,32], index: 4, kind: input, shape index: {}]
  %s5 = inlined_call_operand.vmem [shape: f32[4,16,16], index: 5, kind: input, shape index: {}]
  %s6 = inlined_call_operand.vmem [shape: f32[128,32], index: 6, kind: output, shape index: {}]
  %s7 = sld [smem:[#allocation0]]
  $region34: #{tpu_custom_call.1} parent=0
    _
  %s9 = ssub.s32 1, %s7
  %s10 = scalar_select 0, %s9, %s7
  // Predicated region
  $region2: #{tpu_custom_call.1} parent=0 // pred_check
    _
  $region3: #{tpu_custom_call.1} parent=0 // pred_check_branch
    %12 = sbr.rel (0) target = $region5
  $region4: #{tpu_custom_call.1} parent=0 // pred_region
    _
  $region5: #{tpu_custom_call.1} parent=0 // pred_fallthru
    _
  // Predicated region
  $region6: #{tpu_custom_call.1} parent=0 // pred_check
    _
  $region7: #{tpu_custom_call.1} parent=0 // pred_check_branch
    %14 = sbr.rel (0) target = $region9
  $region8: #{tpu_custom_call.1} parent=0 // pred_region
    _
  $region9: #{tpu_custom_call.1} parent=0 // pred_fallthru
    _
  // Predicated region
  $region10: #{tpu_custom_call.1} parent=0 // pred_check
    _
  $region11: #{tpu_custom_call.1} parent=0 // pred_check_branch
    %16 = sbr.rel (0) target = $region13
  $region12: #{tpu_custom_call.1} parent=0 // pred_region
    _
  $region13: #{tpu_custom_call.1} parent=0 // pred_fallthru
    _
  // Predicated region
  $region14: #{tpu_custom_call.1} parent=0 // pred_check
    _
  $region15: #{tpu_custom_call.1} parent=0 // pred_check_branch
    %18 = sbr.rel (0) target = $region17
  $region16: #{tpu_custom_call.1} parent=0 // pred_region
    _
  $region17: #{tpu_custom_call.1} parent=0 // pred_fallthru
    _
  // Predicated region
  $region18: #{tpu_custom_call.1} parent=0 // pred_check
    _
  $region19: #{tpu_custom_call.1} parent=0 // pred_check_branch
    %20 = sbr.rel (0) target = $region21
  $region20: #{tpu_custom_call.1} parent=0 // pred_region
    _
  $region21: #{tpu_custom_call.1} parent=0 // pred_fallthru
    _
  // Predicated region
  $region22: #{tpu_custom_call.1} parent=0 // pred_check
    _
  $region23: #{tpu_custom_call.1} parent=0 // pred_check_branch
    %22 = sbr.rel (0) target = $region25
  $region24: #{tpu_custom_call.1} parent=0 // pred_region
    _
  $region25: #{tpu_custom_call.1} parent=0 // pred_fallthru
    _
  %v23 = vld [vmem:[%s0] sm:$0xff]
  %v24 = vld [vmem:[%s0 + $0x8] sm:$0xff]
  %v25 = vld [vmem:[%s0 + $0x10] sm:$0xff]
  %v26 = vld [vmem:[%s0 + $0x18] sm:$0xff]
  %v27 = vld [vmem:[%s0 + $0x20] sm:$0xff]
  %v28 = vld [vmem:[%s0 + $0x28] sm:$0xff]
  %v29 = vld [vmem:[%s0 + $0x30] sm:$0xff]
  %v30 = vld [vmem:[%s0 + $0x38] sm:$0xff]
  %v31 = vld [vmem:[%s0 + $0x40] sm:$0xff]
  %v32 = vld [vmem:[%s0 + $0x48] sm:$0xff]
  %v33 = vld [vmem:[%s0 + $0x50] sm:$0xff]
  %v34 = vld [vmem:[%s0 + $0x58] sm:$0xff]
  %v35 = vld [vmem:[%s0 + $0x60] sm:$0xff]
  %v36 = vld [vmem:[%s0 + $0x68] sm:$0xff]
  %v37 = vld [vmem:[%s0 + $0x70] sm:$0xff]
  %v38 = vld [vmem:[%s0 + $0x78] sm:$0xff]
  %v39 = vld [vmem:[%s1] sm:$0xff]
  %v40 = vld [vmem:[%s1 + $0x8] sm:$0xff]
  %v41 = vld [vmem:[%s1 + $0x10] sm:$0xff]
  %v42 = vld [vmem:[%s1 + $0x18] sm:$0xff]
  %v43 = vld [vmem:[%s2] sm:$0x1]
  %v45 = vlaneseq
  %v46 = vshrl.u32 %v45, 7
  %v47 = vsub.s32 0, %v46
  %v48 = vrot.slane %v43, %v47
  %vm50 = vcmask 261120
  %v52 = vsel %vm50, %v23, 0
  %v55 = vsel %vm50, %v24, 0
  %v58 = vsel %vm50, %v25, 0
  %v61 = vsel %vm50, %v26, 0
  %v64 = vsel %vm50, %v27, 0
  %v67 = vsel %vm50, %v28, 0
  %v70 = vsel %vm50, %v29, 0
  %v73 = vsel %vm50, %v30, 0
  %v76 = vsel %vm50, %v31, 0
  %v79 = vsel %vm50, %v32, 0
  %v82 = vsel %vm50, %v33, 0
  %v85 = vsel %vm50, %v34, 0
  %v88 = vsel %vm50, %v35, 0
  %v91 = vsel %vm50, %v36, 0
  %v94 = vsel %vm50, %v37, 0
  %v97 = vsel %vm50, %v38, 0
  %99 = vmatprep.subr.mxu0 0.0
  %100 = vmatpush1.msra.mxu0 0.0
  %101 = vmatprep.subr.mxu0 0.0
  %102 = vmatpush1.msra.mxu0 0.0
  %103 = vmatprep.subr.mxu0 0.0
  %104 = vmatpush1.msra.mxu0 0.0
  %105 = vmatprep.subr.mxu0 0.0
  %106 = vmatpush1.msra.mxu0 0.0
  %107 = vmatprep.subr.mxu0 0.0
  %108 = vmatpush1.msra.mxu0 0.0
  %109 = vmatprep.subr.mxu0 0.0
  %110 = vmatpush1.msra.mxu0 0.0
  %111 = vmatprep.subr.mxu0 0.0
  %112 = vmatpush1.msra.mxu0 0.0
  %113 = vmatprep.subr.mxu0 0.0
  %114 = vmatpush1.msra.mxu0 0.0
  %115 = vmatprep.subr.mxu0 0.0
  %116 = vmatpush1.msra.mxu0 0.0
  %117 = vmatprep.subr.mxu0 0.0
  %118 = vmatpush1.msra.mxu0 0.0
  %119 = vmatprep.subr.mxu0 0.0
  %120 = vmatpush1.msra.mxu0 0.0
  %121 = vmatprep.subr.mxu0 0.0
  %122 = vmatpush1.msra.mxu0 0.0
  %123 = vmatprep.subr.mxu0 0.0
  %124 = vmatpush1.msra.mxu0 %v42
  %125 = vmatprep.subr.mxu0 0.0
  %126 = vmatpush1.msra.mxu0 %v41
  %127 = vmatprep.subr.mxu0 0.0
  %128 = vmatpush1.msra.mxu0 %v40
  %129 = vmatprep.subr.mxu0 0.0
  %130 = vmatpush1.msra.mxu0 %v39
  %131 = vmatprep.subr.mxu0 0.0
  %132 = vmatpush2.msra.mxu0 0.0
  %133 = vmatprep.subr.mxu0 0.0
  %134 = vmatpush2.msra.mxu0 0.0
  %135 = vmatprep.subr.mxu0 0.0
  %136 = vmatpush2.msra.mxu0 0.0
  %137 = vmatprep.subr.mxu0 0.0
  %138 = vmatpush2.msra.mxu0 0.0
  %139 = vmatprep.subr.mxu0 0.0
  %140 = vmatpush2.msra.mxu0 0.0
  %141 = vmatprep.subr.mxu0 0.0
  %142 = vmatpush2.msra.mxu0 0.0
  %143 = vmatprep.subr.mxu0 0.0
  %144 = vmatpush2.msra.mxu0 0.0
  %145 = vmatprep.subr.mxu0 0.0
  %146 = vmatpush2.msra.mxu0 0.0
  %147 = vmatprep.subr.mxu0 0.0
  %148 = vmatpush2.msra.mxu0 0.0
  %149 = vmatprep.subr.mxu0 0.0
  %150 = vmatpush2.msra.mxu0 0.0
  %151 = vmatprep.subr.mxu0 0.0
  %152 = vmatpush2.msra.mxu0 0.0
  %153 = vmatprep.subr.mxu0 0.0
  %154 = vmatpush2.msra.mxu0 0.0
  %155 = vmatprep.subr.mxu0 0.0
  %156 = vmatpush2.msra.mxu0 0.0
  %157 = vmatprep.subr.mxu0 0.0
  %158 = vmatpush2.msra.mxu0 0.0
  %159 = vmatprep.subr.mxu0 0.0
  %160 = vmatpush2.msra.mxu0 0.0
  %161 = vmatprep.subr.mxu0 0.0
  %162 = vmatpush2.msra.mxu0 0.0
  %163 = vmatprep.mubr.f32.mxu0 0.0
  %164 = vmatmul.mubr.f32.gmra.mxu0 %v52
  %v165 = vpop.f32.mrf.mxu0
  %v166 = vadd.f32 %v48, %v165
  %v167 = vpop.f32.mrf.mxu0
  %168 = vmatprep.mubr.f32.mxu0 0.0
  %169 = vmatmul.mubr.f32.gmra.mxu0 %v55
  %v170 = vpop.f32.mrf.mxu0
  %v171 = vadd.f32 %v48, %v170
  %v172 = vpop.f32.mrf.mxu0
  %173 = vmatprep.mubr.f32.mxu0 0.0
  %174 = vmatmul.mubr.f32.gmra.mxu0 %v58
  %v175 = vpop.f32.mrf.mxu0
  %v176 = vadd.f32 %v48, %v175
  %v177 = vpop.f32.mrf.mxu0
  %178 = vmatprep.mubr.f32.mxu0 0.0
  %179 = vmatmul.mubr.f32.gmra.mxu0 %v61
  %v180 = vpop.f32.mrf.mxu0
  %v181 = vadd.f32 %v48, %v180
  %v182 = vpop.f32.mrf.mxu0
  %183 = vmatprep.mubr.f32.mxu0 0.0
  %184 = vmatmul.mubr.f32.gmra.mxu0 %v64
  %v185 = vpop.f32.mrf.mxu0
  %v186 = vadd.f32 %v48, %v185
  %v187 = vpop.f32.mrf.mxu0
  %188 = vmatprep.mubr.f32.mxu0 0.0
  %189 = vmatmul.mubr.f32.gmra.mxu0 %v67
  %v190 = vpop.f32.mrf.mxu0
  %v191 = vadd.f32 %v48, %v190
  %v192 = vpop.f32.mrf.mxu0
  %193 = vmatprep.mubr.f32.mxu0 0.0
  %194 = vmatmul.mubr.f32.gmra.mxu0 %v70
  %v195 = vpop.f32.mrf.mxu0
  %v196 = vadd.f32 %v48, %v195
  %v197 = vpop.f32.mrf.mxu0
  %198 = vmatprep.mubr.f32.mxu0 0.0
  %199 = vmatmul.mubr.f32.gmra.mxu0 %v73
  %v200 = vpop.f32.mrf.mxu0
  %v201 = vadd.f32 %v48, %v200
  %v202 = vpop.f32.mrf.mxu0
  %203 = vmatprep.mubr.f32.mxu0 0.0
  %204 = vmatmul.mubr.f32.gmra.mxu0 %v76
  %v205 = vpop.f32.mrf.mxu0
  %v206 = vadd.f32 %v48, %v205
  %v207 = vpop.f32.mrf.mxu0
  %208 = vmatprep.mubr.f32.mxu0 0.0
  %209 = vmatmul.mubr.f32.gmra.mxu0 %v79
  %v210 = vpop.f32.mrf.mxu0
  %v211 = vadd.f32 %v48, %v210
  %v212 = vpop.f32.mrf.mxu0
  %213 = vmatprep.mubr.f32.mxu0 0.0
  %214 = vmatmul.mubr.f32.gmra.mxu0 %v82
  %v215 = vpop.f32.mrf.mxu0
  %v216 = vadd.f32 %v48, %v215
  %v217 = vpop.f32.mrf.mxu0
  %218 = vmatprep.mubr.f32.mxu0 0.0
  %219 = vmatmul.mubr.f32.gmra.mxu0 %v85
  %v220 = vpop.f32.mrf.mxu0
  %v221 = vadd.f32 %v48, %v220
  %v222 = vpop.f32.mrf.mxu0
  %223 = vmatprep.mubr.f32.mxu0 0.0
  %224 = vmatmul.mubr.f32.gmra.mxu0 %v88
  %v225 = vpop.f32.mrf.mxu0
  %v226 = vadd.f32 %v48, %v225
  %v227 = vpop.f32.mrf.mxu0
  %228 = vmatprep.mubr.f32.mxu0 0.0
  %229 = vmatmul.mubr.f32.gmra.mxu0 %v91
  %v230 = vpop.f32.mrf.mxu0
  %v231 = vadd.f32 %v48, %v230
  %v232 = vpop.f32.mrf.mxu0
  %233 = vmatprep.mubr.f32.mxu0 0.0
  %234 = vmatmul.mubr.f32.gmra.mxu0 %v94
  %v235 = vpop.f32.mrf.mxu0
  %v236 = vadd.f32 %v48, %v235
  %v237 = vpop.f32.mrf.mxu0
  %238 = vmatprep.mubr.f32.mxu0 0.0
  %239 = vmatmul.mubr.f32.gmra.mxu0 %v97
  %v240 = vpop.f32.mrf.mxu0
  %v241 = vadd.f32 %v48, %v240
  %v242 = vpop.f32.mrf.mxu0
  %243 = vdwg.mxu0
  %v244 = vld [vmem:[%s5] sm:$0xff]
  %v245 = vld [vmem:[%s5 + $0x8] sm:$0xff]
  %v246 = vld [vmem:[%s5 + $0x10] sm:$0xff]
  %v247 = vld [vmem:[%s5 + $0x18] sm:$0xff]
  %v248 = vld [vmem:[%s5 + $0x20] sm:$0xff]
  %v249 = vld [vmem:[%s5 + $0x28] sm:$0xff]
  %v250 = vld [vmem:[%s5 + $0x30] sm:$0xff]
  %v251 = vld [vmem:[%s5 + $0x38] sm:$0xff]
  %254 = vrot.lane.b32.xlu0 %v166, 96
  %v255 = vpop.permute.xlu0 %254
  %256 = vrot.lane.b32.xlu0 %v171, 96
  %v257 = vpop.permute.xlu0 %256
  %vm258 = vcmask 64512
  %v259 = vsel %vm258, %v166, 0
  %v261 = vsel %vm258, %v171, 0
  %v263 = vsel %vm258, %v255, 0
  %v265 = vsel %vm258, %v257, 0
  %267 = vmatprep.subr.mxu0 0.0
  %268 = vmatpush1.xpose.msra.mxu0 0.0
  %269 = vmatprep.subr.mxu0 0.0
  %270 = vmatpush1.xpose.msra.mxu0 0.0
  %271 = vmatprep.subr.mxu0 0.0
  %272 = vmatpush1.xpose.msra.mxu0 0.0
  %273 = vmatprep.subr.mxu0 0.0
  %274 = vmatpush1.xpose.msra.mxu0 0.0
  %275 = vmatprep.subr.mxu0 0.0
  %276 = vmatpush1.xpose.msra.mxu0 0.0
  %277 = vmatprep.subr.mxu0 0.0
  %278 = vmatpush1.xpose.msra.mxu0 0.0
  %279 = vmatprep.subr.mxu0 0.0
  %280 = vmatpush1.xpose.msra.mxu0 0.0
  %281 = vmatprep.subr.mxu0 0.0
  %282 = vmatpush1.xpose.msra.mxu0 0.0
  %283 = vmatprep.subr.mxu0 0.0
  %284 = vmatpush1.xpose.msra.mxu0 0.0
  %285 = vmatprep.subr.mxu0 0.0
  %286 = vmatpush1.xpose.msra.mxu0 0.0
  %287 = vmatprep.subr.mxu0 0.0
  %288 = vmatpush1.xpose.msra.mxu0 0.0
  %289 = vmatprep.subr.mxu0 0.0
  %290 = vmatpush1.xpose.msra.mxu0 0.0
  %291 = vmatprep.subr.mxu0 0.0
  %292 = vmatpush1.xpose.msra.mxu0 0.0
  %293 = vmatprep.subr.mxu0 0.0
  %294 = vmatpush1.xpose.msra.mxu0 0.0
  %295 = vmatprep.subr.mxu0 0.0
  %296 = vmatpush1.xpose.msra.mxu0 %v265
  %297 = vmatprep.subr.mxu0 0.0
  %298 = vmatpush1.xpose.msra.mxu0 %v263
  %299 = vmatprep.subr.mxu0 0.0
  %300 = vmatpush2.xpose.msra.mxu0 0.0
  %301 = vmatprep.subr.mxu0 0.0
  %302 = vmatpush2.xpose.msra.mxu0 0.0
  %303 = vmatprep.subr.mxu0 0.0
  %304 = vmatpush2.xpose.msra.mxu0 0.0
  %305 = vmatprep.subr.mxu0 0.0
  %306 = vmatpush2.xpose.msra.mxu0 0.0
  %307 = vmatprep.subr.mxu0 0.0
  %308 = vmatpush2.xpose.msra.mxu0 0.0
  %309 = vmatprep.subr.mxu0 0.0
  %310 = vmatpush2.xpose.msra.mxu0 0.0
  %311 = vmatprep.subr.mxu0 0.0
  %312 = vmatpush2.xpose.msra.mxu0 0.0
  %313 = vmatprep.subr.mxu0 0.0
  %314 = vmatpush2.xpose.msra.mxu0 0.0
  %315 = vmatprep.subr.mxu0 0.0
  %316 = vmatpush2.xpose.msra.mxu0 0.0
  %317 = vmatprep.subr.mxu0 0.0
  %318 = vmatpush2.xpose.msra.mxu0 0.0
  %319 = vmatprep.subr.mxu0 0.0
  %320 = vmatpush2.xpose.msra.mxu0 0.0
  %321 = vmatprep.subr.mxu0 0.0
  %322 = vmatpush2.xpose.msra.mxu0 0.0
  %323 = vmatprep.subr.mxu0 0.0
  %324 = vmatpush2.xpose.msra.mxu0 0.0
  %325 = vmatprep.subr.mxu0 0.0
  %326 = vmatpush2.xpose.msra.mxu0 0.0
  %327 = vmatprep.subr.mxu0 0.0
  %328 = vmatpush2.xpose.msra.mxu0 0.0
  %329 = vmatprep.subr.mxu0 0.0
  %330 = vmatpush2.xpose.msra.mxu0 0.0
  %331 = vmatprep.mubr.f32.mxu0 0.0
  %332 = vmatmul.mubr.f32.gmra.mxu0 %v259
  %v333 = vpop.f32.mrf.mxu0
  %v334 = vadd.f32 %v244, %v333
  %v335 = vpop.f32.mrf.mxu0
  %336 = vmatprep.mubr.f32.mxu0 0.0
  %337 = vmatmul.mubr.f32.gmra.mxu0 %v261
  %v338 = vpop.f32.mrf.mxu0
  %v339 = vadd.f32 %v245, %v338
  %v340 = vpop.f32.mrf.mxu0
  %341 = vdwg.mxu0
  %344 = vrot.lane.b32.xlu0 %v176, 96
  %v345 = vpop.permute.xlu0 %344
  %346 = vrot.lane.b32.xlu0 %v181, 96
  %v347 = vpop.permute.xlu0 %346
  %v348 = vsel %vm258, %v176, 0
  %v350 = vsel %vm258, %v181, 0
  %v352 = vsel %vm258, %v345, 0
  %v354 = vsel %vm258, %v347, 0
  %356 = vmatprep.subr.mxu0 0.0
  %357 = vmatpush1.xpose.msra.mxu0 0.0
  %358 = vmatprep.subr.mxu0 0.0
  %359 = vmatpush1.xpose.msra.mxu0 0.0
  %360 = vmatprep.subr.mxu0 0.0
  %361 = vmatpush1.xpose.msra.mxu0 0.0
  %362 = vmatprep.subr.mxu0 0.0
  %363 = vmatpush1.xpose.msra.mxu0 0.0
  %364 = vmatprep.subr.mxu0 0.0
  %365 = vmatpush1.xpose.msra.mxu0 0.0
  %366 = vmatprep.subr.mxu0 0.0
  %367 = vmatpush1.xpose.msra.mxu0 0.0
  %368 = vmatprep.subr.mxu0 0.0
  %369 = vmatpush1.xpose.msra.mxu0 0.0
  %370 = vmatprep.subr.mxu0 0.0
  %371 = vmatpush1.xpose.msra.mxu0 0.0
  %372 = vmatprep.subr.mxu0 0.0
  %373 = vmatpush1.xpose.msra.mxu0 0.0
  %374 = vmatprep.subr.mxu0 0.0
  %375 = vmatpush1.xpose.msra.mxu0 0.0
  %376 = vmatprep.subr.mxu0 0.0
  %377 = vmatpush1.xpose.msra.mxu0 0.0
  %378 = vmatprep.subr.mxu0 0.0
  %379 = vmatpush1.xpose.msra.mxu0 0.0
  %380 = vmatprep.subr.mxu0 0.0
  %381 = vmatpush1.xpose.msra.mxu0 0.0
  %382 = vmatprep.subr.mxu0 0.0
  %383 = vmatpush1.xpose.msra.mxu0 0.0
  %384 = vmatprep.subr.mxu0 0.0
  %385 = vmatpush1.xpose.msra.mxu0 %v354
  %386 = vmatprep.subr.mxu0 0.0
  %387 = vmatpush1.xpose.msra.mxu0 %v352
  %388 = vmatprep.subr.mxu0 0.0
  %389 = vmatpush2.xpose.msra.mxu0 0.0
  %390 = vmatprep.subr.mxu0 0.0
  %391 = vmatpush2.xpose.msra.mxu0 0.0
  %392 = vmatprep.subr.mxu0 0.0
  %393 = vmatpush2.xpose.msra.mxu0 0.0
  %394 = vmatprep.subr.mxu0 0.0
  %395 = vmatpush2.xpose.msra.mxu0 0.0
  %396 = vmatprep.subr.mxu0 0.0
  %397 = vmatpush2.xpose.msra.mxu0 0.0
  %398 = vmatprep.subr.mxu0 0.0
  %399 = vmatpush2.xpose.msra.mxu0 0.0
  %400 = vmatprep.subr.mxu0 0.0
  %401 = vmatpush2.xpose.msra.mxu0 0.0
  %402 = vmatprep.subr.mxu0 0.0
  %403 = vmatpush2.xpose.msra.mxu0 0.0
  %404 = vmatprep.subr.mxu0 0.0
  %405 = vmatpush2.xpose.msra.mxu0 0.0
  %406 = vmatprep.subr.mxu0 0.0
  %407 = vmatpush2.xpose.msra.mxu0 0.0
  %408 = vmatprep.subr.mxu0 0.0
  %409 = vmatpush2.xpose.msra.mxu0 0.0
  %410 = vmatprep.subr.mxu0 0.0
  %411 = vmatpush2.xpose.msra.mxu0 0.0
  %412 = vmatprep.subr.mxu0 0.0
  %413 = vmatpush2.xpose.msra.mxu0 0.0
  %414 = vmatprep.subr.mxu0 0.0
  %415 = vmatpush2.xpose.msra.mxu0 0.0
  %416 = vmatprep.subr.mxu0 0.0
  %417 = vmatpush2.xpose.msra.mxu0 0.0
  %418 = vmatprep.subr.mxu0 0.0
  %419 = vmatpush2.xpose.msra.mxu0 0.0
  %420 = vmatprep.mubr.f32.mxu0 0.0
  %421 = vmatmul.mubr.f32.gmra.mxu0 %v348
  %v422 = vpop.f32.mrf.mxu0
  %v423 = vadd.f32 %v244, %v422
  %v424 = vpop.f32.mrf.mxu0
  %425 = vmatprep.mubr.f32.mxu0 0.0
  %426 = vmatmul.mubr.f32.gmra.mxu0 %v350
  %v427 = vpop.f32.mrf.mxu0
  %v428 = vadd.f32 %v245, %v427
  %v429 = vpop.f32.mrf.mxu0
  %430 = vdwg.mxu0
  %433 = vrot.lane.b32.xlu0 %v186, 96
  %v434 = vpop.permute.xlu0 %433
  %435 = vrot.lane.b32.xlu0 %v191, 96
  %v436 = vpop.permute.xlu0 %435
  %v437 = vsel %vm258, %v186, 0
  %v439 = vsel %vm258, %v191, 0
  %v441 = vsel %vm258, %v434, 0
  %v443 = vsel %vm258, %v436, 0
  %445 = vmatprep.subr.mxu0 0.0
  %446 = vmatpush1.xpose.msra.mxu0 0.0
  %447 = vmatprep.subr.mxu0 0.0
  %448 = vmatpush1.xpose.msra.mxu0 0.0
  %449 = vmatprep.subr.mxu0 0.0
  %450 = vmatpush1.xpose.msra.mxu0 0.0
  %451 = vmatprep.subr.mxu0 0.0
  %452 = vmatpush1.xpose.msra.mxu0 0.0
  %453 = vmatprep.subr.mxu0 0.0
  %454 = vmatpush1.xpose.msra.mxu0 0.0
  %455 = vmatprep.subr.mxu0 0.0
  %456 = vmatpush1.xpose.msra.mxu0 0.0
  %457 = vmatprep.subr.mxu0 0.0
  %458 = vmatpush1.xpose.msra.mxu0 0.0
  %459 = vmatprep.subr.mxu0 0.0
  %460 = vmatpush1.xpose.msra.mxu0 0.0
  %461 = vmatprep.subr.mxu0 0.0
  %462 = vmatpush1.xpose.msra.mxu0 0.0
  %463 = vmatprep.subr.mxu0 0.0
  %464 = vmatpush1.xpose.msra.mxu0 0.0
  %465 = vmatprep.subr.mxu0 0.0
  %466 = vmatpush1.xpose.msra.mxu0 0.0
  %467 = vmatprep.subr.mxu0 0.0
  %468 = vmatpush1.xpose.msra.mxu0 0.0
  %469 = vmatprep.subr.mxu0 0.0
  %470 = vmatpush1.xpose.msra.mxu0 0.0
  %471 = vmatprep.subr.mxu0 0.0
  %472 = vmatpush1.xpose.msra.mxu0 0.0
  %473 = vmatprep.subr.mxu0 0.0
  %474 = vmatpush1.xpose.msra.mxu0 %v443
  %475 = vmatprep.subr.mxu0 0.0
  %476 = vmatpush1.xpose.msra.mxu0 %v441
  %477 = vmatprep.subr.mxu0 0.0
  %478 = vmatpush2.xpose.msra.mxu0 0.0
  %479 = vmatprep.subr.mxu0 0.0
  %480 = vmatpush2.xpose.msra.mxu0 0.0
  %481 = vmatprep.subr.mxu0 0.0
  %482 = vmatpush2.xpose.msra.mxu0 0.0
  %483 = vmatprep.subr.mxu0 0.0
  %484 = vmatpush2.xpose.msra.mxu0 0.0
  %485 = vmatprep.subr.mxu0 0.0
  %486 = vmatpush2.xpose.msra.mxu0 0.0
  %487 = vmatprep.subr.mxu0 0.0
  %488 = vmatpush2.xpose.msra.mxu0 0.0
  %489 = vmatprep.subr.mxu0 0.0
  %490 = vmatpush2.xpose.msra.mxu0 0.0
  %491 = vmatprep.subr.mxu0 0.0
  %492 = vmatpush2.xpose.msra.mxu0 0.0
  %493 = vmatprep.subr.mxu0 0.0
  %494 = vmatpush2.xpose.msra.mxu0 0.0
  %495 = vmatprep.subr.mxu0 0.0
  %496 = vmatpush2.xpose.msra.mxu0 0.0
  %497 = vmatprep.subr.mxu0 0.0
  %498 = vmatpush2.xpose.msra.mxu0 0.0
  %499 = vmatprep.subr.mxu0 0.0
  %500 = vmatpush2.xpose.msra.mxu0 0.0
  %501 = vmatprep.subr.mxu0 0.0
  %502 = vmatpush2.xpose.msra.mxu0 0.0
  %503 = vmatprep.subr.mxu0 0.0
  %504 = vmatpush2.xpose.msra.mxu0 0.0
  %505 = vmatprep.subr.mxu0 0.0
  %506 = vmatpush2.xpose.msra.mxu0 0.0
  %507 = vmatprep.subr.mxu0 0.0
  %508 = vmatpush2.xpose.msra.mxu0 0.0
  %509 = vmatprep.mubr.f32.mxu0 0.0
  %510 = vmatmul.mubr.f32.gmra.mxu0 %v437
  %v511 = vpop.f32.mrf.mxu0
  %v512 = vadd.f32 %v244, %v511
  %v513 = vpop.f32.mrf.mxu0
  %514 = vmatprep.mubr.f32.mxu0 0.0
  %515 = vmatmul.mubr.f32.gmra.mxu0 %v439
  %v516 = vpop.f32.mrf.mxu0
  %v517 = vadd.f32 %v245, %v516
  %v518 = vpop.f32.mrf.mxu0
  %519 = vdwg.mxu0
  %522 = vrot.lane.b32.xlu0 %v196, 96
  %v523 = vpop.permute.xlu0 %522
  %524 = vrot.lane.b32.xlu0 %v201, 96
  %v525 = vpop.permute.xlu0 %524
  %v526 = vsel %vm258, %v196, 0
  %v528 = vsel %vm258, %v201, 0
  %v530 = vsel %vm258, %v523, 0
  %v532 = vsel %vm258, %v525, 0
  %534 = vmatprep.subr.mxu0 0.0
  %535 = vmatpush1.xpose.msra.mxu0 0.0
  %536 = vmatprep.subr.mxu0 0.0
  %537 = vmatpush1.xpose.msra.mxu0 0.0
  %538 = vmatprep.subr.mxu0 0.0
  %539 = vmatpush1.xpose.msra.mxu0 0.0
  %540 = vmatprep.subr.mxu0 0.0
  %541 = vmatpush1.xpose.msra.mxu0 0.0
  %542 = vmatprep.subr.mxu0 0.0
  %543 = vmatpush1.xpose.msra.mxu0 0.0
  %544 = vmatprep.subr.mxu0 0.0
  %545 = vmatpush1.xpose.msra.mxu0 0.0
  %546 = vmatprep.subr.mxu0 0.0
  %547 = vmatpush1.xpose.msra.mxu0 0.0
  %548 = vmatprep.subr.mxu0 0.0
  %549 = vmatpush1.xpose.msra.mxu0 0.0
  %550 = vmatprep.subr.mxu0 0.0
  %551 = vmatpush1.xpose.msra.mxu0 0.0
  %552 = vmatprep.subr.mxu0 0.0
  %553 = vmatpush1.xpose.msra.mxu0 0.0
  %554 = vmatprep.subr.mxu0 0.0
  %555 = vmatpush1.xpose.msra.mxu0 0.0
  %556 = vmatprep.subr.mxu0 0.0
  %557 = vmatpush1.xpose.msra.mxu0 0.0
  %558 = vmatprep.subr.mxu0 0.0
  %559 = vmatpush1.xpose.msra.mxu0 0.0
  %560 = vmatprep.subr.mxu0 0.0
  %561 = vmatpush1.xpose.msra.mxu0 0.0
  %562 = vmatprep.subr.mxu0 0.0
  %563 = vmatpush1.xpose.msra.mxu0 %v532
  %564 = vmatprep.subr.mxu0 0.0
  %565 = vmatpush1.xpose.msra.mxu0 %v530
  %566 = vmatprep.subr.mxu0 0.0
  %567 = vmatpush2.xpose.msra.mxu0 0.0
  %568 = vmatprep.subr.mxu0 0.0
  %569 = vmatpush2.xpose.msra.mxu0 0.0
  %570 = vmatprep.subr.mxu0 0.0
  %571 = vmatpush2.xpose.msra.mxu0 0.0
  %572 = vmatprep.subr.mxu0 0.0
  %573 = vmatpush2.xpose.msra.mxu0 0.0
  %574 = vmatprep.subr.mxu0 0.0
  %575 = vmatpush2.xpose.msra.mxu0 0.0
  %576 = vmatprep.subr.mxu0 0.0
  %577 = vmatpush2.xpose.msra.mxu0 0.0
  %578 = vmatprep.subr.mxu0 0.0
  %579 = vmatpush2.xpose.msra.mxu0 0.0
  %580 = vmatprep.subr.mxu0 0.0
  %581 = vmatpush2.xpose.msra.mxu0 0.0
  %582 = vmatprep.subr.mxu0 0.0
  %583 = vmatpush2.xpose.msra.mxu0 0.0
  %584 = vmatprep.subr.mxu0 0.0
  %585 = vmatpush2.xpose.msra.mxu0 0.0
  %586 = vmatprep.subr.mxu0 0.0
  %587 = vmatpush2.xpose.msra.mxu0 0.0
  %588 = vmatprep.subr.mxu0 0.0
  %589 = vmatpush2.xpose.msra.mxu0 0.0
  %590 = vmatprep.subr.mxu0 0.0
  %591 = vmatpush2.xpose.msra.mxu0 0.0
  %592 = vmatprep.subr.mxu0 0.0
  %593 = vmatpush2.xpose.msra.mxu0 0.0
  %594 = vmatprep.subr.mxu0 0.0
  %595 = vmatpush2.xpose.msra.mxu0 0.0
  %596 = vmatprep.subr.mxu0 0.0
  %597 = vmatpush2.xpose.msra.mxu0 0.0
  %598 = vmatprep.mubr.f32.mxu0 0.0
  %599 = vmatmul.mubr.f32.gmra.mxu0 %v526
  %v600 = vpop.f32.mrf.mxu0
  %v601 = vadd.f32 %v244, %v600
  %v602 = vpop.f32.mrf.mxu0
  %603 = vmatprep.mubr.f32.mxu0 0.0
  %604 = vmatmul.mubr.f32.gmra.mxu0 %v528
  %v605 = vpop.f32.mrf.mxu0
  %v606 = vadd.f32 %v245, %v605
  %v607 = vpop.f32.mrf.mxu0
  %608 = vdwg.mxu0
  %611 = vrot.lane.b32.xlu0 %v206, 96
  %v612 = vpop.permute.xlu0 %611
  %613 = vrot.lane.b32.xlu0 %v211, 96
  %v614 = vpop.permute.xlu0 %613
  %v615 = vsel %vm258, %v206, 0
  %v617 = vsel %vm258, %v211, 0
  %v619 = vsel %vm258, %v612, 0
  %v621 = vsel %vm258, %v614, 0
  %623 = vmatprep.subr.mxu0 0.0
  %624 = vmatpush1.xpose.msra.mxu0 0.0
  %625 = vmatprep.subr.mxu0 0.0
  %626 = vmatpush1.xpose.msra.mxu0 0.0
  %627 = vmatprep.subr.mxu0 0.0
  %628 = vmatpush1.xpose.msra.mxu0 0.0
  %629 = vmatprep.subr.mxu0 0.0
  %630 = vmatpush1.xpose.msra.mxu0 0.0
  %631 = vmatprep.subr.mxu0 0.0
  %632 = vmatpush1.xpose.msra.mxu0 0.0
  %633 = vmatprep.subr.mxu0 0.0
  %634 = vmatpush1.xpose.msra.mxu0 0.0
  %635 = vmatprep.subr.mxu0 0.0
  %636 = vmatpush1.xpose.msra.mxu0 0.0
  %637 = vmatprep.subr.mxu0 0.0
  %638 = vmatpush1.xpose.msra.mxu0 0.0
  %639 = vmatprep.subr.mxu0 0.0
  %640 = vmatpush1.xpose.msra.mxu0 0.0
  %641 = vmatprep.subr.mxu0 0.0
  %642 = vmatpush1.xpose.msra.mxu0 0.0
  %643 = vmatprep.subr.mxu0 0.0
  %644 = vmatpush1.xpose.msra.mxu0 0.0
  %645 = vmatprep.subr.mxu0 0.0
  %646 = vmatpush1.xpose.msra.mxu0 0.0
  %647 = vmatprep.subr.mxu0 0.0
  %648 = vmatpush1.xpose.msra.mxu0 0.0
  %649 = vmatprep.subr.mxu0 0.0
  %650 = vmatpush1.xpose.msra.mxu0 0.0
  %651 = vmatprep.subr.mxu0 0.0
  %652 = vmatpush1.xpose.msra.mxu0 %v621
  %653 = vmatprep.subr.mxu0 0.0
  %654 = vmatpush1.xpose.msra.mxu0 %v619
  %655 = vmatprep.subr.mxu0 0.0
  %656 = vmatpush2.xpose.msra.mxu0 0.0
  %657 = vmatprep.subr.mxu0 0.0
  %658 = vmatpush2.xpose.msra.mxu0 0.0
  %659 = vmatprep.subr.mxu0 0.0
  %660 = vmatpush2.xpose.msra.mxu0 0.0
  %661 = vmatprep.subr.mxu0 0.0
  %662 = vmatpush2.xpose.msra.mxu0 0.0
  %663 = vmatprep.subr.mxu0 0.0
  %664 = vmatpush2.xpose.msra.mxu0 0.0
  %665 = vmatprep.subr.mxu0 0.0
  %666 = vmatpush2.xpose.msra.mxu0 0.0
  %667 = vmatprep.subr.mxu0 0.0
  %668 = vmatpush2.xpose.msra.mxu0 0.0
  %669 = vmatprep.subr.mxu0 0.0
  %670 = vmatpush2.xpose.msra.mxu0 0.0
  %671 = vmatprep.subr.mxu0 0.0
  %672 = vmatpush2.xpose.msra.mxu0 0.0
  %673 = vmatprep.subr.mxu0 0.0
  %674 = vmatpush2.xpose.msra.mxu0 0.0
  %675 = vmatprep.subr.mxu0 0.0
  %676 = vmatpush2.xpose.msra.mxu0 0.0
  %677 = vmatprep.subr.mxu0 0.0
  %678 = vmatpush2.xpose.msra.mxu0 0.0
  %679 = vmatprep.subr.mxu0 0.0
  %680 = vmatpush2.xpose.msra.mxu0 0.0
  %681 = vmatprep.subr.mxu0 0.0
  %682 = vmatpush2.xpose.msra.mxu0 0.0
  %683 = vmatprep.subr.mxu0 0.0
  %684 = vmatpush2.xpose.msra.mxu0 0.0
  %685 = vmatprep.subr.mxu0 0.0
  %686 = vmatpush2.xpose.msra.mxu0 0.0
  %687 = vmatprep.mubr.f32.mxu0 0.0
  %688 = vmatmul.mubr.f32.gmra.mxu0 %v615
  %v689 = vpop.f32.mrf.mxu0
  %v690 = vadd.f32 %v244, %v689
  %v691 = vpop.f32.mrf.mxu0
  %692 = vmatprep.mubr.f32.mxu0 0.0
  %693 = vmatmul.mubr.f32.gmra.mxu0 %v617
  %v694 = vpop.f32.mrf.mxu0
  %v695 = vadd.f32 %v245, %v694
  %v696 = vpop.f32.mrf.mxu0
  %697 = vdwg.mxu0
  %700 = vrot.lane.b32.xlu0 %v216, 96
  %v701 = vpop.permute.xlu0 %700
  %702 = vrot.lane.b32.xlu0 %v221, 96
  %v703 = vpop.permute.xlu0 %702
  %v704 = vsel %vm258, %v216, 0
  %v706 = vsel %vm258, %v221, 0
  %v708 = vsel %vm258, %v701, 0
  %v710 = vsel %vm258, %v703, 0
  %712 = vmatprep.subr.mxu0 0.0
  %713 = vmatpush1.xpose.msra.mxu0 0.0
  %714 = vmatprep.subr.mxu0 0.0
  %715 = vmatpush1.xpose.msra.mxu0 0.0
  %716 = vmatprep.subr.mxu0 0.0
  %717 = vmatpush1.xpose.msra.mxu0 0.0
  %718 = vmatprep.subr.mxu0 0.0
  %719 = vmatpush1.xpose.msra.mxu0 0.0
  %720 = vmatprep.subr.mxu0 0.0
  %721 = vmatpush1.xpose.msra.mxu0 0.0
  %722 = vmatprep.subr.mxu0 0.0
  %723 = vmatpush1.xpose.msra.mxu0 0.0
  %724 = vmatprep.subr.mxu0 0.0
  %725 = vmatpush1.xpose.msra.mxu0 0.0
  %726 = vmatprep.subr.mxu0 0.0
  %727 = vmatpush1.xpose.msra.mxu0 0.0
  %728 = vmatprep.subr.mxu0 0.0
  %729 = vmatpush1.xpose.msra.mxu0 0.0
  %730 = vmatprep.subr.mxu0 0.0
  %731 = vmatpush1.xpose.msra.mxu0 0.0
  %732 = vmatprep.subr.mxu0 0.0
  %733 = vmatpush1.xpose.msra.mxu0 0.0
  %734 = vmatprep.subr.mxu0 0.0
  %735 = vmatpush1.xpose.msra.mxu0 0.0
  %736 = vmatprep.subr.mxu0 0.0
  %737 = vmatpush1.xpose.msra.mxu0 0.0
  %738 = vmatprep.subr.mxu0 0.0
  %739 = vmatpush1.xpose.msra.mxu0 0.0
  %740 = vmatprep.subr.mxu0 0.0
  %741 = vmatpush1.xpose.msra.mxu0 %v710
  %742 = vmatprep.subr.mxu0 0.0
  %743 = vmatpush1.xpose.msra.mxu0 %v708
  %744 = vmatprep.subr.mxu0 0.0
  %745 = vmatpush2.xpose.msra.mxu0 0.0
  %746 = vmatprep.subr.mxu0 0.0
  %747 = vmatpush2.xpose.msra.mxu0 0.0
  %748 = vmatprep.subr.mxu0 0.0
  %749 = vmatpush2.xpose.msra.mxu0 0.0
  %750 = vmatprep.subr.mxu0 0.0
  %751 = vmatpush2.xpose.msra.mxu0 0.0
  %752 = vmatprep.subr.mxu0 0.0
  %753 = vmatpush2.xpose.msra.mxu0 0.0
  %754 = vmatprep.subr.mxu0 0.0
  %755 = vmatpush2.xpose.msra.mxu0 0.0
  %756 = vmatprep.subr.mxu0 0.0
  %757 = vmatpush2.xpose.msra.mxu0 0.0
  %758 = vmatprep.subr.mxu0 0.0
  %759 = vmatpush2.xpose.msra.mxu0 0.0
  %760 = vmatprep.subr.mxu0 0.0
  %761 = vmatpush2.xpose.msra.mxu0 0.0
  %762 = vmatprep.subr.mxu0 0.0
  %763 = vmatpush2.xpose.msra.mxu0 0.0
  %764 = vmatprep.subr.mxu0 0.0
  %765 = vmatpush2.xpose.msra.mxu0 0.0
  %766 = vmatprep.subr.mxu0 0.0
  %767 = vmatpush2.xpose.msra.mxu0 0.0
  %768 = vmatprep.subr.mxu0 0.0
  %769 = vmatpush2.xpose.msra.mxu0 0.0
  %770 = vmatprep.subr.mxu0 0.0
  %771 = vmatpush2.xpose.msra.mxu0 0.0
  %772 = vmatprep.subr.mxu0 0.0
  %773 = vmatpush2.xpose.msra.mxu0 0.0
  %774 = vmatprep.subr.mxu0 0.0
  %775 = vmatpush2.xpose.msra.mxu0 0.0
  %776 = vmatprep.mubr.f32.mxu0 0.0
  %777 = vmatmul.mubr.f32.gmra.mxu0 %v704
  %v778 = vpop.f32.mrf.mxu0
  %v779 = vadd.f32 %v244, %v778
  %v780 = vpop.f32.mrf.mxu0
  %781 = vmatprep.mubr.f32.mxu0 0.0
  %782 = vmatmul.mubr.f32.gmra.mxu0 %v706
  %v783 = vpop.f32.mrf.mxu0
  %v784 = vadd.f32 %v245, %v783
  %v785 = vpop.f32.mrf.mxu0
  %786 = vdwg.mxu0
  %789 = vrot.lane.b32.xlu0 %v226, 96
  %v790 = vpop.permute.xlu0 %789
  %791 = vrot.lane.b32.xlu0 %v231, 96
  %v792 = vpop.permute.xlu0 %791
  %v793 = vsel %vm258, %v226, 0
  %v795 = vsel %vm258, %v231, 0
  %v797 = vsel %vm258, %v790, 0
  %v799 = vsel %vm258, %v792, 0
  %801 = vmatprep.subr.mxu0 0.0
  %802 = vmatpush1.xpose.msra.mxu0 0.0
  %803 = vmatprep.subr.mxu0 0.0
  %804 = vmatpush1.xpose.msra.mxu0 0.0
  %805 = vmatprep.subr.mxu0 0.0
  %806 = vmatpush1.xpose.msra.mxu0 0.0
  %807 = vmatprep.subr.mxu0 0.0
  %808 = vmatpush1.xpose.msra.mxu0 0.0
  %809 = vmatprep.subr.mxu0 0.0
  %810 = vmatpush1.xpose.msra.mxu0 0.0
  %811 = vmatprep.subr.mxu0 0.0
  %812 = vmatpush1.xpose.msra.mxu0 0.0
  %813 = vmatprep.subr.mxu0 0.0
  %814 = vmatpush1.xpose.msra.mxu0 0.0
  %815 = vmatprep.subr.mxu0 0.0
  %816 = vmatpush1.xpose.msra.mxu0 0.0
  %817 = vmatprep.subr.mxu0 0.0
  %818 = vmatpush1.xpose.msra.mxu0 0.0
  %819 = vmatprep.subr.mxu0 0.0
  %820 = vmatpush1.xpose.msra.mxu0 0.0
  %821 = vmatprep.subr.mxu0 0.0
  %822 = vmatpush1.xpose.msra.mxu0 0.0
  %823 = vmatprep.subr.mxu0 0.0
  %824 = vmatpush1.xpose.msra.mxu0 0.0
  %825 = vmatprep.subr.mxu0 0.0
  %826 = vmatpush1.xpose.msra.mxu0 0.0
  %827 = vmatprep.subr.mxu0 0.0
  %828 = vmatpush1.xpose.msra.mxu0 0.0
  %829 = vmatprep.subr.mxu0 0.0
  %830 = vmatpush1.xpose.msra.mxu0 %v799
  %831 = vmatprep.subr.mxu0 0.0
  %832 = vmatpush1.xpose.msra.mxu0 %v797
  %833 = vmatprep.subr.mxu0 0.0
  %834 = vmatpush2.xpose.msra.mxu0 0.0
  %835 = vmatprep.subr.mxu0 0.0
  %836 = vmatpush2.xpose.msra.mxu0 0.0
  %837 = vmatprep.subr.mxu0 0.0
  %838 = vmatpush2.xpose.msra.mxu0 0.0
  %839 = vmatprep.subr.mxu0 0.0
  %840 = vmatpush2.xpose.msra.mxu0 0.0
  %841 = vmatprep.subr.mxu0 0.0
  %842 = vmatpush2.xpose.msra.mxu0 0.0
  %843 = vmatprep.subr.mxu0 0.0
  %844 = vmatpush2.xpose.msra.mxu0 0.0
  %845 = vmatprep.subr.mxu0 0.0
  %846 = vmatpush2.xpose.msra.mxu0 0.0
  %847 = vmatprep.subr.mxu0 0.0
  %848 = vmatpush2.xpose.msra.mxu0 0.0
  %849 = vmatprep.subr.mxu0 0.0
  %850 = vmatpush2.xpose.msra.mxu0 0.0
  %851 = vmatprep.subr.mxu0 0.0
  %852 = vmatpush2.xpose.msra.mxu0 0.0
  %853 = vmatprep.subr.mxu0 0.0
  %854 = vmatpush2.xpose.msra.mxu0 0.0
  %855 = vmatprep.subr.mxu0 0.0
  %856 = vmatpush2.xpose.msra.mxu0 0.0
  %857 = vmatprep.subr.mxu0 0.0
  %858 = vmatpush2.xpose.msra.mxu0 0.0
  %859 = vmatprep.subr.mxu0 0.0
  %860 = vmatpush2.xpose.msra.mxu0 0.0
  %861 = vmatprep.subr.mxu0 0.0
  %862 = vmatpush2.xpose.msra.mxu0 0.0
  %863 = vmatprep.subr.mxu0 0.0
  %864 = vmatpush2.xpose.msra.mxu0 0.0
  %865 = vmatprep.mubr.f32.mxu0 0.0
  %866 = vmatmul.mubr.f32.gmra.mxu0 %v793
  %v867 = vpop.f32.mrf.mxu0
  %v868 = vadd.f32 %v244, %v867
  %v869 = vpop.f32.mrf.mxu0
  %870 = vmatprep.mubr.f32.mxu0 0.0
  %871 = vmatmul.mubr.f32.gmra.mxu0 %v795
  %v872 = vpop.f32.mrf.mxu0
  %v873 = vadd.f32 %v245, %v872
  %v874 = vpop.f32.mrf.mxu0
  %875 = vdwg.mxu0
  %878 = vrot.lane.b32.xlu0 %v236, 96
  %v879 = vpop.permute.xlu0 %878
  %880 = vrot.lane.b32.xlu0 %v241, 96
  %v881 = vpop.permute.xlu0 %880
  %v882 = vsel %vm258, %v236, 0
  %v884 = vsel %vm258, %v241, 0
  %v886 = vsel %vm258, %v879, 0
  %v888 = vsel %vm258, %v881, 0
  %890 = vmatprep.subr.mxu0 0.0
  %891 = vmatpush1.xpose.msra.mxu0 0.0
  %892 = vmatprep.subr.mxu0 0.0
  %893 = vmatpush1.xpose.msra.mxu0 0.0
  %894 = vmatprep.subr.mxu0 0.0
  %895 = vmatpush1.xpose.msra.mxu0 0.0
  %896 = vmatprep.subr.mxu0 0.0
  %897 = vmatpush1.xpose.msra.mxu0 0.0
  %898 = vmatprep.subr.mxu0 0.0
  %899 = vmatpush1.xpose.msra.mxu0 0.0
  %900 = vmatprep.subr.mxu0 0.0
  %901 = vmatpush1.xpose.msra.mxu0 0.0
  %902 = vmatprep.subr.mxu0 0.0
  %903 = vmatpush1.xpose.msra.mxu0 0.0
  %904 = vmatprep.subr.mxu0 0.0
  %905 = vmatpush1.xpose.msra.mxu0 0.0
  %906 = vmatprep.subr.mxu0 0.0
  %907 = vmatpush1.xpose.msra.mxu0 0.0
  %908 = vmatprep.subr.mxu0 0.0
  %909 = vmatpush1.xpose.msra.mxu0 0.0
  %910 = vmatprep.subr.mxu0 0.0
  %911 = vmatpush1.xpose.msra.mxu0 0.0
  %912 = vmatprep.subr.mxu0 0.0
  %913 = vmatpush1.xpose.msra.mxu0 0.0
  %914 = vmatprep.subr.mxu0 0.0
  %915 = vmatpush1.xpose.msra.mxu0 0.0
  %916 = vmatprep.subr.mxu0 0.0
  %917 = vmatpush1.xpose.msra.mxu0 0.0
  %918 = vmatprep.subr.mxu0 0.0
  %919 = vmatpush1.xpose.msra.mxu0 %v888
  %920 = vmatprep.subr.mxu0 0.0
  %921 = vmatpush1.xpose.msra.mxu0 %v886
  %922 = vmatprep.subr.mxu0 0.0
  %923 = vmatpush2.xpose.msra.mxu0 0.0
  %924 = vmatprep.subr.mxu0 0.0
  %925 = vmatpush2.xpose.msra.mxu0 0.0
  %926 = vmatprep.subr.mxu0 0.0
  %927 = vmatpush2.xpose.msra.mxu0 0.0
  %928 = vmatprep.subr.mxu0 0.0
  %929 = vmatpush2.xpose.msra.mxu0 0.0
  %930 = vmatprep.subr.mxu0 0.0
  %931 = vmatpush2.xpose.msra.mxu0 0.0
  %932 = vmatprep.subr.mxu0 0.0
  %933 = vmatpush2.xpose.msra.mxu0 0.0
  %934 = vmatprep.subr.mxu0 0.0
  %935 = vmatpush2.xpose.msra.mxu0 0.0
  %936 = vmatprep.subr.mxu0 0.0
  %937 = vmatpush2.xpose.msra.mxu0 0.0
  %938 = vmatprep.subr.mxu0 0.0
  %939 = vmatpush2.xpose.msra.mxu0 0.0
  %940 = vmatprep.subr.mxu0 0.0
  %941 = vmatpush2.xpose.msra.mxu0 0.0
  %942 = vmatprep.subr.mxu0 0.0
  %943 = vmatpush2.xpose.msra.mxu0 0.0
  %944 = vmatprep.subr.mxu0 0.0
  %945 = vmatpush2.xpose.msra.mxu0 0.0
  %946 = vmatprep.subr.mxu0 0.0
  %947 = vmatpush2.xpose.msra.mxu0 0.0
  %948 = vmatprep.subr.mxu0 0.0
  %949 = vmatpush2.xpose.msra.mxu0 0.0
  %950 = vmatprep.subr.mxu0 0.0
  %951 = vmatpush2.xpose.msra.mxu0 0.0
  %952 = vmatprep.subr.mxu0 0.0
  %953 = vmatpush2.xpose.msra.mxu0 0.0
  %954 = vmatprep.mubr.f32.mxu0 0.0
  %955 = vmatmul.mubr.f32.gmra.mxu0 %v882
  %v956 = vpop.f32.mrf.mxu0
  %v957 = vadd.f32 %v244, %v956
  %v958 = vpop.f32.mrf.mxu0
  %959 = vmatprep.mubr.f32.mxu0 0.0
  %960 = vmatmul.mubr.f32.gmra.mxu0 %v884
  %v961 = vpop.f32.mrf.mxu0
  %v962 = vadd.f32 %v245, %v961
  %v963 = vpop.f32.mrf.mxu0
  %964 = vdwg.mxu0
  %vm965 = vcmask 130048
  %v966 = vsel %vm965, %v334, -inf
  %967 = vmax.xlane.f32.xlu0 %v966
  %v968 = vpop.xlane.xlu0 %967
  %v969 = vsel %vm965, %v339, -inf
  %970 = vmax.xlane.f32.xlu0 %v969
  %v971 = vpop.xlane.xlu0 %970
  %v972 = vsel %vm965, %v423, -inf
  %973 = vmax.xlane.f32.xlu0 %v972
  %v974 = vpop.xlane.xlu0 %973
  %v975 = vsel %vm965, %v428, -inf
  %976 = vmax.xlane.f32.xlu0 %v975
  %v977 = vpop.xlane.xlu0 %976
  %v978 = vsel %vm965, %v512, -inf
  %979 = vmax.xlane.f32.xlu0 %v978
  %v980 = vpop.xlane.xlu0 %979
  %v981 = vsel %vm965, %v517, -inf
  %982 = vmax.xlane.f32.xlu0 %v981
  %v983 = vpop.xlane.xlu0 %982
  %v984 = vsel %vm965, %v601, -inf
  %985 = vmax.xlane.f32.xlu0 %v984
  %v986 = vpop.xlane.xlu0 %985
  %v987 = vsel %vm965, %v606, -inf
  %988 = vmax.xlane.f32.xlu0 %v987
  %v989 = vpop.xlane.xlu0 %988
  %v990 = vsel %vm965, %v690, -inf
  %991 = vmax.xlane.f32.xlu0 %v990
  %v992 = vpop.xlane.xlu0 %991
  %v993 = vsel %vm965, %v695, -inf
  %994 = vmax.xlane.f32.xlu0 %v993
  %v995 = vpop.xlane.xlu0 %994
  %v996 = vsel %vm965, %v779, -inf
  %997 = vmax.xlane.f32.xlu0 %v996
  %v998 = vpop.xlane.xlu0 %997
  %v999 = vsel %vm965, %v784, -inf
  %1000 = vmax.xlane.f32.xlu0 %v999
  %v1001 = vpop.xlane.xlu0 %1000
  %v1002 = vsel %vm965, %v868, -inf
  %1003 = vmax.xlane.f32.xlu0 %v1002
  %v1004 = vpop.xlane.xlu0 %1003
  %v1005 = vsel %vm965, %v873, -inf
  %1006 = vmax.xlane.f32.xlu0 %v1005
  %v1007 = vpop.xlane.xlu0 %1006
  %v1008 = vsel %vm965, %v957, -inf
  %1009 = vmax.xlane.f32.xlu0 %v1008
  %v1010 = vpop.xlane.xlu0 %1009
  %v1011 = vsel %vm965, %v962, -inf
  %1012 = vmax.xlane.f32.xlu0 %v1011
  %v1013 = vpop.xlane.xlu0 %1012
  %v1014 = vsub.f32 %v334, %v968
  %v1015 = vsub.f32 %v339, %v971
  %v1016 = vsub.f32 %v423, %v974
  %v1017 = vsub.f32 %v428, %v977
  %v1018 = vsub.f32 %v512, %v980
  %v1019 = vsub.f32 %v517, %v983
  %v1020 = vsub.f32 %v601, %v986
  %v1021 = vsub.f32 %v606, %v989
  %v1022 = vsub.f32 %v690, %v992
  %v1023 = vsub.f32 %v695, %v995
  %v1024 = vsub.f32 %v779, %v998
  %v1025 = vsub.f32 %v784, %v1001
  %v1026 = vsub.f32 %v868, %v1004
  %v1027 = vsub.f32 %v873, %v1007
  %v1028 = vsub.f32 %v957, %v1010
  %v1029 = vsub.f32 %v962, %v1013
  %v1030 = vmul.f32 %v1014, 1.442695
  %v1031 = vpow.pop %v1030
  %v1032 = vmul.f32 %v1015, 1.442695
  %v1033 = vpow.pop %v1032
  %v1034 = vmul.f32 %v1016, 1.442695
  %v1035 = vpow.pop %v1034
  %v1036 = vmul.f32 %v1017, 1.442695
  %v1037 = vpow.pop %v1036
  %v1038 = vmul.f32 %v1018, 1.442695
  %v1039 = vpow.pop %v1038
  %v1040 = vmul.f32 %v1019, 1.442695
  %v1041 = vpow.pop %v1040
  %v1042 = vmul.f32 %v1020, 1.442695
  %v1043 = vpow.pop %v1042
  %v1044 = vmul.f32 %v1021, 1.442695
  %v1045 = vpow.pop %v1044
  %v1046 = vmul.f32 %v1022, 1.442695
  %v1047 = vpow.pop %v1046
  %v1048 = vmul.f32 %v1023, 1.442695
  %v1049 = vpow.pop %v1048
  %v1050 = vmul.f32 %v1024, 1.442695
  %v1051 = vpow.pop %v1050
  %v1052 = vmul.f32 %v1025, 1.442695
  %v1053 = vpow.pop %v1052
  %v1054 = vmul.f32 %v1026, 1.442695
  %v1055 = vpow.pop %v1054
  %v1056 = vmul.f32 %v1027, 1.442695
  %v1057 = vpow.pop %v1056
  %v1058 = vmul.f32 %v1028, 1.442695
  %v1059 = vpow.pop %v1058
  %v1060 = vmul.f32 %v1029, 1.442695
  %v1061 = vpow.pop %v1060
  %v1062 = vsel %vm965, %v1031, 0.0
  %1063 = vadd.xlane.f32.xlu0 %v1062
  %v1064 = vpop.xlane.xlu0 %1063
  %v1065 = vsel %vm965, %v1033, 0.0
  %1066 = vadd.xlane.f32.xlu0 %v1065
  %v1067 = vpop.xlane.xlu0 %1066
  %v1068 = vsel %vm965, %v1035, 0.0
  %1069 = vadd.xlane.f32.xlu0 %v1068
  %v1070 = vpop.xlane.xlu0 %1069
  %v1071 = vsel %vm965, %v1037, 0.0
  %1072 = vadd.xlane.f32.xlu0 %v1071
  %v1073 = vpop.xlane.xlu0 %1072
  %v1074 = vsel %vm965, %v1039, 0.0
  %1075 = vadd.xlane.f32.xlu0 %v1074
  %v1076 = vpop.xlane.xlu0 %1075
  %v1077 = vsel %vm965, %v1041, 0.0
  %1078 = vadd.xlane.f32.xlu0 %v1077
  %v1079 = vpop.xlane.xlu0 %1078
  %v1080 = vsel %vm965, %v1043, 0.0
  %1081 = vadd.xlane.f32.xlu0 %v1080
  %v1082 = vpop.xlane.xlu0 %1081
  %v1083 = vsel %vm965, %v1045, 0.0
  %1084 = vadd.xlane.f32.xlu0 %v1083
  %v1085 = vpop.xlane.xlu0 %1084
  %v1086 = vsel %vm965, %v1047, 0.0
  %1087 = vadd.xlane.f32.xlu0 %v1086
  %v1088 = vpop.xlane.xlu0 %1087
  %v1089 = vsel %vm965, %v1049, 0.0
  %1090 = vadd.xlane.f32.xlu0 %v1089
  %v1091 = vpop.xlane.xlu0 %1090
  %v1092 = vsel %vm965, %v1051, 0.0
  %1093 = vadd.xlane.f32.xlu0 %v1092
  %v1094 = vpop.xlane.xlu0 %1093
  %v1095 = vsel %vm965, %v1053, 0.0
  %1096 = vadd.xlane.f32.xlu0 %v1095
  %v1097 = vpop.xlane.xlu0 %1096
  %v1098 = vsel %vm965, %v1055, 0.0
  %1099 = vadd.xlane.f32.xlu0 %v1098
  %v1100 = vpop.xlane.xlu0 %1099
  %v1101 = vsel %vm965, %v1057, 0.0
  %1102 = vadd.xlane.f32.xlu0 %v1101
  %v1103 = vpop.xlane.xlu0 %1102
  %v1104 = vsel %vm965, %v1059, 0.0
  %1105 = vadd.xlane.f32.xlu0 %v1104
  %v1106 = vpop.xlane.xlu0 %1105
  %v1107 = vsel %vm965, %v1061, 0.0
  %1108 = vadd.xlane.f32.xlu0 %v1107
  %v1109 = vpop.xlane.xlu0 %1108
  %v1110 = vrcp.pop %v1064
  %v1111 = vrcp.pop %v1067
  %v1112 = vrcp.pop %v1070
  %v1113 = vrcp.pop %v1073
  %v1114 = vrcp.pop %v1076
  %v1115 = vrcp.pop %v1079
  %v1116 = vrcp.pop %v1082
  %v1117 = vrcp.pop %v1085
  %v1118 = vrcp.pop %v1088
  %v1119 = vrcp.pop %v1091
  %v1120 = vrcp.pop %v1094
  %v1121 = vrcp.pop %v1097
  %v1122 = vrcp.pop %v1100
  %v1123 = vrcp.pop %v1103
  %v1124 = vrcp.pop %v1106
  %v1125 = vrcp.pop %v1109
  %v1126 = vmul.f32 %v1031, %v1110
  %v1127 = vmul.f32 %v1033, %v1111
  %v1128 = vmul.f32 %v1035, %v1112
  %v1129 = vmul.f32 %v1037, %v1113
  %v1130 = vmul.f32 %v1039, %v1114
  %v1131 = vmul.f32 %v1041, %v1115
  %v1132 = vmul.f32 %v1043, %v1116
  %v1133 = vmul.f32 %v1045, %v1117
  %v1134 = vmul.f32 %v1047, %v1118
  %v1135 = vmul.f32 %v1049, %v1119
  %v1136 = vmul.f32 %v1051, %v1120
  %v1137 = vmul.f32 %v1053, %v1121
  %v1138 = vmul.f32 %v1055, %v1122
  %v1139 = vmul.f32 %v1057, %v1123
  %v1140 = vmul.f32 %v1059, %v1124
  %v1141 = vmul.f32 %v1061, %v1125
  %1142 = vrot.lane.b32.xlu0 %v166, 64
  %v1143 = vpop.permute.xlu0 %1142
  %1144 = vrot.lane.b32.xlu0 %v171, 64
  %v1145 = vpop.permute.xlu0 %1144
  %v1149 = vsel %vm965, %v1126, 0
  %v1152 = vsel %vm965, %v1127, 0
  %1154 = vmatprep.subr.mxu0 0.0
  %1155 = vmatpush1.msra.mxu0 0.0
  %1156 = vmatprep.subr.mxu0 0.0
  %1157 = vmatpush1.msra.mxu0 0.0
  %1158 = vmatprep.subr.mxu0 0.0
  %1159 = vmatpush1.msra.mxu0 0.0
  %1160 = vmatprep.subr.mxu0 0.0
  %1161 = vmatpush1.msra.mxu0 0.0
  %1162 = vmatprep.subr.mxu0 0.0
  %1163 = vmatpush1.msra.mxu0 0.0
  %1164 = vmatprep.subr.mxu0 0.0
  %1165 = vmatpush1.msra.mxu0 0.0
  %1166 = vmatprep.subr.mxu0 0.0
  %1167 = vmatpush1.msra.mxu0 0.0
  %1168 = vmatprep.subr.mxu0 0.0
  %1169 = vmatpush1.msra.mxu0 0.0
  %1170 = vmatprep.subr.mxu0 0.0
  %1171 = vmatpush1.msra.mxu0 0.0
  %1172 = vmatprep.subr.mxu0 0.0
  %1173 = vmatpush1.msra.mxu0 0.0
  %1174 = vmatprep.subr.mxu0 0.0
  %1175 = vmatpush1.msra.mxu0 0.0
  %1176 = vmatprep.subr.mxu0 0.0
  %1177 = vmatpush1.msra.mxu0 0.0
  %1178 = vmatprep.subr.mxu0 0.0
  %1179 = vmatpush1.msra.mxu0 0.0
  %1180 = vmatprep.subr.mxu0 0.0
  %1181 = vmatpush1.msra.mxu0 0.0
  %1182 = vmatprep.subr.mxu0 0.0
  %1183 = vmatpush1.msra.mxu0 %v1145
  %1184 = vmatprep.subr.mxu0 0.0
  %1185 = vmatpush1.msra.mxu0 %v1143
  %1186 = vmatprep.subr.mxu0 0.0
  %1187 = vmatpush2.msra.mxu0 0.0
  %1188 = vmatprep.subr.mxu0 0.0
  %1189 = vmatpush2.msra.mxu0 0.0
  %1190 = vmatprep.subr.mxu0 0.0
  %1191 = vmatpush2.msra.mxu0 0.0
  %1192 = vmatprep.subr.mxu0 0.0
  %1193 = vmatpush2.msra.mxu0 0.0
  %1194 = vmatprep.subr.mxu0 0.0
  %1195 = vmatpush2.msra.mxu0 0.0
  %1196 = vmatprep.subr.mxu0 0.0
  %1197 = vmatpush2.msra.mxu0 0.0
  %1198 = vmatprep.subr.mxu0 0.0
  %1199 = vmatpush2.msra.mxu0 0.0
  %1200 = vmatprep.subr.mxu0 0.0
  %1201 = vmatpush2.msra.mxu0 0.0
  %1202 = vmatprep.subr.mxu0 0.0
  %1203 = vmatpush2.msra.mxu0 0.0
  %1204 = vmatprep.subr.mxu0 0.0
  %1205 = vmatpush2.msra.mxu0 0.0
  %1206 = vmatprep.subr.mxu0 0.0
  %1207 = vmatpush2.msra.mxu0 0.0
  %1208 = vmatprep.subr.mxu0 0.0
  %1209 = vmatpush2.msra.mxu0 0.0
  %1210 = vmatprep.subr.mxu0 0.0
  %1211 = vmatpush2.msra.mxu0 0.0
  %1212 = vmatprep.subr.mxu0 0.0
  %1213 = vmatpush2.msra.mxu0 0.0
  %1214 = vmatprep.subr.mxu0 0.0
  %1215 = vmatpush2.msra.mxu0 0.0
  %1216 = vmatprep.subr.mxu0 0.0
  %1217 = vmatpush2.msra.mxu0 0.0
  %1218 = vmatprep.mubr.f32.mxu0 0.0
  %1219 = vmatmul.mubr.f32.gmra.mxu0 %v1149
  %v1220 = vpop.f32.mrf.mxu0
  %v1221 = vadd.f32 0.0, %v1220
  %v1222 = vpop.f32.mrf.mxu0
  %1223 = vmatprep.mubr.f32.mxu0 0.0
  %1224 = vmatmul.mubr.f32.gmra.mxu0 %v1152
  %v1225 = vpop.f32.mrf.mxu0
  %v1226 = vadd.f32 0.0, %v1225
  %v1227 = vpop.f32.mrf.mxu0
  %1228 = vdwg.mxu0
  %1229 = vrot.lane.b32.xlu0 %v176, 64
  %v1230 = vpop.permute.xlu0 %1229
  %1231 = vrot.lane.b32.xlu0 %v181, 64
  %v1232 = vpop.permute.xlu0 %1231
  %v1236 = vsel %vm965, %v1128, 0
  %v1239 = vsel %vm965, %v1129, 0
  %1241 = vmatprep.subr.mxu0 0.0
  %1242 = vmatpush1.msra.mxu0 0.0
  %1243 = vmatprep.subr.mxu0 0.0
  %1244 = vmatpush1.msra.mxu0 0.0
  %1245 = vmatprep.subr.mxu0 0.0
  %1246 = vmatpush1.msra.mxu0 0.0
  %1247 = vmatprep.subr.mxu0 0.0
  %1248 = vmatpush1.msra.mxu0 0.0
  %1249 = vmatprep.subr.mxu0 0.0
  %1250 = vmatpush1.msra.mxu0 0.0
  %1251 = vmatprep.subr.mxu0 0.0
  %1252 = vmatpush1.msra.mxu0 0.0
  %1253 = vmatprep.subr.mxu0 0.0
  %1254 = vmatpush1.msra.mxu0 0.0
  %1255 = vmatprep.subr.mxu0 0.0
  %1256 = vmatpush1.msra.mxu0 0.0
  %1257 = vmatprep.subr.mxu0 0.0
  %1258 = vmatpush1.msra.mxu0 0.0
  %1259 = vmatprep.subr.mxu0 0.0
  %1260 = vmatpush1.msra.mxu0 0.0
  %1261 = vmatprep.subr.mxu0 0.0
  %1262 = vmatpush1.msra.mxu0 0.0
  %1263 = vmatprep.subr.mxu0 0.0
  %1264 = vmatpush1.msra.mxu0 0.0
  %1265 = vmatprep.subr.mxu0 0.0
  %1266 = vmatpush1.msra.mxu0 0.0
  %1267 = vmatprep.subr.mxu0 0.0
  %1268 = vmatpush1.msra.mxu0 0.0
  %1269 = vmatprep.subr.mxu0 0.0
  %1270 = vmatpush1.msra.mxu0 %v1232
  %1271 = vmatprep.subr.mxu0 0.0
  %1272 = vmatpush1.msra.mxu0 %v1230
  %1273 = vmatprep.subr.mxu0 0.0
  %1274 = vmatpush2.msra.mxu0 0.0
  %1275 = vmatprep.subr.mxu0 0.0
  %1276 = vmatpush2.msra.mxu0 0.0
  %1277 = vmatprep.subr.mxu0 0.0
  %1278 = vmatpush2.msra.mxu0 0.0
  %1279 = vmatprep.subr.mxu0 0.0
  %1280 = vmatpush2.msra.mxu0 0.0
  %1281 = vmatprep.subr.mxu0 0.0
  %1282 = vmatpush2.msra.mxu0 0.0
  %1283 = vmatprep.subr.mxu0 0.0
  %1284 = vmatpush2.msra.mxu0 0.0
  %1285 = vmatprep.subr.mxu0 0.0
  %1286 = vmatpush2.msra.mxu0 0.0
  %1287 = vmatprep.subr.mxu0 0.0
  %1288 = vmatpush2.msra.mxu0 0.0
  %1289 = vmatprep.subr.mxu0 0.0
  %1290 = vmatpush2.msra.mxu0 0.0
  %1291 = vmatprep.subr.mxu0 0.0
  %1292 = vmatpush2.msra.mxu0 0.0
  %1293 = vmatprep.subr.mxu0 0.0
  %1294 = vmatpush2.msra.mxu0 0.0
  %1295 = vmatprep.subr.mxu0 0.0
  %1296 = vmatpush2.msra.mxu0 0.0
  %1297 = vmatprep.subr.mxu0 0.0
  %1298 = vmatpush2.msra.mxu0 0.0
  %1299 = vmatprep.subr.mxu0 0.0
  %1300 = vmatpush2.msra.mxu0 0.0
  %1301 = vmatprep.subr.mxu0 0.0
  %1302 = vmatpush2.msra.mxu0 0.0
  %1303 = vmatprep.subr.mxu0 0.0
  %1304 = vmatpush2.msra.mxu0 0.0
  %1305 = vmatprep.mubr.f32.mxu0 0.0
  %1306 = vmatmul.mubr.f32.gmra.mxu0 %v1236
  %v1307 = vpop.f32.mrf.mxu0
  %v1308 = vadd.f32 0.0, %v1307
  %v1309 = vpop.f32.mrf.mxu0
  %1310 = vmatprep.mubr.f32.mxu0 0.0
  %1311 = vmatmul.mubr.f32.gmra.mxu0 %v1239
  %v1312 = vpop.f32.mrf.mxu0
  %v1313 = vadd.f32 0.0, %v1312
  %v1314 = vpop.f32.mrf.mxu0
  %1315 = vdwg.mxu0
  %1316 = vrot.lane.b32.xlu0 %v186, 64
  %v1317 = vpop.permute.xlu0 %1316
  %1318 = vrot.lane.b32.xlu0 %v191, 64
  %v1319 = vpop.permute.xlu0 %1318
  %v1323 = vsel %vm965, %v1130, 0
  %v1326 = vsel %vm965, %v1131, 0
  %1328 = vmatprep.subr.mxu0 0.0
  %1329 = vmatpush1.msra.mxu0 0.0
  %1330 = vmatprep.subr.mxu0 0.0
  %1331 = vmatpush1.msra.mxu0 0.0
  %1332 = vmatprep.subr.mxu0 0.0
  %1333 = vmatpush1.msra.mxu0 0.0
  %1334 = vmatprep.subr.mxu0 0.0
  %1335 = vmatpush1.msra.mxu0 0.0
  %1336 = vmatprep.subr.mxu0 0.0
  %1337 = vmatpush1.msra.mxu0 0.0
  %1338 = vmatprep.subr.mxu0 0.0
  %1339 = vmatpush1.msra.mxu0 0.0
  %1340 = vmatprep.subr.mxu0 0.0
  %1341 = vmatpush1.msra.mxu0 0.0
  %1342 = vmatprep.subr.mxu0 0.0
  %1343 = vmatpush1.msra.mxu0 0.0
  %1344 = vmatprep.subr.mxu0 0.0
  %1345 = vmatpush1.msra.mxu0 0.0
  %1346 = vmatprep.subr.mxu0 0.0
  %1347 = vmatpush1.msra.mxu0 0.0
  %1348 = vmatprep.subr.mxu0 0.0
  %1349 = vmatpush1.msra.mxu0 0.0
  %1350 = vmatprep.subr.mxu0 0.0
  %1351 = vmatpush1.msra.mxu0 0.0
  %1352 = vmatprep.subr.mxu0 0.0
  %1353 = vmatpush1.msra.mxu0 0.0
  %1354 = vmatprep.subr.mxu0 0.0
  %1355 = vmatpush1.msra.mxu0 0.0
  %1356 = vmatprep.subr.mxu0 0.0
  %1357 = vmatpush1.msra.mxu0 %v1319
  %1358 = vmatprep.subr.mxu0 0.0
  %1359 = vmatpush1.msra.mxu0 %v1317
  %1360 = vmatprep.subr.mxu0 0.0
  %1361 = vmatpush2.msra.mxu0 0.0
  %1362 = vmatprep.subr.mxu0 0.0
  %1363 = vmatpush2.msra.mxu0 0.0
  %1364 = vmatprep.subr.mxu0 0.0
  %1365 = vmatpush2.msra.mxu0 0.0
  %1366 = vmatprep.subr.mxu0 0.0
  %1367 = vmatpush2.msra.mxu0 0.0
  %1368 = vmatprep.subr.mxu0 0.0
  %1369 = vmatpush2.msra.mxu0 0.0
  %1370 = vmatprep.subr.mxu0 0.0
  %1371 = vmatpush2.msra.mxu0 0.0
  %1372 = vmatprep.subr.mxu0 0.0
  %1373 = vmatpush2.msra.mxu0 0.0
  %1374 = vmatprep.subr.mxu0 0.0
  %1375 = vmatpush2.msra.mxu0 0.0
  %1376 = vmatprep.subr.mxu0 0.0
  %1377 = vmatpush2.msra.mxu0 0.0
  %1378 = vmatprep.subr.mxu0 0.0
  %1379 = vmatpush2.msra.mxu0 0.0
  %1380 = vmatprep.subr.mxu0 0.0
  %1381 = vmatpush2.msra.mxu0 0.0
  %1382 = vmatprep.subr.mxu0 0.0
  %1383 = vmatpush2.msra.mxu0 0.0
  %1384 = vmatprep.subr.mxu0 0.0
  %1385 = vmatpush2.msra.mxu0 0.0
  %1386 = vmatprep.subr.mxu0 0.0
  %1387 = vmatpush2.msra.mxu0 0.0
  %1388 = vmatprep.subr.mxu0 0.0
  %1389 = vmatpush2.msra.mxu0 0.0
  %1390 = vmatprep.subr.mxu0 0.0
  %1391 = vmatpush2.msra.mxu0 0.0
  %1392 = vmatprep.mubr.f32.mxu0 0.0
  %1393 = vmatmul.mubr.f32.gmra.mxu0 %v1323
  %v1394 = vpop.f32.mrf.mxu0
  %v1395 = vadd.f32 0.0, %v1394
  %v1396 = vpop.f32.mrf.mxu0
  %1397 = vmatprep.mubr.f32.mxu0 0.0
  %1398 = vmatmul.mubr.f32.gmra.mxu0 %v1326
  %v1399 = vpop.f32.mrf.mxu0
  %v1400 = vadd.f32 0.0, %v1399
  %v1401 = vpop.f32.mrf.mxu0
  %1402 = vdwg.mxu0
  %1403 = vrot.lane.b32.xlu0 %v196, 64
  %v1404 = vpop.permute.xlu0 %1403
  %1405 = vrot.lane.b32.xlu0 %v201, 64
  %v1406 = vpop.permute.xlu0 %1405
  %v1410 = vsel %vm965, %v1132, 0
  %v1413 = vsel %vm965, %v1133, 0
  %1415 = vmatprep.subr.mxu0 0.0
  %1416 = vmatpush1.msra.mxu0 0.0
  %1417 = vmatprep.subr.mxu0 0.0
  %1418 = vmatpush1.msra.mxu0 0.0
  %1419 = vmatprep.subr.mxu0 0.0
  %1420 = vmatpush1.msra.mxu0 0.0
  %1421 = vmatprep.subr.mxu0 0.0
  %1422 = vmatpush1.msra.mxu0 0.0
  %1423 = vmatprep.subr.mxu0 0.0
  %1424 = vmatpush1.msra.mxu0 0.0
  %1425 = vmatprep.subr.mxu0 0.0
  %1426 = vmatpush1.msra.mxu0 0.0
  %1427 = vmatprep.subr.mxu0 0.0
  %1428 = vmatpush1.msra.mxu0 0.0
  %1429 = vmatprep.subr.mxu0 0.0
  %1430 = vmatpush1.msra.mxu0 0.0
  %1431 = vmatprep.subr.mxu0 0.0
  %1432 = vmatpush1.msra.mxu0 0.0
  %1433 = vmatprep.subr.mxu0 0.0
  %1434 = vmatpush1.msra.mxu0 0.0
  %1435 = vmatprep.subr.mxu0 0.0
  %1436 = vmatpush1.msra.mxu0 0.0
  %1437 = vmatprep.subr.mxu0 0.0
  %1438 = vmatpush1.msra.mxu0 0.0
  %1439 = vmatprep.subr.mxu0 0.0
  %1440 = vmatpush1.msra.mxu0 0.0
  %1441 = vmatprep.subr.mxu0 0.0
  %1442 = vmatpush1.msra.mxu0 0.0
  %1443 = vmatprep.subr.mxu0 0.0
  %1444 = vmatpush1.msra.mxu0 %v1406
  %1445 = vmatprep.subr.mxu0 0.0
  %1446 = vmatpush1.msra.mxu0 %v1404
  %1447 = vmatprep.subr.mxu0 0.0
  %1448 = vmatpush2.msra.mxu0 0.0
  %1449 = vmatprep.subr.mxu0 0.0
  %1450 = vmatpush2.msra.mxu0 0.0
  %1451 = vmatprep.subr.mxu0 0.0
  %1452 = vmatpush2.msra.mxu0 0.0
  %1453 = vmatprep.subr.mxu0 0.0
  %1454 = vmatpush2.msra.mxu0 0.0
  %1455 = vmatprep.subr.mxu0 0.0
  %1456 = vmatpush2.msra.mxu0 0.0
  %1457 = vmatprep.subr.mxu0 0.0
  %1458 = vmatpush2.msra.mxu0 0.0
  %1459 = vmatprep.subr.mxu0 0.0
  %1460 = vmatpush2.msra.mxu0 0.0
  %1461 = vmatprep.subr.mxu0 0.0
  %1462 = vmatpush2.msra.mxu0 0.0
  %1463 = vmatprep.subr.mxu0 0.0
  %1464 = vmatpush2.msra.mxu0 0.0
  %1465 = vmatprep.subr.mxu0 0.0
  %1466 = vmatpush2.msra.mxu0 0.0
  %1467 = vmatprep.subr.mxu0 0.0
  %1468 = vmatpush2.msra.mxu0 0.0
  %1469 = vmatprep.subr.mxu0 0.0
  %1470 = vmatpush2.msra.mxu0 0.0
  %1471 = vmatprep.subr.mxu0 0.0
  %1472 = vmatpush2.msra.mxu0 0.0
  %1473 = vmatprep.subr.mxu0 0.0
  %1474 = vmatpush2.msra.mxu0 0.0
  %1475 = vmatprep.subr.mxu0 0.0
  %1476 = vmatpush2.msra.mxu0 0.0
  %1477 = vmatprep.subr.mxu0 0.0
  %1478 = vmatpush2.msra.mxu0 0.0
  %1479 = vmatprep.mubr.f32.mxu0 0.0
  %1480 = vmatmul.mubr.f32.gmra.mxu0 %v1410
  %v1481 = vpop.f32.mrf.mxu0
  %v1482 = vadd.f32 0.0, %v1481
  %v1483 = vpop.f32.mrf.mxu0
  %1484 = vmatprep.mubr.f32.mxu0 0.0
  %1485 = vmatmul.mubr.f32.gmra.mxu0 %v1413
  %v1486 = vpop.f32.mrf.mxu0
  %v1487 = vadd.f32 0.0, %v1486
  %v1488 = vpop.f32.mrf.mxu0
  %1489 = vdwg.mxu0
  %1490 = vrot.lane.b32.xlu0 %v206, 64
  %v1491 = vpop.permute.xlu0 %1490
  %1492 = vrot.lane.b32.xlu0 %v211, 64
  %v1493 = vpop.permute.xlu0 %1492
  %v1497 = vsel %vm965, %v1134, 0
  %v1500 = vsel %vm965, %v1135, 0
  %1502 = vmatprep.subr.mxu0 0.0
  %1503 = vmatpush1.msra.mxu0 0.0
  %1504 = vmatprep.subr.mxu0 0.0
  %1505 = vmatpush1.msra.mxu0 0.0
  %1506 = vmatprep.subr.mxu0 0.0
  %1507 = vmatpush1.msra.mxu0 0.0
  %1508 = vmatprep.subr.mxu0 0.0
  %1509 = vmatpush1.msra.mxu0 0.0
  %1510 = vmatprep.subr.mxu0 0.0
  %1511 = vmatpush1.msra.mxu0 0.0
  %1512 = vmatprep.subr.mxu0 0.0
  %1513 = vmatpush1.msra.mxu0 0.0
  %1514 = vmatprep.subr.mxu0 0.0
  %1515 = vmatpush1.msra.mxu0 0.0
  %1516 = vmatprep.subr.mxu0 0.0
  %1517 = vmatpush1.msra.mxu0 0.0
  %1518 = vmatprep.subr.mxu0 0.0
  %1519 = vmatpush1.msra.mxu0 0.0
  %1520 = vmatprep.subr.mxu0 0.0
  %1521 = vmatpush1.msra.mxu0 0.0
  %1522 = vmatprep.subr.mxu0 0.0
  %1523 = vmatpush1.msra.mxu0 0.0
  %1524 = vmatprep.subr.mxu0 0.0
  %1525 = vmatpush1.msra.mxu0 0.0
  %1526 = vmatprep.subr.mxu0 0.0
  %1527 = vmatpush1.msra.mxu0 0.0
  %1528 = vmatprep.subr.mxu0 0.0
  %1529 = vmatpush1.msra.mxu0 0.0
  %1530 = vmatprep.subr.mxu0 0.0
  %1531 = vmatpush1.msra.mxu0 %v1493
  %1532 = vmatprep.subr.mxu0 0.0
  %1533 = vmatpush1.msra.mxu0 %v1491
  %1534 = vmatprep.subr.mxu0 0.0
  %1535 = vmatpush2.msra.mxu0 0.0
  %1536 = vmatprep.subr.mxu0 0.0
  %1537 = vmatpush2.msra.mxu0 0.0
  %1538 = vmatprep.subr.mxu0 0.0
  %1539 = vmatpush2.msra.mxu0 0.0
  %1540 = vmatprep.subr.mxu0 0.0
  %1541 = vmatpush2.msra.mxu0 0.0
  %1542 = vmatprep.subr.mxu0 0.0
  %1543 = vmatpush2.msra.mxu0 0.0
  %1544 = vmatprep.subr.mxu0 0.0
  %1545 = vmatpush2.msra.mxu0 0.0
  %1546 = vmatprep.subr.mxu0 0.0
  %1547 = vmatpush2.msra.mxu0 0.0
  %1548 = vmatprep.subr.mxu0 0.0
  %1549 = vmatpush2.msra.mxu0 0.0
  %1550 = vmatprep.subr.mxu0 0.0
  %1551 = vmatpush2.msra.mxu0 0.0
  %1552 = vmatprep.subr.mxu0 0.0
  %1553 = vmatpush2.msra.mxu0 0.0
  %1554 = vmatprep.subr.mxu0 0.0
  %1555 = vmatpush2.msra.mxu0 0.0
  %1556 = vmatprep.subr.mxu0 0.0
  %1557 = vmatpush2.msra.mxu0 0.0
  %1558 = vmatprep.subr.mxu0 0.0
  %1559 = vmatpush2.msra.mxu0 0.0
  %1560 = vmatprep.subr.mxu0 0.0
  %1561 = vmatpush2.msra.mxu0 0.0
  %1562 = vmatprep.subr.mxu0 0.0
  %1563 = vmatpush2.msra.mxu0 0.0
  %1564 = vmatprep.subr.mxu0 0.0
  %1565 = vmatpush2.msra.mxu0 0.0
  %1566 = vmatprep.mubr.f32.mxu0 0.0
  %1567 = vmatmul.mubr.f32.gmra.mxu0 %v1497
  %v1568 = vpop.f32.mrf.mxu0
  %v1569 = vadd.f32 0.0, %v1568
  %v1570 = vpop.f32.mrf.mxu0
  %1571 = vmatprep.mubr.f32.mxu0 0.0
  %1572 = vmatmul.mubr.f32.gmra.mxu0 %v1500
  %v1573 = vpop.f32.mrf.mxu0
  %v1574 = vadd.f32 0.0, %v1573
  %v1575 = vpop.f32.mrf.mxu0
  %1576 = vdwg.mxu0
  %1577 = vrot.lane.b32.xlu0 %v216, 64
  %v1578 = vpop.permute.xlu0 %1577
  %1579 = vrot.lane.b32.xlu0 %v221, 64
  %v1580 = vpop.permute.xlu0 %1579
  %v1584 = vsel %vm965, %v1136, 0
  %v1587 = vsel %vm965, %v1137, 0
  %1589 = vmatprep.subr.mxu0 0.0
  %1590 = vmatpush1.msra.mxu0 0.0
  %1591 = vmatprep.subr.mxu0 0.0
  %1592 = vmatpush1.msra.mxu0 0.0
  %1593 = vmatprep.subr.mxu0 0.0
  %1594 = vmatpush1.msra.mxu0 0.0
  %1595 = vmatprep.subr.mxu0 0.0
  %1596 = vmatpush1.msra.mxu0 0.0
  %1597 = vmatprep.subr.mxu0 0.0
  %1598 = vmatpush1.msra.mxu0 0.0
  %1599 = vmatprep.subr.mxu0 0.0
  %1600 = vmatpush1.msra.mxu0 0.0
  %1601 = vmatprep.subr.mxu0 0.0
  %1602 = vmatpush1.msra.mxu0 0.0
  %1603 = vmatprep.subr.mxu0 0.0
  %1604 = vmatpush1.msra.mxu0 0.0
  %1605 = vmatprep.subr.mxu0 0.0
  %1606 = vmatpush1.msra.mxu0 0.0
  %1607 = vmatprep.subr.mxu0 0.0
  %1608 = vmatpush1.msra.mxu0 0.0
  %1609 = vmatprep.subr.mxu0 0.0
  %1610 = vmatpush1.msra.mxu0 0.0
  %1611 = vmatprep.subr.mxu0 0.0
  %1612 = vmatpush1.msra.mxu0 0.0
  %1613 = vmatprep.subr.mxu0 0.0
  %1614 = vmatpush1.msra.mxu0 0.0
  %1615 = vmatprep.subr.mxu0 0.0
  %1616 = vmatpush1.msra.mxu0 0.0
  %1617 = vmatprep.subr.mxu0 0.0
  %1618 = vmatpush1.msra.mxu0 %v1580
  %1619 = vmatprep.subr.mxu0 0.0
  %1620 = vmatpush1.msra.mxu0 %v1578
  %1621 = vmatprep.subr.mxu0 0.0
  %1622 = vmatpush2.msra.mxu0 0.0
  %1623 = vmatprep.subr.mxu0 0.0
  %1624 = vmatpush2.msra.mxu0 0.0
  %1625 = vmatprep.subr.mxu0 0.0
  %1626 = vmatpush2.msra.mxu0 0.0
  %1627 = vmatprep.subr.mxu0 0.0
  %1628 = vmatpush2.msra.mxu0 0.0
  %1629 = vmatprep.subr.mxu0 0.0
  %1630 = vmatpush2.msra.mxu0 0.0
  %1631 = vmatprep.subr.mxu0 0.0
  %1632 = vmatpush2.msra.mxu0 0.0
  %1633 = vmatprep.subr.mxu0 0.0
  %1634 = vmatpush2.msra.mxu0 0.0
  %1635 = vmatprep.subr.mxu0 0.0
  %1636 = vmatpush2.msra.mxu0 0.0
  %1637 = vmatprep.subr.mxu0 0.0
  %1638 = vmatpush2.msra.mxu0 0.0
  %1639 = vmatprep.subr.mxu0 0.0
  %1640 = vmatpush2.msra.mxu0 0.0
  %1641 = vmatprep.subr.mxu0 0.0
  %1642 = vmatpush2.msra.mxu0 0.0
  %1643 = vmatprep.subr.mxu0 0.0
  %1644 = vmatpush2.msra.mxu0 0.0
  %1645 = vmatprep.subr.mxu0 0.0
  %1646 = vmatpush2.msra.mxu0 0.0
  %1647 = vmatprep.subr.mxu0 0.0
  %1648 = vmatpush2.msra.mxu0 0.0
  %1649 = vmatprep.subr.mxu0 0.0
  %1650 = vmatpush2.msra.mxu0 0.0
  %1651 = vmatprep.subr.mxu0 0.0
  %1652 = vmatpush2.msra.mxu0 0.0
  %1653 = vmatprep.mubr.f32.mxu0 0.0
  %1654 = vmatmul.mubr.f32.gmra.mxu0 %v1584
  %v1655 = vpop.f32.mrf.mxu0
  %v1656 = vadd.f32 0.0, %v1655
  %v1657 = vpop.f32.mrf.mxu0
  %1658 = vmatprep.mubr.f32.mxu0 0.0
  %1659 = vmatmul.mubr.f32.gmra.mxu0 %v1587
  %v1660 = vpop.f32.mrf.mxu0
  %v1661 = vadd.f32 0.0, %v1660
  %v1662 = vpop.f32.mrf.mxu0
  %1663 = vdwg.mxu0
  %1664 = vrot.lane.b32.xlu0 %v226, 64
  %v1665 = vpop.permute.xlu0 %1664
  %1666 = vrot.lane.b32.xlu0 %v231, 64
  %v1667 = vpop.permute.xlu0 %1666
  %v1671 = vsel %vm965, %v1138, 0
  %v1674 = vsel %vm965, %v1139, 0
  %1676 = vmatprep.subr.mxu0 0.0
  %1677 = vmatpush1.msra.mxu0 0.0
  %1678 = vmatprep.subr.mxu0 0.0
  %1679 = vmatpush1.msra.mxu0 0.0
  %1680 = vmatprep.subr.mxu0 0.0
  %1681 = vmatpush1.msra.mxu0 0.0
  %1682 = vmatprep.subr.mxu0 0.0
  %1683 = vmatpush1.msra.mxu0 0.0
  %1684 = vmatprep.subr.mxu0 0.0
  %1685 = vmatpush1.msra.mxu0 0.0
  %1686 = vmatprep.subr.mxu0 0.0
  %1687 = vmatpush1.msra.mxu0 0.0
  %1688 = vmatprep.subr.mxu0 0.0
  %1689 = vmatpush1.msra.mxu0 0.0
  %1690 = vmatprep.subr.mxu0 0.0
  %1691 = vmatpush1.msra.mxu0 0.0
  %1692 = vmatprep.subr.mxu0 0.0
  %1693 = vmatpush1.msra.mxu0 0.0
  %1694 = vmatprep.subr.mxu0 0.0
  %1695 = vmatpush1.msra.mxu0 0.0
  %1696 = vmatprep.subr.mxu0 0.0
  %1697 = vmatpush1.msra.mxu0 0.0
  %1698 = vmatprep.subr.mxu0 0.0
  %1699 = vmatpush1.msra.mxu0 0.0
  %1700 = vmatprep.subr.mxu0 0.0
  %1701 = vmatpush1.msra.mxu0 0.0
  %1702 = vmatprep.subr.mxu0 0.0
  %1703 = vmatpush1.msra.mxu0 0.0
  %1704 = vmatprep.subr.mxu0 0.0
  %1705 = vmatpush1.msra.mxu0 %v1667
  %1706 = vmatprep.subr.mxu0 0.0
  %1707 = vmatpush1.msra.mxu0 %v1665
  %1708 = vmatprep.subr.mxu0 0.0
  %1709 = vmatpush2.msra.mxu0 0.0
  %1710 = vmatprep.subr.mxu0 0.0
  %1711 = vmatpush2.msra.mxu0 0.0
  %1712 = vmatprep.subr.mxu0 0.0
  %1713 = vmatpush2.msra.mxu0 0.0
  %1714 = vmatprep.subr.mxu0 0.0
  %1715 = vmatpush2.msra.mxu0 0.0
  %1716 = vmatprep.subr.mxu0 0.0
  %1717 = vmatpush2.msra.mxu0 0.0
  %1718 = vmatprep.subr.mxu0 0.0
  %1719 = vmatpush2.msra.mxu0 0.0
  %1720 = vmatprep.subr.mxu0 0.0
  %1721 = vmatpush2.msra.mxu0 0.0
  %1722 = vmatprep.subr.mxu0 0.0
  %1723 = vmatpush2.msra.mxu0 0.0
  %1724 = vmatprep.subr.mxu0 0.0
  %1725 = vmatpush2.msra.mxu0 0.0
  %1726 = vmatprep.subr.mxu0 0.0
  %1727 = vmatpush2.msra.mxu0 0.0
  %1728 = vmatprep.subr.mxu0 0.0
  %1729 = vmatpush2.msra.mxu0 0.0
  %1730 = vmatprep.subr.mxu0 0.0
  %1731 = vmatpush2.msra.mxu0 0.0
  %1732 = vmatprep.subr.mxu0 0.0
  %1733 = vmatpush2.msra.mxu0 0.0
  %1734 = vmatprep.subr.mxu0 0.0
  %1735 = vmatpush2.msra.mxu0 0.0
  %1736 = vmatprep.subr.mxu0 0.0
  %1737 = vmatpush2.msra.mxu0 0.0
  %1738 = vmatprep.subr.mxu0 0.0
  %1739 = vmatpush2.msra.mxu0 0.0
  %1740 = vmatprep.mubr.f32.mxu0 0.0
  %1741 = vmatmul.mubr.f32.gmra.mxu0 %v1671
  %v1742 = vpop.f32.mrf.mxu0
  %v1743 = vadd.f32 0.0, %v1742
  %v1744 = vpop.f32.mrf.mxu0
  %1745 = vmatprep.mubr.f32.mxu0 0.0
  %1746 = vmatmul.mubr.f32.gmra.mxu0 %v1674
  %v1747 = vpop.f32.mrf.mxu0
  %v1748 = vadd.f32 0.0, %v1747
  %v1749 = vpop.f32.mrf.mxu0
  %1750 = vdwg.mxu0
  %1751 = vrot.lane.b32.xlu0 %v236, 64
  %v1752 = vpop.permute.xlu0 %1751
  %1753 = vrot.lane.b32.xlu0 %v241, 64
  %v1754 = vpop.permute.xlu0 %1753
  %v1758 = vsel %vm965, %v1140, 0
  %v1761 = vsel %vm965, %v1141, 0
  %1763 = vmatprep.subr.mxu0 0.0
  %1764 = vmatpush1.msra.mxu0 0.0
  %1765 = vmatprep.subr.mxu0 0.0
  %1766 = vmatpush1.msra.mxu0 0.0
  %1767 = vmatprep.subr.mxu0 0.0
  %1768 = vmatpush1.msra.mxu0 0.0
  %1769 = vmatprep.subr.mxu0 0.0
  %1770 = vmatpush1.msra.mxu0 0.0
  %1771 = vmatprep.subr.mxu0 0.0
  %1772 = vmatpush1.msra.mxu0 0.0
  %1773 = vmatprep.subr.mxu0 0.0
  %1774 = vmatpush1.msra.mxu0 0.0
  %1775 = vmatprep.subr.mxu0 0.0
  %1776 = vmatpush1.msra.mxu0 0.0
  %1777 = vmatprep.subr.mxu0 0.0
  %1778 = vmatpush1.msra.mxu0 0.0
  %1779 = vmatprep.subr.mxu0 0.0
  %1780 = vmatpush1.msra.mxu0 0.0
  %1781 = vmatprep.subr.mxu0 0.0
  %1782 = vmatpush1.msra.mxu0 0.0
  %1783 = vmatprep.subr.mxu0 0.0
  %1784 = vmatpush1.msra.mxu0 0.0
  %1785 = vmatprep.subr.mxu0 0.0
  %1786 = vmatpush1.msra.mxu0 0.0
  %1787 = vmatprep.subr.mxu0 0.0
  %1788 = vmatpush1.msra.mxu0 0.0
  %1789 = vmatprep.subr.mxu0 0.0
  %1790 = vmatpush1.msra.mxu0 0.0
  %1791 = vmatprep.subr.mxu0 0.0
  %1792 = vmatpush1.msra.mxu0 %v1754
  %1793 = vmatprep.subr.mxu0 0.0
  %1794 = vmatpush1.msra.mxu0 %v1752
  %1795 = vmatprep.subr.mxu0 0.0
  %1796 = vmatpush2.msra.mxu0 0.0
  %1797 = vmatprep.subr.mxu0 0.0
  %1798 = vmatpush2.msra.mxu0 0.0
  %1799 = vmatprep.subr.mxu0 0.0
  %1800 = vmatpush2.msra.mxu0 0.0
  %1801 = vmatprep.subr.mxu0 0.0
  %1802 = vmatpush2.msra.mxu0 0.0
  %1803 = vmatprep.subr.mxu0 0.0
  %1804 = vmatpush2.msra.mxu0 0.0
  %1805 = vmatprep.subr.mxu0 0.0
  %1806 = vmatpush2.msra.mxu0 0.0
  %1807 = vmatprep.subr.mxu0 0.0
  %1808 = vmatpush2.msra.mxu0 0.0
  %1809 = vmatprep.subr.mxu0 0.0
  %1810 = vmatpush2.msra.mxu0 0.0
  %1811 = vmatprep.subr.mxu0 0.0
  %1812 = vmatpush2.msra.mxu0 0.0
  %1813 = vmatprep.subr.mxu0 0.0
  %1814 = vmatpush2.msra.mxu0 0.0
  %1815 = vmatprep.subr.mxu0 0.0
  %1816 = vmatpush2.msra.mxu0 0.0
  %1817 = vmatprep.subr.mxu0 0.0
  %1818 = vmatpush2.msra.mxu0 0.0
  %1819 = vmatprep.subr.mxu0 0.0
  %1820 = vmatpush2.msra.mxu0 0.0
  %1821 = vmatprep.subr.mxu0 0.0
  %1822 = vmatpush2.msra.mxu0 0.0
  %1823 = vmatprep.subr.mxu0 0.0
  %1824 = vmatpush2.msra.mxu0 0.0
  %1825 = vmatprep.subr.mxu0 0.0
  %1826 = vmatpush2.msra.mxu0 0.0
  %1827 = vmatprep.mubr.f32.mxu0 0.0
  %1828 = vmatmul.mubr.f32.gmra.mxu0 %v1758
  %v1829 = vpop.f32.mrf.mxu0
  %v1830 = vadd.f32 0.0, %v1829
  %v1831 = vpop.f32.mrf.mxu0
  %1832 = vmatprep.mubr.f32.mxu0 0.0
  %1833 = vmatmul.mubr.f32.gmra.mxu0 %v1761
  %v1834 = vpop.f32.mrf.mxu0
  %v1835 = vadd.f32 0.0, %v1834
  %v1836 = vpop.f32.mrf.mxu0
  %1837 = vdwg.mxu0
  %1838 = vrot.lane.b32.xlu0 %v166, 120
  %v1839 = vpop.permute.xlu0 %1838
  %1840 = vrot.lane.b32.xlu0 %v171, 120
  %v1841 = vpop.permute.xlu0 %1840
  %1842 = vrot.lane.b32.xlu0 %v166, 88
  %v1843 = vpop.permute.xlu0 %1842
  %1844 = vrot.lane.b32.xlu0 %v171, 88
  %v1845 = vpop.permute.xlu0 %1844
  %v1846 = vsel %vm258, %v1839, 0
  %v1848 = vsel %vm258, %v1841, 0
  %v1850 = vsel %vm258, %v1843, 0
  %v1852 = vsel %vm258, %v1845, 0
  %1854 = vmatprep.subr.mxu0 0.0
  %1855 = vmatpush1.xpose.msra.mxu0 0.0
  %1856 = vmatprep.subr.mxu0 0.0
  %1857 = vmatpush1.xpose.msra.mxu0 0.0
  %1858 = vmatprep.subr.mxu0 0.0
  %1859 = vmatpush1.xpose.msra.mxu0 0.0
  %1860 = vmatprep.subr.mxu0 0.0
  %1861 = vmatpush1.xpose.msra.mxu0 0.0
  %1862 = vmatprep.subr.mxu0 0.0
  %1863 = vmatpush1.xpose.msra.mxu0 0.0
  %1864 = vmatprep.subr.mxu0 0.0
  %1865 = vmatpush1.xpose.msra.mxu0 0.0
  %1866 = vmatprep.subr.mxu0 0.0
  %1867 = vmatpush1.xpose.msra.mxu0 0.0
  %1868 = vmatprep.subr.mxu0 0.0
  %1869 = vmatpush1.xpose.msra.mxu0 0.0
  %1870 = vmatprep.subr.mxu0 0.0
  %1871 = vmatpush1.xpose.msra.mxu0 0.0
  %1872 = vmatprep.subr.mxu0 0.0
  %1873 = vmatpush1.xpose.msra.mxu0 0.0
  %1874 = vmatprep.subr.mxu0 0.0
  %1875 = vmatpush1.xpose.msra.mxu0 0.0
  %1876 = vmatprep.subr.mxu0 0.0
  %1877 = vmatpush1.xpose.msra.mxu0 0.0
  %1878 = vmatprep.subr.mxu0 0.0
  %1879 = vmatpush1.xpose.msra.mxu0 0.0
  %1880 = vmatprep.subr.mxu0 0.0
  %1881 = vmatpush1.xpose.msra.mxu0 0.0
  %1882 = vmatprep.subr.mxu0 0.0
  %1883 = vmatpush1.xpose.msra.mxu0 %v1852
  %1884 = vmatprep.subr.mxu0 0.0
  %1885 = vmatpush1.xpose.msra.mxu0 %v1850
  %1886 = vmatprep.subr.mxu0 0.0
  %1887 = vmatpush2.xpose.msra.mxu0 0.0
  %1888 = vmatprep.subr.mxu0 0.0
  %1889 = vmatpush2.xpose.msra.mxu0 0.0
  %1890 = vmatprep.subr.mxu0 0.0
  %1891 = vmatpush2.xpose.msra.mxu0 0.0
  %1892 = vmatprep.subr.mxu0 0.0
  %1893 = vmatpush2.xpose.msra.mxu0 0.0
  %1894 = vmatprep.subr.mxu0 0.0
  %1895 = vmatpush2.xpose.msra.mxu0 0.0
  %1896 = vmatprep.subr.mxu0 0.0
  %1897 = vmatpush2.xpose.msra.mxu0 0.0
  %1898 = vmatprep.subr.mxu0 0.0
  %1899 = vmatpush2.xpose.msra.mxu0 0.0
  %1900 = vmatprep.subr.mxu0 0.0
  %1901 = vmatpush2.xpose.msra.mxu0 0.0
  %1902 = vmatprep.subr.mxu0 0.0
  %1903 = vmatpush2.xpose.msra.mxu0 0.0
  %1904 = vmatprep.subr.mxu0 0.0
  %1905 = vmatpush2.xpose.msra.mxu0 0.0
  %1906 = vmatprep.subr.mxu0 0.0
  %1907 = vmatpush2.xpose.msra.mxu0 0.0
  %1908 = vmatprep.subr.mxu0 0.0
  %1909 = vmatpush2.xpose.msra.mxu0 0.0
  %1910 = vmatprep.subr.mxu0 0.0
  %1911 = vmatpush2.xpose.msra.mxu0 0.0
  %1912 = vmatprep.subr.mxu0 0.0
  %1913 = vmatpush2.xpose.msra.mxu0 0.0
  %1914 = vmatprep.subr.mxu0 0.0
  %1915 = vmatpush2.xpose.msra.mxu0 0.0
  %1916 = vmatprep.subr.mxu0 0.0
  %1917 = vmatpush2.xpose.msra.mxu0 0.0
  %1918 = vmatprep.mubr.f32.mxu0 0.0
  %1919 = vmatmul.mubr.f32.gmra.mxu0 %v1846
  %v1920 = vpop.f32.mrf.mxu0
  %v1921 = vadd.f32 %v246, %v1920
  %v1922 = vpop.f32.mrf.mxu0
  %1923 = vmatprep.mubr.f32.mxu0 0.0
  %1924 = vmatmul.mubr.f32.gmra.mxu0 %v1848
  %v1925 = vpop.f32.mrf.mxu0
  %v1926 = vadd.f32 %v247, %v1925
  %v1927 = vpop.f32.mrf.mxu0
  %1928 = vdwg.mxu0
  %1929 = vrot.lane.b32.xlu0 %v176, 120
  %v1930 = vpop.permute.xlu0 %1929
  %1931 = vrot.lane.b32.xlu0 %v181, 120
  %v1932 = vpop.permute.xlu0 %1931
  %1933 = vrot.lane.b32.xlu0 %v176, 88
  %v1934 = vpop.permute.xlu0 %1933
  %1935 = vrot.lane.b32.xlu0 %v181, 88
  %v1936 = vpop.permute.xlu0 %1935
  %v1937 = vsel %vm258, %v1930, 0
  %v1939 = vsel %vm258, %v1932, 0
  %v1941 = vsel %vm258, %v1934, 0
  %v1943 = vsel %vm258, %v1936, 0
  %1945 = vmatprep.subr.mxu0 0.0
  %1946 = vmatpush1.xpose.msra.mxu0 0.0
  %1947 = vmatprep.subr.mxu0 0.0
  %1948 = vmatpush1.xpose.msra.mxu0 0.0
  %1949 = vmatprep.subr.mxu0 0.0
  %1950 = vmatpush1.xpose.msra.mxu0 0.0
  %1951 = vmatprep.subr.mxu0 0.0
  %1952 = vmatpush1.xpose.msra.mxu0 0.0
  %1953 = vmatprep.subr.mxu0 0.0
  %1954 = vmatpush1.xpose.msra.mxu0 0.0
  %1955 = vmatprep.subr.mxu0 0.0
  %1956 = vmatpush1.xpose.msra.mxu0 0.0
  %1957 = vmatprep.subr.mxu0 0.0
  %1958 = vmatpush1.xpose.msra.mxu0 0.0
  %1959 = vmatprep.subr.mxu0 0.0
  %1960 = vmatpush1.xpose.msra.mxu0 0.0
  %1961 = vmatprep.subr.mxu0 0.0
  %1962 = vmatpush1.xpose.msra.mxu0 0.0
  %1963 = vmatprep.subr.mxu0 0.0
  %1964 = vmatpush1.xpose.msra.mxu0 0.0
  %1965 = vmatprep.subr.mxu0 0.0
  %1966 = vmatpush1.xpose.msra.mxu0 0.0
  %1967 = vmatprep.subr.mxu0 0.0
  %1968 = vmatpush1.xpose.msra.mxu0 0.0
  %1969 = vmatprep.subr.mxu0 0.0
  %1970 = vmatpush1.xpose.msra.mxu0 0.0
  %1971 = vmatprep.subr.mxu0 0.0
  %1972 = vmatpush1.xpose.msra.mxu0 0.0
  %1973 = vmatprep.subr.mxu0 0.0
  %1974 = vmatpush1.xpose.msra.mxu0 %v1943
  %1975 = vmatprep.subr.mxu0 0.0
  %1976 = vmatpush1.xpose.msra.mxu0 %v1941
  %1977 = vmatprep.subr.mxu0 0.0
  %1978 = vmatpush2.xpose.msra.mxu0 0.0
  %1979 = vmatprep.subr.mxu0 0.0
  %1980 = vmatpush2.xpose.msra.mxu0 0.0
  %1981 = vmatprep.subr.mxu0 0.0
  %1982 = vmatpush2.xpose.msra.mxu0 0.0
  %1983 = vmatprep.subr.mxu0 0.0
  %1984 = vmatpush2.xpose.msra.mxu0 0.0
  %1985 = vmatprep.subr.mxu0 0.0
  %1986 = vmatpush2.xpose.msra.mxu0 0.0
  %1987 = vmatprep.subr.mxu0 0.0
  %1988 = vmatpush2.xpose.msra.mxu0 0.0
  %1989 = vmatprep.subr.mxu0 0.0
  %1990 = vmatpush2.xpose.msra.mxu0 0.0
  %1991 = vmatprep.subr.mxu0 0.0
  %1992 = vmatpush2.xpose.msra.mxu0 0.0
  %1993 = vmatprep.subr.mxu0 0.0
  %1994 = vmatpush2.xpose.msra.mxu0 0.0
  %1995 = vmatprep.subr.mxu0 0.0
  %1996 = vmatpush2.xpose.msra.mxu0 0.0
  %1997 = vmatprep.subr.mxu0 0.0
  %1998 = vmatpush2.xpose.msra.mxu0 0.0
  %1999 = vmatprep.subr.mxu0 0.0
  %2000 = vmatpush2.xpose.msra.mxu0 0.0
  %2001 = vmatprep.subr.mxu0 0.0
  %2002 = vmatpush2.xpose.msra.mxu0 0.0
  %2003 = vmatprep.subr.mxu0 0.0
  %2004 = vmatpush2.xpose.msra.mxu0 0.0
  %2005 = vmatprep.subr.mxu0 0.0
  %2006 = vmatpush2.xpose.msra.mxu0 0.0
  %2007 = vmatprep.subr.mxu0 0.0
  %2008 = vmatpush2.xpose.msra.mxu0 0.0
  %2009 = vmatprep.mubr.f32.mxu0 0.0
  %2010 = vmatmul.mubr.f32.gmra.mxu0 %v1937
  %v2011 = vpop.f32.mrf.mxu0
  %v2012 = vadd.f32 %v246, %v2011
  %v2013 = vpop.f32.mrf.mxu0
  %2014 = vmatprep.mubr.f32.mxu0 0.0
  %2015 = vmatmul.mubr.f32.gmra.mxu0 %v1939
  %v2016 = vpop.f32.mrf.mxu0
  %v2017 = vadd.f32 %v247, %v2016
  %v2018 = vpop.f32.mrf.mxu0
  %2019 = vdwg.mxu0
  %2020 = vrot.lane.b32.xlu0 %v186, 120
  %v2021 = vpop.permute.xlu0 %2020
  %2022 = vrot.lane.b32.xlu0 %v191, 120
  %v2023 = vpop.permute.xlu0 %2022
  %2024 = vrot.lane.b32.xlu0 %v186, 88
  %v2025 = vpop.permute.xlu0 %2024
  %2026 = vrot.lane.b32.xlu0 %v191, 88
  %v2027 = vpop.permute.xlu0 %2026
  %v2028 = vsel %vm258, %v2021, 0
  %v2030 = vsel %vm258, %v2023, 0
  %v2032 = vsel %vm258, %v2025, 0
  %v2034 = vsel %vm258, %v2027, 0
  %2036 = vmatprep.subr.mxu0 0.0
  %2037 = vmatpush1.xpose.msra.mxu0 0.0
  %2038 = vmatprep.subr.mxu0 0.0
  %2039 = vmatpush1.xpose.msra.mxu0 0.0
  %2040 = vmatprep.subr.mxu0 0.0
  %2041 = vmatpush1.xpose.msra.mxu0 0.0
  %2042 = vmatprep.subr.mxu0 0.0
  %2043 = vmatpush1.xpose.msra.mxu0 0.0
  %2044 = vmatprep.subr.mxu0 0.0
  %2045 = vmatpush1.xpose.msra.mxu0 0.0
  %2046 = vmatprep.subr.mxu0 0.0
  %2047 = vmatpush1.xpose.msra.mxu0 0.0
  %2048 = vmatprep.subr.mxu0 0.0
  %2049 = vmatpush1.xpose.msra.mxu0 0.0
  %2050 = vmatprep.subr.mxu0 0.0
  %2051 = vmatpush1.xpose.msra.mxu0 0.0
  %2052 = vmatprep.subr.mxu0 0.0
  %2053 = vmatpush1.xpose.msra.mxu0 0.0
  %2054 = vmatprep.subr.mxu0 0.0
  %2055 = vmatpush1.xpose.msra.mxu0 0.0
  %2056 = vmatprep.subr.mxu0 0.0
  %2057 = vmatpush1.xpose.msra.mxu0 0.0
  %2058 = vmatprep.subr.mxu0 0.0
  %2059 = vmatpush1.xpose.msra.mxu0 0.0
  %2060 = vmatprep.subr.mxu0 0.0
  %2061 = vmatpush1.xpose.msra.mxu0 0.0
  %2062 = vmatprep.subr.mxu0 0.0
  %2063 = vmatpush1.xpose.msra.mxu0 0.0
  %2064 = vmatprep.subr.mxu0 0.0
  %2065 = vmatpush1.xpose.msra.mxu0 %v2034
  %2066 = vmatprep.subr.mxu0 0.0
  %2067 = vmatpush1.xpose.msra.mxu0 %v2032
  %2068 = vmatprep.subr.mxu0 0.0
  %2069 = vmatpush2.xpose.msra.mxu0 0.0
  %2070 = vmatprep.subr.mxu0 0.0
  %2071 = vmatpush2.xpose.msra.mxu0 0.0
  %2072 = vmatprep.subr.mxu0 0.0
  %2073 = vmatpush2.xpose.msra.mxu0 0.0
  %2074 = vmatprep.subr.mxu0 0.0
  %2075 = vmatpush2.xpose.msra.mxu0 0.0
  %2076 = vmatprep.subr.mxu0 0.0
  %2077 = vmatpush2.xpose.msra.mxu0 0.0
  %2078 = vmatprep.subr.mxu0 0.0
  %2079 = vmatpush2.xpose.msra.mxu0 0.0
  %2080 = vmatprep.subr.mxu0 0.0
  %2081 = vmatpush2.xpose.msra.mxu0 0.0
  %2082 = vmatprep.subr.mxu0 0.0
  %2083 = vmatpush2.xpose.msra.mxu0 0.0
  %2084 = vmatprep.subr.mxu0 0.0
  %2085 = vmatpush2.xpose.msra.mxu0 0.0
  %2086 = vmatprep.subr.mxu0 0.0
  %2087 = vmatpush2.xpose.msra.mxu0 0.0
  %2088 = vmatprep.subr.mxu0 0.0
  %2089 = vmatpush2.xpose.msra.mxu0 0.0
  %2090 = vmatprep.subr.mxu0 0.0
  %2091 = vmatpush2.xpose.msra.mxu0 0.0
  %2092 = vmatprep.subr.mxu0 0.0
  %2093 = vmatpush2.xpose.msra.mxu0 0.0
  %2094 = vmatprep.subr.mxu0 0.0
  %2095 = vmatpush2.xpose.msra.mxu0 0.0
  %2096 = vmatprep.subr.mxu0 0.0
  %2097 = vmatpush2.xpose.msra.mxu0 0.0
  %2098 = vmatprep.subr.mxu0 0.0
  %2099 = vmatpush2.xpose.msra.mxu0 0.0
  %2100 = vmatprep.mubr.f32.mxu0 0.0
  %2101 = vmatmul.mubr.f32.gmra.mxu0 %v2028
  %v2102 = vpop.f32.mrf.mxu0
  %v2103 = vadd.f32 %v246, %v2102
  %v2104 = vpop.f32.mrf.mxu0
  %2105 = vmatprep.mubr.f32.mxu0 0.0
  %2106 = vmatmul.mubr.f32.gmra.mxu0 %v2030
  %v2107 = vpop.f32.mrf.mxu0
  %v2108 = vadd.f32 %v247, %v2107
  %v2109 = vpop.f32.mrf.mxu0
  %2110 = vdwg.mxu0
  %2111 = vrot.lane.b32.xlu0 %v196, 120
  %v2112 = vpop.permute.xlu0 %2111
  %2113 = vrot.lane.b32.xlu0 %v201, 120
  %v2114 = vpop.permute.xlu0 %2113
  %2115 = vrot.lane.b32.xlu0 %v196, 88
  %v2116 = vpop.permute.xlu0 %2115
  %2117 = vrot.lane.b32.xlu0 %v201, 88
  %v2118 = vpop.permute.xlu0 %2117
  %v2119 = vsel %vm258, %v2112, 0
  %v2121 = vsel %vm258, %v2114, 0
  %v2123 = vsel %vm258, %v2116, 0
  %v2125 = vsel %vm258, %v2118, 0
  %2127 = vmatprep.subr.mxu0 0.0
  %2128 = vmatpush1.xpose.msra.mxu0 0.0
  %2129 = vmatprep.subr.mxu0 0.0
  %2130 = vmatpush1.xpose.msra.mxu0 0.0
  %2131 = vmatprep.subr.mxu0 0.0
  %2132 = vmatpush1.xpose.msra.mxu0 0.0
  %2133 = vmatprep.subr.mxu0 0.0
  %2134 = vmatpush1.xpose.msra.mxu0 0.0
  %2135 = vmatprep.subr.mxu0 0.0
  %2136 = vmatpush1.xpose.msra.mxu0 0.0
  %2137 = vmatprep.subr.mxu0 0.0
  %2138 = vmatpush1.xpose.msra.mxu0 0.0
  %2139 = vmatprep.subr.mxu0 0.0
  %2140 = vmatpush1.xpose.msra.mxu0 0.0
  %2141 = vmatprep.subr.mxu0 0.0
  %2142 = vmatpush1.xpose.msra.mxu0 0.0
  %2143 = vmatprep.subr.mxu0 0.0
  %2144 = vmatpush1.xpose.msra.mxu0 0.0
  %2145 = vmatprep.subr.mxu0 0.0
  %2146 = vmatpush1.xpose.msra.mxu0 0.0
  %2147 = vmatprep.subr.mxu0 0.0
  %2148 = vmatpush1.xpose.msra.mxu0 0.0
  %2149 = vmatprep.subr.mxu0 0.0
  %2150 = vmatpush1.xpose.msra.mxu0 0.0
  %2151 = vmatprep.subr.mxu0 0.0
  %2152 = vmatpush1.xpose.msra.mxu0 0.0
  %2153 = vmatprep.subr.mxu0 0.0
  %2154 = vmatpush1.xpose.msra.mxu0 0.0
  %2155 = vmatprep.subr.mxu0 0.0
  %2156 = vmatpush1.xpose.msra.mxu0 %v2125
  %2157 = vmatprep.subr.mxu0 0.0
  %2158 = vmatpush1.xpose.msra.mxu0 %v2123
  %2159 = vmatprep.subr.mxu0 0.0
  %2160 = vmatpush2.xpose.msra.mxu0 0.0
  %2161 = vmatprep.subr.mxu0 0.0
  %2162 = vmatpush2.xpose.msra.mxu0 0.0
  %2163 = vmatprep.subr.mxu0 0.0
  %2164 = vmatpush2.xpose.msra.mxu0 0.0
  %2165 = vmatprep.subr.mxu0 0.0
  %2166 = vmatpush2.xpose.msra.mxu0 0.0
  %2167 = vmatprep.subr.mxu0 0.0
  %2168 = vmatpush2.xpose.msra.mxu0 0.0
  %2169 = vmatprep.subr.mxu0 0.0
  %2170 = vmatpush2.xpose.msra.mxu0 0.0
  %2171 = vmatprep.subr.mxu0 0.0
  %2172 = vmatpush2.xpose.msra.mxu0 0.0
  %2173 = vmatprep.subr.mxu0 0.0
  %2174 = vmatpush2.xpose.msra.mxu0 0.0
  %2175 = vmatprep.subr.mxu0 0.0
  %2176 = vmatpush2.xpose.msra.mxu0 0.0
  %2177 = vmatprep.subr.mxu0 0.0
  %2178 = vmatpush2.xpose.msra.mxu0 0.0
  %2179 = vmatprep.subr.mxu0 0.0
  %2180 = vmatpush2.xpose.msra.mxu0 0.0
  %2181 = vmatprep.subr.mxu0 0.0
  %2182 = vmatpush2.xpose.msra.mxu0 0.0
  %2183 = vmatprep.subr.mxu0 0.0
  %2184 = vmatpush2.xpose.msra.mxu0 0.0
  %2185 = vmatprep.subr.mxu0 0.0
  %2186 = vmatpush2.xpose.msra.mxu0 0.0
  %2187 = vmatprep.subr.mxu0 0.0
  %2188 = vmatpush2.xpose.msra.mxu0 0.0
  %2189 = vmatprep.subr.mxu0 0.0
  %2190 = vmatpush2.xpose.msra.mxu0 0.0
  %2191 = vmatprep.mubr.f32.mxu0 0.0
  %2192 = vmatmul.mubr.f32.gmra.mxu0 %v2119
  %v2193 = vpop.f32.mrf.mxu0
  %v2194 = vadd.f32 %v246, %v2193
  %v2195 = vpop.f32.mrf.mxu0
  %2196 = vmatprep.mubr.f32.mxu0 0.0
  %2197 = vmatmul.mubr.f32.gmra.mxu0 %v2121
  %v2198 = vpop.f32.mrf.mxu0
  %v2199 = vadd.f32 %v247, %v2198
  %v2200 = vpop.f32.mrf.mxu0
  %2201 = vdwg.mxu0
  %2202 = vrot.lane.b32.xlu0 %v206, 120
  %v2203 = vpop.permute.xlu0 %2202
  %2204 = vrot.lane.b32.xlu0 %v211, 120
  %v2205 = vpop.permute.xlu0 %2204
  %2206 = vrot.lane.b32.xlu0 %v206, 88
  %v2207 = vpop.permute.xlu0 %2206
  %2208 = vrot.lane.b32.xlu0 %v211, 88
  %v2209 = vpop.permute.xlu0 %2208
  %v2210 = vsel %vm258, %v2203, 0
  %v2212 = vsel %vm258, %v2205, 0
  %v2214 = vsel %vm258, %v2207, 0
  %v2216 = vsel %vm258, %v2209, 0
  %2218 = vmatprep.subr.mxu0 0.0
  %2219 = vmatpush1.xpose.msra.mxu0 0.0
  %2220 = vmatprep.subr.mxu0 0.0
  %2221 = vmatpush1.xpose.msra.mxu0 0.0
  %2222 = vmatprep.subr.mxu0 0.0
  %2223 = vmatpush1.xpose.msra.mxu0 0.0
  %2224 = vmatprep.subr.mxu0 0.0
  %2225 = vmatpush1.xpose.msra.mxu0 0.0
  %2226 = vmatprep.subr.mxu0 0.0
  %2227 = vmatpush1.xpose.msra.mxu0 0.0
  %2228 = vmatprep.subr.mxu0 0.0
  %2229 = vmatpush1.xpose.msra.mxu0 0.0
  %2230 = vmatprep.subr.mxu0 0.0
  %2231 = vmatpush1.xpose.msra.mxu0 0.0
  %2232 = vmatprep.subr.mxu0 0.0
  %2233 = vmatpush1.xpose.msra.mxu0 0.0
  %2234 = vmatprep.subr.mxu0 0.0
  %2235 = vmatpush1.xpose.msra.mxu0 0.0
  %2236 = vmatprep.subr.mxu0 0.0
  %2237 = vmatpush1.xpose.msra.mxu0 0.0
  %2238 = vmatprep.subr.mxu0 0.0
  %2239 = vmatpush1.xpose.msra.mxu0 0.0
  %2240 = vmatprep.subr.mxu0 0.0
  %2241 = vmatpush1.xpose.msra.mxu0 0.0
  %2242 = vmatprep.subr.mxu0 0.0
  %2243 = vmatpush1.xpose.msra.mxu0 0.0
  %2244 = vmatprep.subr.mxu0 0.0
  %2245 = vmatpush1.xpose.msra.mxu0 0.0
  %2246 = vmatprep.subr.mxu0 0.0
  %2247 = vmatpush1.xpose.msra.mxu0 %v2216
  %2248 = vmatprep.subr.mxu0 0.0
  %2249 = vmatpush1.xpose.msra.mxu0 %v2214
  %2250 = vmatprep.subr.mxu0 0.0
  %2251 = vmatpush2.xpose.msra.mxu0 0.0
  %2252 = vmatprep.subr.mxu0 0.0
  %2253 = vmatpush2.xpose.msra.mxu0 0.0
  %2254 = vmatprep.subr.mxu0 0.0
  %2255 = vmatpush2.xpose.msra.mxu0 0.0
  %2256 = vmatprep.subr.mxu0 0.0
  %2257 = vmatpush2.xpose.msra.mxu0 0.0
  %2258 = vmatprep.subr.mxu0 0.0
  %2259 = vmatpush2.xpose.msra.mxu0 0.0
  %2260 = vmatprep.subr.mxu0 0.0
  %2261 = vmatpush2.xpose.msra.mxu0 0.0
  %2262 = vmatprep.subr.mxu0 0.0
  %2263 = vmatpush2.xpose.msra.mxu0 0.0
  %2264 = vmatprep.subr.mxu0 0.0
  %2265 = vmatpush2.xpose.msra.mxu0 0.0
  %2266 = vmatprep.subr.mxu0 0.0
  %2267 = vmatpush2.xpose.msra.mxu0 0.0
  %2268 = vmatprep.subr.mxu0 0.0
  %2269 = vmatpush2.xpose.msra.mxu0 0.0
  %2270 = vmatprep.subr.mxu0 0.0
  %2271 = vmatpush2.xpose.msra.mxu0 0.0
  %2272 = vmatprep.subr.mxu0 0.0
  %2273 = vmatpush2.xpose.msra.mxu0 0.0
  %2274 = vmatprep.subr.mxu0 0.0
  %2275 = vmatpush2.xpose.msra.mxu0 0.0
  %2276 = vmatprep.subr.mxu0 0.0
  %2277 = vmatpush2.xpose.msra.mxu0 0.0
  %2278 = vmatprep.subr.mxu0 0.0
  %2279 = vmatpush2.xpose.msra.mxu0 0.0
  %2280 = vmatprep.subr.mxu0 0.0
  %2281 = vmatpush2.xpose.msra.mxu0 0.0
  %2282 = vmatprep.mubr.f32.mxu0 0.0
  %2283 = vmatmul.mubr.f32.gmra.mxu0 %v2210
  %v2284 = vpop.f32.mrf.mxu0
  %v2285 = vadd.f32 %v246, %v2284
  %v2286 = vpop.f32.mrf.mxu0
  %2287 = vmatprep.mubr.f32.mxu0 0.0
  %2288 = vmatmul.mubr.f32.gmra.mxu0 %v2212
  %v2289 = vpop.f32.mrf.mxu0
  %v2290 = vadd.f32 %v247, %v2289
  %v2291 = vpop.f32.mrf.mxu0
  %2292 = vdwg.mxu0
  %2293 = vrot.lane.b32.xlu0 %v216, 120
  %v2294 = vpop.permute.xlu0 %2293
  %2295 = vrot.lane.b32.xlu0 %v221, 120
  %v2296 = vpop.permute.xlu0 %2295
  %2297 = vrot.lane.b32.xlu0 %v216, 88
  %v2298 = vpop.permute.xlu0 %2297
  %2299 = vrot.lane.b32.xlu0 %v221, 88
  %v2300 = vpop.permute.xlu0 %2299
  %v2301 = vsel %vm258, %v2294, 0
  %v2303 = vsel %vm258, %v2296, 0
  %v2305 = vsel %vm258, %v2298, 0
  %v2307 = vsel %vm258, %v2300, 0
  %2309 = vmatprep.subr.mxu0 0.0
  %2310 = vmatpush1.xpose.msra.mxu0 0.0
  %2311 = vmatprep.subr.mxu0 0.0
  %2312 = vmatpush1.xpose.msra.mxu0 0.0
  %2313 = vmatprep.subr.mxu0 0.0
  %2314 = vmatpush1.xpose.msra.mxu0 0.0
  %2315 = vmatprep.subr.mxu0 0.0
  %2316 = vmatpush1.xpose.msra.mxu0 0.0
  %2317 = vmatprep.subr.mxu0 0.0
  %2318 = vmatpush1.xpose.msra.mxu0 0.0
  %2319 = vmatprep.subr.mxu0 0.0
  %2320 = vmatpush1.xpose.msra.mxu0 0.0
  %2321 = vmatprep.subr.mxu0 0.0
  %2322 = vmatpush1.xpose.msra.mxu0 0.0
  %2323 = vmatprep.subr.mxu0 0.0
  %2324 = vmatpush1.xpose.msra.mxu0 0.0
  %2325 = vmatprep.subr.mxu0 0.0
  %2326 = vmatpush1.xpose.msra.mxu0 0.0
  %2327 = vmatprep.subr.mxu0 0.0
  %2328 = vmatpush1.xpose.msra.mxu0 0.0
  %2329 = vmatprep.subr.mxu0 0.0
  %2330 = vmatpush1.xpose.msra.mxu0 0.0
  %2331 = vmatprep.subr.mxu0 0.0
  %2332 = vmatpush1.xpose.msra.mxu0 0.0
  %2333 = vmatprep.subr.mxu0 0.0
  %2334 = vmatpush1.xpose.msra.mxu0 0.0
  %2335 = vmatprep.subr.mxu0 0.0
  %2336 = vmatpush1.xpose.msra.mxu0 0.0
  %2337 = vmatprep.subr.mxu0 0.0
  %2338 = vmatpush1.xpose.msra.mxu0 %v2307
  %2339 = vmatprep.subr.mxu0 0.0
  %2340 = vmatpush1.xpose.msra.mxu0 %v2305
  %2341 = vmatprep.subr.mxu0 0.0
  %2342 = vmatpush2.xpose.msra.mxu0 0.0
  %2343 = vmatprep.subr.mxu0 0.0
  %2344 = vmatpush2.xpose.msra.mxu0 0.0
  %2345 = vmatprep.subr.mxu0 0.0
  %2346 = vmatpush2.xpose.msra.mxu0 0.0
  %2347 = vmatprep.subr.mxu0 0.0
  %2348 = vmatpush2.xpose.msra.mxu0 0.0
  %2349 = vmatprep.subr.mxu0 0.0
  %2350 = vmatpush2.xpose.msra.mxu0 0.0
  %2351 = vmatprep.subr.mxu0 0.0
  %2352 = vmatpush2.xpose.msra.mxu0 0.0
  %2353 = vmatprep.subr.mxu0 0.0
  %2354 = vmatpush2.xpose.msra.mxu0 0.0
  %2355 = vmatprep.subr.mxu0 0.0
  %2356 = vmatpush2.xpose.msra.mxu0 0.0
  %2357 = vmatprep.subr.mxu0 0.0
  %2358 = vmatpush2.xpose.msra.mxu0 0.0
  %2359 = vmatprep.subr.mxu0 0.0
  %2360 = vmatpush2.xpose.msra.mxu0 0.0
  %2361 = vmatprep.subr.mxu0 0.0
  %2362 = vmatpush2.xpose.msra.mxu0 0.0
  %2363 = vmatprep.subr.mxu0 0.0
  %2364 = vmatpush2.xpose.msra.mxu0 0.0
  %2365 = vmatprep.subr.mxu0 0.0
  %2366 = vmatpush2.xpose.msra.mxu0 0.0
  %2367 = vmatprep.subr.mxu0 0.0
  %2368 = vmatpush2.xpose.msra.mxu0 0.0
  %2369 = vmatprep.subr.mxu0 0.0
  %2370 = vmatpush2.xpose.msra.mxu0 0.0
  %2371 = vmatprep.subr.mxu0 0.0
  %2372 = vmatpush2.xpose.msra.mxu0 0.0
  %2373 = vmatprep.mubr.f32.mxu0 0.0
  %2374 = vmatmul.mubr.f32.gmra.mxu0 %v2301
  %v2375 = vpop.f32.mrf.mxu0
  %v2376 = vadd.f32 %v246, %v2375
  %v2377 = vpop.f32.mrf.mxu0
  %2378 = vmatprep.mubr.f32.mxu0 0.0
  %2379 = vmatmul.mubr.f32.gmra.mxu0 %v2303
  %v2380 = vpop.f32.mrf.mxu0
  %v2381 = vadd.f32 %v247, %v2380
  %v2382 = vpop.f32.mrf.mxu0
  %2383 = vdwg.mxu0
  %2384 = vrot.lane.b32.xlu0 %v226, 120
  %v2385 = vpop.permute.xlu0 %2384
  %2386 = vrot.lane.b32.xlu0 %v231, 120
  %v2387 = vpop.permute.xlu0 %2386
  %2388 = vrot.lane.b32.xlu0 %v226, 88
  %v2389 = vpop.permute.xlu0 %2388
  %2390 = vrot.lane.b32.xlu0 %v231, 88
  %v2391 = vpop.permute.xlu0 %2390
  %v2392 = vsel %vm258, %v2385, 0
  %v2394 = vsel %vm258, %v2387, 0
  %v2396 = vsel %vm258, %v2389, 0
  %v2398 = vsel %vm258, %v2391, 0
  %2400 = vmatprep.subr.mxu0 0.0
  %2401 = vmatpush1.xpose.msra.mxu0 0.0
  %2402 = vmatprep.subr.mxu0 0.0
  %2403 = vmatpush1.xpose.msra.mxu0 0.0
  %2404 = vmatprep.subr.mxu0 0.0
  %2405 = vmatpush1.xpose.msra.mxu0 0.0
  %2406 = vmatprep.subr.mxu0 0.0
  %2407 = vmatpush1.xpose.msra.mxu0 0.0
  %2408 = vmatprep.subr.mxu0 0.0
  %2409 = vmatpush1.xpose.msra.mxu0 0.0
  %2410 = vmatprep.subr.mxu0 0.0
  %2411 = vmatpush1.xpose.msra.mxu0 0.0
  %2412 = vmatprep.subr.mxu0 0.0
  %2413 = vmatpush1.xpose.msra.mxu0 0.0
  %2414 = vmatprep.subr.mxu0 0.0
  %2415 = vmatpush1.xpose.msra.mxu0 0.0
  %2416 = vmatprep.subr.mxu0 0.0
  %2417 = vmatpush1.xpose.msra.mxu0 0.0
  %2418 = vmatprep.subr.mxu0 0.0
  %2419 = vmatpush1.xpose.msra.mxu0 0.0
  %2420 = vmatprep.subr.mxu0 0.0
  %2421 = vmatpush1.xpose.msra.mxu0 0.0
  %2422 = vmatprep.subr.mxu0 0.0
  %2423 = vmatpush1.xpose.msra.mxu0 0.0
  %2424 = vmatprep.subr.mxu0 0.0
  %2425 = vmatpush1.xpose.msra.mxu0 0.0
  %2426 = vmatprep.subr.mxu0 0.0
  %2427 = vmatpush1.xpose.msra.mxu0 0.0
  %2428 = vmatprep.subr.mxu0 0.0
  %2429 = vmatpush1.xpose.msra.mxu0 %v2398
  %2430 = vmatprep.subr.mxu0 0.0
  %2431 = vmatpush1.xpose.msra.mxu0 %v2396
  %2432 = vmatprep.subr.mxu0 0.0
  %2433 = vmatpush2.xpose.msra.mxu0 0.0
  %2434 = vmatprep.subr.mxu0 0.0
  %2435 = vmatpush2.xpose.msra.mxu0 0.0
  %2436 = vmatprep.subr.mxu0 0.0
  %2437 = vmatpush2.xpose.msra.mxu0 0.0
  %2438 = vmatprep.subr.mxu0 0.0
  %2439 = vmatpush2.xpose.msra.mxu0 0.0
  %2440 = vmatprep.subr.mxu0 0.0
  %2441 = vmatpush2.xpose.msra.mxu0 0.0
  %2442 = vmatprep.subr.mxu0 0.0
  %2443 = vmatpush2.xpose.msra.mxu0 0.0
  %2444 = vmatprep.subr.mxu0 0.0
  %2445 = vmatpush2.xpose.msra.mxu0 0.0
  %2446 = vmatprep.subr.mxu0 0.0
  %2447 = vmatpush2.xpose.msra.mxu0 0.0
  %2448 = vmatprep.subr.mxu0 0.0
  %2449 = vmatpush2.xpose.msra.mxu0 0.0
  %2450 = vmatprep.subr.mxu0 0.0
  %2451 = vmatpush2.xpose.msra.mxu0 0.0
  %2452 = vmatprep.subr.mxu0 0.0
  %2453 = vmatpush2.xpose.msra.mxu0 0.0
  %2454 = vmatprep.subr.mxu0 0.0
  %2455 = vmatpush2.xpose.msra.mxu0 0.0
  %2456 = vmatprep.subr.mxu0 0.0
  %2457 = vmatpush2.xpose.msra.mxu0 0.0
  %2458 = vmatprep.subr.mxu0 0.0
  %2459 = vmatpush2.xpose.msra.mxu0 0.0
  %2460 = vmatprep.subr.mxu0 0.0
  %2461 = vmatpush2.xpose.msra.mxu0 0.0
  %2462 = vmatprep.subr.mxu0 0.0
  %2463 = vmatpush2.xpose.msra.mxu0 0.0
  %2464 = vmatprep.mubr.f32.mxu0 0.0
  %2465 = vmatmul.mubr.f32.gmra.mxu0 %v2392
  %v2466 = vpop.f32.mrf.mxu0
  %v2467 = vadd.f32 %v246, %v2466
  %v2468 = vpop.f32.mrf.mxu0
  %2469 = vmatprep.mubr.f32.mxu0 0.0
  %2470 = vmatmul.mubr.f32.gmra.mxu0 %v2394
  %v2471 = vpop.f32.mrf.mxu0
  %v2472 = vadd.f32 %v247, %v2471
  %v2473 = vpop.f32.mrf.mxu0
  %2474 = vdwg.mxu0
  %2475 = vrot.lane.b32.xlu0 %v236, 120
  %v2476 = vpop.permute.xlu0 %2475
  %2477 = vrot.lane.b32.xlu0 %v241, 120
  %v2478 = vpop.permute.xlu0 %2477
  %2479 = vrot.lane.b32.xlu0 %v236, 88
  %v2480 = vpop.permute.xlu0 %2479
  %2481 = vrot.lane.b32.xlu0 %v241, 88
  %v2482 = vpop.permute.xlu0 %2481
  %v2483 = vsel %vm258, %v2476, 0
  %v2485 = vsel %vm258, %v2478, 0
  %v2487 = vsel %vm258, %v2480, 0
  %v2489 = vsel %vm258, %v2482, 0
  %2491 = vmatprep.subr.mxu0 0.0
  %2492 = vmatpush1.xpose.msra.mxu0 0.0
  %2493 = vmatprep.subr.mxu0 0.0
  %2494 = vmatpush1.xpose.msra.mxu0 0.0
  %2495 = vmatprep.subr.mxu0 0.0
  %2496 = vmatpush1.xpose.msra.mxu0 0.0
  %2497 = vmatprep.subr.mxu0 0.0
  %2498 = vmatpush1.xpose.msra.mxu0 0.0
  %2499 = vmatprep.subr.mxu0 0.0
  %2500 = vmatpush1.xpose.msra.mxu0 0.0
  %2501 = vmatprep.subr.mxu0 0.0
  %2502 = vmatpush1.xpose.msra.mxu0 0.0
  %2503 = vmatprep.subr.mxu0 0.0
  %2504 = vmatpush1.xpose.msra.mxu0 0.0
  %2505 = vmatprep.subr.mxu0 0.0
  %2506 = vmatpush1.xpose.msra.mxu0 0.0
  %2507 = vmatprep.subr.mxu0 0.0
  %2508 = vmatpush1.xpose.msra.mxu0 0.0
  %2509 = vmatprep.subr.mxu0 0.0
  %2510 = vmatpush1.xpose.msra.mxu0 0.0
  %2511 = vmatprep.subr.mxu0 0.0
  %2512 = vmatpush1.xpose.msra.mxu0 0.0
  %2513 = vmatprep.subr.mxu0 0.0
  %2514 = vmatpush1.xpose.msra.mxu0 0.0
  %2515 = vmatprep.subr.mxu0 0.0
  %2516 = vmatpush1.xpose.msra.mxu0 0.0
  %2517 = vmatprep.subr.mxu0 0.0
  %2518 = vmatpush1.xpose.msra.mxu0 0.0
  %2519 = vmatprep.subr.mxu0 0.0
  %2520 = vmatpush1.xpose.msra.mxu0 %v2489
  %2521 = vmatprep.subr.mxu0 0.0
  %2522 = vmatpush1.xpose.msra.mxu0 %v2487
  %2523 = vmatprep.subr.mxu0 0.0
  %2524 = vmatpush2.xpose.msra.mxu0 0.0
  %2525 = vmatprep.subr.mxu0 0.0
  %2526 = vmatpush2.xpose.msra.mxu0 0.0
  %2527 = vmatprep.subr.mxu0 0.0
  %2528 = vmatpush2.xpose.msra.mxu0 0.0
  %2529 = vmatprep.subr.mxu0 0.0
  %2530 = vmatpush2.xpose.msra.mxu0 0.0
  %2531 = vmatprep.subr.mxu0 0.0
  %2532 = vmatpush2.xpose.msra.mxu0 0.0
  %2533 = vmatprep.subr.mxu0 0.0
  %2534 = vmatpush2.xpose.msra.mxu0 0.0
  %2535 = vmatprep.subr.mxu0 0.0
  %2536 = vmatpush2.xpose.msra.mxu0 0.0
  %2537 = vmatprep.subr.mxu0 0.0
  %2538 = vmatpush2.xpose.msra.mxu0 0.0
  %2539 = vmatprep.subr.mxu0 0.0
  %2540 = vmatpush2.xpose.msra.mxu0 0.0
  %2541 = vmatprep.subr.mxu0 0.0
  %2542 = vmatpush2.xpose.msra.mxu0 0.0
  %2543 = vmatprep.subr.mxu0 0.0
  %2544 = vmatpush2.xpose.msra.mxu0 0.0
  %2545 = vmatprep.subr.mxu0 0.0
  %2546 = vmatpush2.xpose.msra.mxu0 0.0
  %2547 = vmatprep.subr.mxu0 0.0
  %2548 = vmatpush2.xpose.msra.mxu0 0.0
  %2549 = vmatprep.subr.mxu0 0.0
  %2550 = vmatpush2.xpose.msra.mxu0 0.0
  %2551 = vmatprep.subr.mxu0 0.0
  %2552 = vmatpush2.xpose.msra.mxu0 0.0
  %2553 = vmatprep.subr.mxu0 0.0
  %2554 = vmatpush2.xpose.msra.mxu0 0.0
  %2555 = vmatprep.mubr.f32.mxu0 0.0
  %2556 = vmatmul.mubr.f32.gmra.mxu0 %v2483
  %v2557 = vpop.f32.mrf.mxu0
  %v2558 = vadd.f32 %v246, %v2557
  %v2559 = vpop.f32.mrf.mxu0
  %2560 = vmatprep.mubr.f32.mxu0 0.0
  %2561 = vmatmul.mubr.f32.gmra.mxu0 %v2485
  %v2562 = vpop.f32.mrf.mxu0
  %v2563 = vadd.f32 %v247, %v2562
  %v2564 = vpop.f32.mrf.mxu0
  %2565 = vdwg.mxu0
  %v2566 = vsel %vm965, %v1921, -inf
  %2567 = vmax.xlane.f32.xlu0 %v2566
  %v2568 = vpop.xlane.xlu0 %2567
  %v2569 = vsel %vm965, %v1926, -inf
  %2570 = vmax.xlane.f32.xlu0 %v2569
  %v2571 = vpop.xlane.xlu0 %2570
  %v2572 = vsel %vm965, %v2012, -inf
  %2573 = vmax.xlane.f32.xlu0 %v2572
  %v2574 = vpop.xlane.xlu0 %2573
  %v2575 = vsel %vm965, %v2017, -inf
  %2576 = vmax.xlane.f32.xlu0 %v2575
  %v2577 = vpop.xlane.xlu0 %2576
  %v2578 = vsel %vm965, %v2103, -inf
  %2579 = vmax.xlane.f32.xlu0 %v2578
  %v2580 = vpop.xlane.xlu0 %2579
  %v2581 = vsel %vm965, %v2108, -inf
  %2582 = vmax.xlane.f32.xlu0 %v2581
  %v2583 = vpop.xlane.xlu0 %2582
  %v2584 = vsel %vm965, %v2194, -inf
  %2585 = vmax.xlane.f32.xlu0 %v2584
  %v2586 = vpop.xlane.xlu0 %2585
  %v2587 = vsel %vm965, %v2199, -inf
  %2588 = vmax.xlane.f32.xlu0 %v2587
  %v2589 = vpop.xlane.xlu0 %2588
  %v2590 = vsel %vm965, %v2285, -inf
  %2591 = vmax.xlane.f32.xlu0 %v2590
  %v2592 = vpop.xlane.xlu0 %2591
  %v2593 = vsel %vm965, %v2290, -inf
  %2594 = vmax.xlane.f32.xlu0 %v2593
  %v2595 = vpop.xlane.xlu0 %2594
  %v2596 = vsel %vm965, %v2376, -inf
  %2597 = vmax.xlane.f32.xlu0 %v2596
  %v2598 = vpop.xlane.xlu0 %2597
  %v2599 = vsel %vm965, %v2381, -inf
  %2600 = vmax.xlane.f32.xlu0 %v2599
  %v2601 = vpop.xlane.xlu0 %2600
  %v2602 = vsel %vm965, %v2467, -inf
  %2603 = vmax.xlane.f32.xlu0 %v2602
  %v2604 = vpop.xlane.xlu0 %2603
  %v2605 = vsel %vm965, %v2472, -inf
  %2606 = vmax.xlane.f32.xlu0 %v2605
  %v2607 = vpop.xlane.xlu0 %2606
  %v2608 = vsel %vm965, %v2558, -inf
  %2609 = vmax.xlane.f32.xlu0 %v2608
  %v2610 = vpop.xlane.xlu0 %2609
  %v2611 = vsel %vm965, %v2563, -inf
  %2612 = vmax.xlane.f32.xlu0 %v2611
  %v2613 = vpop.xlane.xlu0 %2612
  %v2614 = vsub.f32 %v1921, %v2568
  %v2615 = vsub.f32 %v1926, %v2571
  %v2616 = vsub.f32 %v2012, %v2574
  %v2617 = vsub.f32 %v2017, %v2577
  %v2618 = vsub.f32 %v2103, %v2580
  %v2619 = vsub.f32 %v2108, %v2583
  %v2620 = vsub.f32 %v2194, %v2586
  %v2621 = vsub.f32 %v2199, %v2589
  %v2622 = vsub.f32 %v2285, %v2592
  %v2623 = vsub.f32 %v2290, %v2595
  %v2624 = vsub.f32 %v2376, %v2598
  %v2625 = vsub.f32 %v2381, %v2601
  %v2626 = vsub.f32 %v2467, %v2604
  %v2627 = vsub.f32 %v2472, %v2607
  %v2628 = vsub.f32 %v2558, %v2610
  %v2629 = vsub.f32 %v2563, %v2613
  %v2630 = vmul.f32 %v2614, 1.442695
  %v2631 = vpow.pop %v2630
  %v2632 = vmul.f32 %v2615, 1.442695
  %v2633 = vpow.pop %v2632
  %v2634 = vmul.f32 %v2616, 1.442695
  %v2635 = vpow.pop %v2634
  %v2636 = vmul.f32 %v2617, 1.442695
  %v2637 = vpow.pop %v2636
  %v2638 = vmul.f32 %v2618, 1.442695
  %v2639 = vpow.pop %v2638
  %v2640 = vmul.f32 %v2619, 1.442695
  %v2641 = vpow.pop %v2640
  %v2642 = vmul.f32 %v2620, 1.442695
  %v2643 = vpow.pop %v2642
  %v2644 = vmul.f32 %v2621, 1.442695
  %v2645 = vpow.pop %v2644
  %v2646 = vmul.f32 %v2622, 1.442695
  %v2647 = vpow.pop %v2646
  %v2648 = vmul.f32 %v2623, 1.442695
  %v2649 = vpow.pop %v2648
  %v2650 = vmul.f32 %v2624, 1.442695
  %v2651 = vpow.pop %v2650
  %v2652 = vmul.f32 %v2625, 1.442695
  %v2653 = vpow.pop %v2652
  %v2654 = vmul.f32 %v2626, 1.442695
  %v2655 = vpow.pop %v2654
  %v2656 = vmul.f32 %v2627, 1.442695
  %v2657 = vpow.pop %v2656
  %v2658 = vmul.f32 %v2628, 1.442695
  %v2659 = vpow.pop %v2658
  %v2660 = vmul.f32 %v2629, 1.442695
  %v2661 = vpow.pop %v2660
  %v2662 = vsel %vm965, %v2631, 0.0
  %2663 = vadd.xlane.f32.xlu0 %v2662
  %v2664 = vpop.xlane.xlu0 %2663
  %v2665 = vsel %vm965, %v2633, 0.0
  %2666 = vadd.xlane.f32.xlu0 %v2665
  %v2667 = vpop.xlane.xlu0 %2666
  %v2668 = vsel %vm965, %v2635, 0.0
  %2669 = vadd.xlane.f32.xlu0 %v2668
  %v2670 = vpop.xlane.xlu0 %2669
  %v2671 = vsel %vm965, %v2637, 0.0
  %2672 = vadd.xlane.f32.xlu0 %v2671
  %v2673 = vpop.xlane.xlu0 %2672
  %v2674 = vsel %vm965, %v2639, 0.0
  %2675 = vadd.xlane.f32.xlu0 %v2674
  %v2676 = vpop.xlane.xlu0 %2675
  %v2677 = vsel %vm965, %v2641, 0.0
  %2678 = vadd.xlane.f32.xlu0 %v2677
  %v2679 = vpop.xlane.xlu0 %2678
  %v2680 = vsel %vm965, %v2643, 0.0
  %2681 = vadd.xlane.f32.xlu0 %v2680
  %v2682 = vpop.xlane.xlu0 %2681
  %v2683 = vsel %vm965, %v2645, 0.0
  %2684 = vadd.xlane.f32.xlu0 %v2683
  %v2685 = vpop.xlane.xlu0 %2684
  %v2686 = vsel %vm965, %v2647, 0.0
  %2687 = vadd.xlane.f32.xlu0 %v2686
  %v2688 = vpop.xlane.xlu0 %2687
  %v2689 = vsel %vm965, %v2649, 0.0
  %2690 = vadd.xlane.f32.xlu0 %v2689
  %v2691 = vpop.xlane.xlu0 %2690
  %v2692 = vsel %vm965, %v2651, 0.0
  %2693 = vadd.xlane.f32.xlu0 %v2692
  %v2694 = vpop.xlane.xlu0 %2693
  %v2695 = vsel %vm965, %v2653, 0.0
  %2696 = vadd.xlane.f32.xlu0 %v2695
  %v2697 = vpop.xlane.xlu0 %2696
  %v2698 = vsel %vm965, %v2655, 0.0
  %2699 = vadd.xlane.f32.xlu0 %v2698
  %v2700 = vpop.xlane.xlu0 %2699
  %v2701 = vsel %vm965, %v2657, 0.0
  %2702 = vadd.xlane.f32.xlu0 %v2701
  %v2703 = vpop.xlane.xlu0 %2702
  %v2704 = vsel %vm965, %v2659, 0.0
  %2705 = vadd.xlane.f32.xlu0 %v2704
  %v2706 = vpop.xlane.xlu0 %2705
  %v2707 = vsel %vm965, %v2661, 0.0
  %2708 = vadd.xlane.f32.xlu0 %v2707
  %v2709 = vpop.xlane.xlu0 %2708
  %v2710 = vrcp.pop %v2664
  %v2711 = vrcp.pop %v2667
  %v2712 = vrcp.pop %v2670
  %v2713 = vrcp.pop %v2673
  %v2714 = vrcp.pop %v2676
  %v2715 = vrcp.pop %v2679
  %v2716 = vrcp.pop %v2682
  %v2717 = vrcp.pop %v2685
  %v2718 = vrcp.pop %v2688
  %v2719 = vrcp.pop %v2691
  %v2720 = vrcp.pop %v2694
  %v2721 = vrcp.pop %v2697
  %v2722 = vrcp.pop %v2700
  %v2723 = vrcp.pop %v2703
  %v2724 = vrcp.pop %v2706
  %v2725 = vrcp.pop %v2709
  %v2726 = vmul.f32 %v2631, %v2710
  %v2727 = vmul.f32 %v2633, %v2711
  %v2728 = vmul.f32 %v2635, %v2712
  %v2729 = vmul.f32 %v2637, %v2713
  %v2730 = vmul.f32 %v2639, %v2714
  %v2731 = vmul.f32 %v2641, %v2715
  %v2732 = vmul.f32 %v2643, %v2716
  %v2733 = vmul.f32 %v2645, %v2717
  %v2734 = vmul.f32 %v2647, %v2718
  %v2735 = vmul.f32 %v2649, %v2719
  %v2736 = vmul.f32 %v2651, %v2720
  %v2737 = vmul.f32 %v2653, %v2721
  %v2738 = vmul.f32 %v2655, %v2722
  %v2739 = vmul.f32 %v2657, %v2723
  %v2740 = vmul.f32 %v2659, %v2724
  %v2741 = vmul.f32 %v2661, %v2725
  %2742 = vrot.lane.b32.xlu0 %v166, 56
  %v2743 = vpop.permute.xlu0 %2742
  %2744 = vrot.lane.b32.xlu0 %v171, 56
  %v2745 = vpop.permute.xlu0 %2744
  %v2749 = vsel %vm965, %v2726, 0
  %v2752 = vsel %vm965, %v2727, 0
  %2754 = vmatprep.subr.mxu0 0.0
  %2755 = vmatpush1.msra.mxu0 0.0
  %2756 = vmatprep.subr.mxu0 0.0
  %2757 = vmatpush1.msra.mxu0 0.0
  %2758 = vmatprep.subr.mxu0 0.0
  %2759 = vmatpush1.msra.mxu0 0.0
  %2760 = vmatprep.subr.mxu0 0.0
  %2761 = vmatpush1.msra.mxu0 0.0
  %2762 = vmatprep.subr.mxu0 0.0
  %2763 = vmatpush1.msra.mxu0 0.0
  %2764 = vmatprep.subr.mxu0 0.0
  %2765 = vmatpush1.msra.mxu0 0.0
  %2766 = vmatprep.subr.mxu0 0.0
  %2767 = vmatpush1.msra.mxu0 0.0
  %2768 = vmatprep.subr.mxu0 0.0
  %2769 = vmatpush1.msra.mxu0 0.0
  %2770 = vmatprep.subr.mxu0 0.0
  %2771 = vmatpush1.msra.mxu0 0.0
  %2772 = vmatprep.subr.mxu0 0.0
  %2773 = vmatpush1.msra.mxu0 0.0
  %2774 = vmatprep.subr.mxu0 0.0
  %2775 = vmatpush1.msra.mxu0 0.0
  %2776 = vmatprep.subr.mxu0 0.0
  %2777 = vmatpush1.msra.mxu0 0.0
  %2778 = vmatprep.subr.mxu0 0.0
  %2779 = vmatpush1.msra.mxu0 0.0
  %2780 = vmatprep.subr.mxu0 0.0
  %2781 = vmatpush1.msra.mxu0 0.0
  %2782 = vmatprep.subr.mxu0 0.0
  %2783 = vmatpush1.msra.mxu0 %v2745
  %2784 = vmatprep.subr.mxu0 0.0
  %2785 = vmatpush1.msra.mxu0 %v2743
  %2786 = vmatprep.subr.mxu0 0.0
  %2787 = vmatpush2.msra.mxu0 0.0
  %2788 = vmatprep.subr.mxu0 0.0
  %2789 = vmatpush2.msra.mxu0 0.0
  %2790 = vmatprep.subr.mxu0 0.0
  %2791 = vmatpush2.msra.mxu0 0.0
  %2792 = vmatprep.subr.mxu0 0.0
  %2793 = vmatpush2.msra.mxu0 0.0
  %2794 = vmatprep.subr.mxu0 0.0
  %2795 = vmatpush2.msra.mxu0 0.0
  %2796 = vmatprep.subr.mxu0 0.0
  %2797 = vmatpush2.msra.mxu0 0.0
  %2798 = vmatprep.subr.mxu0 0.0
  %2799 = vmatpush2.msra.mxu0 0.0
  %2800 = vmatprep.subr.mxu0 0.0
  %2801 = vmatpush2.msra.mxu0 0.0
  %2802 = vmatprep.subr.mxu0 0.0
  %2803 = vmatpush2.msra.mxu0 0.0
  %2804 = vmatprep.subr.mxu0 0.0
  %2805 = vmatpush2.msra.mxu0 0.0
  %2806 = vmatprep.subr.mxu0 0.0
  %2807 = vmatpush2.msra.mxu0 0.0
  %2808 = vmatprep.subr.mxu0 0.0
  %2809 = vmatpush2.msra.mxu0 0.0
  %2810 = vmatprep.subr.mxu0 0.0
  %2811 = vmatpush2.msra.mxu0 0.0
  %2812 = vmatprep.subr.mxu0 0.0
  %2813 = vmatpush2.msra.mxu0 0.0
  %2814 = vmatprep.subr.mxu0 0.0
  %2815 = vmatpush2.msra.mxu0 0.0
  %2816 = vmatprep.subr.mxu0 0.0
  %2817 = vmatpush2.msra.mxu0 0.0
  %2818 = vmatprep.mubr.f32.mxu0 0.0
  %2819 = vmatmul.mubr.f32.gmra.mxu0 %v2749
  %v2820 = vpop.f32.mrf.mxu0
  %v2821 = vadd.f32 0.0, %v2820
  %v2822 = vpop.f32.mrf.mxu0
  %2823 = vmatprep.mubr.f32.mxu0 0.0
  %2824 = vmatmul.mubr.f32.gmra.mxu0 %v2752
  %v2825 = vpop.f32.mrf.mxu0
  %v2826 = vadd.f32 0.0, %v2825
  %v2827 = vpop.f32.mrf.mxu0
  %2828 = vdwg.mxu0
  %2829 = vrot.lane.b32.xlu0 %v176, 56
  %v2830 = vpop.permute.xlu0 %2829
  %2831 = vrot.lane.b32.xlu0 %v181, 56
  %v2832 = vpop.permute.xlu0 %2831
  %v2836 = vsel %vm965, %v2728, 0
  %v2839 = vsel %vm965, %v2729, 0
  %2841 = vmatprep.subr.mxu0 0.0
  %2842 = vmatpush1.msra.mxu0 0.0
  %2843 = vmatprep.subr.mxu0 0.0
  %2844 = vmatpush1.msra.mxu0 0.0
  %2845 = vmatprep.subr.mxu0 0.0
  %2846 = vmatpush1.msra.mxu0 0.0
  %2847 = vmatprep.subr.mxu0 0.0
  %2848 = vmatpush1.msra.mxu0 0.0
  %2849 = vmatprep.subr.mxu0 0.0
  %2850 = vmatpush1.msra.mxu0 0.0
  %2851 = vmatprep.subr.mxu0 0.0
  %2852 = vmatpush1.msra.mxu0 0.0
  %2853 = vmatprep.subr.mxu0 0.0
  %2854 = vmatpush1.msra.mxu0 0.0
  %2855 = vmatprep.subr.mxu0 0.0
  %2856 = vmatpush1.msra.mxu0 0.0
  %2857 = vmatprep.subr.mxu0 0.0
  %2858 = vmatpush1.msra.mxu0 0.0
  %2859 = vmatprep.subr.mxu0 0.0
  %2860 = vmatpush1.msra.mxu0 0.0
  %2861 = vmatprep.subr.mxu0 0.0
  %2862 = vmatpush1.msra.mxu0 0.0
  %2863 = vmatprep.subr.mxu0 0.0
  %2864 = vmatpush1.msra.mxu0 0.0
  %2865 = vmatprep.subr.mxu0 0.0
  %2866 = vmatpush1.msra.mxu0 0.0
  %2867 = vmatprep.subr.mxu0 0.0
  %2868 = vmatpush1.msra.mxu0 0.0
  %2869 = vmatprep.subr.mxu0 0.0
  %2870 = vmatpush1.msra.mxu0 %v2832
  %2871 = vmatprep.subr.mxu0 0.0
  %2872 = vmatpush1.msra.mxu0 %v2830
  %2873 = vmatprep.subr.mxu0 0.0
  %2874 = vmatpush2.msra.mxu0 0.0
  %2875 = vmatprep.subr.mxu0 0.0
  %2876 = vmatpush2.msra.mxu0 0.0
  %2877 = vmatprep.subr.mxu0 0.0
  %2878 = vmatpush2.msra.mxu0 0.0
  %2879 = vmatprep.subr.mxu0 0.0
  %2880 = vmatpush2.msra.mxu0 0.0
  %2881 = vmatprep.subr.mxu0 0.0
  %2882 = vmatpush2.msra.mxu0 0.0
  %2883 = vmatprep.subr.mxu0 0.0
  %2884 = vmatpush2.msra.mxu0 0.0
  %2885 = vmatprep.subr.mxu0 0.0
  %2886 = vmatpush2.msra.mxu0 0.0
  %2887 = vmatprep.subr.mxu0 0.0
  %2888 = vmatpush2.msra.mxu0 0.0
  %2889 = vmatprep.subr.mxu0 0.0
  %2890 = vmatpush2.msra.mxu0 0.0
  %2891 = vmatprep.subr.mxu0 0.0
  %2892 = vmatpush2.msra.mxu0 0.0
  %2893 = vmatprep.subr.mxu0 0.0
  %2894 = vmatpush2.msra.mxu0 0.0
  %2895 = vmatprep.subr.mxu0 0.0
  %2896 = vmatpush2.msra.mxu0 0.0
  %2897 = vmatprep.subr.mxu0 0.0
  %2898 = vmatpush2.msra.mxu0 0.0
  %2899 = vmatprep.subr.mxu0 0.0
  %2900 = vmatpush2.msra.mxu0 0.0
  %2901 = vmatprep.subr.mxu0 0.0
  %2902 = vmatpush2.msra.mxu0 0.0
  %2903 = vmatprep.subr.mxu0 0.0
  %2904 = vmatpush2.msra.mxu0 0.0
  %2905 = vmatprep.mubr.f32.mxu0 0.0
  %2906 = vmatmul.mubr.f32.gmra.mxu0 %v2836
  %v2907 = vpop.f32.mrf.mxu0
  %v2908 = vadd.f32 0.0, %v2907
  %v2909 = vpop.f32.mrf.mxu0
  %2910 = vmatprep.mubr.f32.mxu0 0.0
  %2911 = vmatmul.mubr.f32.gmra.mxu0 %v2839
  %v2912 = vpop.f32.mrf.mxu0
  %v2913 = vadd.f32 0.0, %v2912
  %v2914 = vpop.f32.mrf.mxu0
  %2915 = vdwg.mxu0
  %2916 = vrot.lane.b32.xlu0 %v186, 56
  %v2917 = vpop.permute.xlu0 %2916
  %2918 = vrot.lane.b32.xlu0 %v191, 56
  %v2919 = vpop.permute.xlu0 %2918
  %v2923 = vsel %vm965, %v2730, 0
  %v2926 = vsel %vm965, %v2731, 0
  %2928 = vmatprep.subr.mxu0 0.0
  %2929 = vmatpush1.msra.mxu0 0.0
  %2930 = vmatprep.subr.mxu0 0.0
  %2931 = vmatpush1.msra.mxu0 0.0
  %2932 = vmatprep.subr.mxu0 0.0
  %2933 = vmatpush1.msra.mxu0 0.0
  %2934 = vmatprep.subr.mxu0 0.0
  %2935 = vmatpush1.msra.mxu0 0.0
  %2936 = vmatprep.subr.mxu0 0.0
  %2937 = vmatpush1.msra.mxu0 0.0
  %2938 = vmatprep.subr.mxu0 0.0
  %2939 = vmatpush1.msra.mxu0 0.0
  %2940 = vmatprep.subr.mxu0 0.0
  %2941 = vmatpush1.msra.mxu0 0.0
  %2942 = vmatprep.subr.mxu0 0.0
  %2943 = vmatpush1.msra.mxu0 0.0
  %2944 = vmatprep.subr.mxu0 0.0
  %2945 = vmatpush1.msra.mxu0 0.0
  %2946 = vmatprep.subr.mxu0 0.0
  %2947 = vmatpush1.msra.mxu0 0.0
  %2948 = vmatprep.subr.mxu0 0.0
  %2949 = vmatpush1.msra.mxu0 0.0
  %2950 = vmatprep.subr.mxu0 0.0
  %2951 = vmatpush1.msra.mxu0 0.0
  %2952 = vmatprep.subr.mxu0 0.0
  %2953 = vmatpush1.msra.mxu0 0.0
  %2954 = vmatprep.subr.mxu0 0.0
  %2955 = vmatpush1.msra.mxu0 0.0
  %2956 = vmatprep.subr.mxu0 0.0
  %2957 = vmatpush1.msra.mxu0 %v2919
  %2958 = vmatprep.subr.mxu0 0.0
  %2959 = vmatpush1.msra.mxu0 %v2917
  %2960 = vmatprep.subr.mxu0 0.0
  %2961 = vmatpush2.msra.mxu0 0.0
  %2962 = vmatprep.subr.mxu0 0.0
  %2963 = vmatpush2.msra.mxu0 0.0
  %2964 = vmatprep.subr.mxu0 0.0
  %2965 = vmatpush2.msra.mxu0 0.0
  %2966 = vmatprep.subr.mxu0 0.0
  %2967 = vmatpush2.msra.mxu0 0.0
  %2968 = vmatprep.subr.mxu0 0.0
  %2969 = vmatpush2.msra.mxu0 0.0
  %2970 = vmatprep.subr.mxu0 0.0
  %2971 = vmatpush2.msra.mxu0 0.0
  %2972 = vmatprep.subr.mxu0 0.0
  %2973 = vmatpush2.msra.mxu0 0.0
  %2974 = vmatprep.subr.mxu0 0.0
  %2975 = vmatpush2.msra.mxu0 0.0
  %2976 = vmatprep.subr.mxu0 0.0
  %2977 = vmatpush2.msra.mxu0 0.0
  %2978 = vmatprep.subr.mxu0 0.0
  %2979 = vmatpush2.msra.mxu0 0.0
  %2980 = vmatprep.subr.mxu0 0.0
  %2981 = vmatpush2.msra.mxu0 0.0
  %2982 = vmatprep.subr.mxu0 0.0
  %2983 = vmatpush2.msra.mxu0 0.0
  %2984 = vmatprep.subr.mxu0 0.0
  %2985 = vmatpush2.msra.mxu0 0.0
  %2986 = vmatprep.subr.mxu0 0.0
  %2987 = vmatpush2.msra.mxu0 0.0
  %2988 = vmatprep.subr.mxu0 0.0
  %2989 = vmatpush2.msra.mxu0 0.0
  %2990 = vmatprep.subr.mxu0 0.0
  %2991 = vmatpush2.msra.mxu0 0.0
  %2992 = vmatprep.mubr.f32.mxu0 0.0
  %2993 = vmatmul.mubr.f32.gmra.mxu0 %v2923
  %v2994 = vpop.f32.mrf.mxu0
  %v2995 = vadd.f32 0.0, %v2994
  %v2996 = vpop.f32.mrf.mxu0
  %2997 = vmatprep.mubr.f32.mxu0 0.0
  %2998 = vmatmul.mubr.f32.gmra.mxu0 %v2926
  %v2999 = vpop.f32.mrf.mxu0
  %v3000 = vadd.f32 0.0, %v2999
  %v3001 = vpop.f32.mrf.mxu0
  %3002 = vdwg.mxu0
  %3003 = vrot.lane.b32.xlu0 %v196, 56
  %v3004 = vpop.permute.xlu0 %3003
  %3005 = vrot.lane.b32.xlu0 %v201, 56
  %v3006 = vpop.permute.xlu0 %3005
  %v3010 = vsel %vm965, %v2732, 0
  %v3013 = vsel %vm965, %v2733, 0
  %3015 = vmatprep.subr.mxu0 0.0
  %3016 = vmatpush1.msra.mxu0 0.0
  %3017 = vmatprep.subr.mxu0 0.0
  %3018 = vmatpush1.msra.mxu0 0.0
  %3019 = vmatprep.subr.mxu0 0.0
  %3020 = vmatpush1.msra.mxu0 0.0
  %3021 = vmatprep.subr.mxu0 0.0
  %3022 = vmatpush1.msra.mxu0 0.0
  %3023 = vmatprep.subr.mxu0 0.0
  %3024 = vmatpush1.msra.mxu0 0.0
  %3025 = vmatprep.subr.mxu0 0.0
  %3026 = vmatpush1.msra.mxu0 0.0
  %3027 = vmatprep.subr.mxu0 0.0
  %3028 = vmatpush1.msra.mxu0 0.0
  %3029 = vmatprep.subr.mxu0 0.0
  %3030 = vmatpush1.msra.mxu0 0.0
  %3031 = vmatprep.subr.mxu0 0.0
  %3032 = vmatpush1.msra.mxu0 0.0
  %3033 = vmatprep.subr.mxu0 0.0
  %3034 = vmatpush1.msra.mxu0 0.0
  %3035 = vmatprep.subr.mxu0 0.0
  %3036 = vmatpush1.msra.mxu0 0.0
  %3037 = vmatprep.subr.mxu0 0.0
  %3038 = vmatpush1.msra.mxu0 0.0
  %3039 = vmatprep.subr.mxu0 0.0
  %3040 = vmatpush1.msra.mxu0 0.0
  %3041 = vmatprep.subr.mxu0 0.0
  %3042 = vmatpush1.msra.mxu0 0.0
  %3043 = vmatprep.subr.mxu0 0.0
  %3044 = vmatpush1.msra.mxu0 %v3006
  %3045 = vmatprep.subr.mxu0 0.0
  %3046 = vmatpush1.msra.mxu0 %v3004
  %3047 = vmatprep.subr.mxu0 0.0
  %3048 = vmatpush2.msra.mxu0 0.0
  %3049 = vmatprep.subr.mxu0 0.0
  %3050 = vmatpush2.msra.mxu0 0.0
  %3051 = vmatprep.subr.mxu0 0.0
  %3052 = vmatpush2.msra.mxu0 0.0
  %3053 = vmatprep.subr.mxu0 0.0
  %3054 = vmatpush2.msra.mxu0 0.0
  %3055 = vmatprep.subr.mxu0 0.0
  %3056 = vmatpush2.msra.mxu0 0.0
  %3057 = vmatprep.subr.mxu0 0.0
  %3058 = vmatpush2.msra.mxu0 0.0
  %3059 = vmatprep.subr.mxu0 0.0
  %3060 = vmatpush2.msra.mxu0 0.0
  %3061 = vmatprep.subr.mxu0 0.0
  %3062 = vmatpush2.msra.mxu0 0.0
  %3063 = vmatprep.subr.mxu0 0.0
  %3064 = vmatpush2.msra.mxu0 0.0
  %3065 = vmatprep.subr.mxu0 0.0
  %3066 = vmatpush2.msra.mxu0 0.0
  %3067 = vmatprep.subr.mxu0 0.0
  %3068 = vmatpush2.msra.mxu0 0.0
  %3069 = vmatprep.subr.mxu0 0.0
  %3070 = vmatpush2.msra.mxu0 0.0
  %3071 = vmatprep.subr.mxu0 0.0
  %3072 = vmatpush2.msra.mxu0 0.0
  %3073 = vmatprep.subr.mxu0 0.0
  %3074 = vmatpush2.msra.mxu0 0.0
  %3075 = vmatprep.subr.mxu0 0.0
  %3076 = vmatpush2.msra.mxu0 0.0
  %3077 = vmatprep.subr.mxu0 0.0
  %3078 = vmatpush2.msra.mxu0 0.0
  %3079 = vmatprep.mubr.f32.mxu0 0.0
  %3080 = vmatmul.mubr.f32.gmra.mxu0 %v3010
  %v3081 = vpop.f32.mrf.mxu0
  %v3082 = vadd.f32 0.0, %v3081
  %v3083 = vpop.f32.mrf.mxu0
  %3084 = vmatprep.mubr.f32.mxu0 0.0
  %3085 = vmatmul.mubr.f32.gmra.mxu0 %v3013
  %v3086 = vpop.f32.mrf.mxu0
  %v3087 = vadd.f32 0.0, %v3086
  %v3088 = vpop.f32.mrf.mxu0
  %3089 = vdwg.mxu0
  %3090 = vrot.lane.b32.xlu0 %v206, 56
  %v3091 = vpop.permute.xlu0 %3090
  %3092 = vrot.lane.b32.xlu0 %v211, 56
  %v3093 = vpop.permute.xlu0 %3092
  %v3097 = vsel %vm965, %v2734, 0
  %v3100 = vsel %vm965, %v2735, 0
  %3102 = vmatprep.subr.mxu0 0.0
  %3103 = vmatpush1.msra.mxu0 0.0
  %3104 = vmatprep.subr.mxu0 0.0
  %3105 = vmatpush1.msra.mxu0 0.0
  %3106 = vmatprep.subr.mxu0 0.0
  %3107 = vmatpush1.msra.mxu0 0.0
  %3108 = vmatprep.subr.mxu0 0.0
  %3109 = vmatpush1.msra.mxu0 0.0
  %3110 = vmatprep.subr.mxu0 0.0
  %3111 = vmatpush1.msra.mxu0 0.0
  %3112 = vmatprep.subr.mxu0 0.0
  %3113 = vmatpush1.msra.mxu0 0.0
  %3114 = vmatprep.subr.mxu0 0.0
  %3115 = vmatpush1.msra.mxu0 0.0
  %3116 = vmatprep.subr.mxu0 0.0
  %3117 = vmatpush1.msra.mxu0 0.0
  %3118 = vmatprep.subr.mxu0 0.0
  %3119 = vmatpush1.msra.mxu0 0.0
  %3120 = vmatprep.subr.mxu0 0.0
  %3121 = vmatpush1.msra.mxu0 0.0
  %3122 = vmatprep.subr.mxu0 0.0
  %3123 = vmatpush1.msra.mxu0 0.0
  %3124 = vmatprep.subr.mxu0 0.0
  %3125 = vmatpush1.msra.mxu0 0.0
  %3126 = vmatprep.subr.mxu0 0.0
  %3127 = vmatpush1.msra.mxu0 0.0
  %3128 = vmatprep.subr.mxu0 0.0
  %3129 = vmatpush1.msra.mxu0 0.0
  %3130 = vmatprep.subr.mxu0 0.0
  %3131 = vmatpush1.msra.mxu0 %v3093
  %3132 = vmatprep.subr.mxu0 0.0
  %3133 = vmatpush1.msra.mxu0 %v3091
  %3134 = vmatprep.subr.mxu0 0.0
  %3135 = vmatpush2.msra.mxu0 0.0
  %3136 = vmatprep.subr.mxu0 0.0
  %3137 = vmatpush2.msra.mxu0 0.0
  %3138 = vmatprep.subr.mxu0 0.0
  %3139 = vmatpush2.msra.mxu0 0.0
  %3140 = vmatprep.subr.mxu0 0.0
  %3141 = vmatpush2.msra.mxu0 0.0
  %3142 = vmatprep.subr.mxu0 0.0
  %3143 = vmatpush2.msra.mxu0 0.0
  %3144 = vmatprep.subr.mxu0 0.0
  %3145 = vmatpush2.msra.mxu0 0.0
  %3146 = vmatprep.subr.mxu0 0.0
  %3147 = vmatpush2.msra.mxu0 0.0
  %3148 = vmatprep.subr.mxu0 0.0
  %3149 = vmatpush2.msra.mxu0 0.0
  %3150 = vmatprep.subr.mxu0 0.0
  %3151 = vmatpush2.msra.mxu0 0.0
  %3152 = vmatprep.subr.mxu0 0.0
  %3153 = vmatpush2.msra.mxu0 0.0
  %3154 = vmatprep.subr.mxu0 0.0
  %3155 = vmatpush2.msra.mxu0 0.0
  %3156 = vmatprep.subr.mxu0 0.0
  %3157 = vmatpush2.msra.mxu0 0.0
  %3158 = vmatprep.subr.mxu0 0.0
  %3159 = vmatpush2.msra.mxu0 0.0
  %3160 = vmatprep.subr.mxu0 0.0
  %3161 = vmatpush2.msra.mxu0 0.0
  %3162 = vmatprep.subr.mxu0 0.0
  %3163 = vmatpush2.msra.mxu0 0.0
  %3164 = vmatprep.subr.mxu0 0.0
  %3165 = vmatpush2.msra.mxu0 0.0
  %3166 = vmatprep.mubr.f32.mxu0 0.0
  %3167 = vmatmul.mubr.f32.gmra.mxu0 %v3097
  %v3168 = vpop.f32.mrf.mxu0
  %v3169 = vadd.f32 0.0, %v3168
  %v3170 = vpop.f32.mrf.mxu0
  %3171 = vmatprep.mubr.f32.mxu0 0.0
  %3172 = vmatmul.mubr.f32.gmra.mxu0 %v3100
  %v3173 = vpop.f32.mrf.mxu0
  %v3174 = vadd.f32 0.0, %v3173
  %v3175 = vpop.f32.mrf.mxu0
  %3176 = vdwg.mxu0
  %3177 = vrot.lane.b32.xlu0 %v216, 56
  %v3178 = vpop.permute.xlu0 %3177
  %3179 = vrot.lane.b32.xlu0 %v221, 56
  %v3180 = vpop.permute.xlu0 %3179
  %v3184 = vsel %vm965, %v2736, 0
  %v3187 = vsel %vm965, %v2737, 0
  %3189 = vmatprep.subr.mxu0 0.0
  %3190 = vmatpush1.msra.mxu0 0.0
  %3191 = vmatprep.subr.mxu0 0.0
  %3192 = vmatpush1.msra.mxu0 0.0
  %3193 = vmatprep.subr.mxu0 0.0
  %3194 = vmatpush1.msra.mxu0 0.0
  %3195 = vmatprep.subr.mxu0 0.0
  %3196 = vmatpush1.msra.mxu0 0.0
  %3197 = vmatprep.subr.mxu0 0.0
  %3198 = vmatpush1.msra.mxu0 0.0
  %3199 = vmatprep.subr.mxu0 0.0
  %3200 = vmatpush1.msra.mxu0 0.0
  %3201 = vmatprep.subr.mxu0 0.0
  %3202 = vmatpush1.msra.mxu0 0.0
  %3203 = vmatprep.subr.mxu0 0.0
  %3204 = vmatpush1.msra.mxu0 0.0
  %3205 = vmatprep.subr.mxu0 0.0
  %3206 = vmatpush1.msra.mxu0 0.0
  %3207 = vmatprep.subr.mxu0 0.0
  %3208 = vmatpush1.msra.mxu0 0.0
  %3209 = vmatprep.subr.mxu0 0.0
  %3210 = vmatpush1.msra.mxu0 0.0
  %3211 = vmatprep.subr.mxu0 0.0
  %3212 = vmatpush1.msra.mxu0 0.0
  %3213 = vmatprep.subr.mxu0 0.0
  %3214 = vmatpush1.msra.mxu0 0.0
  %3215 = vmatprep.subr.mxu0 0.0
  %3216 = vmatpush1.msra.mxu0 0.0
  %3217 = vmatprep.subr.mxu0 0.0
  %3218 = vmatpush1.msra.mxu0 %v3180
  %3219 = vmatprep.subr.mxu0 0.0
  %3220 = vmatpush1.msra.mxu0 %v3178
  %3221 = vmatprep.subr.mxu0 0.0
  %3222 = vmatpush2.msra.mxu0 0.0
  %3223 = vmatprep.subr.mxu0 0.0
  %3224 = vmatpush2.msra.mxu0 0.0
  %3225 = vmatprep.subr.mxu0 0.0
  %3226 = vmatpush2.msra.mxu0 0.0
  %3227 = vmatprep.subr.mxu0 0.0
  %3228 = vmatpush2.msra.mxu0 0.0
  %3229 = vmatprep.subr.mxu0 0.0
  %3230 = vmatpush2.msra.mxu0 0.0
  %3231 = vmatprep.subr.mxu0 0.0
  %3232 = vmatpush2.msra.mxu0 0.0
  %3233 = vmatprep.subr.mxu0 0.0
  %3234 = vmatpush2.msra.mxu0 0.0
  %3235 = vmatprep.subr.mxu0 0.0
  %3236 = vmatpush2.msra.mxu0 0.0
  %3237 = vmatprep.subr.mxu0 0.0
  %3238 = vmatpush2.msra.mxu0 0.0
  %3239 = vmatprep.subr.mxu0 0.0
  %3240 = vmatpush2.msra.mxu0 0.0
  %3241 = vmatprep.subr.mxu0 0.0
  %3242 = vmatpush2.msra.mxu0 0.0
  %3243 = vmatprep.subr.mxu0 0.0
  %3244 = vmatpush2.msra.mxu0 0.0
  %3245 = vmatprep.subr.mxu0 0.0
  %3246 = vmatpush2.msra.mxu0 0.0
  %3247 = vmatprep.subr.mxu0 0.0
  %3248 = vmatpush2.msra.mxu0 0.0
  %3249 = vmatprep.subr.mxu0 0.0
  %3250 = vmatpush2.msra.mxu0 0.0
  %3251 = vmatprep.subr.mxu0 0.0
  %3252 = vmatpush2.msra.mxu0 0.0
  %3253 = vmatprep.mubr.f32.mxu0 0.0
  %3254 = vmatmul.mubr.f32.gmra.mxu0 %v3184
  %v3255 = vpop.f32.mrf.mxu0
  %v3256 = vadd.f32 0.0, %v3255
  %v3257 = vpop.f32.mrf.mxu0
  %3258 = vmatprep.mubr.f32.mxu0 0.0
  %3259 = vmatmul.mubr.f32.gmra.mxu0 %v3187
  %v3260 = vpop.f32.mrf.mxu0
  %v3261 = vadd.f32 0.0, %v3260
  %v3262 = vpop.f32.mrf.mxu0
  %3263 = vdwg.mxu0
  %3264 = vrot.lane.b32.xlu0 %v226, 56
  %v3265 = vpop.permute.xlu0 %3264
  %3266 = vrot.lane.b32.xlu0 %v231, 56
  %v3267 = vpop.permute.xlu0 %3266
  %v3271 = vsel %vm965, %v2738, 0
  %v3274 = vsel %vm965, %v2739, 0
  %3276 = vmatprep.subr.mxu0 0.0
  %3277 = vmatpush1.msra.mxu0 0.0
  %3278 = vmatprep.subr.mxu0 0.0
  %3279 = vmatpush1.msra.mxu0 0.0
  %3280 = vmatprep.subr.mxu0 0.0
  %3281 = vmatpush1.msra.mxu0 0.0
  %3282 = vmatprep.subr.mxu0 0.0
  %3283 = vmatpush1.msra.mxu0 0.0
  %3284 = vmatprep.subr.mxu0 0.0
  %3285 = vmatpush1.msra.mxu0 0.0
  %3286 = vmatprep.subr.mxu0 0.0
  %3287 = vmatpush1.msra.mxu0 0.0
  %3288 = vmatprep.subr.mxu0 0.0
  %3289 = vmatpush1.msra.mxu0 0.0
  %3290 = vmatprep.subr.mxu0 0.0
  %3291 = vmatpush1.msra.mxu0 0.0
  %3292 = vmatprep.subr.mxu0 0.0
  %3293 = vmatpush1.msra.mxu0 0.0
  %3294 = vmatprep.subr.mxu0 0.0
  %3295 = vmatpush1.msra.mxu0 0.0
  %3296 = vmatprep.subr.mxu0 0.0
  %3297 = vmatpush1.msra.mxu0 0.0
  %3298 = vmatprep.subr.mxu0 0.0
  %3299 = vmatpush1.msra.mxu0 0.0
  %3300 = vmatprep.subr.mxu0 0.0
  %3301 = vmatpush1.msra.mxu0 0.0
  %3302 = vmatprep.subr.mxu0 0.0
  %3303 = vmatpush1.msra.mxu0 0.0
  %3304 = vmatprep.subr.mxu0 0.0
  %3305 = vmatpush1.msra.mxu0 %v3267
  %3306 = vmatprep.subr.mxu0 0.0
  %3307 = vmatpush1.msra.mxu0 %v3265
  %3308 = vmatprep.subr.mxu0 0.0
  %3309 = vmatpush2.msra.mxu0 0.0
  %3310 = vmatprep.subr.mxu0 0.0
  %3311 = vmatpush2.msra.mxu0 0.0
  %3312 = vmatprep.subr.mxu0 0.0
  %3313 = vmatpush2.msra.mxu0 0.0
  %3314 = vmatprep.subr.mxu0 0.0
  %3315 = vmatpush2.msra.mxu0 0.0
  %3316 = vmatprep.subr.mxu0 0.0
  %3317 = vmatpush2.msra.mxu0 0.0
  %3318 = vmatprep.subr.mxu0 0.0
  %3319 = vmatpush2.msra.mxu0 0.0
  %3320 = vmatprep.subr.mxu0 0.0
  %3321 = vmatpush2.msra.mxu0 0.0
  %3322 = vmatprep.subr.mxu0 0.0
  %3323 = vmatpush2.msra.mxu0 0.0
  %3324 = vmatprep.subr.mxu0 0.0
  %3325 = vmatpush2.msra.mxu0 0.0
  %3326 = vmatprep.subr.mxu0 0.0
  %3327 = vmatpush2.msra.mxu0 0.0
  %3328 = vmatprep.subr.mxu0 0.0
  %3329 = vmatpush2.msra.mxu0 0.0
  %3330 = vmatprep.subr.mxu0 0.0
  %3331 = vmatpush2.msra.mxu0 0.0
  %3332 = vmatprep.subr.mxu0 0.0
  %3333 = vmatpush2.msra.mxu0 0.0
  %3334 = vmatprep.subr.mxu0 0.0
  %3335 = vmatpush2.msra.mxu0 0.0
  %3336 = vmatprep.subr.mxu0 0.0
  %3337 = vmatpush2.msra.mxu0 0.0
  %3338 = vmatprep.subr.mxu0 0.0
  %3339 = vmatpush2.msra.mxu0 0.0
  %3340 = vmatprep.mubr.f32.mxu0 0.0
  %3341 = vmatmul.mubr.f32.gmra.mxu0 %v3271
  %v3342 = vpop.f32.mrf.mxu0
  %v3343 = vadd.f32 0.0, %v3342
  %v3344 = vpop.f32.mrf.mxu0
  %3345 = vmatprep.mubr.f32.mxu0 0.0
  %3346 = vmatmul.mubr.f32.gmra.mxu0 %v3274
  %v3347 = vpop.f32.mrf.mxu0
  %v3348 = vadd.f32 0.0, %v3347
  %v3349 = vpop.f32.mrf.mxu0
  %3350 = vdwg.mxu0
  %3351 = vrot.lane.b32.xlu0 %v236, 56
  %v3352 = vpop.permute.xlu0 %3351
  %3353 = vrot.lane.b32.xlu0 %v241, 56
  %v3354 = vpop.permute.xlu0 %3353
  %v3358 = vsel %vm965, %v2740, 0
  %v3361 = vsel %vm965, %v2741, 0
  %3363 = vmatprep.subr.mxu0 0.0
  %3364 = vmatpush1.msra.mxu0 0.0
  %3365 = vmatprep.subr.mxu0 0.0
  %3366 = vmatpush1.msra.mxu0 0.0
  %3367 = vmatprep.subr.mxu0 0.0
  %3368 = vmatpush1.msra.mxu0 0.0
  %3369 = vmatprep.subr.mxu0 0.0
  %3370 = vmatpush1.msra.mxu0 0.0
  %3371 = vmatprep.subr.mxu0 0.0
  %3372 = vmatpush1.msra.mxu0 0.0
  %3373 = vmatprep.subr.mxu0 0.0
  %3374 = vmatpush1.msra.mxu0 0.0
  %3375 = vmatprep.subr.mxu0 0.0
  %3376 = vmatpush1.msra.mxu0 0.0
  %3377 = vmatprep.subr.mxu0 0.0
  %3378 = vmatpush1.msra.mxu0 0.0
  %3379 = vmatprep.subr.mxu0 0.0
  %3380 = vmatpush1.msra.mxu0 0.0
  %3381 = vmatprep.subr.mxu0 0.0
  %3382 = vmatpush1.msra.mxu0 0.0
  %3383 = vmatprep.subr.mxu0 0.0
  %3384 = vmatpush1.msra.mxu0 0.0
  %3385 = vmatprep.subr.mxu0 0.0
  %3386 = vmatpush1.msra.mxu0 0.0
  %3387 = vmatprep.subr.mxu0 0.0
  %3388 = vmatpush1.msra.mxu0 0.0
  %3389 = vmatprep.subr.mxu0 0.0
  %3390 = vmatpush1.msra.mxu0 0.0
  %3391 = vmatprep.subr.mxu0 0.0
  %3392 = vmatpush1.msra.mxu0 %v3354
  %3393 = vmatprep.subr.mxu0 0.0
  %3394 = vmatpush1.msra.mxu0 %v3352
  %3395 = vmatprep.subr.mxu0 0.0
  %3396 = vmatpush2.msra.mxu0 0.0
  %3397 = vmatprep.subr.mxu0 0.0
  %3398 = vmatpush2.msra.mxu0 0.0
  %3399 = vmatprep.subr.mxu0 0.0
  %3400 = vmatpush2.msra.mxu0 0.0
  %3401 = vmatprep.subr.mxu0 0.0
  %3402 = vmatpush2.msra.mxu0 0.0
  %3403 = vmatprep.subr.mxu0 0.0
  %3404 = vmatpush2.msra.mxu0 0.0
  %3405 = vmatprep.subr.mxu0 0.0
  %3406 = vmatpush2.msra.mxu0 0.0
  %3407 = vmatprep.subr.mxu0 0.0
  %3408 = vmatpush2.msra.mxu0 0.0
  %3409 = vmatprep.subr.mxu0 0.0
  %3410 = vmatpush2.msra.mxu0 0.0
  %3411 = vmatprep.subr.mxu0 0.0
  %3412 = vmatpush2.msra.mxu0 0.0
  %3413 = vmatprep.subr.mxu0 0.0
  %3414 = vmatpush2.msra.mxu0 0.0
  %3415 = vmatprep.subr.mxu0 0.0
  %3416 = vmatpush2.msra.mxu0 0.0
  %3417 = vmatprep.subr.mxu0 0.0
  %3418 = vmatpush2.msra.mxu0 0.0
  %3419 = vmatprep.subr.mxu0 0.0
  %3420 = vmatpush2.msra.mxu0 0.0
  %3421 = vmatprep.subr.mxu0 0.0
  %3422 = vmatpush2.msra.mxu0 0.0
  %3423 = vmatprep.subr.mxu0 0.0
  %3424 = vmatpush2.msra.mxu0 0.0
  %3425 = vmatprep.subr.mxu0 0.0
  %3426 = vmatpush2.msra.mxu0 0.0
  %3427 = vmatprep.mubr.f32.mxu0 0.0
  %3428 = vmatmul.mubr.f32.gmra.mxu0 %v3358
  %v3429 = vpop.f32.mrf.mxu0
  %v3430 = vadd.f32 0.0, %v3429
  %v3431 = vpop.f32.mrf.mxu0
  %3432 = vmatprep.mubr.f32.mxu0 0.0
  %3433 = vmatmul.mubr.f32.gmra.mxu0 %v3361
  %v3434 = vpop.f32.mrf.mxu0
  %v3435 = vadd.f32 0.0, %v3434
  %v3436 = vpop.f32.mrf.mxu0
  %3437 = vdwg.mxu0
  %3438 = vrot.lane.b32.xlu0 %v166, 112
  %v3439 = vpop.permute.xlu0 %3438
  %3440 = vrot.lane.b32.xlu0 %v171, 112
  %v3441 = vpop.permute.xlu0 %3440
  %3442 = vrot.lane.b32.xlu0 %v166, 80
  %v3443 = vpop.permute.xlu0 %3442
  %3444 = vrot.lane.b32.xlu0 %v171, 80
  %v3445 = vpop.permute.xlu0 %3444
  %v3446 = vsel %vm258, %v3439, 0
  %v3448 = vsel %vm258, %v3441, 0
  %v3450 = vsel %vm258, %v3443, 0
  %v3452 = vsel %vm258, %v3445, 0
  %3454 = vmatprep.subr.mxu0 0.0
  %3455 = vmatpush1.xpose.msra.mxu0 0.0
  %3456 = vmatprep.subr.mxu0 0.0
  %3457 = vmatpush1.xpose.msra.mxu0 0.0
  %3458 = vmatprep.subr.mxu0 0.0
  %3459 = vmatpush1.xpose.msra.mxu0 0.0
  %3460 = vmatprep.subr.mxu0 0.0
  %3461 = vmatpush1.xpose.msra.mxu0 0.0
  %3462 = vmatprep.subr.mxu0 0.0
  %3463 = vmatpush1.xpose.msra.mxu0 0.0
  %3464 = vmatprep.subr.mxu0 0.0
  %3465 = vmatpush1.xpose.msra.mxu0 0.0
  %3466 = vmatprep.subr.mxu0 0.0
  %3467 = vmatpush1.xpose.msra.mxu0 0.0
  %3468 = vmatprep.subr.mxu0 0.0
  %3469 = vmatpush1.xpose.msra.mxu0 0.0
  %3470 = vmatprep.subr.mxu0 0.0
  %3471 = vmatpush1.xpose.msra.mxu0 0.0
  %3472 = vmatprep.subr.mxu0 0.0
  %3473 = vmatpush1.xpose.msra.mxu0 0.0
  %3474 = vmatprep.subr.mxu0 0.0
  %3475 = vmatpush1.xpose.msra.mxu0 0.0
  %3476 = vmatprep.subr.mxu0 0.0
  %3477 = vmatpush1.xpose.msra.mxu0 0.0
  %3478 = vmatprep.subr.mxu0 0.0
  %3479 = vmatpush1.xpose.msra.mxu0 0.0
  %3480 = vmatprep.subr.mxu0 0.0
  %3481 = vmatpush1.xpose.msra.mxu0 0.0
  %3482 = vmatprep.subr.mxu0 0.0
  %3483 = vmatpush1.xpose.msra.mxu0 %v3452
  %3484 = vmatprep.subr.mxu0 0.0
  %3485 = vmatpush1.xpose.msra.mxu0 %v3450
  %3486 = vmatprep.subr.mxu0 0.0
  %3487 = vmatpush2.xpose.msra.mxu0 0.0
  %3488 = vmatprep.subr.mxu0 0.0
  %3489 = vmatpush2.xpose.msra.mxu0 0.0
  %3490 = vmatprep.subr.mxu0 0.0
  %3491 = vmatpush2.xpose.msra.mxu0 0.0
  %3492 = vmatprep.subr.mxu0 0.0
  %3493 = vmatpush2.xpose.msra.mxu0 0.0
  %3494 = vmatprep.subr.mxu0 0.0
  %3495 = vmatpush2.xpose.msra.mxu0 0.0
  %3496 = vmatprep.subr.mxu0 0.0
  %3497 = vmatpush2.xpose.msra.mxu0 0.0
  %3498 = vmatprep.subr.mxu0 0.0
  %3499 = vmatpush2.xpose.msra.mxu0 0.0
  %3500 = vmatprep.subr.mxu0 0.0
  %3501 = vmatpush2.xpose.msra.mxu0 0.0
  %3502 = vmatprep.subr.mxu0 0.0
  %3503 = vmatpush2.xpose.msra.mxu0 0.0
  %3504 = vmatprep.subr.mxu0 0.0
  %3505 = vmatpush2.xpose.msra.mxu0 0.0
  %3506 = vmatprep.subr.mxu0 0.0
  %3507 = vmatpush2.xpose.msra.mxu0 0.0
  %3508 = vmatprep.subr.mxu0 0.0
  %3509 = vmatpush2.xpose.msra.mxu0 0.0
  %3510 = vmatprep.subr.mxu0 0.0
  %3511 = vmatpush2.xpose.msra.mxu0 0.0
  %3512 = vmatprep.subr.mxu0 0.0
  %3513 = vmatpush2.xpose.msra.mxu0 0.0
  %3514 = vmatprep.subr.mxu0 0.0
  %3515 = vmatpush2.xpose.msra.mxu0 0.0
  %3516 = vmatprep.subr.mxu0 0.0
  %3517 = vmatpush2.xpose.msra.mxu0 0.0
  %3518 = vmatprep.mubr.f32.mxu0 0.0
  %3519 = vmatmul.mubr.f32.gmra.mxu0 %v3446
  %v3520 = vpop.f32.mrf.mxu0
  %v3521 = vadd.f32 %v248, %v3520
  %v3522 = vpop.f32.mrf.mxu0
  %3523 = vmatprep.mubr.f32.mxu0 0.0
  %3524 = vmatmul.mubr.f32.gmra.mxu0 %v3448
  %v3525 = vpop.f32.mrf.mxu0
  %v3526 = vadd.f32 %v249, %v3525
  %v3527 = vpop.f32.mrf.mxu0
  %3528 = vdwg.mxu0
  %3529 = vrot.lane.b32.xlu0 %v176, 112
  %v3530 = vpop.permute.xlu0 %3529
  %3531 = vrot.lane.b32.xlu0 %v181, 112
  %v3532 = vpop.permute.xlu0 %3531
  %3533 = vrot.lane.b32.xlu0 %v176, 80
  %v3534 = vpop.permute.xlu0 %3533
  %3535 = vrot.lane.b32.xlu0 %v181, 80
  %v3536 = vpop.permute.xlu0 %3535
  %v3537 = vsel %vm258, %v3530, 0
  %v3539 = vsel %vm258, %v3532, 0
  %v3541 = vsel %vm258, %v3534, 0
  %v3543 = vsel %vm258, %v3536, 0
  %3545 = vmatprep.subr.mxu0 0.0
  %3546 = vmatpush1.xpose.msra.mxu0 0.0
  %3547 = vmatprep.subr.mxu0 0.0
  %3548 = vmatpush1.xpose.msra.mxu0 0.0
  %3549 = vmatprep.subr.mxu0 0.0
  %3550 = vmatpush1.xpose.msra.mxu0 0.0
  %3551 = vmatprep.subr.mxu0 0.0
  %3552 = vmatpush1.xpose.msra.mxu0 0.0
  %3553 = vmatprep.subr.mxu0 0.0
  %3554 = vmatpush1.xpose.msra.mxu0 0.0
  %3555 = vmatprep.subr.mxu0 0.0
  %3556 = vmatpush1.xpose.msra.mxu0 0.0
  %3557 = vmatprep.subr.mxu0 0.0
  %3558 = vmatpush1.xpose.msra.mxu0 0.0
  %3559 = vmatprep.subr.mxu0 0.0
  %3560 = vmatpush1.xpose.msra.mxu0 0.0
  %3561 = vmatprep.subr.mxu0 0.0
  %3562 = vmatpush1.xpose.msra.mxu0 0.0
  %3563 = vmatprep.subr.mxu0 0.0
  %3564 = vmatpush1.xpose.msra.mxu0 0.0
  %3565 = vmatprep.subr.mxu0 0.0
  %3566 = vmatpush1.xpose.msra.mxu0 0.0
  %3567 = vmatprep.subr.mxu0 0.0
  %3568 = vmatpush1.xpose.msra.mxu0 0.0
  %3569 = vmatprep.subr.mxu0 0.0
  %3570 = vmatpush1.xpose.msra.mxu0 0.0
  %3571 = vmatprep.subr.mxu0 0.0
  %3572 = vmatpush1.xpose.msra.mxu0 0.0
  %3573 = vmatprep.subr.mxu0 0.0
  %3574 = vmatpush1.xpose.msra.mxu0 %v3543
  %3575 = vmatprep.subr.mxu0 0.0
  %3576 = vmatpush1.xpose.msra.mxu0 %v3541
  %3577 = vmatprep.subr.mxu0 0.0
  %3578 = vmatpush2.xpose.msra.mxu0 0.0
  %3579 = vmatprep.subr.mxu0 0.0
  %3580 = vmatpush2.xpose.msra.mxu0 0.0
  %3581 = vmatprep.subr.mxu0 0.0
  %3582 = vmatpush2.xpose.msra.mxu0 0.0
  %3583 = vmatprep.subr.mxu0 0.0
  %3584 = vmatpush2.xpose.msra.mxu0 0.0
  %3585 = vmatprep.subr.mxu0 0.0
  %3586 = vmatpush2.xpose.msra.mxu0 0.0
  %3587 = vmatprep.subr.mxu0 0.0
  %3588 = vmatpush2.xpose.msra.mxu0 0.0
  %3589 = vmatprep.subr.mxu0 0.0
  %3590 = vmatpush2.xpose.msra.mxu0 0.0
  %3591 = vmatprep.subr.mxu0 0.0
  %3592 = vmatpush2.xpose.msra.mxu0 0.0
  %3593 = vmatprep.subr.mxu0 0.0
  %3594 = vmatpush2.xpose.msra.mxu0 0.0
  %3595 = vmatprep.subr.mxu0 0.0
  %3596 = vmatpush2.xpose.msra.mxu0 0.0
  %3597 = vmatprep.subr.mxu0 0.0
  %3598 = vmatpush2.xpose.msra.mxu0 0.0
  %3599 = vmatprep.subr.mxu0 0.0
  %3600 = vmatpush2.xpose.msra.mxu0 0.0
  %3601 = vmatprep.subr.mxu0 0.0
  %3602 = vmatpush2.xpose.msra.mxu0 0.0
  %3603 = vmatprep.subr.mxu0 0.0
  %3604 = vmatpush2.xpose.msra.mxu0 0.0
  %3605 = vmatprep.subr.mxu0 0.0
  %3606 = vmatpush2.xpose.msra.mxu0 0.0
  %3607 = vmatprep.subr.mxu0 0.0
  %3608 = vmatpush2.xpose.msra.mxu0 0.0
  %3609 = vmatprep.mubr.f32.mxu0 0.0
  %3610 = vmatmul.mubr.f32.gmra.mxu0 %v3537
  %v3611 = vpop.f32.mrf.mxu0
  %v3612 = vadd.f32 %v248, %v3611
  %v3613 = vpop.f32.mrf.mxu0
  %3614 = vmatprep.mubr.f32.mxu0 0.0
  %3615 = vmatmul.mubr.f32.gmra.mxu0 %v3539
  %v3616 = vpop.f32.mrf.mxu0
  %v3617 = vadd.f32 %v249, %v3616
  %v3618 = vpop.f32.mrf.mxu0
  %3619 = vdwg.mxu0
  %3620 = vrot.lane.b32.xlu0 %v186, 112
  %v3621 = vpop.permute.xlu0 %3620
  %3622 = vrot.lane.b32.xlu0 %v191, 112
  %v3623 = vpop.permute.xlu0 %3622
  %3624 = vrot.lane.b32.xlu0 %v186, 80
  %v3625 = vpop.permute.xlu0 %3624
  %3626 = vrot.lane.b32.xlu0 %v191, 80
  %v3627 = vpop.permute.xlu0 %3626
  %v3628 = vsel %vm258, %v3621, 0
  %v3630 = vsel %vm258, %v3623, 0
  %v3632 = vsel %vm258, %v3625, 0
  %v3634 = vsel %vm258, %v3627, 0
  %3636 = vmatprep.subr.mxu0 0.0
  %3637 = vmatpush1.xpose.msra.mxu0 0.0
  %3638 = vmatprep.subr.mxu0 0.0
  %3639 = vmatpush1.xpose.msra.mxu0 0.0
  %3640 = vmatprep.subr.mxu0 0.0
  %3641 = vmatpush1.xpose.msra.mxu0 0.0
  %3642 = vmatprep.subr.mxu0 0.0
  %3643 = vmatpush1.xpose.msra.mxu0 0.0
  %3644 = vmatprep.subr.mxu0 0.0
  %3645 = vmatpush1.xpose.msra.mxu0 0.0
  %3646 = vmatprep.subr.mxu0 0.0
  %3647 = vmatpush1.xpose.msra.mxu0 0.0
  %3648 = vmatprep.subr.mxu0 0.0
  %3649 = vmatpush1.xpose.msra.mxu0 0.0
  %3650 = vmatprep.subr.mxu0 0.0
  %3651 = vmatpush1.xpose.msra.mxu0 0.0
  %3652 = vmatprep.subr.mxu0 0.0
  %3653 = vmatpush1.xpose.msra.mxu0 0.0
  %3654 = vmatprep.subr.mxu0 0.0
  %3655 = vmatpush1.xpose.msra.mxu0 0.0
  %3656 = vmatprep.subr.mxu0 0.0
  %3657 = vmatpush1.xpose.msra.mxu0 0.0
  %3658 = vmatprep.subr.mxu0 0.0
  %3659 = vmatpush1.xpose.msra.mxu0 0.0
  %3660 = vmatprep.subr.mxu0 0.0
  %3661 = vmatpush1.xpose.msra.mxu0 0.0
  %3662 = vmatprep.subr.mxu0 0.0
  %3663 = vmatpush1.xpose.msra.mxu0 0.0
  %3664 = vmatprep.subr.mxu0 0.0
  %3665 = vmatpush1.xpose.msra.mxu0 %v3634
  %3666 = vmatprep.subr.mxu0 0.0
  %3667 = vmatpush1.xpose.msra.mxu0 %v3632
  %3668 = vmatprep.subr.mxu0 0.0
  %3669 = vmatpush2.xpose.msra.mxu0 0.0
  %3670 = vmatprep.subr.mxu0 0.0
  %3671 = vmatpush2.xpose.msra.mxu0 0.0
  %3672 = vmatprep.subr.mxu0 0.0
  %3673 = vmatpush2.xpose.msra.mxu0 0.0
  %3674 = vmatprep.subr.mxu0 0.0
  %3675 = vmatpush2.xpose.msra.mxu0 0.0
  %3676 = vmatprep.subr.mxu0 0.0
  %3677 = vmatpush2.xpose.msra.mxu0 0.0
  %3678 = vmatprep.subr.mxu0 0.0
  %3679 = vmatpush2.xpose.msra.mxu0 0.0
  %3680 = vmatprep.subr.mxu0 0.0
  %3681 = vmatpush2.xpose.msra.mxu0 0.0
  %3682 = vmatprep.subr.mxu0 0.0
  %3683 = vmatpush2.xpose.msra.mxu0 0.0
  %3684 = vmatprep.subr.mxu0 0.0
  %3685 = vmatpush2.xpose.msra.mxu0 0.0
  %3686 = vmatprep.subr.mxu0 0.0
  %3687 = vmatpush2.xpose.msra.mxu0 0.0
  %3688 = vmatprep.subr.mxu0 0.0
  %3689 = vmatpush2.xpose.msra.mxu0 0.0
  %3690 = vmatprep.subr.mxu0 0.0
  %3691 = vmatpush2.xpose.msra.mxu0 0.0
  %3692 = vmatprep.subr.mxu0 0.0
  %3693 = vmatpush2.xpose.msra.mxu0 0.0
  %3694 = vmatprep.subr.mxu0 0.0
  %3695 = vmatpush2.xpose.msra.mxu0 0.0
  %3696 = vmatprep.subr.mxu0 0.0
  %3697 = vmatpush2.xpose.msra.mxu0 0.0
  %3698 = vmatprep.subr.mxu0 0.0
  %3699 = vmatpush2.xpose.msra.mxu0 0.0
  %3700 = vmatprep.mubr.f32.mxu0 0.0
  %3701 = vmatmul.mubr.f32.gmra.mxu0 %v3628
  %v3702 = vpop.f32.mrf.mxu0
  %v3703 = vadd.f32 %v248, %v3702
  %v3704 = vpop.f32.mrf.mxu0
  %3705 = vmatprep.mubr.f32.mxu0 0.0
  %3706 = vmatmul.mubr.f32.gmra.mxu0 %v3630
  %v3707 = vpop.f32.mrf.mxu0
  %v3708 = vadd.f32 %v249, %v3707
  %v3709 = vpop.f32.mrf.mxu0
  %3710 = vdwg.mxu0
  %3711 = vrot.lane.b32.xlu0 %v196, 112
  %v3712 = vpop.permute.xlu0 %3711
  %3713 = vrot.lane.b32.xlu0 %v201, 112
  %v3714 = vpop.permute.xlu0 %3713
  %3715 = vrot.lane.b32.xlu0 %v196, 80
  %v3716 = vpop.permute.xlu0 %3715
  %3717 = vrot.lane.b32.xlu0 %v201, 80
  %v3718 = vpop.permute.xlu0 %3717
  %v3719 = vsel %vm258, %v3712, 0
  %v3721 = vsel %vm258, %v3714, 0
  %v3723 = vsel %vm258, %v3716, 0
  %v3725 = vsel %vm258, %v3718, 0
  %3727 = vmatprep.subr.mxu0 0.0
  %3728 = vmatpush1.xpose.msra.mxu0 0.0
  %3729 = vmatprep.subr.mxu0 0.0
  %3730 = vmatpush1.xpose.msra.mxu0 0.0
  %3731 = vmatprep.subr.mxu0 0.0
  %3732 = vmatpush1.xpose.msra.mxu0 0.0
  %3733 = vmatprep.subr.mxu0 0.0
  %3734 = vmatpush1.xpose.msra.mxu0 0.0
  %3735 = vmatprep.subr.mxu0 0.0
  %3736 = vmatpush1.xpose.msra.mxu0 0.0
  %3737 = vmatprep.subr.mxu0 0.0
  %3738 = vmatpush1.xpose.msra.mxu0 0.0
  %3739 = vmatprep.subr.mxu0 0.0
  %3740 = vmatpush1.xpose.msra.mxu0 0.0
  %3741 = vmatprep.subr.mxu0 0.0
  %3742 = vmatpush1.xpose.msra.mxu0 0.0
  %3743 = vmatprep.subr.mxu0 0.0
  %3744 = vmatpush1.xpose.msra.mxu0 0.0
  %3745 = vmatprep.subr.mxu0 0.0
  %3746 = vmatpush1.xpose.msra.mxu0 0.0
  %3747 = vmatprep.subr.mxu0 0.0
  %3748 = vmatpush1.xpose.msra.mxu0 0.0
  %3749 = vmatprep.subr.mxu0 0.0
  %3750 = vmatpush1.xpose.msra.mxu0 0.0
  %3751 = vmatprep.subr.mxu0 0.0
  %3752 = vmatpush1.xpose.msra.mxu0 0.0
  %3753 = vmatprep.subr.mxu0 0.0
  %3754 = vmatpush1.xpose.msra.mxu0 0.0
  %3755 = vmatprep.subr.mxu0 0.0
  %3756 = vmatpush1.xpose.msra.mxu0 %v3725
  %3757 = vmatprep.subr.mxu0 0.0
  %3758 = vmatpush1.xpose.msra.mxu0 %v3723
  %3759 = vmatprep.subr.mxu0 0.0
  %3760 = vmatpush2.xpose.msra.mxu0 0.0
  %3761 = vmatprep.subr.mxu0 0.0
  %3762 = vmatpush2.xpose.msra.mxu0 0.0
  %3763 = vmatprep.subr.mxu0 0.0
  %3764 = vmatpush2.xpose.msra.mxu0 0.0
  %3765 = vmatprep.subr.mxu0 0.0
  %3766 = vmatpush2.xpose.msra.mxu0 0.0
  %3767 = vmatprep.subr.mxu0 0.0
  %3768 = vmatpush2.xpose.msra.mxu0 0.0
  %3769 = vmatprep.subr.mxu0 0.0
  %3770 = vmatpush2.xpose.msra.mxu0 0.0
  %3771 = vmatprep.subr.mxu0 0.0
  %3772 = vmatpush2.xpose.msra.mxu0 0.0
  %3773 = vmatprep.subr.mxu0 0.0
  %3774 = vmatpush2.xpose.msra.mxu0 0.0
  %3775 = vmatprep.subr.mxu0 0.0
  %3776 = vmatpush2.xpose.msra.mxu0 0.0
  %3777 = vmatprep.subr.mxu0 0.0
  %3778 = vmatpush2.xpose.msra.mxu0 0.0
  %3779 = vmatprep.subr.mxu0 0.0
  %3780 = vmatpush2.xpose.msra.mxu0 0.0
  %3781 = vmatprep.subr.mxu0 0.0
  %3782 = vmatpush2.xpose.msra.mxu0 0.0
  %3783 = vmatprep.subr.mxu0 0.0
  %3784 = vmatpush2.xpose.msra.mxu0 0.0
  %3785 = vmatprep.subr.mxu0 0.0
  %3786 = vmatpush2.xpose.msra.mxu0 0.0
  %3787 = vmatprep.subr.mxu0 0.0
  %3788 = vmatpush2.xpose.msra.mxu0 0.0
  %3789 = vmatprep.subr.mxu0 0.0
  %3790 = vmatpush2.xpose.msra.mxu0 0.0
  %3791 = vmatprep.mubr.f32.mxu0 0.0
  %3792 = vmatmul.mubr.f32.gmra.mxu0 %v3719
  %v3793 = vpop.f32.mrf.mxu0
  %v3794 = vadd.f32 %v248, %v3793
  %v3795 = vpop.f32.mrf.mxu0
  %3796 = vmatprep.mubr.f32.mxu0 0.0
  %3797 = vmatmul.mubr.f32.gmra.mxu0 %v3721
  %v3798 = vpop.f32.mrf.mxu0
  %v3799 = vadd.f32 %v249, %v3798
  %v3800 = vpop.f32.mrf.mxu0
  %3801 = vdwg.mxu0
  %3802 = vrot.lane.b32.xlu0 %v206, 112
  %v3803 = vpop.permute.xlu0 %3802
  %3804 = vrot.lane.b32.xlu0 %v211, 112
  %v3805 = vpop.permute.xlu0 %3804
  %3806 = vrot.lane.b32.xlu0 %v206, 80
  %v3807 = vpop.permute.xlu0 %3806
  %3808 = vrot.lane.b32.xlu0 %v211, 80
  %v3809 = vpop.permute.xlu0 %3808
  %v3810 = vsel %vm258, %v3803, 0
  %v3812 = vsel %vm258, %v3805, 0
  %v3814 = vsel %vm258, %v3807, 0
  %v3816 = vsel %vm258, %v3809, 0
  %3818 = vmatprep.subr.mxu0 0.0
  %3819 = vmatpush1.xpose.msra.mxu0 0.0
  %3820 = vmatprep.subr.mxu0 0.0
  %3821 = vmatpush1.xpose.msra.mxu0 0.0
  %3822 = vmatprep.subr.mxu0 0.0
  %3823 = vmatpush1.xpose.msra.mxu0 0.0
  %3824 = vmatprep.subr.mxu0 0.0
  %3825 = vmatpush1.xpose.msra.mxu0 0.0
  %3826 = vmatprep.subr.mxu0 0.0
  %3827 = vmatpush1.xpose.msra.mxu0 0.0
  %3828 = vmatprep.subr.mxu0 0.0
  %3829 = vmatpush1.xpose.msra.mxu0 0.0
  %3830 = vmatprep.subr.mxu0 0.0
  %3831 = vmatpush1.xpose.msra.mxu0 0.0
  %3832 = vmatprep.subr.mxu0 0.0
  %3833 = vmatpush1.xpose.msra.mxu0 0.0
  %3834 = vmatprep.subr.mxu0 0.0
  %3835 = vmatpush1.xpose.msra.mxu0 0.0
  %3836 = vmatprep.subr.mxu0 0.0
  %3837 = vmatpush1.xpose.msra.mxu0 0.0
  %3838 = vmatprep.subr.mxu0 0.0
  %3839 = vmatpush1.xpose.msra.mxu0 0.0
  %3840 = vmatprep.subr.mxu0 0.0
  %3841 = vmatpush1.xpose.msra.mxu0 0.0
  %3842 = vmatprep.subr.mxu0 0.0
  %3843 = vmatpush1.xpose.msra.mxu0 0.0
  %3844 = vmatprep.subr.mxu0 0.0
  %3845 = vmatpush1.xpose.msra.mxu0 0.0
  %3846 = vmatprep.subr.mxu0 0.0
  %3847 = vmatpush1.xpose.msra.mxu0 %v3816
  %3848 = vmatprep.subr.mxu0 0.0
  %3849 = vmatpush1.xpose.msra.mxu0 %v3814
  %3850 = vmatprep.subr.mxu0 0.0
  %3851 = vmatpush2.xpose.msra.mxu0 0.0
  %3852 = vmatprep.subr.mxu0 0.0
  %3853 = vmatpush2.xpose.msra.mxu0 0.0
  %3854 = vmatprep.subr.mxu0 0.0
  %3855 = vmatpush2.xpose.msra.mxu0 0.0
  %3856 = vmatprep.subr.mxu0 0.0
  %3857 = vmatpush2.xpose.msra.mxu0 0.0
  %3858 = vmatprep.subr.mxu0 0.0
  %3859 = vmatpush2.xpose.msra.mxu0 0.0
  %3860 = vmatprep.subr.mxu0 0.0
  %3861 = vmatpush2.xpose.msra.mxu0 0.0
  %3862 = vmatprep.subr.mxu0 0.0
  %3863 = vmatpush2.xpose.msra.mxu0 0.0
  %3864 = vmatprep.subr.mxu0 0.0
  %3865 = vmatpush2.xpose.msra.mxu0 0.0
  %3866 = vmatprep.subr.mxu0 0.0
  %3867 = vmatpush2.xpose.msra.mxu0 0.0
  %3868 = vmatprep.subr.mxu0 0.0
  %3869 = vmatpush2.xpose.msra.mxu0 0.0
  %3870 = vmatprep.subr.mxu0 0.0
  %3871 = vmatpush2.xpose.msra.mxu0 0.0
  %3872 = vmatprep.subr.mxu0 0.0
  %3873 = vmatpush2.xpose.msra.mxu0 0.0
  %3874 = vmatprep.subr.mxu0 0.0
  %3875 = vmatpush2.xpose.msra.mxu0 0.0
  %3876 = vmatprep.subr.mxu0 0.0
  %3877 = vmatpush2.xpose.msra.mxu0 0.0
  %3878 = vmatprep.subr.mxu0 0.0
  %3879 = vmatpush2.xpose.msra.mxu0 0.0
  %3880 = vmatprep.subr.mxu0 0.0
  %3881 = vmatpush2.xpose.msra.mxu0 0.0
  %3882 = vmatprep.mubr.f32.mxu0 0.0
  %3883 = vmatmul.mubr.f32.gmra.mxu0 %v3810
  %v3884 = vpop.f32.mrf.mxu0
  %v3885 = vadd.f32 %v248, %v3884
  %v3886 = vpop.f32.mrf.mxu0
  %3887 = vmatprep.mubr.f32.mxu0 0.0
  %3888 = vmatmul.mubr.f32.gmra.mxu0 %v3812
  %v3889 = vpop.f32.mrf.mxu0
  %v3890 = vadd.f32 %v249, %v3889
  %v3891 = vpop.f32.mrf.mxu0
  %3892 = vdwg.mxu0
  %3893 = vrot.lane.b32.xlu0 %v216, 112
  %v3894 = vpop.permute.xlu0 %3893
  %3895 = vrot.lane.b32.xlu0 %v221, 112
  %v3896 = vpop.permute.xlu0 %3895
  %3897 = vrot.lane.b32.xlu0 %v216, 80
  %v3898 = vpop.permute.xlu0 %3897
  %3899 = vrot.lane.b32.xlu0 %v221, 80
  %v3900 = vpop.permute.xlu0 %3899
  %v3901 = vsel %vm258, %v3894, 0
  %v3903 = vsel %vm258, %v3896, 0
  %v3905 = vsel %vm258, %v3898, 0
  %v3907 = vsel %vm258, %v3900, 0
  %3909 = vmatprep.subr.mxu0 0.0
  %3910 = vmatpush1.xpose.msra.mxu0 0.0
  %3911 = vmatprep.subr.mxu0 0.0
  %3912 = vmatpush1.xpose.msra.mxu0 0.0
  %3913 = vmatprep.subr.mxu0 0.0
  %3914 = vmatpush1.xpose.msra.mxu0 0.0
  %3915 = vmatprep.subr.mxu0 0.0
  %3916 = vmatpush1.xpose.msra.mxu0 0.0
  %3917 = vmatprep.subr.mxu0 0.0
  %3918 = vmatpush1.xpose.msra.mxu0 0.0
  %3919 = vmatprep.subr.mxu0 0.0
  %3920 = vmatpush1.xpose.msra.mxu0 0.0
  %3921 = vmatprep.subr.mxu0 0.0
  %3922 = vmatpush1.xpose.msra.mxu0 0.0
  %3923 = vmatprep.subr.mxu0 0.0
  %3924 = vmatpush1.xpose.msra.mxu0 0.0
  %3925 = vmatprep.subr.mxu0 0.0
  %3926 = vmatpush1.xpose.msra.mxu0 0.0
  %3927 = vmatprep.subr.mxu0 0.0
  %3928 = vmatpush1.xpose.msra.mxu0 0.0
  %3929 = vmatprep.subr.mxu0 0.0
  %3930 = vmatpush1.xpose.msra.mxu0 0.0
  %3931 = vmatprep.subr.mxu0 0.0
  %3932 = vmatpush1.xpose.msra.mxu0 0.0
  %3933 = vmatprep.subr.mxu0 0.0
  %3934 = vmatpush1.xpose.msra.mxu0 0.0
  %3935 = vmatprep.subr.mxu0 0.0
  %3936 = vmatpush1.xpose.msra.mxu0 0.0
  %3937 = vmatprep.subr.mxu0 0.0
  %3938 = vmatpush1.xpose.msra.mxu0 %v3907
  %3939 = vmatprep.subr.mxu0 0.0
  %3940 = vmatpush1.xpose.msra.mxu0 %v3905
  %3941 = vmatprep.subr.mxu0 0.0
  %3942 = vmatpush2.xpose.msra.mxu0 0.0
  %3943 = vmatprep.subr.mxu0 0.0
  %3944 = vmatpush2.xpose.msra.mxu0 0.0
  %3945 = vmatprep.subr.mxu0 0.0
  %3946 = vmatpush2.xpose.msra.mxu0 0.0
  %3947 = vmatprep.subr.mxu0 0.0
  %3948 = vmatpush2.xpose.msra.mxu0 0.0
  %3949 = vmatprep.subr.mxu0 0.0
  %3950 = vmatpush2.xpose.msra.mxu0 0.0
  %3951 = vmatprep.subr.mxu0 0.0
  %3952 = vmatpush2.xpose.msra.mxu0 0.0
  %3953 = vmatprep.subr.mxu0 0.0
  %3954 = vmatpush2.xpose.msra.mxu0 0.0
  %3955 = vmatprep.subr.mxu0 0.0
  %3956 = vmatpush2.xpose.msra.mxu0 0.0
  %3957 = vmatprep.subr.mxu0 0.0
  %3958 = vmatpush2.xpose.msra.mxu0 0.0
  %3959 = vmatprep.subr.mxu0 0.0
  %3960 = vmatpush2.xpose.msra.mxu0 0.0
  %3961 = vmatprep.subr.mxu0 0.0
  %3962 = vmatpush2.xpose.msra.mxu0 0.0
  %3963 = vmatprep.subr.mxu0 0.0
  %3964 = vmatpush2.xpose.msra.mxu0 0.0
  %3965 = vmatprep.subr.mxu0 0.0
  %3966 = vmatpush2.xpose.msra.mxu0 0.0
  %3967 = vmatprep.subr.mxu0 0.0
  %3968 = vmatpush2.xpose.msra.mxu0 0.0
  %3969 = vmatprep.subr.mxu0 0.0
  %3970 = vmatpush2.xpose.msra.mxu0 0.0
  %3971 = vmatprep.subr.mxu0 0.0
  %3972 = vmatpush2.xpose.msra.mxu0 0.0
  %3973 = vmatprep.mubr.f32.mxu0 0.0
  %3974 = vmatmul.mubr.f32.gmra.mxu0 %v3901
  %v3975 = vpop.f32.mrf.mxu0
  %v3976 = vadd.f32 %v248, %v3975
  %v3977 = vpop.f32.mrf.mxu0
  %3978 = vmatprep.mubr.f32.mxu0 0.0
  %3979 = vmatmul.mubr.f32.gmra.mxu0 %v3903
  %v3980 = vpop.f32.mrf.mxu0
  %v3981 = vadd.f32 %v249, %v3980
  %v3982 = vpop.f32.mrf.mxu0
  %3983 = vdwg.mxu0
  %3984 = vrot.lane.b32.xlu0 %v226, 112
  %v3985 = vpop.permute.xlu0 %3984
  %3986 = vrot.lane.b32.xlu0 %v231, 112
  %v3987 = vpop.permute.xlu0 %3986
  %3988 = vrot.lane.b32.xlu0 %v226, 80
  %v3989 = vpop.permute.xlu0 %3988
  %3990 = vrot.lane.b32.xlu0 %v231, 80
  %v3991 = vpop.permute.xlu0 %3990
  %v3992 = vsel %vm258, %v3985, 0
  %v3994 = vsel %vm258, %v3987, 0
  %v3996 = vsel %vm258, %v3989, 0
  %v3998 = vsel %vm258, %v3991, 0
  %4000 = vmatprep.subr.mxu0 0.0
  %4001 = vmatpush1.xpose.msra.mxu0 0.0
  %4002 = vmatprep.subr.mxu0 0.0
  %4003 = vmatpush1.xpose.msra.mxu0 0.0
  %4004 = vmatprep.subr.mxu0 0.0
  %4005 = vmatpush1.xpose.msra.mxu0 0.0
  %4006 = vmatprep.subr.mxu0 0.0
  %4007 = vmatpush1.xpose.msra.mxu0 0.0
  %4008 = vmatprep.subr.mxu0 0.0
  %4009 = vmatpush1.xpose.msra.mxu0 0.0
  %4010 = vmatprep.subr.mxu0 0.0
  %4011 = vmatpush1.xpose.msra.mxu0 0.0
  %4012 = vmatprep.subr.mxu0 0.0
  %4013 = vmatpush1.xpose.msra.mxu0 0.0
  %4014 = vmatprep.subr.mxu0 0.0
  %4015 = vmatpush1.xpose.msra.mxu0 0.0
  %4016 = vmatprep.subr.mxu0 0.0
  %4017 = vmatpush1.xpose.msra.mxu0 0.0
  %4018 = vmatprep.subr.mxu0 0.0
  %4019 = vmatpush1.xpose.msra.mxu0 0.0
  %4020 = vmatprep.subr.mxu0 0.0
  %4021 = vmatpush1.xpose.msra.mxu0 0.0
  %4022 = vmatprep.subr.mxu0 0.0
  %4023 = vmatpush1.xpose.msra.mxu0 0.0
  %4024 = vmatprep.subr.mxu0 0.0
  %4025 = vmatpush1.xpose.msra.mxu0 0.0
  %4026 = vmatprep.subr.mxu0 0.0
  %4027 = vmatpush1.xpose.msra.mxu0 0.0
  %4028 = vmatprep.subr.mxu0 0.0
  %4029 = vmatpush1.xpose.msra.mxu0 %v3998
  %4030 = vmatprep.subr.mxu0 0.0
  %4031 = vmatpush1.xpose.msra.mxu0 %v3996
  %4032 = vmatprep.subr.mxu0 0.0
  %4033 = vmatpush2.xpose.msra.mxu0 0.0
  %4034 = vmatprep.subr.mxu0 0.0
  %4035 = vmatpush2.xpose.msra.mxu0 0.0
  %4036 = vmatprep.subr.mxu0 0.0
  %4037 = vmatpush2.xpose.msra.mxu0 0.0
  %4038 = vmatprep.subr.mxu0 0.0
  %4039 = vmatpush2.xpose.msra.mxu0 0.0
  %4040 = vmatprep.subr.mxu0 0.0
  %4041 = vmatpush2.xpose.msra.mxu0 0.0
  %4042 = vmatprep.subr.mxu0 0.0
  %4043 = vmatpush2.xpose.msra.mxu0 0.0
  %4044 = vmatprep.subr.mxu0 0.0
  %4045 = vmatpush2.xpose.msra.mxu0 0.0
  %4046 = vmatprep.subr.mxu0 0.0
  %4047 = vmatpush2.xpose.msra.mxu0 0.0
  %4048 = vmatprep.subr.mxu0 0.0
  %4049 = vmatpush2.xpose.msra.mxu0 0.0
  %4050 = vmatprep.subr.mxu0 0.0
  %4051 = vmatpush2.xpose.msra.mxu0 0.0
  %4052 = vmatprep.subr.mxu0 0.0
  %4053 = vmatpush2.xpose.msra.mxu0 0.0
  %4054 = vmatprep.subr.mxu0 0.0
  %4055 = vmatpush2.xpose.msra.mxu0 0.0
  %4056 = vmatprep.subr.mxu0 0.0
  %4057 = vmatpush2.xpose.msra.mxu0 0.0
  %4058 = vmatprep.subr.mxu0 0.0
  %4059 = vmatpush2.xpose.msra.mxu0 0.0
  %4060 = vmatprep.subr.mxu0 0.0
  %4061 = vmatpush2.xpose.msra.mxu0 0.0
  %4062 = vmatprep.subr.mxu0 0.0
  %4063 = vmatpush2.xpose.msra.mxu0 0.0
  %4064 = vmatprep.mubr.f32.mxu0 0.0
  %4065 = vmatmul.mubr.f32.gmra.mxu0 %v3992
  %v4066 = vpop.f32.mrf.mxu0
  %v4067 = vadd.f32 %v248, %v4066
  %v4068 = vpop.f32.mrf.mxu0
  %4069 = vmatprep.mubr.f32.mxu0 0.0
  %4070 = vmatmul.mubr.f32.gmra.mxu0 %v3994
  %v4071 = vpop.f32.mrf.mxu0
  %v4072 = vadd.f32 %v249, %v4071
  %v4073 = vpop.f32.mrf.mxu0
  %4074 = vdwg.mxu0
  %4075 = vrot.lane.b32.xlu0 %v236, 112
  %v4076 = vpop.permute.xlu0 %4075
  %4077 = vrot.lane.b32.xlu0 %v241, 112
  %v4078 = vpop.permute.xlu0 %4077
  %4079 = vrot.lane.b32.xlu0 %v236, 80
  %v4080 = vpop.permute.xlu0 %4079
  %4081 = vrot.lane.b32.xlu0 %v241, 80
  %v4082 = vpop.permute.xlu0 %4081
  %v4083 = vsel %vm258, %v4076, 0
  %v4085 = vsel %vm258, %v4078, 0
  %v4087 = vsel %vm258, %v4080, 0
  %v4089 = vsel %vm258, %v4082, 0
  %4091 = vmatprep.subr.mxu0 0.0
  %4092 = vmatpush1.xpose.msra.mxu0 0.0
  %4093 = vmatprep.subr.mxu0 0.0
  %4094 = vmatpush1.xpose.msra.mxu0 0.0
  %4095 = vmatprep.subr.mxu0 0.0
  %4096 = vmatpush1.xpose.msra.mxu0 0.0
  %4097 = vmatprep.subr.mxu0 0.0
  %4098 = vmatpush1.xpose.msra.mxu0 0.0
  %4099 = vmatprep.subr.mxu0 0.0
  %4100 = vmatpush1.xpose.msra.mxu0 0.0
  %4101 = vmatprep.subr.mxu0 0.0
  %4102 = vmatpush1.xpose.msra.mxu0 0.0
  %4103 = vmatprep.subr.mxu0 0.0
  %4104 = vmatpush1.xpose.msra.mxu0 0.0
  %4105 = vmatprep.subr.mxu0 0.0
  %4106 = vmatpush1.xpose.msra.mxu0 0.0
  %4107 = vmatprep.subr.mxu0 0.0
  %4108 = vmatpush1.xpose.msra.mxu0 0.0
  %4109 = vmatprep.subr.mxu0 0.0
  %4110 = vmatpush1.xpose.msra.mxu0 0.0
  %4111 = vmatprep.subr.mxu0 0.0
  %4112 = vmatpush1.xpose.msra.mxu0 0.0
  %4113 = vmatprep.subr.mxu0 0.0
  %4114 = vmatpush1.xpose.msra.mxu0 0.0
  %4115 = vmatprep.subr.mxu0 0.0
  %4116 = vmatpush1.xpose.msra.mxu0 0.0
  %4117 = vmatprep.subr.mxu0 0.0
  %4118 = vmatpush1.xpose.msra.mxu0 0.0
  %4119 = vmatprep.subr.mxu0 0.0
  %4120 = vmatpush1.xpose.msra.mxu0 %v4089
  %4121 = vmatprep.subr.mxu0 0.0
  %4122 = vmatpush1.xpose.msra.mxu0 %v4087
  %4123 = vmatprep.subr.mxu0 0.0
  %4124 = vmatpush2.xpose.msra.mxu0 0.0
  %4125 = vmatprep.subr.mxu0 0.0
  %4126 = vmatpush2.xpose.msra.mxu0 0.0
  %4127 = vmatprep.subr.mxu0 0.0
  %4128 = vmatpush2.xpose.msra.mxu0 0.0
  %4129 = vmatprep.subr.mxu0 0.0
  %4130 = vmatpush2.xpose.msra.mxu0 0.0
  %4131 = vmatprep.subr.mxu0 0.0
  %4132 = vmatpush2.xpose.msra.mxu0 0.0
  %4133 = vmatprep.subr.mxu0 0.0
  %4134 = vmatpush2.xpose.msra.mxu0 0.0
  %4135 = vmatprep.subr.mxu0 0.0
  %4136 = vmatpush2.xpose.msra.mxu0 0.0
  %4137 = vmatprep.subr.mxu0 0.0
  %4138 = vmatpush2.xpose.msra.mxu0 0.0
  %4139 = vmatprep.subr.mxu0 0.0
  %4140 = vmatpush2.xpose.msra.mxu0 0.0
  %4141 = vmatprep.subr.mxu0 0.0
  %4142 = vmatpush2.xpose.msra.mxu0 0.0
  %4143 = vmatprep.subr.mxu0 0.0
  %4144 = vmatpush2.xpose.msra.mxu0 0.0
  %4145 = vmatprep.subr.mxu0 0.0
  %4146 = vmatpush2.xpose.msra.mxu0 0.0
  %4147 = vmatprep.subr.mxu0 0.0
  %4148 = vmatpush2.xpose.msra.mxu0 0.0
  %4149 = vmatprep.subr.mxu0 0.0
  %4150 = vmatpush2.xpose.msra.mxu0 0.0
  %4151 = vmatprep.subr.mxu0 0.0
  %4152 = vmatpush2.xpose.msra.mxu0 0.0
  %4153 = vmatprep.subr.mxu0 0.0
  %4154 = vmatpush2.xpose.msra.mxu0 0.0
  %4155 = vmatprep.mubr.f32.mxu0 0.0
  %4156 = vmatmul.mubr.f32.gmra.mxu0 %v4083
  %v4157 = vpop.f32.mrf.mxu0
  %v4158 = vadd.f32 %v248, %v4157
  %v4159 = vpop.f32.mrf.mxu0
  %4160 = vmatprep.mubr.f32.mxu0 0.0
  %4161 = vmatmul.mubr.f32.gmra.mxu0 %v4085
  %v4162 = vpop.f32.mrf.mxu0
  %v4163 = vadd.f32 %v249, %v4162
  %v4164 = vpop.f32.mrf.mxu0
  %4165 = vdwg.mxu0
  %v4166 = vsel %vm965, %v3521, -inf
  %4167 = vmax.xlane.f32.xlu0 %v4166
  %v4168 = vpop.xlane.xlu0 %4167
  %v4169 = vsel %vm965, %v3526, -inf
  %4170 = vmax.xlane.f32.xlu0 %v4169
  %v4171 = vpop.xlane.xlu0 %4170
  %v4172 = vsel %vm965, %v3612, -inf
  %4173 = vmax.xlane.f32.xlu0 %v4172
  %v4174 = vpop.xlane.xlu0 %4173
  %v4175 = vsel %vm965, %v3617, -inf
  %4176 = vmax.xlane.f32.xlu0 %v4175
  %v4177 = vpop.xlane.xlu0 %4176
  %v4178 = vsel %vm965, %v3703, -inf
  %4179 = vmax.xlane.f32.xlu0 %v4178
  %v4180 = vpop.xlane.xlu0 %4179
  %v4181 = vsel %vm965, %v3708, -inf
  %4182 = vmax.xlane.f32.xlu0 %v4181
  %v4183 = vpop.xlane.xlu0 %4182
  %v4184 = vsel %vm965, %v3794, -inf
  %4185 = vmax.xlane.f32.xlu0 %v4184
  %v4186 = vpop.xlane.xlu0 %4185
  %v4187 = vsel %vm965, %v3799, -inf
  %4188 = vmax.xlane.f32.xlu0 %v4187
  %v4189 = vpop.xlane.xlu0 %4188
  %v4190 = vsel %vm965, %v3885, -inf
  %4191 = vmax.xlane.f32.xlu0 %v4190
  %v4192 = vpop.xlane.xlu0 %4191
  %v4193 = vsel %vm965, %v3890, -inf
  %4194 = vmax.xlane.f32.xlu0 %v4193
  %v4195 = vpop.xlane.xlu0 %4194
  %v4196 = vsel %vm965, %v3976, -inf
  %4197 = vmax.xlane.f32.xlu0 %v4196
  %v4198 = vpop.xlane.xlu0 %4197
  %v4199 = vsel %vm965, %v3981, -inf
  %4200 = vmax.xlane.f32.xlu0 %v4199
  %v4201 = vpop.xlane.xlu0 %4200
  %v4202 = vsel %vm965, %v4067, -inf
  %4203 = vmax.xlane.f32.xlu0 %v4202
  %v4204 = vpop.xlane.xlu0 %4203
  %v4205 = vsel %vm965, %v4072, -inf
  %4206 = vmax.xlane.f32.xlu0 %v4205
  %v4207 = vpop.xlane.xlu0 %4206
  %v4208 = vsel %vm965, %v4158, -inf
  %4209 = vmax.xlane.f32.xlu0 %v4208
  %v4210 = vpop.xlane.xlu0 %4209
  %v4211 = vsel %vm965, %v4163, -inf
  %4212 = vmax.xlane.f32.xlu0 %v4211
  %v4213 = vpop.xlane.xlu0 %4212
  %v4214 = vsub.f32 %v3521, %v4168
  %v4215 = vsub.f32 %v3526, %v4171
  %v4216 = vsub.f32 %v3612, %v4174
  %v4217 = vsub.f32 %v3617, %v4177
  %v4218 = vsub.f32 %v3703, %v4180
  %v4219 = vsub.f32 %v3708, %v4183
  %v4220 = vsub.f32 %v3794, %v4186
  %v4221 = vsub.f32 %v3799, %v4189
  %v4222 = vsub.f32 %v3885, %v4192
  %v4223 = vsub.f32 %v3890, %v4195
  %v4224 = vsub.f32 %v3976, %v4198
  %v4225 = vsub.f32 %v3981, %v4201
  %v4226 = vsub.f32 %v4067, %v4204
  %v4227 = vsub.f32 %v4072, %v4207
  %v4228 = vsub.f32 %v4158, %v4210
  %v4229 = vsub.f32 %v4163, %v4213
  %v4230 = vmul.f32 %v4214, 1.442695
  %v4231 = vpow.pop %v4230
  %v4232 = vmul.f32 %v4215, 1.442695
  %v4233 = vpow.pop %v4232
  %v4234 = vmul.f32 %v4216, 1.442695
  %v4235 = vpow.pop %v4234
  %v4236 = vmul.f32 %v4217, 1.442695
  %v4237 = vpow.pop %v4236
  %v4238 = vmul.f32 %v4218, 1.442695
  %v4239 = vpow.pop %v4238
  %v4240 = vmul.f32 %v4219, 1.442695
  %v4241 = vpow.pop %v4240
  %v4242 = vmul.f32 %v4220, 1.442695
  %v4243 = vpow.pop %v4242
  %v4244 = vmul.f32 %v4221, 1.442695
  %v4245 = vpow.pop %v4244
  %v4246 = vmul.f32 %v4222, 1.442695
  %v4247 = vpow.pop %v4246
  %v4248 = vmul.f32 %v4223, 1.442695
  %v4249 = vpow.pop %v4248
  %v4250 = vmul.f32 %v4224, 1.442695
  %v4251 = vpow.pop %v4250
  %v4252 = vmul.f32 %v4225, 1.442695
  %v4253 = vpow.pop %v4252
  %v4254 = vmul.f32 %v4226, 1.442695
  %v4255 = vpow.pop %v4254
  %v4256 = vmul.f32 %v4227, 1.442695
  %v4257 = vpow.pop %v4256
  %v4258 = vmul.f32 %v4228, 1.442695
  %v4259 = vpow.pop %v4258
  %v4260 = vmul.f32 %v4229, 1.442695
  %v4261 = vpow.pop %v4260
  %v4262 = vsel %vm965, %v4231, 0.0
  %4263 = vadd.xlane.f32.xlu0 %v4262
  %v4264 = vpop.xlane.xlu0 %4263
  %v4265 = vsel %vm965, %v4233, 0.0
  %4266 = vadd.xlane.f32.xlu0 %v4265
  %v4267 = vpop.xlane.xlu0 %4266
  %v4268 = vsel %vm965, %v4235, 0.0
  %4269 = vadd.xlane.f32.xlu0 %v4268
  %v4270 = vpop.xlane.xlu0 %4269
  %v4271 = vsel %vm965, %v4237, 0.0
  %4272 = vadd.xlane.f32.xlu0 %v4271
  %v4273 = vpop.xlane.xlu0 %4272
  %v4274 = vsel %vm965, %v4239, 0.0
  %4275 = vadd.xlane.f32.xlu0 %v4274
  %v4276 = vpop.xlane.xlu0 %4275
  %v4277 = vsel %vm965, %v4241, 0.0
  %4278 = vadd.xlane.f32.xlu0 %v4277
  %v4279 = vpop.xlane.xlu0 %4278
  %v4280 = vsel %vm965, %v4243, 0.0
  %4281 = vadd.xlane.f32.xlu0 %v4280
  %v4282 = vpop.xlane.xlu0 %4281
  %v4283 = vsel %vm965, %v4245, 0.0
  %4284 = vadd.xlane.f32.xlu0 %v4283
  %v4285 = vpop.xlane.xlu0 %4284
  %v4286 = vsel %vm965, %v4247, 0.0
  %4287 = vadd.xlane.f32.xlu0 %v4286
  %v4288 = vpop.xlane.xlu0 %4287
  %v4289 = vsel %vm965, %v4249, 0.0
  %4290 = vadd.xlane.f32.xlu0 %v4289
  %v4291 = vpop.xlane.xlu0 %4290
  %v4292 = vsel %vm965, %v4251, 0.0
  %4293 = vadd.xlane.f32.xlu0 %v4292
  %v4294 = vpop.xlane.xlu0 %4293
  %v4295 = vsel %vm965, %v4253, 0.0
  %4296 = vadd.xlane.f32.xlu0 %v4295
  %v4297 = vpop.xlane.xlu0 %4296
  %v4298 = vsel %vm965, %v4255, 0.0
  %4299 = vadd.xlane.f32.xlu0 %v4298
  %v4300 = vpop.xlane.xlu0 %4299
  %v4301 = vsel %vm965, %v4257, 0.0
  %4302 = vadd.xlane.f32.xlu0 %v4301
  %v4303 = vpop.xlane.xlu0 %4302
  %v4304 = vsel %vm965, %v4259, 0.0
  %4305 = vadd.xlane.f32.xlu0 %v4304
  %v4306 = vpop.xlane.xlu0 %4305
  %v4307 = vsel %vm965, %v4261, 0.0
  %4308 = vadd.xlane.f32.xlu0 %v4307
  %v4309 = vpop.xlane.xlu0 %4308
  %v4310 = vrcp.pop %v4264
  %v4311 = vrcp.pop %v4267
  %v4312 = vrcp.pop %v4270
  %v4313 = vrcp.pop %v4273
  %v4314 = vrcp.pop %v4276
  %v4315 = vrcp.pop %v4279
  %v4316 = vrcp.pop %v4282
  %v4317 = vrcp.pop %v4285
  %v4318 = vrcp.pop %v4288
  %v4319 = vrcp.pop %v4291
  %v4320 = vrcp.pop %v4294
  %v4321 = vrcp.pop %v4297
  %v4322 = vrcp.pop %v4300
  %v4323 = vrcp.pop %v4303
  %v4324 = vrcp.pop %v4306
  %v4325 = vrcp.pop %v4309
  %v4326 = vmul.f32 %v4231, %v4310
  %v4327 = vmul.f32 %v4233, %v4311
  %v4328 = vmul.f32 %v4235, %v4312
  %v4329 = vmul.f32 %v4237, %v4313
  %v4330 = vmul.f32 %v4239, %v4314
  %v4331 = vmul.f32 %v4241, %v4315
  %v4332 = vmul.f32 %v4243, %v4316
  %v4333 = vmul.f32 %v4245, %v4317
  %v4334 = vmul.f32 %v4247, %v4318
  %v4335 = vmul.f32 %v4249, %v4319
  %v4336 = vmul.f32 %v4251, %v4320
  %v4337 = vmul.f32 %v4253, %v4321
  %v4338 = vmul.f32 %v4255, %v4322
  %v4339 = vmul.f32 %v4257, %v4323
  %v4340 = vmul.f32 %v4259, %v4324
  %v4341 = vmul.f32 %v4261, %v4325
  %4342 = vrot.lane.b32.xlu0 %v166, 48
  %v4343 = vpop.permute.xlu0 %4342
  %4344 = vrot.lane.b32.xlu0 %v171, 48
  %v4345 = vpop.permute.xlu0 %4344
  %v4349 = vsel %vm965, %v4326, 0
  %v4352 = vsel %vm965, %v4327, 0
  %4354 = vmatprep.subr.mxu0 0.0
  %4355 = vmatpush1.msra.mxu0 0.0
  %4356 = vmatprep.subr.mxu0 0.0
  %4357 = vmatpush1.msra.mxu0 0.0
  %4358 = vmatprep.subr.mxu0 0.0
  %4359 = vmatpush1.msra.mxu0 0.0
  %4360 = vmatprep.subr.mxu0 0.0
  %4361 = vmatpush1.msra.mxu0 0.0
  %4362 = vmatprep.subr.mxu0 0.0
  %4363 = vmatpush1.msra.mxu0 0.0
  %4364 = vmatprep.subr.mxu0 0.0
  %4365 = vmatpush1.msra.mxu0 0.0
  %4366 = vmatprep.subr.mxu0 0.0
  %4367 = vmatpush1.msra.mxu0 0.0
  %4368 = vmatprep.subr.mxu0 0.0
  %4369 = vmatpush1.msra.mxu0 0.0
  %4370 = vmatprep.subr.mxu0 0.0
  %4371 = vmatpush1.msra.mxu0 0.0
  %4372 = vmatprep.subr.mxu0 0.0
  %4373 = vmatpush1.msra.mxu0 0.0
  %4374 = vmatprep.subr.mxu0 0.0
  %4375 = vmatpush1.msra.mxu0 0.0
  %4376 = vmatprep.subr.mxu0 0.0
  %4377 = vmatpush1.msra.mxu0 0.0
  %4378 = vmatprep.subr.mxu0 0.0
  %4379 = vmatpush1.msra.mxu0 0.0
  %4380 = vmatprep.subr.mxu0 0.0
  %4381 = vmatpush1.msra.mxu0 0.0
  %4382 = vmatprep.subr.mxu0 0.0
  %4383 = vmatpush1.msra.mxu0 %v4345
  %4384 = vmatprep.subr.mxu0 0.0
  %4385 = vmatpush1.msra.mxu0 %v4343
  %4386 = vmatprep.subr.mxu0 0.0
  %4387 = vmatpush2.msra.mxu0 0.0
  %4388 = vmatprep.subr.mxu0 0.0
  %4389 = vmatpush2.msra.mxu0 0.0
  %4390 = vmatprep.subr.mxu0 0.0
  %4391 = vmatpush2.msra.mxu0 0.0
  %4392 = vmatprep.subr.mxu0 0.0
  %4393 = vmatpush2.msra.mxu0 0.0
  %4394 = vmatprep.subr.mxu0 0.0
  %4395 = vmatpush2.msra.mxu0 0.0
  %4396 = vmatprep.subr.mxu0 0.0
  %4397 = vmatpush2.msra.mxu0 0.0
  %4398 = vmatprep.subr.mxu0 0.0
  %4399 = vmatpush2.msra.mxu0 0.0
  %4400 = vmatprep.subr.mxu0 0.0
  %4401 = vmatpush2.msra.mxu0 0.0
  %4402 = vmatprep.subr.mxu0 0.0
  %4403 = vmatpush2.msra.mxu0 0.0
  %4404 = vmatprep.subr.mxu0 0.0
  %4405 = vmatpush2.msra.mxu0 0.0
  %4406 = vmatprep.subr.mxu0 0.0
  %4407 = vmatpush2.msra.mxu0 0.0
  %4408 = vmatprep.subr.mxu0 0.0
  %4409 = vmatpush2.msra.mxu0 0.0
  %4410 = vmatprep.subr.mxu0 0.0
  %4411 = vmatpush2.msra.mxu0 0.0
  %4412 = vmatprep.subr.mxu0 0.0
  %4413 = vmatpush2.msra.mxu0 0.0
  %4414 = vmatprep.subr.mxu0 0.0
  %4415 = vmatpush2.msra.mxu0 0.0
  %4416 = vmatprep.subr.mxu0 0.0
  %4417 = vmatpush2.msra.mxu0 0.0
  %4418 = vmatprep.mubr.f32.mxu0 0.0
  %4419 = vmatmul.mubr.f32.gmra.mxu0 %v4349
  %v4420 = vpop.f32.mrf.mxu0
  %v4421 = vadd.f32 0.0, %v4420
  %v4422 = vpop.f32.mrf.mxu0
  %4423 = vmatprep.mubr.f32.mxu0 0.0
  %4424 = vmatmul.mubr.f32.gmra.mxu0 %v4352
  %v4425 = vpop.f32.mrf.mxu0
  %v4426 = vadd.f32 0.0, %v4425
  %v4427 = vpop.f32.mrf.mxu0
  %4428 = vdwg.mxu0
  %4429 = vrot.lane.b32.xlu0 %v176, 48
  %v4430 = vpop.permute.xlu0 %4429
  %4431 = vrot.lane.b32.xlu0 %v181, 48
  %v4432 = vpop.permute.xlu0 %4431
  %v4436 = vsel %vm965, %v4328, 0
  %v4439 = vsel %vm965, %v4329, 0
  %4441 = vmatprep.subr.mxu0 0.0
  %4442 = vmatpush1.msra.mxu0 0.0
  %4443 = vmatprep.subr.mxu0 0.0
  %4444 = vmatpush1.msra.mxu0 0.0
  %4445 = vmatprep.subr.mxu0 0.0
  %4446 = vmatpush1.msra.mxu0 0.0
  %4447 = vmatprep.subr.mxu0 0.0
  %4448 = vmatpush1.msra.mxu0 0.0
  %4449 = vmatprep.subr.mxu0 0.0
  %4450 = vmatpush1.msra.mxu0 0.0
  %4451 = vmatprep.subr.mxu0 0.0
  %4452 = vmatpush1.msra.mxu0 0.0
  %4453 = vmatprep.subr.mxu0 0.0
  %4454 = vmatpush1.msra.mxu0 0.0
  %4455 = vmatprep.subr.mxu0 0.0
  %4456 = vmatpush1.msra.mxu0 0.0
  %4457 = vmatprep.subr.mxu0 0.0
  %4458 = vmatpush1.msra.mxu0 0.0
  %4459 = vmatprep.subr.mxu0 0.0
  %4460 = vmatpush1.msra.mxu0 0.0
  %4461 = vmatprep.subr.mxu0 0.0
  %4462 = vmatpush1.msra.mxu0 0.0
  %4463 = vmatprep.subr.mxu0 0.0
  %4464 = vmatpush1.msra.mxu0 0.0
  %4465 = vmatprep.subr.mxu0 0.0
  %4466 = vmatpush1.msra.mxu0 0.0
  %4467 = vmatprep.subr.mxu0 0.0
  %4468 = vmatpush1.msra.mxu0 0.0
  %4469 = vmatprep.subr.mxu0 0.0
  %4470 = vmatpush1.msra.mxu0 %v4432
  %4471 = vmatprep.subr.mxu0 0.0
  %4472 = vmatpush1.msra.mxu0 %v4430
  %4473 = vmatprep.subr.mxu0 0.0
  %4474 = vmatpush2.msra.mxu0 0.0
  %4475 = vmatprep.subr.mxu0 0.0
  %4476 = vmatpush2.msra.mxu0 0.0
  %4477 = vmatprep.subr.mxu0 0.0
  %4478 = vmatpush2.msra.mxu0 0.0
  %4479 = vmatprep.subr.mxu0 0.0
  %4480 = vmatpush2.msra.mxu0 0.0
  %4481 = vmatprep.subr.mxu0 0.0
  %4482 = vmatpush2.msra.mxu0 0.0
  %4483 = vmatprep.subr.mxu0 0.0
  %4484 = vmatpush2.msra.mxu0 0.0
  %4485 = vmatprep.subr.mxu0 0.0
  %4486 = vmatpush2.msra.mxu0 0.0
  %4487 = vmatprep.subr.mxu0 0.0
  %4488 = vmatpush2.msra.mxu0 0.0
  %4489 = vmatprep.subr.mxu0 0.0
  %4490 = vmatpush2.msra.mxu0 0.0
  %4491 = vmatprep.subr.mxu0 0.0
  %4492 = vmatpush2.msra.mxu0 0.0
  %4493 = vmatprep.subr.mxu0 0.0
  %4494 = vmatpush2.msra.mxu0 0.0
  %4495 = vmatprep.subr.mxu0 0.0
  %4496 = vmatpush2.msra.mxu0 0.0
  %4497 = vmatprep.subr.mxu0 0.0
  %4498 = vmatpush2.msra.mxu0 0.0
  %4499 = vmatprep.subr.mxu0 0.0
  %4500 = vmatpush2.msra.mxu0 0.0
  %4501 = vmatprep.subr.mxu0 0.0
  %4502 = vmatpush2.msra.mxu0 0.0
  %4503 = vmatprep.subr.mxu0 0.0
  %4504 = vmatpush2.msra.mxu0 0.0
  %4505 = vmatprep.mubr.f32.mxu0 0.0
  %4506 = vmatmul.mubr.f32.gmra.mxu0 %v4436
  %v4507 = vpop.f32.mrf.mxu0
  %v4508 = vadd.f32 0.0, %v4507
  %v4509 = vpop.f32.mrf.mxu0
  %4510 = vmatprep.mubr.f32.mxu0 0.0
  %4511 = vmatmul.mubr.f32.gmra.mxu0 %v4439
  %v4512 = vpop.f32.mrf.mxu0
  %v4513 = vadd.f32 0.0, %v4512
  %v4514 = vpop.f32.mrf.mxu0
  %4515 = vdwg.mxu0
  %4516 = vrot.lane.b32.xlu0 %v186, 48
  %v4517 = vpop.permute.xlu0 %4516
  %4518 = vrot.lane.b32.xlu0 %v191, 48
  %v4519 = vpop.permute.xlu0 %4518
  %v4523 = vsel %vm965, %v4330, 0
  %v4526 = vsel %vm965, %v4331, 0
  %4528 = vmatprep.subr.mxu0 0.0
  %4529 = vmatpush1.msra.mxu0 0.0
  %4530 = vmatprep.subr.mxu0 0.0
  %4531 = vmatpush1.msra.mxu0 0.0
  %4532 = vmatprep.subr.mxu0 0.0
  %4533 = vmatpush1.msra.mxu0 0.0
  %4534 = vmatprep.subr.mxu0 0.0
  %4535 = vmatpush1.msra.mxu0 0.0
  %4536 = vmatprep.subr.mxu0 0.0
  %4537 = vmatpush1.msra.mxu0 0.0
  %4538 = vmatprep.subr.mxu0 0.0
  %4539 = vmatpush1.msra.mxu0 0.0
  %4540 = vmatprep.subr.mxu0 0.0
  %4541 = vmatpush1.msra.mxu0 0.0
  %4542 = vmatprep.subr.mxu0 0.0
  %4543 = vmatpush1.msra.mxu0 0.0
  %4544 = vmatprep.subr.mxu0 0.0
  %4545 = vmatpush1.msra.mxu0 0.0
  %4546 = vmatprep.subr.mxu0 0.0
  %4547 = vmatpush1.msra.mxu0 0.0
  %4548 = vmatprep.subr.mxu0 0.0
  %4549 = vmatpush1.msra.mxu0 0.0
  %4550 = vmatprep.subr.mxu0 0.0
  %4551 = vmatpush1.msra.mxu0 0.0
  %4552 = vmatprep.subr.mxu0 0.0
  %4553 = vmatpush1.msra.mxu0 0.0
  %4554 = vmatprep.subr.mxu0 0.0
  %4555 = vmatpush1.msra.mxu0 0.0
  %4556 = vmatprep.subr.mxu0 0.0
  %4557 = vmatpush1.msra.mxu0 %v4519
  %4558 = vmatprep.subr.mxu0 0.0
  %4559 = vmatpush1.msra.mxu0 %v4517
  %4560 = vmatprep.subr.mxu0 0.0
  %4561 = vmatpush2.msra.mxu0 0.0
  %4562 = vmatprep.subr.mxu0 0.0
  %4563 = vmatpush2.msra.mxu0 0.0
  %4564 = vmatprep.subr.mxu0 0.0
  %4565 = vmatpush2.msra.mxu0 0.0
  %4566 = vmatprep.subr.mxu0 0.0
  %4567 = vmatpush2.msra.mxu0 0.0
  %4568 = vmatprep.subr.mxu0 0.0
  %4569 = vmatpush2.msra.mxu0 0.0
  %4570 = vmatprep.subr.mxu0 0.0
  %4571 = vmatpush2.msra.mxu0 0.0
  %4572 = vmatprep.subr.mxu0 0.0
  %4573 = vmatpush2.msra.mxu0 0.0
  %4574 = vmatprep.subr.mxu0 0.0
  %4575 = vmatpush2.msra.mxu0 0.0
  %4576 = vmatprep.subr.mxu0 0.0
  %4577 = vmatpush2.msra.mxu0 0.0
  %4578 = vmatprep.subr.mxu0 0.0
  %4579 = vmatpush2.msra.mxu0 0.0
  %4580 = vmatprep.subr.mxu0 0.0
  %4581 = vmatpush2.msra.mxu0 0.0
  %4582 = vmatprep.subr.mxu0 0.0
  %4583 = vmatpush2.msra.mxu0 0.0
  %4584 = vmatprep.subr.mxu0 0.0
  %4585 = vmatpush2.msra.mxu0 0.0
  %4586 = vmatprep.subr.mxu0 0.0
  %4587 = vmatpush2.msra.mxu0 0.0
  %4588 = vmatprep.subr.mxu0 0.0
  %4589 = vmatpush2.msra.mxu0 0.0
  %4590 = vmatprep.subr.mxu0 0.0
  %4591 = vmatpush2.msra.mxu0 0.0
  %4592 = vmatprep.mubr.f32.mxu0 0.0
  %4593 = vmatmul.mubr.f32.gmra.mxu0 %v4523
  %v4594 = vpop.f32.mrf.mxu0
  %v4595 = vadd.f32 0.0, %v4594
  %v4596 = vpop.f32.mrf.mxu0
  %4597 = vmatprep.mubr.f32.mxu0 0.0
  %4598 = vmatmul.mubr.f32.gmra.mxu0 %v4526
  %v4599 = vpop.f32.mrf.mxu0
  %v4600 = vadd.f32 0.0, %v4599
  %v4601 = vpop.f32.mrf.mxu0
  %4602 = vdwg.mxu0
  %4603 = vrot.lane.b32.xlu0 %v196, 48
  %v4604 = vpop.permute.xlu0 %4603
  %4605 = vrot.lane.b32.xlu0 %v201, 48
  %v4606 = vpop.permute.xlu0 %4605
  %v4610 = vsel %vm965, %v4332, 0
  %v4613 = vsel %vm965, %v4333, 0
  %4615 = vmatprep.subr.mxu0 0.0
  %4616 = vmatpush1.msra.mxu0 0.0
  %4617 = vmatprep.subr.mxu0 0.0
  %4618 = vmatpush1.msra.mxu0 0.0
  %4619 = vmatprep.subr.mxu0 0.0
  %4620 = vmatpush1.msra.mxu0 0.0
  %4621 = vmatprep.subr.mxu0 0.0
  %4622 = vmatpush1.msra.mxu0 0.0
  %4623 = vmatprep.subr.mxu0 0.0
  %4624 = vmatpush1.msra.mxu0 0.0
  %4625 = vmatprep.subr.mxu0 0.0
  %4626 = vmatpush1.msra.mxu0 0.0
  %4627 = vmatprep.subr.mxu0 0.0
  %4628 = vmatpush1.msra.mxu0 0.0
  %4629 = vmatprep.subr.mxu0 0.0
  %4630 = vmatpush1.msra.mxu0 0.0
  %4631 = vmatprep.subr.mxu0 0.0
  %4632 = vmatpush1.msra.mxu0 0.0
  %4633 = vmatprep.subr.mxu0 0.0
  %4634 = vmatpush1.msra.mxu0 0.0
  %4635 = vmatprep.subr.mxu0 0.0
  %4636 = vmatpush1.msra.mxu0 0.0
  %4637 = vmatprep.subr.mxu0 0.0
  %4638 = vmatpush1.msra.mxu0 0.0
  %4639 = vmatprep.subr.mxu0 0.0
  %4640 = vmatpush1.msra.mxu0 0.0
  %4641 = vmatprep.subr.mxu0 0.0
  %4642 = vmatpush1.msra.mxu0 0.0
  %4643 = vmatprep.subr.mxu0 0.0
  %4644 = vmatpush1.msra.mxu0 %v4606
  %4645 = vmatprep.subr.mxu0 0.0
  %4646 = vmatpush1.msra.mxu0 %v4604
  %4647 = vmatprep.subr.mxu0 0.0
  %4648 = vmatpush2.msra.mxu0 0.0
  %4649 = vmatprep.subr.mxu0 0.0
  %4650 = vmatpush2.msra.mxu0 0.0
  %4651 = vmatprep.subr.mxu0 0.0
  %4652 = vmatpush2.msra.mxu0 0.0
  %4653 = vmatprep.subr.mxu0 0.0
  %4654 = vmatpush2.msra.mxu0 0.0
  %4655 = vmatprep.subr.mxu0 0.0
  %4656 = vmatpush2.msra.mxu0 0.0
  %4657 = vmatprep.subr.mxu0 0.0
  %4658 = vmatpush2.msra.mxu0 0.0
  %4659 = vmatprep.subr.mxu0 0.0
  %4660 = vmatpush2.msra.mxu0 0.0
  %4661 = vmatprep.subr.mxu0 0.0
  %4662 = vmatpush2.msra.mxu0 0.0
  %4663 = vmatprep.subr.mxu0 0.0
  %4664 = vmatpush2.msra.mxu0 0.0
  %4665 = vmatprep.subr.mxu0 0.0
  %4666 = vmatpush2.msra.mxu0 0.0
  %4667 = vmatprep.subr.mxu0 0.0
  %4668 = vmatpush2.msra.mxu0 0.0
  %4669 = vmatprep.subr.mxu0 0.0
  %4670 = vmatpush2.msra.mxu0 0.0
  %4671 = vmatprep.subr.mxu0 0.0
  %4672 = vmatpush2.msra.mxu0 0.0
  %4673 = vmatprep.subr.mxu0 0.0
  %4674 = vmatpush2.msra.mxu0 0.0
  %4675 = vmatprep.subr.mxu0 0.0
  %4676 = vmatpush2.msra.mxu0 0.0
  %4677 = vmatprep.subr.mxu0 0.0
  %4678 = vmatpush2.msra.mxu0 0.0
  %4679 = vmatprep.mubr.f32.mxu0 0.0
  %4680 = vmatmul.mubr.f32.gmra.mxu0 %v4610
  %v4681 = vpop.f32.mrf.mxu0
  %v4682 = vadd.f32 0.0, %v4681
  %v4683 = vpop.f32.mrf.mxu0
  %4684 = vmatprep.mubr.f32.mxu0 0.0
  %4685 = vmatmul.mubr.f32.gmra.mxu0 %v4613
  %v4686 = vpop.f32.mrf.mxu0
  %v4687 = vadd.f32 0.0, %v4686
  %v4688 = vpop.f32.mrf.mxu0
  %4689 = vdwg.mxu0
  %4690 = vrot.lane.b32.xlu0 %v206, 48
  %v4691 = vpop.permute.xlu0 %4690
  %4692 = vrot.lane.b32.xlu0 %v211, 48
  %v4693 = vpop.permute.xlu0 %4692
  %v4697 = vsel %vm965, %v4334, 0
  %v4700 = vsel %vm965, %v4335, 0
  %4702 = vmatprep.subr.mxu0 0.0
  %4703 = vmatpush1.msra.mxu0 0.0
  %4704 = vmatprep.subr.mxu0 0.0
  %4705 = vmatpush1.msra.mxu0 0.0
  %4706 = vmatprep.subr.mxu0 0.0
  %4707 = vmatpush1.msra.mxu0 0.0
  %4708 = vmatprep.subr.mxu0 0.0
  %4709 = vmatpush1.msra.mxu0 0.0
  %4710 = vmatprep.subr.mxu0 0.0
  %4711 = vmatpush1.msra.mxu0 0.0
  %4712 = vmatprep.subr.mxu0 0.0
  %4713 = vmatpush1.msra.mxu0 0.0
  %4714 = vmatprep.subr.mxu0 0.0
  %4715 = vmatpush1.msra.mxu0 0.0
  %4716 = vmatprep.subr.mxu0 0.0
  %4717 = vmatpush1.msra.mxu0 0.0
  %4718 = vmatprep.subr.mxu0 0.0
  %4719 = vmatpush1.msra.mxu0 0.0
  %4720 = vmatprep.subr.mxu0 0.0
  %4721 = vmatpush1.msra.mxu0 0.0
  %4722 = vmatprep.subr.mxu0 0.0
  %4723 = vmatpush1.msra.mxu0 0.0
  %4724 = vmatprep.subr.mxu0 0.0
  %4725 = vmatpush1.msra.mxu0 0.0
  %4726 = vmatprep.subr.mxu0 0.0
  %4727 = vmatpush1.msra.mxu0 0.0
  %4728 = vmatprep.subr.mxu0 0.0
  %4729 = vmatpush1.msra.mxu0 0.0
  %4730 = vmatprep.subr.mxu0 0.0
  %4731 = vmatpush1.msra.mxu0 %v4693
  %4732 = vmatprep.subr.mxu0 0.0
  %4733 = vmatpush1.msra.mxu0 %v4691
  %4734 = vmatprep.subr.mxu0 0.0
  %4735 = vmatpush2.msra.mxu0 0.0
  %4736 = vmatprep.subr.mxu0 0.0
  %4737 = vmatpush2.msra.mxu0 0.0
  %4738 = vmatprep.subr.mxu0 0.0
  %4739 = vmatpush2.msra.mxu0 0.0
  %4740 = vmatprep.subr.mxu0 0.0
  %4741 = vmatpush2.msra.mxu0 0.0
  %4742 = vmatprep.subr.mxu0 0.0
  %4743 = vmatpush2.msra.mxu0 0.0
  %4744 = vmatprep.subr.mxu0 0.0
  %4745 = vmatpush2.msra.mxu0 0.0
  %4746 = vmatprep.subr.mxu0 0.0
  %4747 = vmatpush2.msra.mxu0 0.0
  %4748 = vmatprep.subr.mxu0 0.0
  %4749 = vmatpush2.msra.mxu0 0.0
  %4750 = vmatprep.subr.mxu0 0.0
  %4751 = vmatpush2.msra.mxu0 0.0
  %4752 = vmatprep.subr.mxu0 0.0
  %4753 = vmatpush2.msra.mxu0 0.0
  %4754 = vmatprep.subr.mxu0 0.0
  %4755 = vmatpush2.msra.mxu0 0.0
  %4756 = vmatprep.subr.mxu0 0.0
  %4757 = vmatpush2.msra.mxu0 0.0
  %4758 = vmatprep.subr.mxu0 0.0
  %4759 = vmatpush2.msra.mxu0 0.0
  %4760 = vmatprep.subr.mxu0 0.0
  %4761 = vmatpush2.msra.mxu0 0.0
  %4762 = vmatprep.subr.mxu0 0.0
  %4763 = vmatpush2.msra.mxu0 0.0
  %4764 = vmatprep.subr.mxu0 0.0
  %4765 = vmatpush2.msra.mxu0 0.0
  %4766 = vmatprep.mubr.f32.mxu0 0.0
  %4767 = vmatmul.mubr.f32.gmra.mxu0 %v4697
  %v4768 = vpop.f32.mrf.mxu0
  %v4769 = vadd.f32 0.0, %v4768
  %v4770 = vpop.f32.mrf.mxu0
  %4771 = vmatprep.mubr.f32.mxu0 0.0
  %4772 = vmatmul.mubr.f32.gmra.mxu0 %v4700
  %v4773 = vpop.f32.mrf.mxu0
  %v4774 = vadd.f32 0.0, %v4773
  %v4775 = vpop.f32.mrf.mxu0
  %4776 = vdwg.mxu0
  %4777 = vrot.lane.b32.xlu0 %v216, 48
  %v4778 = vpop.permute.xlu0 %4777
  %4779 = vrot.lane.b32.xlu0 %v221, 48
  %v4780 = vpop.permute.xlu0 %4779
  %v4784 = vsel %vm965, %v4336, 0
  %v4787 = vsel %vm965, %v4337, 0
  %4789 = vmatprep.subr.mxu0 0.0
  %4790 = vmatpush1.msra.mxu0 0.0
  %4791 = vmatprep.subr.mxu0 0.0
  %4792 = vmatpush1.msra.mxu0 0.0
  %4793 = vmatprep.subr.mxu0 0.0
  %4794 = vmatpush1.msra.mxu0 0.0
  %4795 = vmatprep.subr.mxu0 0.0
  %4796 = vmatpush1.msra.mxu0 0.0
  %4797 = vmatprep.subr.mxu0 0.0
  %4798 = vmatpush1.msra.mxu0 0.0
  %4799 = vmatprep.subr.mxu0 0.0
  %4800 = vmatpush1.msra.mxu0 0.0
  %4801 = vmatprep.subr.mxu0 0.0
  %4802 = vmatpush1.msra.mxu0 0.0
  %4803 = vmatprep.subr.mxu0 0.0
  %4804 = vmatpush1.msra.mxu0 0.0
  %4805 = vmatprep.subr.mxu0 0.0
  %4806 = vmatpush1.msra.mxu0 0.0
  %4807 = vmatprep.subr.mxu0 0.0
  %4808 = vmatpush1.msra.mxu0 0.0
  %4809 = vmatprep.subr.mxu0 0.0
  %4810 = vmatpush1.msra.mxu0 0.0
  %4811 = vmatprep.subr.mxu0 0.0
  %4812 = vmatpush1.msra.mxu0 0.0
  %4813 = vmatprep.subr.mxu0 0.0
  %4814 = vmatpush1.msra.mxu0 0.0
  %4815 = vmatprep.subr.mxu0 0.0
  %4816 = vmatpush1.msra.mxu0 0.0
  %4817 = vmatprep.subr.mxu0 0.0
  %4818 = vmatpush1.msra.mxu0 %v4780
  %4819 = vmatprep.subr.mxu0 0.0
  %4820 = vmatpush1.msra.mxu0 %v4778
  %4821 = vmatprep.subr.mxu0 0.0
  %4822 = vmatpush2.msra.mxu0 0.0
  %4823 = vmatprep.subr.mxu0 0.0
  %4824 = vmatpush2.msra.mxu0 0.0
  %4825 = vmatprep.subr.mxu0 0.0
  %4826 = vmatpush2.msra.mxu0 0.0
  %4827 = vmatprep.subr.mxu0 0.0
  %4828 = vmatpush2.msra.mxu0 0.0
  %4829 = vmatprep.subr.mxu0 0.0
  %4830 = vmatpush2.msra.mxu0 0.0
  %4831 = vmatprep.subr.mxu0 0.0
  %4832 = vmatpush2.msra.mxu0 0.0
  %4833 = vmatprep.subr.mxu0 0.0
  %4834 = vmatpush2.msra.mxu0 0.0
  %4835 = vmatprep.subr.mxu0 0.0
  %4836 = vmatpush2.msra.mxu0 0.0
  %4837 = vmatprep.subr.mxu0 0.0
  %4838 = vmatpush2.msra.mxu0 0.0
  %4839 = vmatprep.subr.mxu0 0.0
  %4840 = vmatpush2.msra.mxu0 0.0
  %4841 = vmatprep.subr.mxu0 0.0
  %4842 = vmatpush2.msra.mxu0 0.0
  %4843 = vmatprep.subr.mxu0 0.0
  %4844 = vmatpush2.msra.mxu0 0.0
  %4845 = vmatprep.subr.mxu0 0.0
  %4846 = vmatpush2.msra.mxu0 0.0
  %4847 = vmatprep.subr.mxu0 0.0
  %4848 = vmatpush2.msra.mxu0 0.0
  %4849 = vmatprep.subr.mxu0 0.0
  %4850 = vmatpush2.msra.mxu0 0.0
  %4851 = vmatprep.subr.mxu0 0.0
  %4852 = vmatpush2.msra.mxu0 0.0
  %4853 = vmatprep.mubr.f32.mxu0 0.0
  %4854 = vmatmul.mubr.f32.gmra.mxu0 %v4784
  %v4855 = vpop.f32.mrf.mxu0
  %v4856 = vadd.f32 0.0, %v4855
  %v4857 = vpop.f32.mrf.mxu0
  %4858 = vmatprep.mubr.f32.mxu0 0.0
  %4859 = vmatmul.mubr.f32.gmra.mxu0 %v4787
  %v4860 = vpop.f32.mrf.mxu0
  %v4861 = vadd.f32 0.0, %v4860
  %v4862 = vpop.f32.mrf.mxu0
  %4863 = vdwg.mxu0
  %4864 = vrot.lane.b32.xlu0 %v226, 48
  %v4865 = vpop.permute.xlu0 %4864
  %4866 = vrot.lane.b32.xlu0 %v231, 48
  %v4867 = vpop.permute.xlu0 %4866
  %v4871 = vsel %vm965, %v4338, 0
  %v4874 = vsel %vm965, %v4339, 0
  %4876 = vmatprep.subr.mxu0 0.0
  %4877 = vmatpush1.msra.mxu0 0.0
  %4878 = vmatprep.subr.mxu0 0.0
  %4879 = vmatpush1.msra.mxu0 0.0
  %4880 = vmatprep.subr.mxu0 0.0
  %4881 = vmatpush1.msra.mxu0 0.0
  %4882 = vmatprep.subr.mxu0 0.0
  %4883 = vmatpush1.msra.mxu0 0.0
  %4884 = vmatprep.subr.mxu0 0.0
  %4885 = vmatpush1.msra.mxu0 0.0
  %4886 = vmatprep.subr.mxu0 0.0
  %4887 = vmatpush1.msra.mxu0 0.0
  %4888 = vmatprep.subr.mxu0 0.0
  %4889 = vmatpush1.msra.mxu0 0.0
  %4890 = vmatprep.subr.mxu0 0.0
  %4891 = vmatpush1.msra.mxu0 0.0
  %4892 = vmatprep.subr.mxu0 0.0
  %4893 = vmatpush1.msra.mxu0 0.0
  %4894 = vmatprep.subr.mxu0 0.0
  %4895 = vmatpush1.msra.mxu0 0.0
  %4896 = vmatprep.subr.mxu0 0.0
  %4897 = vmatpush1.msra.mxu0 0.0
  %4898 = vmatprep.subr.mxu0 0.0
  %4899 = vmatpush1.msra.mxu0 0.0
  %4900 = vmatprep.subr.mxu0 0.0
  %4901 = vmatpush1.msra.mxu0 0.0
  %4902 = vmatprep.subr.mxu0 0.0
  %4903 = vmatpush1.msra.mxu0 0.0
  %4904 = vmatprep.subr.mxu0 0.0
  %4905 = vmatpush1.msra.mxu0 %v4867
  %4906 = vmatprep.subr.mxu0 0.0
  %4907 = vmatpush1.msra.mxu0 %v4865
  %4908 = vmatprep.subr.mxu0 0.0
  %4909 = vmatpush2.msra.mxu0 0.0
  %4910 = vmatprep.subr.mxu0 0.0
  %4911 = vmatpush2.msra.mxu0 0.0
  %4912 = vmatprep.subr.mxu0 0.0
  %4913 = vmatpush2.msra.mxu0 0.0
  %4914 = vmatprep.subr.mxu0 0.0
  %4915 = vmatpush2.msra.mxu0 0.0
  %4916 = vmatprep.subr.mxu0 0.0
  %4917 = vmatpush2.msra.mxu0 0.0
  %4918 = vmatprep.subr.mxu0 0.0
  %4919 = vmatpush2.msra.mxu0 0.0
  %4920 = vmatprep.subr.mxu0 0.0
  %4921 = vmatpush2.msra.mxu0 0.0
  %4922 = vmatprep.subr.mxu0 0.0
  %4923 = vmatpush2.msra.mxu0 0.0
  %4924 = vmatprep.subr.mxu0 0.0
  %4925 = vmatpush2.msra.mxu0 0.0
  %4926 = vmatprep.subr.mxu0 0.0
  %4927 = vmatpush2.msra.mxu0 0.0
  %4928 = vmatprep.subr.mxu0 0.0
  %4929 = vmatpush2.msra.mxu0 0.0
  %4930 = vmatprep.subr.mxu0 0.0
  %4931 = vmatpush2.msra.mxu0 0.0
  %4932 = vmatprep.subr.mxu0 0.0
  %4933 = vmatpush2.msra.mxu0 0.0
  %4934 = vmatprep.subr.mxu0 0.0
  %4935 = vmatpush2.msra.mxu0 0.0
  %4936 = vmatprep.subr.mxu0 0.0
  %4937 = vmatpush2.msra.mxu0 0.0
  %4938 = vmatprep.subr.mxu0 0.0
  %4939 = vmatpush2.msra.mxu0 0.0
  %4940 = vmatprep.mubr.f32.mxu0 0.0
  %4941 = vmatmul.mubr.f32.gmra.mxu0 %v4871
  %v4942 = vpop.f32.mrf.mxu0
  %v4943 = vadd.f32 0.0, %v4942
  %v4944 = vpop.f32.mrf.mxu0
  %4945 = vmatprep.mubr.f32.mxu0 0.0
  %4946 = vmatmul.mubr.f32.gmra.mxu0 %v4874
  %v4947 = vpop.f32.mrf.mxu0
  %v4948 = vadd.f32 0.0, %v4947
  %v4949 = vpop.f32.mrf.mxu0
  %4950 = vdwg.mxu0
  %4951 = vrot.lane.b32.xlu0 %v236, 48
  %v4952 = vpop.permute.xlu0 %4951
  %4953 = vrot.lane.b32.xlu0 %v241, 48
  %v4954 = vpop.permute.xlu0 %4953
  %v4958 = vsel %vm965, %v4340, 0
  %v4961 = vsel %vm965, %v4341, 0
  %4963 = vmatprep.subr.mxu0 0.0
  %4964 = vmatpush1.msra.mxu0 0.0
  %4965 = vmatprep.subr.mxu0 0.0
  %4966 = vmatpush1.msra.mxu0 0.0
  %4967 = vmatprep.subr.mxu0 0.0
  %4968 = vmatpush1.msra.mxu0 0.0
  %4969 = vmatprep.subr.mxu0 0.0
  %4970 = vmatpush1.msra.mxu0 0.0
  %4971 = vmatprep.subr.mxu0 0.0
  %4972 = vmatpush1.msra.mxu0 0.0
  %4973 = vmatprep.subr.mxu0 0.0
  %4974 = vmatpush1.msra.mxu0 0.0
  %4975 = vmatprep.subr.mxu0 0.0
  %4976 = vmatpush1.msra.mxu0 0.0
  %4977 = vmatprep.subr.mxu0 0.0
  %4978 = vmatpush1.msra.mxu0 0.0
  %4979 = vmatprep.subr.mxu0 0.0
  %4980 = vmatpush1.msra.mxu0 0.0
  %4981 = vmatprep.subr.mxu0 0.0
  %4982 = vmatpush1.msra.mxu0 0.0
  %4983 = vmatprep.subr.mxu0 0.0
  %4984 = vmatpush1.msra.mxu0 0.0
  %4985 = vmatprep.subr.mxu0 0.0
  %4986 = vmatpush1.msra.mxu0 0.0
  %4987 = vmatprep.subr.mxu0 0.0
  %4988 = vmatpush1.msra.mxu0 0.0
  %4989 = vmatprep.subr.mxu0 0.0
  %4990 = vmatpush1.msra.mxu0 0.0
  %4991 = vmatprep.subr.mxu0 0.0
  %4992 = vmatpush1.msra.mxu0 %v4954
  %4993 = vmatprep.subr.mxu0 0.0
  %4994 = vmatpush1.msra.mxu0 %v4952
  %4995 = vmatprep.subr.mxu0 0.0
  %4996 = vmatpush2.msra.mxu0 0.0
  %4997 = vmatprep.subr.mxu0 0.0
  %4998 = vmatpush2.msra.mxu0 0.0
  %4999 = vmatprep.subr.mxu0 0.0
  %5000 = vmatpush2.msra.mxu0 0.0
  %5001 = vmatprep.subr.mxu0 0.0
  %5002 = vmatpush2.msra.mxu0 0.0
  %5003 = vmatprep.subr.mxu0 0.0
  %5004 = vmatpush2.msra.mxu0 0.0
  %5005 = vmatprep.subr.mxu0 0.0
  %5006 = vmatpush2.msra.mxu0 0.0
  %5007 = vmatprep.subr.mxu0 0.0
  %5008 = vmatpush2.msra.mxu0 0.0
  %5009 = vmatprep.subr.mxu0 0.0
  %5010 = vmatpush2.msra.mxu0 0.0
  %5011 = vmatprep.subr.mxu0 0.0
  %5012 = vmatpush2.msra.mxu0 0.0
  %5013 = vmatprep.subr.mxu0 0.0
  %5014 = vmatpush2.msra.mxu0 0.0
  %5015 = vmatprep.subr.mxu0 0.0
  %5016 = vmatpush2.msra.mxu0 0.0
  %5017 = vmatprep.subr.mxu0 0.0
  %5018 = vmatpush2.msra.mxu0 0.0
  %5019 = vmatprep.subr.mxu0 0.0
  %5020 = vmatpush2.msra.mxu0 0.0
  %5021 = vmatprep.subr.mxu0 0.0
  %5022 = vmatpush2.msra.mxu0 0.0
  %5023 = vmatprep.subr.mxu0 0.0
  %5024 = vmatpush2.msra.mxu0 0.0
  %5025 = vmatprep.subr.mxu0 0.0
  %5026 = vmatpush2.msra.mxu0 0.0
  %5027 = vmatprep.mubr.f32.mxu0 0.0
  %5028 = vmatmul.mubr.f32.gmra.mxu0 %v4958
  %v5029 = vpop.f32.mrf.mxu0
  %v5030 = vadd.f32 0.0, %v5029
  %v5031 = vpop.f32.mrf.mxu0
  %5032 = vmatprep.mubr.f32.mxu0 0.0
  %5033 = vmatmul.mubr.f32.gmra.mxu0 %v4961
  %v5034 = vpop.f32.mrf.mxu0
  %v5035 = vadd.f32 0.0, %v5034
  %v5036 = vpop.f32.mrf.mxu0
  %5037 = vdwg.mxu0
  %5038 = vrot.lane.b32.xlu0 %v166, 104
  %v5039 = vpop.permute.xlu0 %5038
  %5040 = vrot.lane.b32.xlu0 %v171, 104
  %v5041 = vpop.permute.xlu0 %5040
  %5042 = vrot.lane.b32.xlu0 %v166, 72
  %v5043 = vpop.permute.xlu0 %5042
  %5044 = vrot.lane.b32.xlu0 %v171, 72
  %v5045 = vpop.permute.xlu0 %5044
  %v5046 = vsel %vm258, %v5039, 0
  %v5048 = vsel %vm258, %v5041, 0
  %v5050 = vsel %vm258, %v5043, 0
  %v5052 = vsel %vm258, %v5045, 0
  %5054 = vmatprep.subr.mxu0 0.0
  %5055 = vmatpush1.xpose.msra.mxu0 0.0
  %5056 = vmatprep.subr.mxu0 0.0
  %5057 = vmatpush1.xpose.msra.mxu0 0.0
  %5058 = vmatprep.subr.mxu0 0.0
  %5059 = vmatpush1.xpose.msra.mxu0 0.0
  %5060 = vmatprep.subr.mxu0 0.0
  %5061 = vmatpush1.xpose.msra.mxu0 0.0
  %5062 = vmatprep.subr.mxu0 0.0
  %5063 = vmatpush1.xpose.msra.mxu0 0.0
  %5064 = vmatprep.subr.mxu0 0.0
  %5065 = vmatpush1.xpose.msra.mxu0 0.0
  %5066 = vmatprep.subr.mxu0 0.0
  %5067 = vmatpush1.xpose.msra.mxu0 0.0
  %5068 = vmatprep.subr.mxu0 0.0
  %5069 = vmatpush1.xpose.msra.mxu0 0.0
  %5070 = vmatprep.subr.mxu0 0.0
  %5071 = vmatpush1.xpose.msra.mxu0 0.0
  %5072 = vmatprep.subr.mxu0 0.0
  %5073 = vmatpush1.xpose.msra.mxu0 0.0
  %5074 = vmatprep.subr.mxu0 0.0
  %5075 = vmatpush1.xpose.msra.mxu0 0.0
  %5076 = vmatprep.subr.mxu0 0.0
  %5077 = vmatpush1.xpose.msra.mxu0 0.0
  %5078 = vmatprep.subr.mxu0 0.0
  %5079 = vmatpush1.xpose.msra.mxu0 0.0
  %5080 = vmatprep.subr.mxu0 0.0
  %5081 = vmatpush1.xpose.msra.mxu0 0.0
  %5082 = vmatprep.subr.mxu0 0.0
  %5083 = vmatpush1.xpose.msra.mxu0 %v5052
  %5084 = vmatprep.subr.mxu0 0.0
  %5085 = vmatpush1.xpose.msra.mxu0 %v5050
  %5086 = vmatprep.subr.mxu0 0.0
  %5087 = vmatpush2.xpose.msra.mxu0 0.0
  %5088 = vmatprep.subr.mxu0 0.0
  %5089 = vmatpush2.xpose.msra.mxu0 0.0
  %5090 = vmatprep.subr.mxu0 0.0
  %5091 = vmatpush2.xpose.msra.mxu0 0.0
  %5092 = vmatprep.subr.mxu0 0.0
  %5093 = vmatpush2.xpose.msra.mxu0 0.0
  %5094 = vmatprep.subr.mxu0 0.0
  %5095 = vmatpush2.xpose.msra.mxu0 0.0
  %5096 = vmatprep.subr.mxu0 0.0
  %5097 = vmatpush2.xpose.msra.mxu0 0.0
  %5098 = vmatprep.subr.mxu0 0.0
  %5099 = vmatpush2.xpose.msra.mxu0 0.0
  %5100 = vmatprep.subr.mxu0 0.0
  %5101 = vmatpush2.xpose.msra.mxu0 0.0
  %5102 = vmatprep.subr.mxu0 0.0
  %5103 = vmatpush2.xpose.msra.mxu0 0.0
  %5104 = vmatprep.subr.mxu0 0.0
  %5105 = vmatpush2.xpose.msra.mxu0 0.0
  %5106 = vmatprep.subr.mxu0 0.0
  %5107 = vmatpush2.xpose.msra.mxu0 0.0
  %5108 = vmatprep.subr.mxu0 0.0
  %5109 = vmatpush2.xpose.msra.mxu0 0.0
  %5110 = vmatprep.subr.mxu0 0.0
  %5111 = vmatpush2.xpose.msra.mxu0 0.0
  %5112 = vmatprep.subr.mxu0 0.0
  %5113 = vmatpush2.xpose.msra.mxu0 0.0
  %5114 = vmatprep.subr.mxu0 0.0
  %5115 = vmatpush2.xpose.msra.mxu0 0.0
  %5116 = vmatprep.subr.mxu0 0.0
  %5117 = vmatpush2.xpose.msra.mxu0 0.0
  %5118 = vmatprep.mubr.f32.mxu0 0.0
  %5119 = vmatmul.mubr.f32.gmra.mxu0 %v5046
  %v5120 = vpop.f32.mrf.mxu0
  %v5121 = vadd.f32 %v250, %v5120
  %v5122 = vpop.f32.mrf.mxu0
  %5123 = vmatprep.mubr.f32.mxu0 0.0
  %5124 = vmatmul.mubr.f32.gmra.mxu0 %v5048
  %v5125 = vpop.f32.mrf.mxu0
  %v5126 = vadd.f32 %v251, %v5125
  %v5127 = vpop.f32.mrf.mxu0
  %5128 = vdwg.mxu0
  %5129 = vrot.lane.b32.xlu0 %v176, 104
  %v5130 = vpop.permute.xlu0 %5129
  %5131 = vrot.lane.b32.xlu0 %v181, 104
  %v5132 = vpop.permute.xlu0 %5131
  %5133 = vrot.lane.b32.xlu0 %v176, 72
  %v5134 = vpop.permute.xlu0 %5133
  %5135 = vrot.lane.b32.xlu0 %v181, 72
  %v5136 = vpop.permute.xlu0 %5135
  %v5137 = vsel %vm258, %v5130, 0
  %v5139 = vsel %vm258, %v5132, 0
  %v5141 = vsel %vm258, %v5134, 0
  %v5143 = vsel %vm258, %v5136, 0
  %5145 = vmatprep.subr.mxu0 0.0
  %5146 = vmatpush1.xpose.msra.mxu0 0.0
  %5147 = vmatprep.subr.mxu0 0.0
  %5148 = vmatpush1.xpose.msra.mxu0 0.0
  %5149 = vmatprep.subr.mxu0 0.0
  %5150 = vmatpush1.xpose.msra.mxu0 0.0
  %5151 = vmatprep.subr.mxu0 0.0
  %5152 = vmatpush1.xpose.msra.mxu0 0.0
  %5153 = vmatprep.subr.mxu0 0.0
  %5154 = vmatpush1.xpose.msra.mxu0 0.0
  %5155 = vmatprep.subr.mxu0 0.0
  %5156 = vmatpush1.xpose.msra.mxu0 0.0
  %5157 = vmatprep.subr.mxu0 0.0
  %5158 = vmatpush1.xpose.msra.mxu0 0.0
  %5159 = vmatprep.subr.mxu0 0.0
  %5160 = vmatpush1.xpose.msra.mxu0 0.0
  %5161 = vmatprep.subr.mxu0 0.0
  %5162 = vmatpush1.xpose.msra.mxu0 0.0
  %5163 = vmatprep.subr.mxu0 0.0
  %5164 = vmatpush1.xpose.msra.mxu0 0.0
  %5165 = vmatprep.subr.mxu0 0.0
  %5166 = vmatpush1.xpose.msra.mxu0 0.0
  %5167 = vmatprep.subr.mxu0 0.0
  %5168 = vmatpush1.xpose.msra.mxu0 0.0
  %5169 = vmatprep.subr.mxu0 0.0
  %5170 = vmatpush1.xpose.msra.mxu0 0.0
  %5171 = vmatprep.subr.mxu0 0.0
  %5172 = vmatpush1.xpose.msra.mxu0 0.0
  %5173 = vmatprep.subr.mxu0 0.0
  %5174 = vmatpush1.xpose.msra.mxu0 %v5143
  %5175 = vmatprep.subr.mxu0 0.0
  %5176 = vmatpush1.xpose.msra.mxu0 %v5141
  %5177 = vmatprep.subr.mxu0 0.0
  %5178 = vmatpush2.xpose.msra.mxu0 0.0
  %5179 = vmatprep.subr.mxu0 0.0
  %5180 = vmatpush2.xpose.msra.mxu0 0.0
  %5181 = vmatprep.subr.mxu0 0.0
  %5182 = vmatpush2.xpose.msra.mxu0 0.0
  %5183 = vmatprep.subr.mxu0 0.0
  %5184 = vmatpush2.xpose.msra.mxu0 0.0
  %5185 = vmatprep.subr.mxu0 0.0
  %5186 = vmatpush2.xpose.msra.mxu0 0.0
  %5187 = vmatprep.subr.mxu0 0.0
  %5188 = vmatpush2.xpose.msra.mxu0 0.0
  %5189 = vmatprep.subr.mxu0 0.0
  %5190 = vmatpush2.xpose.msra.mxu0 0.0
  %5191 = vmatprep.subr.mxu0 0.0
  %5192 = vmatpush2.xpose.msra.mxu0 0.0
  %5193 = vmatprep.subr.mxu0 0.0
  %5194 = vmatpush2.xpose.msra.mxu0 0.0
  %5195 = vmatprep.subr.mxu0 0.0
  %5196 = vmatpush2.xpose.msra.mxu0 0.0
  %5197 = vmatprep.subr.mxu0 0.0
  %5198 = vmatpush2.xpose.msra.mxu0 0.0
  %5199 = vmatprep.subr.mxu0 0.0
  %5200 = vmatpush2.xpose.msra.mxu0 0.0
  %5201 = vmatprep.subr.mxu0 0.0
  %5202 = vmatpush2.xpose.msra.mxu0 0.0
  %5203 = vmatprep.subr.mxu0 0.0
  %5204 = vmatpush2.xpose.msra.mxu0 0.0
  %5205 = vmatprep.subr.mxu0 0.0
  %5206 = vmatpush2.xpose.msra.mxu0 0.0
  %5207 = vmatprep.subr.mxu0 0.0
  %5208 = vmatpush2.xpose.msra.mxu0 0.0
  %5209 = vmatprep.mubr.f32.mxu0 0.0
  %5210 = vmatmul.mubr.f32.gmra.mxu0 %v5137
  %v5211 = vpop.f32.mrf.mxu0
  %v5212 = vadd.f32 %v250, %v5211
  %v5213 = vpop.f32.mrf.mxu0
  %5214 = vmatprep.mubr.f32.mxu0 0.0
  %5215 = vmatmul.mubr.f32.gmra.mxu0 %v5139
  %v5216 = vpop.f32.mrf.mxu0
  %v5217 = vadd.f32 %v251, %v5216
  %v5218 = vpop.f32.mrf.mxu0
  %5219 = vdwg.mxu0
  %5220 = vrot.lane.b32.xlu0 %v186, 104
  %v5221 = vpop.permute.xlu0 %5220
  %5222 = vrot.lane.b32.xlu0 %v191, 104
  %v5223 = vpop.permute.xlu0 %5222
  %5224 = vrot.lane.b32.xlu0 %v186, 72
  %v5225 = vpop.permute.xlu0 %5224
  %5226 = vrot.lane.b32.xlu0 %v191, 72
  %v5227 = vpop.permute.xlu0 %5226
  %v5228 = vsel %vm258, %v5221, 0
  %v5230 = vsel %vm258, %v5223, 0
  %v5232 = vsel %vm258, %v5225, 0
  %v5234 = vsel %vm258, %v5227, 0
  %5236 = vmatprep.subr.mxu0 0.0
  %5237 = vmatpush1.xpose.msra.mxu0 0.0
  %5238 = vmatprep.subr.mxu0 0.0
  %5239 = vmatpush1.xpose.msra.mxu0 0.0
  %5240 = vmatprep.subr.mxu0 0.0
  %5241 = vmatpush1.xpose.msra.mxu0 0.0
  %5242 = vmatprep.subr.mxu0 0.0
  %5243 = vmatpush1.xpose.msra.mxu0 0.0
  %5244 = vmatprep.subr.mxu0 0.0
  %5245 = vmatpush1.xpose.msra.mxu0 0.0
  %5246 = vmatprep.subr.mxu0 0.0
  %5247 = vmatpush1.xpose.msra.mxu0 0.0
  %5248 = vmatprep.subr.mxu0 0.0
  %5249 = vmatpush1.xpose.msra.mxu0 0.0
  %5250 = vmatprep.subr.mxu0 0.0
  %5251 = vmatpush1.xpose.msra.mxu0 0.0
  %5252 = vmatprep.subr.mxu0 0.0
  %5253 = vmatpush1.xpose.msra.mxu0 0.0
  %5254 = vmatprep.subr.mxu0 0.0
  %5255 = vmatpush1.xpose.msra.mxu0 0.0
  %5256 = vmatprep.subr.mxu0 0.0
  %5257 = vmatpush1.xpose.msra.mxu0 0.0
  %5258 = vmatprep.subr.mxu0 0.0
  %5259 = vmatpush1.xpose.msra.mxu0 0.0
  %5260 = vmatprep.subr.mxu0 0.0
  %5261 = vmatpush1.xpose.msra.mxu0 0.0
  %5262 = vmatprep.subr.mxu0 0.0
  %5263 = vmatpush1.xpose.msra.mxu0 0.0
  %5264 = vmatprep.subr.mxu0 0.0
  %5265 = vmatpush1.xpose.msra.mxu0 %v5234
  %5266 = vmatprep.subr.mxu0 0.0
  %5267 = vmatpush1.xpose.msra.mxu0 %v5232
  %5268 = vmatprep.subr.mxu0 0.0
  %5269 = vmatpush2.xpose.msra.mxu0 0.0
  %5270 = vmatprep.subr.mxu0 0.0
  %5271 = vmatpush2.xpose.msra.mxu0 0.0
  %5272 = vmatprep.subr.mxu0 0.0
  %5273 = vmatpush2.xpose.msra.mxu0 0.0
  %5274 = vmatprep.subr.mxu0 0.0
  %5275 = vmatpush2.xpose.msra.mxu0 0.0
  %5276 = vmatprep.subr.mxu0 0.0
  %5277 = vmatpush2.xpose.msra.mxu0 0.0
  %5278 = vmatprep.subr.mxu0 0.0
  %5279 = vmatpush2.xpose.msra.mxu0 0.0
  %5280 = vmatprep.subr.mxu0 0.0
  %5281 = vmatpush2.xpose.msra.mxu0 0.0
  %5282 = vmatprep.subr.mxu0 0.0
  %5283 = vmatpush2.xpose.msra.mxu0 0.0
  %5284 = vmatprep.subr.mxu0 0.0
  %5285 = vmatpush2.xpose.msra.mxu0 0.0
  %5286 = vmatprep.subr.mxu0 0.0
  %5287 = vmatpush2.xpose.msra.mxu0 0.0
  %5288 = vmatprep.subr.mxu0 0.0
  %5289 = vmatpush2.xpose.msra.mxu0 0.0
  %5290 = vmatprep.subr.mxu0 0.0
  %5291 = vmatpush2.xpose.msra.mxu0 0.0
  %5292 = vmatprep.subr.mxu0 0.0
  %5293 = vmatpush2.xpose.msra.mxu0 0.0
  %5294 = vmatprep.subr.mxu0 0.0
  %5295 = vmatpush2.xpose.msra.mxu0 0.0
  %5296 = vmatprep.subr.mxu0 0.0
  %5297 = vmatpush2.xpose.msra.mxu0 0.0
  %5298 = vmatprep.subr.mxu0 0.0
  %5299 = vmatpush2.xpose.msra.mxu0 0.0
  %5300 = vmatprep.mubr.f32.mxu0 0.0
  %5301 = vmatmul.mubr.f32.gmra.mxu0 %v5228
  %v5302 = vpop.f32.mrf.mxu0
  %v5303 = vadd.f32 %v250, %v5302
  %v5304 = vpop.f32.mrf.mxu0
  %5305 = vmatprep.mubr.f32.mxu0 0.0
  %5306 = vmatmul.mubr.f32.gmra.mxu0 %v5230
  %v5307 = vpop.f32.mrf.mxu0
  %v5308 = vadd.f32 %v251, %v5307
  %v5309 = vpop.f32.mrf.mxu0
  %5310 = vdwg.mxu0
  %5311 = vrot.lane.b32.xlu0 %v196, 104
  %v5312 = vpop.permute.xlu0 %5311
  %5313 = vrot.lane.b32.xlu0 %v201, 104
  %v5314 = vpop.permute.xlu0 %5313
  %5315 = vrot.lane.b32.xlu0 %v196, 72
  %v5316 = vpop.permute.xlu0 %5315
  %5317 = vrot.lane.b32.xlu0 %v201, 72
  %v5318 = vpop.permute.xlu0 %5317
  %v5319 = vsel %vm258, %v5312, 0
  %v5321 = vsel %vm258, %v5314, 0
  %v5323 = vsel %vm258, %v5316, 0
  %v5325 = vsel %vm258, %v5318, 0
  %5327 = vmatprep.subr.mxu0 0.0
  %5328 = vmatpush1.xpose.msra.mxu0 0.0
  %5329 = vmatprep.subr.mxu0 0.0
  %5330 = vmatpush1.xpose.msra.mxu0 0.0
  %5331 = vmatprep.subr.mxu0 0.0
  %5332 = vmatpush1.xpose.msra.mxu0 0.0
  %5333 = vmatprep.subr.mxu0 0.0
  %5334 = vmatpush1.xpose.msra.mxu0 0.0
  %5335 = vmatprep.subr.mxu0 0.0
  %5336 = vmatpush1.xpose.msra.mxu0 0.0
  %5337 = vmatprep.subr.mxu0 0.0
  %5338 = vmatpush1.xpose.msra.mxu0 0.0
  %5339 = vmatprep.subr.mxu0 0.0
  %5340 = vmatpush1.xpose.msra.mxu0 0.0
  %5341 = vmatprep.subr.mxu0 0.0
  %5342 = vmatpush1.xpose.msra.mxu0 0.0
  %5343 = vmatprep.subr.mxu0 0.0
  %5344 = vmatpush1.xpose.msra.mxu0 0.0
  %5345 = vmatprep.subr.mxu0 0.0
  %5346 = vmatpush1.xpose.msra.mxu0 0.0
  %5347 = vmatprep.subr.mxu0 0.0
  %5348 = vmatpush1.xpose.msra.mxu0 0.0
  %5349 = vmatprep.subr.mxu0 0.0
  %5350 = vmatpush1.xpose.msra.mxu0 0.0
  %5351 = vmatprep.subr.mxu0 0.0
  %5352 = vmatpush1.xpose.msra.mxu0 0.0
  %5353 = vmatprep.subr.mxu0 0.0
  %5354 = vmatpush1.xpose.msra.mxu0 0.0
  %5355 = vmatprep.subr.mxu0 0.0
  %5356 = vmatpush1.xpose.msra.mxu0 %v5325
  %5357 = vmatprep.subr.mxu0 0.0
  %5358 = vmatpush1.xpose.msra.mxu0 %v5323
  %5359 = vmatprep.subr.mxu0 0.0
  %5360 = vmatpush2.xpose.msra.mxu0 0.0
  %5361 = vmatprep.subr.mxu0 0.0
  %5362 = vmatpush2.xpose.msra.mxu0 0.0
  %5363 = vmatprep.subr.mxu0 0.0
  %5364 = vmatpush2.xpose.msra.mxu0 0.0
  %5365 = vmatprep.subr.mxu0 0.0
  %5366 = vmatpush2.xpose.msra.mxu0 0.0
  %5367 = vmatprep.subr.mxu0 0.0
  %5368 = vmatpush2.xpose.msra.mxu0 0.0
  %5369 = vmatprep.subr.mxu0 0.0
  %5370 = vmatpush2.xpose.msra.mxu0 0.0
  %5371 = vmatprep.subr.mxu0 0.0
  %5372 = vmatpush2.xpose.msra.mxu0 0.0
  %5373 = vmatprep.subr.mxu0 0.0
  %5374 = vmatpush2.xpose.msra.mxu0 0.0
  %5375 = vmatprep.subr.mxu0 0.0
  %5376 = vmatpush2.xpose.msra.mxu0 0.0
  %5377 = vmatprep.subr.mxu0 0.0
  %5378 = vmatpush2.xpose.msra.mxu0 0.0
  %5379 = vmatprep.subr.mxu0 0.0
  %5380 = vmatpush2.xpose.msra.mxu0 0.0
  %5381 = vmatprep.subr.mxu0 0.0
  %5382 = vmatpush2.xpose.msra.mxu0 0.0
  %5383 = vmatprep.subr.mxu0 0.0
  %5384 = vmatpush2.xpose.msra.mxu0 0.0
  %5385 = vmatprep.subr.mxu0 0.0
  %5386 = vmatpush2.xpose.msra.mxu0 0.0
  %5387 = vmatprep.subr.mxu0 0.0
  %5388 = vmatpush2.xpose.msra.mxu0 0.0
  %5389 = vmatprep.subr.mxu0 0.0
  %5390 = vmatpush2.xpose.msra.mxu0 0.0
  %5391 = vmatprep.mubr.f32.mxu0 0.0
  %5392 = vmatmul.mubr.f32.gmra.mxu0 %v5319
  %v5393 = vpop.f32.mrf.mxu0
  %v5394 = vadd.f32 %v250, %v5393
  %v5395 = vpop.f32.mrf.mxu0
  %5396 = vmatprep.mubr.f32.mxu0 0.0
  %5397 = vmatmul.mubr.f32.gmra.mxu0 %v5321
  %v5398 = vpop.f32.mrf.mxu0
  %v5399 = vadd.f32 %v251, %v5398
  %v5400 = vpop.f32.mrf.mxu0
  %5401 = vdwg.mxu0
  %5402 = vrot.lane.b32.xlu0 %v206, 104
  %v5403 = vpop.permute.xlu0 %5402
  %5404 = vrot.lane.b32.xlu0 %v211, 104
  %v5405 = vpop.permute.xlu0 %5404
  %5406 = vrot.lane.b32.xlu0 %v206, 72
  %v5407 = vpop.permute.xlu0 %5406
  %5408 = vrot.lane.b32.xlu0 %v211, 72
  %v5409 = vpop.permute.xlu0 %5408
  %v5410 = vsel %vm258, %v5403, 0
  %v5412 = vsel %vm258, %v5405, 0
  %v5414 = vsel %vm258, %v5407, 0
  %v5416 = vsel %vm258, %v5409, 0
  %5418 = vmatprep.subr.mxu0 0.0
  %5419 = vmatpush1.xpose.msra.mxu0 0.0
  %5420 = vmatprep.subr.mxu0 0.0
  %5421 = vmatpush1.xpose.msra.mxu0 0.0
  %5422 = vmatprep.subr.mxu0 0.0
  %5423 = vmatpush1.xpose.msra.mxu0 0.0
  %5424 = vmatprep.subr.mxu0 0.0
  %5425 = vmatpush1.xpose.msra.mxu0 0.0
  %5426 = vmatprep.subr.mxu0 0.0
  %5427 = vmatpush1.xpose.msra.mxu0 0.0
  %5428 = vmatprep.subr.mxu0 0.0
  %5429 = vmatpush1.xpose.msra.mxu0 0.0
  %5430 = vmatprep.subr.mxu0 0.0
  %5431 = vmatpush1.xpose.msra.mxu0 0.0
  %5432 = vmatprep.subr.mxu0 0.0
  %5433 = vmatpush1.xpose.msra.mxu0 0.0
  %5434 = vmatprep.subr.mxu0 0.0
  %5435 = vmatpush1.xpose.msra.mxu0 0.0
  %5436 = vmatprep.subr.mxu0 0.0
  %5437 = vmatpush1.xpose.msra.mxu0 0.0
  %5438 = vmatprep.subr.mxu0 0.0
  %5439 = vmatpush1.xpose.msra.mxu0 0.0
  %5440 = vmatprep.subr.mxu0 0.0
  %5441 = vmatpush1.xpose.msra.mxu0 0.0
  %5442 = vmatprep.subr.mxu0 0.0
  %5443 = vmatpush1.xpose.msra.mxu0 0.0
  %5444 = vmatprep.subr.mxu0 0.0
  %5445 = vmatpush1.xpose.msra.mxu0 0.0
  %5446 = vmatprep.subr.mxu0 0.0
  %5447 = vmatpush1.xpose.msra.mxu0 %v5416
  %5448 = vmatprep.subr.mxu0 0.0
  %5449 = vmatpush1.xpose.msra.mxu0 %v5414
  %5450 = vmatprep.subr.mxu0 0.0
  %5451 = vmatpush2.xpose.msra.mxu0 0.0
  %5452 = vmatprep.subr.mxu0 0.0
  %5453 = vmatpush2.xpose.msra.mxu0 0.0
  %5454 = vmatprep.subr.mxu0 0.0
  %5455 = vmatpush2.xpose.msra.mxu0 0.0
  %5456 = vmatprep.subr.mxu0 0.0
  %5457 = vmatpush2.xpose.msra.mxu0 0.0
  %5458 = vmatprep.subr.mxu0 0.0
  %5459 = vmatpush2.xpose.msra.mxu0 0.0
  %5460 = vmatprep.subr.mxu0 0.0
  %5461 = vmatpush2.xpose.msra.mxu0 0.0
  %5462 = vmatprep.subr.mxu0 0.0
  %5463 = vmatpush2.xpose.msra.mxu0 0.0
  %5464 = vmatprep.subr.mxu0 0.0
  %5465 = vmatpush2.xpose.msra.mxu0 0.0
  %5466 = vmatprep.subr.mxu0 0.0
  %5467 = vmatpush2.xpose.msra.mxu0 0.0
  %5468 = vmatprep.subr.mxu0 0.0
  %5469 = vmatpush2.xpose.msra.mxu0 0.0
  %5470 = vmatprep.subr.mxu0 0.0
  %5471 = vmatpush2.xpose.msra.mxu0 0.0
  %5472 = vmatprep.subr.mxu0 0.0
  %5473 = vmatpush2.xpose.msra.mxu0 0.0
  %5474 = vmatprep.subr.mxu0 0.0
  %5475 = vmatpush2.xpose.msra.mxu0 0.0
  %5476 = vmatprep.subr.mxu0 0.0
  %5477 = vmatpush2.xpose.msra.mxu0 0.0
  %5478 = vmatprep.subr.mxu0 0.0
  %5479 = vmatpush2.xpose.msra.mxu0 0.0
  %5480 = vmatprep.subr.mxu0 0.0
  %5481 = vmatpush2.xpose.msra.mxu0 0.0
  %5482 = vmatprep.mubr.f32.mxu0 0.0
  %5483 = vmatmul.mubr.f32.gmra.mxu0 %v5410
  %v5484 = vpop.f32.mrf.mxu0
  %v5485 = vadd.f32 %v250, %v5484
  %v5486 = vpop.f32.mrf.mxu0
  %5487 = vmatprep.mubr.f32.mxu0 0.0
  %5488 = vmatmul.mubr.f32.gmra.mxu0 %v5412
  %v5489 = vpop.f32.mrf.mxu0
  %v5490 = vadd.f32 %v251, %v5489
  %v5491 = vpop.f32.mrf.mxu0
  %5492 = vdwg.mxu0
  %5493 = vrot.lane.b32.xlu0 %v216, 104
  %v5494 = vpop.permute.xlu0 %5493
  %5495 = vrot.lane.b32.xlu0 %v221, 104
  %v5496 = vpop.permute.xlu0 %5495
  %5497 = vrot.lane.b32.xlu0 %v216, 72
  %v5498 = vpop.permute.xlu0 %5497
  %5499 = vrot.lane.b32.xlu0 %v221, 72
  %v5500 = vpop.permute.xlu0 %5499
  %v5501 = vsel %vm258, %v5494, 0
  %v5503 = vsel %vm258, %v5496, 0
  %v5505 = vsel %vm258, %v5498, 0
  %v5507 = vsel %vm258, %v5500, 0
  %5509 = vmatprep.subr.mxu0 0.0
  %5510 = vmatpush1.xpose.msra.mxu0 0.0
  %5511 = vmatprep.subr.mxu0 0.0
  %5512 = vmatpush1.xpose.msra.mxu0 0.0
  %5513 = vmatprep.subr.mxu0 0.0
  %5514 = vmatpush1.xpose.msra.mxu0 0.0
  %5515 = vmatprep.subr.mxu0 0.0
  %5516 = vmatpush1.xpose.msra.mxu0 0.0
  %5517 = vmatprep.subr.mxu0 0.0
  %5518 = vmatpush1.xpose.msra.mxu0 0.0
  %5519 = vmatprep.subr.mxu0 0.0
  %5520 = vmatpush1.xpose.msra.mxu0 0.0
  %5521 = vmatprep.subr.mxu0 0.0
  %5522 = vmatpush1.xpose.msra.mxu0 0.0
  %5523 = vmatprep.subr.mxu0 0.0
  %5524 = vmatpush1.xpose.msra.mxu0 0.0
  %5525 = vmatprep.subr.mxu0 0.0
  %5526 = vmatpush1.xpose.msra.mxu0 0.0
  %5527 = vmatprep.subr.mxu0 0.0
  %5528 = vmatpush1.xpose.msra.mxu0 0.0
  %5529 = vmatprep.subr.mxu0 0.0
  %5530 = vmatpush1.xpose.msra.mxu0 0.0
  %5531 = vmatprep.subr.mxu0 0.0
  %5532 = vmatpush1.xpose.msra.mxu0 0.0
  %5533 = vmatprep.subr.mxu0 0.0
  %5534 = vmatpush1.xpose.msra.mxu0 0.0
  %5535 = vmatprep.subr.mxu0 0.0
  %5536 = vmatpush1.xpose.msra.mxu0 0.0
  %5537 = vmatprep.subr.mxu0 0.0
  %5538 = vmatpush1.xpose.msra.mxu0 %v5507
  %5539 = vmatprep.subr.mxu0 0.0
  %5540 = vmatpush1.xpose.msra.mxu0 %v5505
  %5541 = vmatprep.subr.mxu0 0.0
  %5542 = vmatpush2.xpose.msra.mxu0 0.0
  %5543 = vmatprep.subr.mxu0 0.0
  %5544 = vmatpush2.xpose.msra.mxu0 0.0
  %5545 = vmatprep.subr.mxu0 0.0
  %5546 = vmatpush2.xpose.msra.mxu0 0.0
  %5547 = vmatprep.subr.mxu0 0.0
  %5548 = vmatpush2.xpose.msra.mxu0 0.0
  %5549 = vmatprep.subr.mxu0 0.0
  %5550 = vmatpush2.xpose.msra.mxu0 0.0
  %5551 = vmatprep.subr.mxu0 0.0
  %5552 = vmatpush2.xpose.msra.mxu0 0.0
  %5553 = vmatprep.subr.mxu0 0.0
  %5554 = vmatpush2.xpose.msra.mxu0 0.0
  %5555 = vmatprep.subr.mxu0 0.0
  %5556 = vmatpush2.xpose.msra.mxu0 0.0
  %5557 = vmatprep.subr.mxu0 0.0
  %5558 = vmatpush2.xpose.msra.mxu0 0.0
  %5559 = vmatprep.subr.mxu0 0.0
  %5560 = vmatpush2.xpose.msra.mxu0 0.0
  %5561 = vmatprep.subr.mxu0 0.0
  %5562 = vmatpush2.xpose.msra.mxu0 0.0
  %5563 = vmatprep.subr.mxu0 0.0
  %5564 = vmatpush2.xpose.msra.mxu0 0.0
  %5565 = vmatprep.subr.mxu0 0.0
  %5566 = vmatpush2.xpose.msra.mxu0 0.0
  %5567 = vmatprep.subr.mxu0 0.0
  %5568 = vmatpush2.xpose.msra.mxu0 0.0
  %5569 = vmatprep.subr.mxu0 0.0
  %5570 = vmatpush2.xpose.msra.mxu0 0.0
  %5571 = vmatprep.subr.mxu0 0.0
  %5572 = vmatpush2.xpose.msra.mxu0 0.0
  %5573 = vmatprep.mubr.f32.mxu0 0.0
  %5574 = vmatmul.mubr.f32.gmra.mxu0 %v5501
  %v5575 = vpop.f32.mrf.mxu0
  %v5576 = vadd.f32 %v250, %v5575
  %v5577 = vpop.f32.mrf.mxu0
  %5578 = vmatprep.mubr.f32.mxu0 0.0
  %5579 = vmatmul.mubr.f32.gmra.mxu0 %v5503
  %v5580 = vpop.f32.mrf.mxu0
  %v5581 = vadd.f32 %v251, %v5580
  %v5582 = vpop.f32.mrf.mxu0
  %5583 = vdwg.mxu0
  %5584 = vrot.lane.b32.xlu0 %v226, 104
  %v5585 = vpop.permute.xlu0 %5584
  %5586 = vrot.lane.b32.xlu0 %v231, 104
  %v5587 = vpop.permute.xlu0 %5586
  %5588 = vrot.lane.b32.xlu0 %v226, 72
  %v5589 = vpop.permute.xlu0 %5588
  %5590 = vrot.lane.b32.xlu0 %v231, 72
  %v5591 = vpop.permute.xlu0 %5590
  %v5592 = vsel %vm258, %v5585, 0
  %v5594 = vsel %vm258, %v5587, 0
  %v5596 = vsel %vm258, %v5589, 0
  %v5598 = vsel %vm258, %v5591, 0
  %5600 = vmatprep.subr.mxu0 0.0
  %5601 = vmatpush1.xpose.msra.mxu0 0.0
  %5602 = vmatprep.subr.mxu0 0.0
  %5603 = vmatpush1.xpose.msra.mxu0 0.0
  %5604 = vmatprep.subr.mxu0 0.0
  %5605 = vmatpush1.xpose.msra.mxu0 0.0
  %5606 = vmatprep.subr.mxu0 0.0
  %5607 = vmatpush1.xpose.msra.mxu0 0.0
  %5608 = vmatprep.subr.mxu0 0.0
  %5609 = vmatpush1.xpose.msra.mxu0 0.0
  %5610 = vmatprep.subr.mxu0 0.0
  %5611 = vmatpush1.xpose.msra.mxu0 0.0
  %5612 = vmatprep.subr.mxu0 0.0
  %5613 = vmatpush1.xpose.msra.mxu0 0.0
  %5614 = vmatprep.subr.mxu0 0.0
  %5615 = vmatpush1.xpose.msra.mxu0 0.0
  %5616 = vmatprep.subr.mxu0 0.0
  %5617 = vmatpush1.xpose.msra.mxu0 0.0
  %5618 = vmatprep.subr.mxu0 0.0
  %5619 = vmatpush1.xpose.msra.mxu0 0.0
  %5620 = vmatprep.subr.mxu0 0.0
  %5621 = vmatpush1.xpose.msra.mxu0 0.0
  %5622 = vmatprep.subr.mxu0 0.0
  %5623 = vmatpush1.xpose.msra.mxu0 0.0
  %5624 = vmatprep.subr.mxu0 0.0
  %5625 = vmatpush1.xpose.msra.mxu0 0.0
  %5626 = vmatprep.subr.mxu0 0.0
  %5627 = vmatpush1.xpose.msra.mxu0 0.0
  %5628 = vmatprep.subr.mxu0 0.0
  %5629 = vmatpush1.xpose.msra.mxu0 %v5598
  %5630 = vmatprep.subr.mxu0 0.0
  %5631 = vmatpush1.xpose.msra.mxu0 %v5596
  %5632 = vmatprep.subr.mxu0 0.0
  %5633 = vmatpush2.xpose.msra.mxu0 0.0
  %5634 = vmatprep.subr.mxu0 0.0
  %5635 = vmatpush2.xpose.msra.mxu0 0.0
  %5636 = vmatprep.subr.mxu0 0.0
  %5637 = vmatpush2.xpose.msra.mxu0 0.0
  %5638 = vmatprep.subr.mxu0 0.0
  %5639 = vmatpush2.xpose.msra.mxu0 0.0
  %5640 = vmatprep.subr.mxu0 0.0
  %5641 = vmatpush2.xpose.msra.mxu0 0.0
  %5642 = vmatprep.subr.mxu0 0.0
  %5643 = vmatpush2.xpose.msra.mxu0 0.0
  %5644 = vmatprep.subr.mxu0 0.0
  %5645 = vmatpush2.xpose.msra.mxu0 0.0
  %5646 = vmatprep.subr.mxu0 0.0
  %5647 = vmatpush2.xpose.msra.mxu0 0.0
  %5648 = vmatprep.subr.mxu0 0.0
  %5649 = vmatpush2.xpose.msra.mxu0 0.0
  %5650 = vmatprep.subr.mxu0 0.0
  %5651 = vmatpush2.xpose.msra.mxu0 0.0
  %5652 = vmatprep.subr.mxu0 0.0
  %5653 = vmatpush2.xpose.msra.mxu0 0.0
  %5654 = vmatprep.subr.mxu0 0.0
  %5655 = vmatpush2.xpose.msra.mxu0 0.0
  %5656 = vmatprep.subr.mxu0 0.0
  %5657 = vmatpush2.xpose.msra.mxu0 0.0
  %5658 = vmatprep.subr.mxu0 0.0
  %5659 = vmatpush2.xpose.msra.mxu0 0.0
  %5660 = vmatprep.subr.mxu0 0.0
  %5661 = vmatpush2.xpose.msra.mxu0 0.0
  %5662 = vmatprep.subr.mxu0 0.0
  %5663 = vmatpush2.xpose.msra.mxu0 0.0
  %5664 = vmatprep.mubr.f32.mxu0 0.0
  %5665 = vmatmul.mubr.f32.gmra.mxu0 %v5592
  %v5666 = vpop.f32.mrf.mxu0
  %v5667 = vadd.f32 %v250, %v5666
  %v5668 = vpop.f32.mrf.mxu0
  %5669 = vmatprep.mubr.f32.mxu0 0.0
  %5670 = vmatmul.mubr.f32.gmra.mxu0 %v5594
  %v5671 = vpop.f32.mrf.mxu0
  %v5672 = vadd.f32 %v251, %v5671
  %v5673 = vpop.f32.mrf.mxu0
  %5674 = vdwg.mxu0
  %5675 = vrot.lane.b32.xlu0 %v236, 104
  %v5676 = vpop.permute.xlu0 %5675
  %5677 = vrot.lane.b32.xlu0 %v241, 104
  %v5678 = vpop.permute.xlu0 %5677
  %5679 = vrot.lane.b32.xlu0 %v236, 72
  %v5680 = vpop.permute.xlu0 %5679
  %5681 = vrot.lane.b32.xlu0 %v241, 72
  %v5682 = vpop.permute.xlu0 %5681
  %v5683 = vsel %vm258, %v5676, 0
  %v5685 = vsel %vm258, %v5678, 0
  %v5687 = vsel %vm258, %v5680, 0
  %v5689 = vsel %vm258, %v5682, 0
  %5691 = vmatprep.subr.mxu0 0.0
  %5692 = vmatpush1.xpose.msra.mxu0 0.0
  %5693 = vmatprep.subr.mxu0 0.0
  %5694 = vmatpush1.xpose.msra.mxu0 0.0
  %5695 = vmatprep.subr.mxu0 0.0
  %5696 = vmatpush1.xpose.msra.mxu0 0.0
  %5697 = vmatprep.subr.mxu0 0.0
  %5698 = vmatpush1.xpose.msra.mxu0 0.0
  %5699 = vmatprep.subr.mxu0 0.0
  %5700 = vmatpush1.xpose.msra.mxu0 0.0
  %5701 = vmatprep.subr.mxu0 0.0
  %5702 = vmatpush1.xpose.msra.mxu0 0.0
  %5703 = vmatprep.subr.mxu0 0.0
  %5704 = vmatpush1.xpose.msra.mxu0 0.0
  %5705 = vmatprep.subr.mxu0 0.0
  %5706 = vmatpush1.xpose.msra.mxu0 0.0
  %5707 = vmatprep.subr.mxu0 0.0
  %5708 = vmatpush1.xpose.msra.mxu0 0.0
  %5709 = vmatprep.subr.mxu0 0.0
  %5710 = vmatpush1.xpose.msra.mxu0 0.0
  %5711 = vmatprep.subr.mxu0 0.0
  %5712 = vmatpush1.xpose.msra.mxu0 0.0
  %5713 = vmatprep.subr.mxu0 0.0
  %5714 = vmatpush1.xpose.msra.mxu0 0.0
  %5715 = vmatprep.subr.mxu0 0.0
  %5716 = vmatpush1.xpose.msra.mxu0 0.0
  %5717 = vmatprep.subr.mxu0 0.0
  %5718 = vmatpush1.xpose.msra.mxu0 0.0
  %5719 = vmatprep.subr.mxu0 0.0
  %5720 = vmatpush1.xpose.msra.mxu0 %v5689
  %5721 = vmatprep.subr.mxu0 0.0
  %5722 = vmatpush1.xpose.msra.mxu0 %v5687
  %5723 = vmatprep.subr.mxu0 0.0
  %5724 = vmatpush2.xpose.msra.mxu0 0.0
  %5725 = vmatprep.subr.mxu0 0.0
  %5726 = vmatpush2.xpose.msra.mxu0 0.0
  %5727 = vmatprep.subr.mxu0 0.0
  %5728 = vmatpush2.xpose.msra.mxu0 0.0
  %5729 = vmatprep.subr.mxu0 0.0
  %5730 = vmatpush2.xpose.msra.mxu0 0.0
  %5731 = vmatprep.subr.mxu0 0.0
  %5732 = vmatpush2.xpose.msra.mxu0 0.0
  %5733 = vmatprep.subr.mxu0 0.0
  %5734 = vmatpush2.xpose.msra.mxu0 0.0
  %5735 = vmatprep.subr.mxu0 0.0
  %5736 = vmatpush2.xpose.msra.mxu0 0.0
  %5737 = vmatprep.subr.mxu0 0.0
  %5738 = vmatpush2.xpose.msra.mxu0 0.0
  %5739 = vmatprep.subr.mxu0 0.0
  %5740 = vmatpush2.xpose.msra.mxu0 0.0
  %5741 = vmatprep.subr.mxu0 0.0
  %5742 = vmatpush2.xpose.msra.mxu0 0.0
  %5743 = vmatprep.subr.mxu0 0.0
  %5744 = vmatpush2.xpose.msra.mxu0 0.0
  %5745 = vmatprep.subr.mxu0 0.0
  %5746 = vmatpush2.xpose.msra.mxu0 0.0
  %5747 = vmatprep.subr.mxu0 0.0
  %5748 = vmatpush2.xpose.msra.mxu0 0.0
  %5749 = vmatprep.subr.mxu0 0.0
  %5750 = vmatpush2.xpose.msra.mxu0 0.0
  %5751 = vmatprep.subr.mxu0 0.0
  %5752 = vmatpush2.xpose.msra.mxu0 0.0
  %5753 = vmatprep.subr.mxu0 0.0
  %5754 = vmatpush2.xpose.msra.mxu0 0.0
  %5755 = vmatprep.mubr.f32.mxu0 0.0
  %5756 = vmatmul.mubr.f32.gmra.mxu0 %v5683
  %v5757 = vpop.f32.mrf.mxu0
  %v5758 = vadd.f32 %v250, %v5757
  %v5759 = vpop.f32.mrf.mxu0
  %5760 = vmatprep.mubr.f32.mxu0 0.0
  %5761 = vmatmul.mubr.f32.gmra.mxu0 %v5685
  %v5762 = vpop.f32.mrf.mxu0
  %v5763 = vadd.f32 %v251, %v5762
  %v5764 = vpop.f32.mrf.mxu0
  %5765 = vdwg.mxu0
  %v5766 = vsel %vm965, %v5121, -inf
  %5767 = vmax.xlane.f32.xlu0 %v5766
  %v5768 = vpop.xlane.xlu0 %5767
  %v5769 = vsel %vm965, %v5126, -inf
  %5770 = vmax.xlane.f32.xlu0 %v5769
  %v5771 = vpop.xlane.xlu0 %5770
  %v5772 = vsel %vm965, %v5212, -inf
  %5773 = vmax.xlane.f32.xlu0 %v5772
  %v5774 = vpop.xlane.xlu0 %5773
  %v5775 = vsel %vm965, %v5217, -inf
  %5776 = vmax.xlane.f32.xlu0 %v5775
  %v5777 = vpop.xlane.xlu0 %5776
  %v5778 = vsel %vm965, %v5303, -inf
  %5779 = vmax.xlane.f32.xlu0 %v5778
  %v5780 = vpop.xlane.xlu0 %5779
  %v5781 = vsel %vm965, %v5308, -inf
  %5782 = vmax.xlane.f32.xlu0 %v5781
  %v5783 = vpop.xlane.xlu0 %5782
  %v5784 = vsel %vm965, %v5394, -inf
  %5785 = vmax.xlane.f32.xlu0 %v5784
  %v5786 = vpop.xlane.xlu0 %5785
  %v5787 = vsel %vm965, %v5399, -inf
  %5788 = vmax.xlane.f32.xlu0 %v5787
  %v5789 = vpop.xlane.xlu0 %5788
  %v5790 = vsel %vm965, %v5485, -inf
  %5791 = vmax.xlane.f32.xlu0 %v5790
  %v5792 = vpop.xlane.xlu0 %5791
  %v5793 = vsel %vm965, %v5490, -inf
  %5794 = vmax.xlane.f32.xlu0 %v5793
  %v5795 = vpop.xlane.xlu0 %5794
  %v5796 = vsel %vm965, %v5576, -inf
  %5797 = vmax.xlane.f32.xlu0 %v5796
  %v5798 = vpop.xlane.xlu0 %5797
  %v5799 = vsel %vm965, %v5581, -inf
  %5800 = vmax.xlane.f32.xlu0 %v5799
  %v5801 = vpop.xlane.xlu0 %5800
  %v5802 = vsel %vm965, %v5667, -inf
  %5803 = vmax.xlane.f32.xlu0 %v5802
  %v5804 = vpop.xlane.xlu0 %5803
  %v5805 = vsel %vm965, %v5672, -inf
  %5806 = vmax.xlane.f32.xlu0 %v5805
  %v5807 = vpop.xlane.xlu0 %5806
  %v5808 = vsel %vm965, %v5758, -inf
  %5809 = vmax.xlane.f32.xlu0 %v5808
  %v5810 = vpop.xlane.xlu0 %5809
  %v5811 = vsel %vm965, %v5763, -inf
  %5812 = vmax.xlane.f32.xlu0 %v5811
  %v5813 = vpop.xlane.xlu0 %5812
  %v5814 = vsub.f32 %v5121, %v5768
  %v5815 = vsub.f32 %v5126, %v5771
  %v5816 = vsub.f32 %v5212, %v5774
  %v5817 = vsub.f32 %v5217, %v5777
  %v5818 = vsub.f32 %v5303, %v5780
  %v5819 = vsub.f32 %v5308, %v5783
  %v5820 = vsub.f32 %v5394, %v5786
  %v5821 = vsub.f32 %v5399, %v5789
  %v5822 = vsub.f32 %v5485, %v5792
  %v5823 = vsub.f32 %v5490, %v5795
  %v5824 = vsub.f32 %v5576, %v5798
  %v5825 = vsub.f32 %v5581, %v5801
  %v5826 = vsub.f32 %v5667, %v5804
  %v5827 = vsub.f32 %v5672, %v5807
  %v5828 = vsub.f32 %v5758, %v5810
  %v5829 = vsub.f32 %v5763, %v5813
  %v5830 = vmul.f32 %v5814, 1.442695
  %v5831 = vpow.pop %v5830
  %v5832 = vmul.f32 %v5815, 1.442695
  %v5833 = vpow.pop %v5832
  %v5834 = vmul.f32 %v5816, 1.442695
  %v5835 = vpow.pop %v5834
  %v5836 = vmul.f32 %v5817, 1.442695
  %v5837 = vpow.pop %v5836
  %v5838 = vmul.f32 %v5818, 1.442695
  %v5839 = vpow.pop %v5838
  %v5840 = vmul.f32 %v5819, 1.442695
  %v5841 = vpow.pop %v5840
  %v5842 = vmul.f32 %v5820, 1.442695
  %v5843 = vpow.pop %v5842
  %v5844 = vmul.f32 %v5821, 1.442695
  %v5845 = vpow.pop %v5844
  %v5846 = vmul.f32 %v5822, 1.442695
  %v5847 = vpow.pop %v5846
  %v5848 = vmul.f32 %v5823, 1.442695
  %v5849 = vpow.pop %v5848
  %v5850 = vmul.f32 %v5824, 1.442695
  %v5851 = vpow.pop %v5850
  %v5852 = vmul.f32 %v5825, 1.442695
  %v5853 = vpow.pop %v5852
  %v5854 = vmul.f32 %v5826, 1.442695
  %v5855 = vpow.pop %v5854
  %v5856 = vmul.f32 %v5827, 1.442695
  %v5857 = vpow.pop %v5856
  %v5858 = vmul.f32 %v5828, 1.442695
  %v5859 = vpow.pop %v5858
  %v5860 = vmul.f32 %v5829, 1.442695
  %v5861 = vpow.pop %v5860
  %v5862 = vsel %vm965, %v5831, 0.0
  %5863 = vadd.xlane.f32.xlu0 %v5862
  %v5864 = vpop.xlane.xlu0 %5863
  %v5865 = vsel %vm965, %v5833, 0.0
  %5866 = vadd.xlane.f32.xlu0 %v5865
  %v5867 = vpop.xlane.xlu0 %5866
  %v5868 = vsel %vm965, %v5835, 0.0
  %5869 = vadd.xlane.f32.xlu0 %v5868
  %v5870 = vpop.xlane.xlu0 %5869
  %v5871 = vsel %vm965, %v5837, 0.0
  %5872 = vadd.xlane.f32.xlu0 %v5871
  %v5873 = vpop.xlane.xlu0 %5872
  %v5874 = vsel %vm965, %v5839, 0.0
  %5875 = vadd.xlane.f32.xlu0 %v5874
  %v5876 = vpop.xlane.xlu0 %5875
  %v5877 = vsel %vm965, %v5841, 0.0
  %5878 = vadd.xlane.f32.xlu0 %v5877
  %v5879 = vpop.xlane.xlu0 %5878
  %v5880 = vsel %vm965, %v5843, 0.0
  %5881 = vadd.xlane.f32.xlu0 %v5880
  %v5882 = vpop.xlane.xlu0 %5881
  %v5883 = vsel %vm965, %v5845, 0.0
  %5884 = vadd.xlane.f32.xlu0 %v5883
  %v5885 = vpop.xlane.xlu0 %5884
  %v5886 = vsel %vm965, %v5847, 0.0
  %5887 = vadd.xlane.f32.xlu0 %v5886
  %v5888 = vpop.xlane.xlu0 %5887
  %v5889 = vsel %vm965, %v5849, 0.0
  %5890 = vadd.xlane.f32.xlu0 %v5889
  %v5891 = vpop.xlane.xlu0 %5890
  %v5892 = vsel %vm965, %v5851, 0.0
  %5893 = vadd.xlane.f32.xlu0 %v5892
  %v5894 = vpop.xlane.xlu0 %5893
  %v5895 = vsel %vm965, %v5853, 0.0
  %5896 = vadd.xlane.f32.xlu0 %v5895
  %v5897 = vpop.xlane.xlu0 %5896
  %v5898 = vsel %vm965, %v5855, 0.0
  %5899 = vadd.xlane.f32.xlu0 %v5898
  %v5900 = vpop.xlane.xlu0 %5899
  %v5901 = vsel %vm965, %v5857, 0.0
  %5902 = vadd.xlane.f32.xlu0 %v5901
  %v5903 = vpop.xlane.xlu0 %5902
  %v5904 = vsel %vm965, %v5859, 0.0
  %5905 = vadd.xlane.f32.xlu0 %v5904
  %v5906 = vpop.xlane.xlu0 %5905
  %v5907 = vsel %vm965, %v5861, 0.0
  %5908 = vadd.xlane.f32.xlu0 %v5907
  %v5909 = vpop.xlane.xlu0 %5908
  %v5910 = vrcp.pop %v5864
  %v5911 = vrcp.pop %v5867
  %v5912 = vrcp.pop %v5870
  %v5913 = vrcp.pop %v5873
  %v5914 = vrcp.pop %v5876
  %v5915 = vrcp.pop %v5879
  %v5916 = vrcp.pop %v5882
  %v5917 = vrcp.pop %v5885
  %v5918 = vrcp.pop %v5888
  %v5919 = vrcp.pop %v5891
  %v5920 = vrcp.pop %v5894
  %v5921 = vrcp.pop %v5897
  %v5922 = vrcp.pop %v5900
  %v5923 = vrcp.pop %v5903
  %v5924 = vrcp.pop %v5906
  %v5925 = vrcp.pop %v5909
  %v5926 = vmul.f32 %v5831, %v5910
  %v5927 = vmul.f32 %v5833, %v5911
  %v5928 = vmul.f32 %v5835, %v5912
  %v5929 = vmul.f32 %v5837, %v5913
  %v5930 = vmul.f32 %v5839, %v5914
  %v5931 = vmul.f32 %v5841, %v5915
  %v5932 = vmul.f32 %v5843, %v5916
  %v5933 = vmul.f32 %v5845, %v5917
  %v5934 = vmul.f32 %v5847, %v5918
  %v5935 = vmul.f32 %v5849, %v5919
  %v5936 = vmul.f32 %v5851, %v5920
  %v5937 = vmul.f32 %v5853, %v5921
  %v5938 = vmul.f32 %v5855, %v5922
  %v5939 = vmul.f32 %v5857, %v5923
  %v5940 = vmul.f32 %v5859, %v5924
  %v5941 = vmul.f32 %v5861, %v5925
  %5942 = vrot.lane.b32.xlu0 %v166, 40
  %v5943 = vpop.permute.xlu0 %5942
  %5944 = vrot.lane.b32.xlu0 %v171, 40
  %v5945 = vpop.permute.xlu0 %5944
  %v5949 = vsel %vm965, %v5926, 0
  %v5952 = vsel %vm965, %v5927, 0
  %5954 = vmatprep.subr.mxu0 0.0
  %5955 = vmatpush1.msra.mxu0 0.0
  %5956 = vmatprep.subr.mxu0 0.0
  %5957 = vmatpush1.msra.mxu0 0.0
  %5958 = vmatprep.subr.mxu0 0.0
  %5959 = vmatpush1.msra.mxu0 0.0
  %5960 = vmatprep.subr.mxu0 0.0
  %5961 = vmatpush1.msra.mxu0 0.0
  %5962 = vmatprep.subr.mxu0 0.0
  %5963 = vmatpush1.msra.mxu0 0.0
  %5964 = vmatprep.subr.mxu0 0.0
  %5965 = vmatpush1.msra.mxu0 0.0
  %5966 = vmatprep.subr.mxu0 0.0
  %5967 = vmatpush1.msra.mxu0 0.0
  %5968 = vmatprep.subr.mxu0 0.0
  %5969 = vmatpush1.msra.mxu0 0.0
  %5970 = vmatprep.subr.mxu0 0.0
  %5971 = vmatpush1.msra.mxu0 0.0
  %5972 = vmatprep.subr.mxu0 0.0
  %5973 = vmatpush1.msra.mxu0 0.0
  %5974 = vmatprep.subr.mxu0 0.0
  %5975 = vmatpush1.msra.mxu0 0.0
  %5976 = vmatprep.subr.mxu0 0.0
  %5977 = vmatpush1.msra.mxu0 0.0
  %5978 = vmatprep.subr.mxu0 0.0
  %5979 = vmatpush1.msra.mxu0 0.0
  %5980 = vmatprep.subr.mxu0 0.0
  %5981 = vmatpush1.msra.mxu0 0.0
  %5982 = vmatprep.subr.mxu0 0.0
  %5983 = vmatpush1.msra.mxu0 %v5945
  %5984 = vmatprep.subr.mxu0 0.0
  %5985 = vmatpush1.msra.mxu0 %v5943
  %5986 = vmatprep.subr.mxu0 0.0
  %5987 = vmatpush2.msra.mxu0 0.0
  %5988 = vmatprep.subr.mxu0 0.0
  %5989 = vmatpush2.msra.mxu0 0.0
  %5990 = vmatprep.subr.mxu0 0.0
  %5991 = vmatpush2.msra.mxu0 0.0
  %5992 = vmatprep.subr.mxu0 0.0
  %5993 = vmatpush2.msra.mxu0 0.0
  %5994 = vmatprep.subr.mxu0 0.0
  %5995 = vmatpush2.msra.mxu0 0.0
  %5996 = vmatprep.subr.mxu0 0.0
  %5997 = vmatpush2.msra.mxu0 0.0
  %5998 = vmatprep.subr.mxu0 0.0
  %5999 = vmatpush2.msra.mxu0 0.0
  %6000 = vmatprep.subr.mxu0 0.0
  %6001 = vmatpush2.msra.mxu0 0.0
  %6002 = vmatprep.subr.mxu0 0.0
  %6003 = vmatpush2.msra.mxu0 0.0
  %6004 = vmatprep.subr.mxu0 0.0
  %6005 = vmatpush2.msra.mxu0 0.0
  %6006 = vmatprep.subr.mxu0 0.0
  %6007 = vmatpush2.msra.mxu0 0.0
  %6008 = vmatprep.subr.mxu0 0.0
  %6009 = vmatpush2.msra.mxu0 0.0
  %6010 = vmatprep.subr.mxu0 0.0
  %6011 = vmatpush2.msra.mxu0 0.0
  %6012 = vmatprep.subr.mxu0 0.0
  %6013 = vmatpush2.msra.mxu0 0.0
  %6014 = vmatprep.subr.mxu0 0.0
  %6015 = vmatpush2.msra.mxu0 0.0
  %6016 = vmatprep.subr.mxu0 0.0
  %6017 = vmatpush2.msra.mxu0 0.0
  %6018 = vmatprep.mubr.f32.mxu0 0.0
  %6019 = vmatmul.mubr.f32.gmra.mxu0 %v5949
  %v6020 = vpop.f32.mrf.mxu0
  %v6021 = vadd.f32 0.0, %v6020
  %v6022 = vpop.f32.mrf.mxu0
  %6023 = vmatprep.mubr.f32.mxu0 0.0
  %6024 = vmatmul.mubr.f32.gmra.mxu0 %v5952
  %v6025 = vpop.f32.mrf.mxu0
  %v6026 = vadd.f32 0.0, %v6025
  %v6027 = vpop.f32.mrf.mxu0
  %6028 = vdwg.mxu0
  %6029 = vrot.lane.b32.xlu0 %v176, 40
  %v6030 = vpop.permute.xlu0 %6029
  %6031 = vrot.lane.b32.xlu0 %v181, 40
  %v6032 = vpop.permute.xlu0 %6031
  %v6036 = vsel %vm965, %v5928, 0
  %v6039 = vsel %vm965, %v5929, 0
  %6041 = vmatprep.subr.mxu0 0.0
  %6042 = vmatpush1.msra.mxu0 0.0
  %6043 = vmatprep.subr.mxu0 0.0
  %6044 = vmatpush1.msra.mxu0 0.0
  %6045 = vmatprep.subr.mxu0 0.0
  %6046 = vmatpush1.msra.mxu0 0.0
  %6047 = vmatprep.subr.mxu0 0.0
  %6048 = vmatpush1.msra.mxu0 0.0
  %6049 = vmatprep.subr.mxu0 0.0
  %6050 = vmatpush1.msra.mxu0 0.0
  %6051 = vmatprep.subr.mxu0 0.0
  %6052 = vmatpush1.msra.mxu0 0.0
  %6053 = vmatprep.subr.mxu0 0.0
  %6054 = vmatpush1.msra.mxu0 0.0
  %6055 = vmatprep.subr.mxu0 0.0
  %6056 = vmatpush1.msra.mxu0 0.0
  %6057 = vmatprep.subr.mxu0 0.0
  %6058 = vmatpush1.msra.mxu0 0.0
  %6059 = vmatprep.subr.mxu0 0.0
  %6060 = vmatpush1.msra.mxu0 0.0
  %6061 = vmatprep.subr.mxu0 0.0
  %6062 = vmatpush1.msra.mxu0 0.0
  %6063 = vmatprep.subr.mxu0 0.0
  %6064 = vmatpush1.msra.mxu0 0.0
  %6065 = vmatprep.subr.mxu0 0.0
  %6066 = vmatpush1.msra.mxu0 0.0
  %6067 = vmatprep.subr.mxu0 0.0
  %6068 = vmatpush1.msra.mxu0 0.0
  %6069 = vmatprep.subr.mxu0 0.0
  %6070 = vmatpush1.msra.mxu0 %v6032
  %6071 = vmatprep.subr.mxu0 0.0
  %6072 = vmatpush1.msra.mxu0 %v6030
  %6073 = vmatprep.subr.mxu0 0.0
  %6074 = vmatpush2.msra.mxu0 0.0
  %6075 = vmatprep.subr.mxu0 0.0
  %6076 = vmatpush2.msra.mxu0 0.0
  %6077 = vmatprep.subr.mxu0 0.0
  %6078 = vmatpush2.msra.mxu0 0.0
  %6079 = vmatprep.subr.mxu0 0.0
  %6080 = vmatpush2.msra.mxu0 0.0
  %6081 = vmatprep.subr.mxu0 0.0
  %6082 = vmatpush2.msra.mxu0 0.0
  %6083 = vmatprep.subr.mxu0 0.0
  %6084 = vmatpush2.msra.mxu0 0.0
  %6085 = vmatprep.subr.mxu0 0.0
  %6086 = vmatpush2.msra.mxu0 0.0
  %6087 = vmatprep.subr.mxu0 0.0
  %6088 = vmatpush2.msra.mxu0 0.0
  %6089 = vmatprep.subr.mxu0 0.0
  %6090 = vmatpush2.msra.mxu0 0.0
  %6091 = vmatprep.subr.mxu0 0.0
  %6092 = vmatpush2.msra.mxu0 0.0
  %6093 = vmatprep.subr.mxu0 0.0
  %6094 = vmatpush2.msra.mxu0 0.0
  %6095 = vmatprep.subr.mxu0 0.0
  %6096 = vmatpush2.msra.mxu0 0.0
  %6097 = vmatprep.subr.mxu0 0.0
  %6098 = vmatpush2.msra.mxu0 0.0
  %6099 = vmatprep.subr.mxu0 0.0
  %6100 = vmatpush2.msra.mxu0 0.0
  %6101 = vmatprep.subr.mxu0 0.0
  %6102 = vmatpush2.msra.mxu0 0.0
  %6103 = vmatprep.subr.mxu0 0.0
  %6104 = vmatpush2.msra.mxu0 0.0
  %6105 = vmatprep.mubr.f32.mxu0 0.0
  %6106 = vmatmul.mubr.f32.gmra.mxu0 %v6036
  %v6107 = vpop.f32.mrf.mxu0
  %v6108 = vadd.f32 0.0, %v6107
  %v6109 = vpop.f32.mrf.mxu0
  %6110 = vmatprep.mubr.f32.mxu0 0.0
  %6111 = vmatmul.mubr.f32.gmra.mxu0 %v6039
  %v6112 = vpop.f32.mrf.mxu0
  %v6113 = vadd.f32 0.0, %v6112
  %v6114 = vpop.f32.mrf.mxu0
  %6115 = vdwg.mxu0
  %6116 = vrot.lane.b32.xlu0 %v186, 40
  %v6117 = vpop.permute.xlu0 %6116
  %6118 = vrot.lane.b32.xlu0 %v191, 40
  %v6119 = vpop.permute.xlu0 %6118
  %v6123 = vsel %vm965, %v5930, 0
  %v6126 = vsel %vm965, %v5931, 0
  %6128 = vmatprep.subr.mxu0 0.0
  %6129 = vmatpush1.msra.mxu0 0.0
  %6130 = vmatprep.subr.mxu0 0.0
  %6131 = vmatpush1.msra.mxu0 0.0
  %6132 = vmatprep.subr.mxu0 0.0
  %6133 = vmatpush1.msra.mxu0 0.0
  %6134 = vmatprep.subr.mxu0 0.0
  %6135 = vmatpush1.msra.mxu0 0.0
  %6136 = vmatprep.subr.mxu0 0.0
  %6137 = vmatpush1.msra.mxu0 0.0
  %6138 = vmatprep.subr.mxu0 0.0
  %6139 = vmatpush1.msra.mxu0 0.0
  %6140 = vmatprep.subr.mxu0 0.0
  %6141 = vmatpush1.msra.mxu0 0.0
  %6142 = vmatprep.subr.mxu0 0.0
  %6143 = vmatpush1.msra.mxu0 0.0
  %6144 = vmatprep.subr.mxu0 0.0
  %6145 = vmatpush1.msra.mxu0 0.0
  %6146 = vmatprep.subr.mxu0 0.0
  %6147 = vmatpush1.msra.mxu0 0.0
  %6148 = vmatprep.subr.mxu0 0.0
  %6149 = vmatpush1.msra.mxu0 0.0
  %6150 = vmatprep.subr.mxu0 0.0
  %6151 = vmatpush1.msra.mxu0 0.0
  %6152 = vmatprep.subr.mxu0 0.0
  %6153 = vmatpush1.msra.mxu0 0.0
  %6154 = vmatprep.subr.mxu0 0.0
  %6155 = vmatpush1.msra.mxu0 0.0
  %6156 = vmatprep.subr.mxu0 0.0
  %6157 = vmatpush1.msra.mxu0 %v6119
  %6158 = vmatprep.subr.mxu0 0.0
  %6159 = vmatpush1.msra.mxu0 %v6117
  %6160 = vmatprep.subr.mxu0 0.0
  %6161 = vmatpush2.msra.mxu0 0.0
  %6162 = vmatprep.subr.mxu0 0.0
  %6163 = vmatpush2.msra.mxu0 0.0
  %6164 = vmatprep.subr.mxu0 0.0
  %6165 = vmatpush2.msra.mxu0 0.0
  %6166 = vmatprep.subr.mxu0 0.0
  %6167 = vmatpush2.msra.mxu0 0.0
  %6168 = vmatprep.subr.mxu0 0.0
  %6169 = vmatpush2.msra.mxu0 0.0
  %6170 = vmatprep.subr.mxu0 0.0
  %6171 = vmatpush2.msra.mxu0 0.0
  %6172 = vmatprep.subr.mxu0 0.0
  %6173 = vmatpush2.msra.mxu0 0.0
  %6174 = vmatprep.subr.mxu0 0.0
  %6175 = vmatpush2.msra.mxu0 0.0
  %6176 = vmatprep.subr.mxu0 0.0
  %6177 = vmatpush2.msra.mxu0 0.0
  %6178 = vmatprep.subr.mxu0 0.0
  %6179 = vmatpush2.msra.mxu0 0.0
  %6180 = vmatprep.subr.mxu0 0.0
  %6181 = vmatpush2.msra.mxu0 0.0
  %6182 = vmatprep.subr.mxu0 0.0
  %6183 = vmatpush2.msra.mxu0 0.0
  %6184 = vmatprep.subr.mxu0 0.0
  %6185 = vmatpush2.msra.mxu0 0.0
  %6186 = vmatprep.subr.mxu0 0.0
  %6187 = vmatpush2.msra.mxu0 0.0
  %6188 = vmatprep.subr.mxu0 0.0
  %6189 = vmatpush2.msra.mxu0 0.0
  %6190 = vmatprep.subr.mxu0 0.0
  %6191 = vmatpush2.msra.mxu0 0.0
  %6192 = vmatprep.mubr.f32.mxu0 0.0
  %6193 = vmatmul.mubr.f32.gmra.mxu0 %v6123
  %v6194 = vpop.f32.mrf.mxu0
  %v6195 = vadd.f32 0.0, %v6194
  %v6196 = vpop.f32.mrf.mxu0
  %6197 = vmatprep.mubr.f32.mxu0 0.0
  %6198 = vmatmul.mubr.f32.gmra.mxu0 %v6126
  %v6199 = vpop.f32.mrf.mxu0
  %v6200 = vadd.f32 0.0, %v6199
  %v6201 = vpop.f32.mrf.mxu0
  %6202 = vdwg.mxu0
  %6203 = vrot.lane.b32.xlu0 %v196, 40
  %v6204 = vpop.permute.xlu0 %6203
  %6205 = vrot.lane.b32.xlu0 %v201, 40
  %v6206 = vpop.permute.xlu0 %6205
  %v6210 = vsel %vm965, %v5932, 0
  %v6213 = vsel %vm965, %v5933, 0
  %6215 = vmatprep.subr.mxu0 0.0
  %6216 = vmatpush1.msra.mxu0 0.0
  %6217 = vmatprep.subr.mxu0 0.0
  %6218 = vmatpush1.msra.mxu0 0.0
  %6219 = vmatprep.subr.mxu0 0.0
  %6220 = vmatpush1.msra.mxu0 0.0
  %6221 = vmatprep.subr.mxu0 0.0
  %6222 = vmatpush1.msra.mxu0 0.0
  %6223 = vmatprep.subr.mxu0 0.0
  %6224 = vmatpush1.msra.mxu0 0.0
  %6225 = vmatprep.subr.mxu0 0.0
  %6226 = vmatpush1.msra.mxu0 0.0
  %6227 = vmatprep.subr.mxu0 0.0
  %6228 = vmatpush1.msra.mxu0 0.0
  %6229 = vmatprep.subr.mxu0 0.0
  %6230 = vmatpush1.msra.mxu0 0.0
  %6231 = vmatprep.subr.mxu0 0.0
  %6232 = vmatpush1.msra.mxu0 0.0
  %6233 = vmatprep.subr.mxu0 0.0
  %6234 = vmatpush1.msra.mxu0 0.0
  %6235 = vmatprep.subr.mxu0 0.0
  %6236 = vmatpush1.msra.mxu0 0.0
  %6237 = vmatprep.subr.mxu0 0.0
  %6238 = vmatpush1.msra.mxu0 0.0
  %6239 = vmatprep.subr.mxu0 0.0
  %6240 = vmatpush1.msra.mxu0 0.0
  %6241 = vmatprep.subr.mxu0 0.0
  %6242 = vmatpush1.msra.mxu0 0.0
  %6243 = vmatprep.subr.mxu0 0.0
  %6244 = vmatpush1.msra.mxu0 %v6206
  %6245 = vmatprep.subr.mxu0 0.0
  %6246 = vmatpush1.msra.mxu0 %v6204
  %6247 = vmatprep.subr.mxu0 0.0
  %6248 = vmatpush2.msra.mxu0 0.0
  %6249 = vmatprep.subr.mxu0 0.0
  %6250 = vmatpush2.msra.mxu0 0.0
  %6251 = vmatprep.subr.mxu0 0.0
  %6252 = vmatpush2.msra.mxu0 0.0
  %6253 = vmatprep.subr.mxu0 0.0
  %6254 = vmatpush2.msra.mxu0 0.0
  %6255 = vmatprep.subr.mxu0 0.0
  %6256 = vmatpush2.msra.mxu0 0.0
  %6257 = vmatprep.subr.mxu0 0.0
  %6258 = vmatpush2.msra.mxu0 0.0
  %6259 = vmatprep.subr.mxu0 0.0
  %6260 = vmatpush2.msra.mxu0 0.0
  %6261 = vmatprep.subr.mxu0 0.0
  %6262 = vmatpush2.msra.mxu0 0.0
  %6263 = vmatprep.subr.mxu0 0.0
  %6264 = vmatpush2.msra.mxu0 0.0
  %6265 = vmatprep.subr.mxu0 0.0
  %6266 = vmatpush2.msra.mxu0 0.0
  %6267 = vmatprep.subr.mxu0 0.0
  %6268 = vmatpush2.msra.mxu0 0.0
  %6269 = vmatprep.subr.mxu0 0.0
  %6270 = vmatpush2.msra.mxu0 0.0
  %6271 = vmatprep.subr.mxu0 0.0
  %6272 = vmatpush2.msra.mxu0 0.0
  %6273 = vmatprep.subr.mxu0 0.0
  %6274 = vmatpush2.msra.mxu0 0.0
  %6275 = vmatprep.subr.mxu0 0.0
  %6276 = vmatpush2.msra.mxu0 0.0
  %6277 = vmatprep.subr.mxu0 0.0
  %6278 = vmatpush2.msra.mxu0 0.0
  %6279 = vmatprep.mubr.f32.mxu0 0.0
  %6280 = vmatmul.mubr.f32.gmra.mxu0 %v6210
  %v6281 = vpop.f32.mrf.mxu0
  %v6282 = vadd.f32 0.0, %v6281
  %v6283 = vpop.f32.mrf.mxu0
  %6284 = vmatprep.mubr.f32.mxu0 0.0
  %6285 = vmatmul.mubr.f32.gmra.mxu0 %v6213
  %v6286 = vpop.f32.mrf.mxu0
  %v6287 = vadd.f32 0.0, %v6286
  %v6288 = vpop.f32.mrf.mxu0
  %6289 = vdwg.mxu0
  %6290 = vrot.lane.b32.xlu0 %v206, 40
  %v6291 = vpop.permute.xlu0 %6290
  %6292 = vrot.lane.b32.xlu0 %v211, 40
  %v6293 = vpop.permute.xlu0 %6292
  %v6297 = vsel %vm965, %v5934, 0
  %v6300 = vsel %vm965, %v5935, 0
  %6302 = vmatprep.subr.mxu0 0.0
  %6303 = vmatpush1.msra.mxu0 0.0
  %6304 = vmatprep.subr.mxu0 0.0
  %6305 = vmatpush1.msra.mxu0 0.0
  %6306 = vmatprep.subr.mxu0 0.0
  %6307 = vmatpush1.msra.mxu0 0.0
  %6308 = vmatprep.subr.mxu0 0.0
  %6309 = vmatpush1.msra.mxu0 0.0
  %6310 = vmatprep.subr.mxu0 0.0
  %6311 = vmatpush1.msra.mxu0 0.0
  %6312 = vmatprep.subr.mxu0 0.0
  %6313 = vmatpush1.msra.mxu0 0.0
  %6314 = vmatprep.subr.mxu0 0.0
  %6315 = vmatpush1.msra.mxu0 0.0
  %6316 = vmatprep.subr.mxu0 0.0
  %6317 = vmatpush1.msra.mxu0 0.0
  %6318 = vmatprep.subr.mxu0 0.0
  %6319 = vmatpush1.msra.mxu0 0.0
  %6320 = vmatprep.subr.mxu0 0.0
  %6321 = vmatpush1.msra.mxu0 0.0
  %6322 = vmatprep.subr.mxu0 0.0
  %6323 = vmatpush1.msra.mxu0 0.0
  %6324 = vmatprep.subr.mxu0 0.0
  %6325 = vmatpush1.msra.mxu0 0.0
  %6326 = vmatprep.subr.mxu0 0.0
  %6327 = vmatpush1.msra.mxu0 0.0
  %6328 = vmatprep.subr.mxu0 0.0
  %6329 = vmatpush1.msra.mxu0 0.0
  %6330 = vmatprep.subr.mxu0 0.0
  %6331 = vmatpush1.msra.mxu0 %v6293
  %6332 = vmatprep.subr.mxu0 0.0
  %6333 = vmatpush1.msra.mxu0 %v6291
  %6334 = vmatprep.subr.mxu0 0.0
  %6335 = vmatpush2.msra.mxu0 0.0
  %6336 = vmatprep.subr.mxu0 0.0
  %6337 = vmatpush2.msra.mxu0 0.0
  %6338 = vmatprep.subr.mxu0 0.0
  %6339 = vmatpush2.msra.mxu0 0.0
  %6340 = vmatprep.subr.mxu0 0.0
  %6341 = vmatpush2.msra.mxu0 0.0
  %6342 = vmatprep.subr.mxu0 0.0
  %6343 = vmatpush2.msra.mxu0 0.0
  %6344 = vmatprep.subr.mxu0 0.0
  %6345 = vmatpush2.msra.mxu0 0.0
  %6346 = vmatprep.subr.mxu0 0.0
  %6347 = vmatpush2.msra.mxu0 0.0
  %6348 = vmatprep.subr.mxu0 0.0
  %6349 = vmatpush2.msra.mxu0 0.0
  %6350 = vmatprep.subr.mxu0 0.0
  %6351 = vmatpush2.msra.mxu0 0.0
  %6352 = vmatprep.subr.mxu0 0.0
  %6353 = vmatpush2.msra.mxu0 0.0
  %6354 = vmatprep.subr.mxu0 0.0
  %6355 = vmatpush2.msra.mxu0 0.0
  %6356 = vmatprep.subr.mxu0 0.0
  %6357 = vmatpush2.msra.mxu0 0.0
  %6358 = vmatprep.subr.mxu0 0.0
  %6359 = vmatpush2.msra.mxu0 0.0
  %6360 = vmatprep.subr.mxu0 0.0
  %6361 = vmatpush2.msra.mxu0 0.0
  %6362 = vmatprep.subr.mxu0 0.0
  %6363 = vmatpush2.msra.mxu0 0.0
  %6364 = vmatprep.subr.mxu0 0.0
  %6365 = vmatpush2.msra.mxu0 0.0
  %6366 = vmatprep.mubr.f32.mxu0 0.0
  %6367 = vmatmul.mubr.f32.gmra.mxu0 %v6297
  %v6368 = vpop.f32.mrf.mxu0
  %v6369 = vadd.f32 0.0, %v6368
  %v6370 = vpop.f32.mrf.mxu0
  %6371 = vmatprep.mubr.f32.mxu0 0.0
  %6372 = vmatmul.mubr.f32.gmra.mxu0 %v6300
  %v6373 = vpop.f32.mrf.mxu0
  %v6374 = vadd.f32 0.0, %v6373
  %v6375 = vpop.f32.mrf.mxu0
  %6376 = vdwg.mxu0
  %6377 = vrot.lane.b32.xlu0 %v216, 40
  %v6378 = vpop.permute.xlu0 %6377
  %6379 = vrot.lane.b32.xlu0 %v221, 40
  %v6380 = vpop.permute.xlu0 %6379
  %v6384 = vsel %vm965, %v5936, 0
  %v6387 = vsel %vm965, %v5937, 0
  %6389 = vmatprep.subr.mxu0 0.0
  %6390 = vmatpush1.msra.mxu0 0.0
  %6391 = vmatprep.subr.mxu0 0.0
  %6392 = vmatpush1.msra.mxu0 0.0
  %6393 = vmatprep.subr.mxu0 0.0
  %6394 = vmatpush1.msra.mxu0 0.0
  %6395 = vmatprep.subr.mxu0 0.0
  %6396 = vmatpush1.msra.mxu0 0.0
  %6397 = vmatprep.subr.mxu0 0.0
  %6398 = vmatpush1.msra.mxu0 0.0
  %6399 = vmatprep.subr.mxu0 0.0
  %6400 = vmatpush1.msra.mxu0 0.0
  %6401 = vmatprep.subr.mxu0 0.0
  %6402 = vmatpush1.msra.mxu0 0.0
  %6403 = vmatprep.subr.mxu0 0.0
  %6404 = vmatpush1.msra.mxu0 0.0
  %6405 = vmatprep.subr.mxu0 0.0
  %6406 = vmatpush1.msra.mxu0 0.0
  %6407 = vmatprep.subr.mxu0 0.0
  %6408 = vmatpush1.msra.mxu0 0.0
  %6409 = vmatprep.subr.mxu0 0.0
  %6410 = vmatpush1.msra.mxu0 0.0
  %6411 = vmatprep.subr.mxu0 0.0
  %6412 = vmatpush1.msra.mxu0 0.0
  %6413 = vmatprep.subr.mxu0 0.0
  %6414 = vmatpush1.msra.mxu0 0.0
  %6415 = vmatprep.subr.mxu0 0.0
  %6416 = vmatpush1.msra.mxu0 0.0
  %6417 = vmatprep.subr.mxu0 0.0
  %6418 = vmatpush1.msra.mxu0 %v6380
  %6419 = vmatprep.subr.mxu0 0.0
  %6420 = vmatpush1.msra.mxu0 %v6378
  %6421 = vmatprep.subr.mxu0 0.0
  %6422 = vmatpush2.msra.mxu0 0.0
  %6423 = vmatprep.subr.mxu0 0.0
  %6424 = vmatpush2.msra.mxu0 0.0
  %6425 = vmatprep.subr.mxu0 0.0
  %6426 = vmatpush2.msra.mxu0 0.0
  %6427 = vmatprep.subr.mxu0 0.0
  %6428 = vmatpush2.msra.mxu0 0.0
  %6429 = vmatprep.subr.mxu0 0.0
  %6430 = vmatpush2.msra.mxu0 0.0
  %6431 = vmatprep.subr.mxu0 0.0
  %6432 = vmatpush2.msra.mxu0 0.0
  %6433 = vmatprep.subr.mxu0 0.0
  %6434 = vmatpush2.msra.mxu0 0.0
  %6435 = vmatprep.subr.mxu0 0.0
  %6436 = vmatpush2.msra.mxu0 0.0
  %6437 = vmatprep.subr.mxu0 0.0
  %6438 = vmatpush2.msra.mxu0 0.0
  %6439 = vmatprep.subr.mxu0 0.0
  %6440 = vmatpush2.msra.mxu0 0.0
  %6441 = vmatprep.subr.mxu0 0.0
  %6442 = vmatpush2.msra.mxu0 0.0
  %6443 = vmatprep.subr.mxu0 0.0
  %6444 = vmatpush2.msra.mxu0 0.0
  %6445 = vmatprep.subr.mxu0 0.0
  %6446 = vmatpush2.msra.mxu0 0.0
  %6447 = vmatprep.subr.mxu0 0.0
  %6448 = vmatpush2.msra.mxu0 0.0
  %6449 = vmatprep.subr.mxu0 0.0
  %6450 = vmatpush2.msra.mxu0 0.0
  %6451 = vmatprep.subr.mxu0 0.0
  %6452 = vmatpush2.msra.mxu0 0.0
  %6453 = vmatprep.mubr.f32.mxu0 0.0
  %6454 = vmatmul.mubr.f32.gmra.mxu0 %v6384
  %v6455 = vpop.f32.mrf.mxu0
  %v6456 = vadd.f32 0.0, %v6455
  %v6457 = vpop.f32.mrf.mxu0
  %6458 = vmatprep.mubr.f32.mxu0 0.0
  %6459 = vmatmul.mubr.f32.gmra.mxu0 %v6387
  %v6460 = vpop.f32.mrf.mxu0
  %v6461 = vadd.f32 0.0, %v6460
  %v6462 = vpop.f32.mrf.mxu0
  %6463 = vdwg.mxu0
  %6464 = vrot.lane.b32.xlu0 %v226, 40
  %v6465 = vpop.permute.xlu0 %6464
  %6466 = vrot.lane.b32.xlu0 %v231, 40
  %v6467 = vpop.permute.xlu0 %6466
  %v6471 = vsel %vm965, %v5938, 0
  %v6474 = vsel %vm965, %v5939, 0
  %6476 = vmatprep.subr.mxu0 0.0
  %6477 = vmatpush1.msra.mxu0 0.0
  %6478 = vmatprep.subr.mxu0 0.0
  %6479 = vmatpush1.msra.mxu0 0.0
  %6480 = vmatprep.subr.mxu0 0.0
  %6481 = vmatpush1.msra.mxu0 0.0
  %6482 = vmatprep.subr.mxu0 0.0
  %6483 = vmatpush1.msra.mxu0 0.0
  %6484 = vmatprep.subr.mxu0 0.0
  %6485 = vmatpush1.msra.mxu0 0.0
  %6486 = vmatprep.subr.mxu0 0.0
  %6487 = vmatpush1.msra.mxu0 0.0
  %6488 = vmatprep.subr.mxu0 0.0
  %6489 = vmatpush1.msra.mxu0 0.0
  %6490 = vmatprep.subr.mxu0 0.0
  %6491 = vmatpush1.msra.mxu0 0.0
  %6492 = vmatprep.subr.mxu0 0.0
  %6493 = vmatpush1.msra.mxu0 0.0
  %6494 = vmatprep.subr.mxu0 0.0
  %6495 = vmatpush1.msra.mxu0 0.0
  %6496 = vmatprep.subr.mxu0 0.0
  %6497 = vmatpush1.msra.mxu0 0.0
  %6498 = vmatprep.subr.mxu0 0.0
  %6499 = vmatpush1.msra.mxu0 0.0
  %6500 = vmatprep.subr.mxu0 0.0
  %6501 = vmatpush1.msra.mxu0 0.0
  %6502 = vmatprep.subr.mxu0 0.0
  %6503 = vmatpush1.msra.mxu0 0.0
  %6504 = vmatprep.subr.mxu0 0.0
  %6505 = vmatpush1.msra.mxu0 %v6467
  %6506 = vmatprep.subr.mxu0 0.0
  %6507 = vmatpush1.msra.mxu0 %v6465
  %6508 = vmatprep.subr.mxu0 0.0
  %6509 = vmatpush2.msra.mxu0 0.0
  %6510 = vmatprep.subr.mxu0 0.0
  %6511 = vmatpush2.msra.mxu0 0.0
  %6512 = vmatprep.subr.mxu0 0.0
  %6513 = vmatpush2.msra.mxu0 0.0
  %6514 = vmatprep.subr.mxu0 0.0
  %6515 = vmatpush2.msra.mxu0 0.0
  %6516 = vmatprep.subr.mxu0 0.0
  %6517 = vmatpush2.msra.mxu0 0.0
  %6518 = vmatprep.subr.mxu0 0.0
  %6519 = vmatpush2.msra.mxu0 0.0
  %6520 = vmatprep.subr.mxu0 0.0
  %6521 = vmatpush2.msra.mxu0 0.0
  %6522 = vmatprep.subr.mxu0 0.0
  %6523 = vmatpush2.msra.mxu0 0.0
  %6524 = vmatprep.subr.mxu0 0.0
  %6525 = vmatpush2.msra.mxu0 0.0
  %6526 = vmatprep.subr.mxu0 0.0
  %6527 = vmatpush2.msra.mxu0 0.0
  %6528 = vmatprep.subr.mxu0 0.0
  %6529 = vmatpush2.msra.mxu0 0.0
  %6530 = vmatprep.subr.mxu0 0.0
  %6531 = vmatpush2.msra.mxu0 0.0
  %6532 = vmatprep.subr.mxu0 0.0
  %6533 = vmatpush2.msra.mxu0 0.0
  %6534 = vmatprep.subr.mxu0 0.0
  %6535 = vmatpush2.msra.mxu0 0.0
  %6536 = vmatprep.subr.mxu0 0.0
  %6537 = vmatpush2.msra.mxu0 0.0
  %6538 = vmatprep.subr.mxu0 0.0
  %6539 = vmatpush2.msra.mxu0 0.0
  %6540 = vmatprep.mubr.f32.mxu0 0.0
  %6541 = vmatmul.mubr.f32.gmra.mxu0 %v6471
  %v6542 = vpop.f32.mrf.mxu0
  %v6543 = vadd.f32 0.0, %v6542
  %v6544 = vpop.f32.mrf.mxu0
  %6545 = vmatprep.mubr.f32.mxu0 0.0
  %6546 = vmatmul.mubr.f32.gmra.mxu0 %v6474
  %v6547 = vpop.f32.mrf.mxu0
  %v6548 = vadd.f32 0.0, %v6547
  %v6549 = vpop.f32.mrf.mxu0
  %6550 = vdwg.mxu0
  %6551 = vrot.lane.b32.xlu0 %v236, 40
  %v6552 = vpop.permute.xlu0 %6551
  %6553 = vrot.lane.b32.xlu0 %v241, 40
  %v6554 = vpop.permute.xlu0 %6553
  %v6558 = vsel %vm965, %v5940, 0
  %v6561 = vsel %vm965, %v5941, 0
  %6563 = vmatprep.subr.mxu0 0.0
  %6564 = vmatpush1.msra.mxu0 0.0
  %6565 = vmatprep.subr.mxu0 0.0
  %6566 = vmatpush1.msra.mxu0 0.0
  %6567 = vmatprep.subr.mxu0 0.0
  %6568 = vmatpush1.msra.mxu0 0.0
  %6569 = vmatprep.subr.mxu0 0.0
  %6570 = vmatpush1.msra.mxu0 0.0
  %6571 = vmatprep.subr.mxu0 0.0
  %6572 = vmatpush1.msra.mxu0 0.0
  %6573 = vmatprep.subr.mxu0 0.0
  %6574 = vmatpush1.msra.mxu0 0.0
  %6575 = vmatprep.subr.mxu0 0.0
  %6576 = vmatpush1.msra.mxu0 0.0
  %6577 = vmatprep.subr.mxu0 0.0
  %6578 = vmatpush1.msra.mxu0 0.0
  %6579 = vmatprep.subr.mxu0 0.0
  %6580 = vmatpush1.msra.mxu0 0.0
  %6581 = vmatprep.subr.mxu0 0.0
  %6582 = vmatpush1.msra.mxu0 0.0
  %6583 = vmatprep.subr.mxu0 0.0
  %6584 = vmatpush1.msra.mxu0 0.0
  %6585 = vmatprep.subr.mxu0 0.0
  %6586 = vmatpush1.msra.mxu0 0.0
  %6587 = vmatprep.subr.mxu0 0.0
  %6588 = vmatpush1.msra.mxu0 0.0
  %6589 = vmatprep.subr.mxu0 0.0
  %6590 = vmatpush1.msra.mxu0 0.0
  %6591 = vmatprep.subr.mxu0 0.0
  %6592 = vmatpush1.msra.mxu0 %v6554
  %6593 = vmatprep.subr.mxu0 0.0
  %6594 = vmatpush1.msra.mxu0 %v6552
  %6595 = vmatprep.subr.mxu0 0.0
  %6596 = vmatpush2.msra.mxu0 0.0
  %6597 = vmatprep.subr.mxu0 0.0
  %6598 = vmatpush2.msra.mxu0 0.0
  %6599 = vmatprep.subr.mxu0 0.0
  %6600 = vmatpush2.msra.mxu0 0.0
  %6601 = vmatprep.subr.mxu0 0.0
  %6602 = vmatpush2.msra.mxu0 0.0
  %6603 = vmatprep.subr.mxu0 0.0
  %6604 = vmatpush2.msra.mxu0 0.0
  %6605 = vmatprep.subr.mxu0 0.0
  %6606 = vmatpush2.msra.mxu0 0.0
  %6607 = vmatprep.subr.mxu0 0.0
  %6608 = vmatpush2.msra.mxu0 0.0
  %6609 = vmatprep.subr.mxu0 0.0
  %6610 = vmatpush2.msra.mxu0 0.0
  %6611 = vmatprep.subr.mxu0 0.0
  %6612 = vmatpush2.msra.mxu0 0.0
  %6613 = vmatprep.subr.mxu0 0.0
  %6614 = vmatpush2.msra.mxu0 0.0
  %6615 = vmatprep.subr.mxu0 0.0
  %6616 = vmatpush2.msra.mxu0 0.0
  %6617 = vmatprep.subr.mxu0 0.0
  %6618 = vmatpush2.msra.mxu0 0.0
  %6619 = vmatprep.subr.mxu0 0.0
  %6620 = vmatpush2.msra.mxu0 0.0
  %6621 = vmatprep.subr.mxu0 0.0
  %6622 = vmatpush2.msra.mxu0 0.0
  %6623 = vmatprep.subr.mxu0 0.0
  %6624 = vmatpush2.msra.mxu0 0.0
  %6625 = vmatprep.subr.mxu0 0.0
  %6626 = vmatpush2.msra.mxu0 0.0
  %6627 = vmatprep.mubr.f32.mxu0 0.0
  %6628 = vmatmul.mubr.f32.gmra.mxu0 %v6558
  %v6629 = vpop.f32.mrf.mxu0
  %v6630 = vadd.f32 0.0, %v6629
  %v6631 = vpop.f32.mrf.mxu0
  %6632 = vmatprep.mubr.f32.mxu0 0.0
  %6633 = vmatmul.mubr.f32.gmra.mxu0 %v6561
  %v6634 = vpop.f32.mrf.mxu0
  %v6635 = vadd.f32 0.0, %v6634
  %v6636 = vpop.f32.mrf.mxu0
  %6637 = vdwg.mxu0
  %6654 = vrot.lane.b32.xlu0 %v2821, 8
  %v6655 = vpop.permute.xlu0 %6654
  %6656 = vrot.lane.b32.xlu0 %v2826, 8
  %v6657 = vpop.permute.xlu0 %6656
  %6658 = vrot.lane.b32.xlu0 %v2908, 8
  %v6659 = vpop.permute.xlu0 %6658
  %6660 = vrot.lane.b32.xlu0 %v2913, 8
  %v6661 = vpop.permute.xlu0 %6660
  %6662 = vrot.lane.b32.xlu0 %v2995, 8
  %v6663 = vpop.permute.xlu0 %6662
  %6664 = vrot.lane.b32.xlu0 %v3000, 8
  %v6665 = vpop.permute.xlu0 %6664
  %6666 = vrot.lane.b32.xlu0 %v3082, 8
  %v6667 = vpop.permute.xlu0 %6666
  %6668 = vrot.lane.b32.xlu0 %v3087, 8
  %v6669 = vpop.permute.xlu0 %6668
  %6670 = vrot.lane.b32.xlu0 %v3169, 8
  %v6671 = vpop.permute.xlu0 %6670
  %6672 = vrot.lane.b32.xlu0 %v3174, 8
  %v6673 = vpop.permute.xlu0 %6672
  %6674 = vrot.lane.b32.xlu0 %v3256, 8
  %v6675 = vpop.permute.xlu0 %6674
  %6676 = vrot.lane.b32.xlu0 %v3261, 8
  %v6677 = vpop.permute.xlu0 %6676
  %6678 = vrot.lane.b32.xlu0 %v3343, 8
  %v6679 = vpop.permute.xlu0 %6678
  %6680 = vrot.lane.b32.xlu0 %v3348, 8
  %v6681 = vpop.permute.xlu0 %6680
  %6682 = vrot.lane.b32.xlu0 %v3430, 8
  %v6683 = vpop.permute.xlu0 %6682
  %6684 = vrot.lane.b32.xlu0 %v3435, 8
  %v6685 = vpop.permute.xlu0 %6684
  %6718 = vrot.lane.b32.xlu0 %v4421, 16
  %v6719 = vpop.permute.xlu0 %6718
  %6720 = vrot.lane.b32.xlu0 %v4426, 16
  %v6721 = vpop.permute.xlu0 %6720
  %6722 = vrot.lane.b32.xlu0 %v4508, 16
  %v6723 = vpop.permute.xlu0 %6722
  %6724 = vrot.lane.b32.xlu0 %v4513, 16
  %v6725 = vpop.permute.xlu0 %6724
  %6726 = vrot.lane.b32.xlu0 %v4595, 16
  %v6727 = vpop.permute.xlu0 %6726
  %6728 = vrot.lane.b32.xlu0 %v4600, 16
  %v6729 = vpop.permute.xlu0 %6728
  %6730 = vrot.lane.b32.xlu0 %v4682, 16
  %v6731 = vpop.permute.xlu0 %6730
  %6732 = vrot.lane.b32.xlu0 %v4687, 16
  %v6733 = vpop.permute.xlu0 %6732
  %6734 = vrot.lane.b32.xlu0 %v4769, 16
  %v6735 = vpop.permute.xlu0 %6734
  %6736 = vrot.lane.b32.xlu0 %v4774, 16
  %v6737 = vpop.permute.xlu0 %6736
  %6738 = vrot.lane.b32.xlu0 %v4856, 16
  %v6739 = vpop.permute.xlu0 %6738
  %6740 = vrot.lane.b32.xlu0 %v4861, 16
  %v6741 = vpop.permute.xlu0 %6740
  %6742 = vrot.lane.b32.xlu0 %v4943, 16
  %v6743 = vpop.permute.xlu0 %6742
  %6744 = vrot.lane.b32.xlu0 %v4948, 16
  %v6745 = vpop.permute.xlu0 %6744
  %6746 = vrot.lane.b32.xlu0 %v5030, 16
  %v6747 = vpop.permute.xlu0 %6746
  %6748 = vrot.lane.b32.xlu0 %v5035, 16
  %v6749 = vpop.permute.xlu0 %6748
  %6782 = vrot.lane.b32.xlu0 %v6021, 24
  %v6783 = vpop.permute.xlu0 %6782
  %6784 = vrot.lane.b32.xlu0 %v6026, 24
  %v6785 = vpop.permute.xlu0 %6784
  %6786 = vrot.lane.b32.xlu0 %v6108, 24
  %v6787 = vpop.permute.xlu0 %6786
  %6788 = vrot.lane.b32.xlu0 %v6113, 24
  %v6789 = vpop.permute.xlu0 %6788
  %6790 = vrot.lane.b32.xlu0 %v6195, 24
  %v6791 = vpop.permute.xlu0 %6790
  %6792 = vrot.lane.b32.xlu0 %v6200, 24
  %v6793 = vpop.permute.xlu0 %6792
  %6794 = vrot.lane.b32.xlu0 %v6282, 24
  %v6795 = vpop.permute.xlu0 %6794
  %6796 = vrot.lane.b32.xlu0 %v6287, 24
  %v6797 = vpop.permute.xlu0 %6796
  %6798 = vrot.lane.b32.xlu0 %v6369, 24
  %v6799 = vpop.permute.xlu0 %6798
  %6800 = vrot.lane.b32.xlu0 %v6374, 24
  %v6801 = vpop.permute.xlu0 %6800
  %6802 = vrot.lane.b32.xlu0 %v6456, 24
  %v6803 = vpop.permute.xlu0 %6802
  %6804 = vrot.lane.b32.xlu0 %v6461, 24
  %v6805 = vpop.permute.xlu0 %6804
  %6806 = vrot.lane.b32.xlu0 %v6543, 24
  %v6807 = vpop.permute.xlu0 %6806
  %6808 = vrot.lane.b32.xlu0 %v6548, 24
  %v6809 = vpop.permute.xlu0 %6808
  %6810 = vrot.lane.b32.xlu0 %v6630, 24
  %v6811 = vpop.permute.xlu0 %6810
  %6812 = vrot.lane.b32.xlu0 %v6635, 24
  %v6813 = vpop.permute.xlu0 %6812
  %v6830 = vsel %vm258, %v1221, %v6655
  %v6831 = vsel %vm258, %v1226, %v6657
  %v6832 = vsel %vm258, %v1308, %v6659
  %v6833 = vsel %vm258, %v1313, %v6661
  %v6834 = vsel %vm258, %v1395, %v6663
  %v6835 = vsel %vm258, %v1400, %v6665
  %v6836 = vsel %vm258, %v1482, %v6667
  %v6837 = vsel %vm258, %v1487, %v6669
  %v6838 = vsel %vm258, %v1569, %v6671
  %v6839 = vsel %vm258, %v1574, %v6673
  %v6840 = vsel %vm258, %v1656, %v6675
  %v6841 = vsel %vm258, %v1661, %v6677
  %v6842 = vsel %vm258, %v1743, %v6679
  %v6843 = vsel %vm258, %v1748, %v6681
  %v6844 = vsel %vm258, %v1830, %v6683
  %v6845 = vsel %vm258, %v1835, %v6685
  %v6846 = vsel %vm965, %v6830, %v6719
  %v6847 = vsel %vm965, %v6831, %v6721
  %v6848 = vsel %vm965, %v6832, %v6723
  %v6849 = vsel %vm965, %v6833, %v6725
  %v6850 = vsel %vm965, %v6834, %v6727
  %v6851 = vsel %vm965, %v6835, %v6729
  %v6852 = vsel %vm965, %v6836, %v6731
  %v6853 = vsel %vm965, %v6837, %v6733
  %v6854 = vsel %vm965, %v6838, %v6735
  %v6855 = vsel %vm965, %v6839, %v6737
  %v6856 = vsel %vm965, %v6840, %v6739
  %v6857 = vsel %vm965, %v6841, %v6741
  %v6858 = vsel %vm965, %v6842, %v6743
  %v6859 = vsel %vm965, %v6843, %v6745
  %v6860 = vsel %vm965, %v6844, %v6747
  %v6861 = vsel %vm965, %v6845, %v6749
  %vm6862 = vcmask 195584
  %v6863 = vsel %vm6862, %v6846, %v6783
  %v6864 = vsel %vm6862, %v6847, %v6785
  %v6865 = vsel %vm6862, %v6848, %v6787
  %v6866 = vsel %vm6862, %v6849, %v6789
  %v6867 = vsel %vm6862, %v6850, %v6791
  %v6868 = vsel %vm6862, %v6851, %v6793
  %v6869 = vsel %vm6862, %v6852, %v6795
  %v6870 = vsel %vm6862, %v6853, %v6797
  %v6871 = vsel %vm6862, %v6854, %v6799
  %v6872 = vsel %vm6862, %v6855, %v6801
  %v6873 = vsel %vm6862, %v6856, %v6803
  %v6874 = vsel %vm6862, %v6857, %v6805
  %v6875 = vsel %vm6862, %v6858, %v6807
  %v6876 = vsel %vm6862, %v6859, %v6809
  %v6877 = vsel %vm6862, %v6860, %v6811
  %v6878 = vsel %vm6862, %v6861, %v6813
  %v6879 = vld [vmem:[%s3] sm:$0xff]
  %v6880 = vld [vmem:[%s3 + $0x8] sm:$0xff]
  %v6881 = vld [vmem:[%s3 + $0x10] sm:$0xff]
  %v6882 = vld [vmem:[%s3 + $0x18] sm:$0xff]
  %v6883 = vld [vmem:[%s4] sm:$0x1]
  %v6885 = vlaneseq
  %v6886 = vshrl.u32 %v6885, 7
  %v6887 = vsub.s32 0, %v6886
  %v6888 = vrot.slane %v6883, %v6887
  %v6891 = vsel %vm50, %v6863, 0
  %v6894 = vsel %vm50, %v6864, 0
  %v6897 = vsel %vm50, %v6865, 0
  %v6900 = vsel %vm50, %v6866, 0
  %v6903 = vsel %vm50, %v6867, 0
  %v6906 = vsel %vm50, %v6868, 0
  %v6909 = vsel %vm50, %v6869, 0
  %v6912 = vsel %vm50, %v6870, 0
  %v6915 = vsel %vm50, %v6871, 0
  %v6918 = vsel %vm50, %v6872, 0
  %v6921 = vsel %vm50, %v6873, 0
  %v6924 = vsel %vm50, %v6874, 0
  %v6927 = vsel %vm50, %v6875, 0
  %v6930 = vsel %vm50, %v6876, 0
  %v6933 = vsel %vm50, %v6877, 0
  %v6936 = vsel %vm50, %v6878, 0
  %6938 = vmatprep.subr.mxu0 0.0
  %6939 = vmatpush1.msra.mxu0 0.0
  %6940 = vmatprep.subr.mxu0 0.0
  %6941 = vmatpush1.msra.mxu0 0.0
  %6942 = vmatprep.subr.mxu0 0.0
  %6943 = vmatpush1.msra.mxu0 0.0
  %6944 = vmatprep.subr.mxu0 0.0
  %6945 = vmatpush1.msra.mxu0 0.0
  %6946 = vmatprep.subr.mxu0 0.0
  %6947 = vmatpush1.msra.mxu0 0.0
  %6948 = vmatprep.subr.mxu0 0.0
  %6949 = vmatpush1.msra.mxu0 0.0
  %6950 = vmatprep.subr.mxu0 0.0
  %6951 = vmatpush1.msra.mxu0 0.0
  %6952 = vmatprep.subr.mxu0 0.0
  %6953 = vmatpush1.msra.mxu0 0.0
  %6954 = vmatprep.subr.mxu0 0.0
  %6955 = vmatpush1.msra.mxu0 0.0
  %6956 = vmatprep.subr.mxu0 0.0
  %6957 = vmatpush1.msra.mxu0 0.0
  %6958 = vmatprep.subr.mxu0 0.0
  %6959 = vmatpush1.msra.mxu0 0.0
  %6960 = vmatprep.subr.mxu0 0.0
  %6961 = vmatpush1.msra.mxu0 0.0
  %6962 = vmatprep.subr.mxu0 0.0
  %6963 = vmatpush1.msra.mxu0 %v6882
  %6964 = vmatprep.subr.mxu0 0.0
  %6965 = vmatpush1.msra.mxu0 %v6881
  %6966 = vmatprep.subr.mxu0 0.0
  %6967 = vmatpush1.msra.mxu0 %v6880
  %6968 = vmatprep.subr.mxu0 0.0
  %6969 = vmatpush1.msra.mxu0 %v6879
  %6970 = vmatprep.subr.mxu0 0.0
  %6971 = vmatpush2.msra.mxu0 0.0
  %6972 = vmatprep.subr.mxu0 0.0
  %6973 = vmatpush2.msra.mxu0 0.0
  %6974 = vmatprep.subr.mxu0 0.0
  %6975 = vmatpush2.msra.mxu0 0.0
  %6976 = vmatprep.subr.mxu0 0.0
  %6977 = vmatpush2.msra.mxu0 0.0
  %6978 = vmatprep.subr.mxu0 0.0
  %6979 = vmatpush2.msra.mxu0 0.0
  %6980 = vmatprep.subr.mxu0 0.0
  %6981 = vmatpush2.msra.mxu0 0.0
  %6982 = vmatprep.subr.mxu0 0.0
  %6983 = vmatpush2.msra.mxu0 0.0
  %6984 = vmatprep.subr.mxu0 0.0
  %6985 = vmatpush2.msra.mxu0 0.0
  %6986 = vmatprep.subr.mxu0 0.0
  %6987 = vmatpush2.msra.mxu0 0.0
  %6988 = vmatprep.subr.mxu0 0.0
  %6989 = vmatpush2.msra.mxu0 0.0
  %6990 = vmatprep.subr.mxu0 0.0
  %6991 = vmatpush2.msra.mxu0 0.0
  %6992 = vmatprep.subr.mxu0 0.0
  %6993 = vmatpush2.msra.mxu0 0.0
  %6994 = vmatprep.subr.mxu0 0.0
  %6995 = vmatpush2.msra.mxu0 0.0
  %6996 = vmatprep.subr.mxu0 0.0
  %6997 = vmatpush2.msra.mxu0 0.0
  %6998 = vmatprep.subr.mxu0 0.0
  %6999 = vmatpush2.msra.mxu0 0.0
  %7000 = vmatprep.subr.mxu0 0.0
  %7001 = vmatpush2.msra.mxu0 0.0
  %7002 = vmatprep.mubr.f32.mxu0 0.0
  %7003 = vmatmul.mubr.f32.gmra.mxu0 %v6891
  %v7004 = vpop.f32.mrf.mxu0
  %v7005 = vadd.f32 %v6888, %v7004
  %v7006 = vpop.f32.mrf.mxu0
  %7007 = vmatprep.mubr.f32.mxu0 0.0
  %7008 = vmatmul.mubr.f32.gmra.mxu0 %v6894
  %v7009 = vpop.f32.mrf.mxu0
  %v7010 = vadd.f32 %v6888, %v7009
  %v7011 = vpop.f32.mrf.mxu0
  %7012 = vmatprep.mubr.f32.mxu0 0.0
  %7013 = vmatmul.mubr.f32.gmra.mxu0 %v6897
  %v7014 = vpop.f32.mrf.mxu0
  %v7015 = vadd.f32 %v6888, %v7014
  %v7016 = vpop.f32.mrf.mxu0
  %7017 = vmatprep.mubr.f32.mxu0 0.0
  %7018 = vmatmul.mubr.f32.gmra.mxu0 %v6900
  %v7019 = vpop.f32.mrf.mxu0
  %v7020 = vadd.f32 %v6888, %v7019
  %v7021 = vpop.f32.mrf.mxu0
  %7022 = vmatprep.mubr.f32.mxu0 0.0
  %7023 = vmatmul.mubr.f32.gmra.mxu0 %v6903
  %v7024 = vpop.f32.mrf.mxu0
  %v7025 = vadd.f32 %v6888, %v7024
  %v7026 = vpop.f32.mrf.mxu0
  %7027 = vmatprep.mubr.f32.mxu0 0.0
  %7028 = vmatmul.mubr.f32.gmra.mxu0 %v6906
  %v7029 = vpop.f32.mrf.mxu0
  %v7030 = vadd.f32 %v6888, %v7029
  %v7031 = vpop.f32.mrf.mxu0
  %7032 = vmatprep.mubr.f32.mxu0 0.0
  %7033 = vmatmul.mubr.f32.gmra.mxu0 %v6909
  %v7034 = vpop.f32.mrf.mxu0
  %v7035 = vadd.f32 %v6888, %v7034
  %v7036 = vpop.f32.mrf.mxu0
  %7037 = vmatprep.mubr.f32.mxu0 0.0
  %7038 = vmatmul.mubr.f32.gmra.mxu0 %v6912
  %v7039 = vpop.f32.mrf.mxu0
  %v7040 = vadd.f32 %v6888, %v7039
  %v7041 = vpop.f32.mrf.mxu0
  %7042 = vmatprep.mubr.f32.mxu0 0.0
  %7043 = vmatmul.mubr.f32.gmra.mxu0 %v6915
  %v7044 = vpop.f32.mrf.mxu0
  %v7045 = vadd.f32 %v6888, %v7044
  %v7046 = vpop.f32.mrf.mxu0
  %7047 = vmatprep.mubr.f32.mxu0 0.0
  %7048 = vmatmul.mubr.f32.gmra.mxu0 %v6918
  %v7049 = vpop.f32.mrf.mxu0
  %v7050 = vadd.f32 %v6888, %v7049
  %v7051 = vpop.f32.mrf.mxu0
  %7052 = vmatprep.mubr.f32.mxu0 0.0
  %7053 = vmatmul.mubr.f32.gmra.mxu0 %v6921
  %v7054 = vpop.f32.mrf.mxu0
  %v7055 = vadd.f32 %v6888, %v7054
  %v7056 = vpop.f32.mrf.mxu0
  %7057 = vmatprep.mubr.f32.mxu0 0.0
  %7058 = vmatmul.mubr.f32.gmra.mxu0 %v6924
  %v7059 = vpop.f32.mrf.mxu0
  %v7060 = vadd.f32 %v6888, %v7059
  %v7061 = vpop.f32.mrf.mxu0
  %7062 = vmatprep.mubr.f32.mxu0 0.0
  %7063 = vmatmul.mubr.f32.gmra.mxu0 %v6927
  %v7064 = vpop.f32.mrf.mxu0
  %v7065 = vadd.f32 %v6888, %v7064
  %v7066 = vpop.f32.mrf.mxu0
  %7067 = vmatprep.mubr.f32.mxu0 0.0
  %7068 = vmatmul.mubr.f32.gmra.mxu0 %v6930
  %v7069 = vpop.f32.mrf.mxu0
  %v7070 = vadd.f32 %v6888, %v7069
  %v7071 = vpop.f32.mrf.mxu0
  %7072 = vmatprep.mubr.f32.mxu0 0.0
  %7073 = vmatmul.mubr.f32.gmra.mxu0 %v6933
  %v7074 = vpop.f32.mrf.mxu0
  %v7075 = vadd.f32 %v6888, %v7074
  %v7076 = vpop.f32.mrf.mxu0
  %7077 = vmatprep.mubr.f32.mxu0 0.0
  %7078 = vmatmul.mubr.f32.gmra.mxu0 %v6936
  %v7079 = vpop.f32.mrf.mxu0
  %v7080 = vadd.f32 %v6888, %v7079
  %v7081 = vpop.f32.mrf.mxu0
  %7082 = vdwg.mxu0
  %7083 = vst.msk [vmem:[%s6] sm:$0xff] %vm50, %v7005
  %7084 = vst.msk [vmem:[%s6 + $0x8] sm:$0xff] %vm50, %v7010
  %7085 = vst.msk [vmem:[%s6 + $0x10] sm:$0xff] %vm50, %v7015
  %7086 = vst.msk [vmem:[%s6 + $0x18] sm:$0xff] %vm50, %v7020
  %7087 = vst.msk [vmem:[%s6 + $0x20] sm:$0xff] %vm50, %v7025
  %7088 = vst.msk [vmem:[%s6 + $0x28] sm:$0xff] %vm50, %v7030
  %7089 = vst.msk [vmem:[%s6 + $0x30] sm:$0xff] %vm50, %v7035
  %7090 = vst.msk [vmem:[%s6 + $0x38] sm:$0xff] %vm50, %v7040
  %7091 = vst.msk [vmem:[%s6 + $0x40] sm:$0xff] %vm50, %v7045
  %7092 = vst.msk [vmem:[%s6 + $0x48] sm:$0xff] %vm50, %v7050
  %7093 = vst.msk [vmem:[%s6 + $0x50] sm:$0xff] %vm50, %v7055
  %7094 = vst.msk [vmem:[%s6 + $0x58] sm:$0xff] %vm50, %v7060
  %7095 = vst.msk [vmem:[%s6 + $0x60] sm:$0xff] %vm50, %v7065
  %7096 = vst.msk [vmem:[%s6 + $0x68] sm:$0xff] %vm50, %v7070
  %7097 = vst.msk [vmem:[%s6 + $0x70] sm:$0xff] %vm50, %v7075
  %7098 = vst.msk [vmem:[%s6 + $0x78] sm:$0xff] %vm50, %v7080
  // Predicated region
  $region26: #{tpu_custom_call.1} parent=0 // pred_check
    _
  $region27: #{tpu_custom_call.1} parent=0 // pred_check_branch
    %7100 = sbr.rel (0) target = $region29
  $region28: #{tpu_custom_call.1} parent=0 // pred_region
    _
  $region29: #{tpu_custom_call.1} parent=0 // pred_fallthru
    _
  // Predicated region
  $region30: #{tpu_custom_call.1} parent=0 // pred_check
    _
  $region31: #{tpu_custom_call.1} parent=0 // pred_check_branch
    %7102 = sbr.rel (0) target = $region33
  $region32: #{tpu_custom_call.1} parent=0 // pred_region
    _
  $region33: #{tpu_custom_call.1} parent=0 // pred_fallthru
    _

</llo_original>
